<compile_context>
chip_gen: v7x
topology: tpu7x:2x2x1
jax: 0.10.0
libtpu: 0.0.40
codegen_flags: <defaults>
</compile_context>

<pallas_src>
import jax
import jax.numpy as jnp
from jax.experimental import pallas as pl
from jax.experimental.pallas import tpu as pltpu

# ----------------------------- small config ---------------------------------
BATCH = 2
IMG = 32          # image spatial size (small stand-in for 224)
PATCH = 16        # patch size (small stand-in for 32)
WIDTH = 128       # transformer width (small stand-in for 768)
HEADS = 4
LAYERS = 2        # small stand-in for 12
MLP = 4 * WIDTH
EMBED = 512       # CLIP embed dim kept at 512 so the head dims match the module
NUM_CLASSES = 16  # small stand-in for 1000
GAMMA = 0.5

GRID = IMG // PATCH
SEQ = GRID * GRID + 1
NC_PAD = ((NUM_CLASSES + 127) // 128) * 128   # lane-dense head output width


def _ln(x, g, b):
    """f32 LayerNorm over the last axis (eps=1e-5, like torch)."""
    x = x.astype(jnp.float32)
    mu = jnp.mean(x, axis=-1, keepdims=True)
    xc = x - mu
    var = jnp.mean(xc * xc, axis=-1, keepdims=True)
    return xc * jax.lax.rsqrt(var + 1e-5) * g + b


# ----------------------------- stem kernel -----------------------------------
def _stem_kernel(patches_ref, conv_w_ref, cls_ref, pos_ref, g_ref, b_ref, o_ref):
    B, S, _ = o_ref.shape
    gp = S - 1
    # strided patch-embed conv as a single bf16 matmul (f32 accumulate);
    # patches were cast to bf16 in the wrapper so the input DMA is half-size.
    tok = jnp.dot(patches_ref[...], conv_w_ref[...],
                  preferred_element_type=jnp.float32)            # (B*gp, W) f32
    g = g_ref[...]
    bb = b_ref[...]
    pos = pos_ref[...]                                           # (S, W)
    # CLS row is batch-independent: normalise once, store to every batch item.
    cls_row = _ln(cls_ref[...] + pos[0:1, :], g, bb).astype(o_ref.dtype)    # (1, W)
    for b in range(B):                                           # static, B=2
        o_ref[b, 0:1, :] = cls_row
        o_ref[b, 1:, :] = _ln(tok[b * gp:(b + 1) * gp, :] + pos[1:, :],
                              g, bb).astype(o_ref.dtype)


# ----------------------------- encoder kernel ---------------------------------
def _encoder_kernel(x_ref, ln1_g, ln1_b, w_qkv, b_qkv, w_out, b_out,
                    ln2_g, ln2_b, w_fc, b_fc, w_proj, b_proj, o_ref):
    B, S, W = o_ref.shape
    dh = W // HEADS
    scale = 1.0 / float(dh) ** 0.5

    # Layer 0: seed the resident output block with the stem activation; it is
    # the f32 carry for every subsequent layer (HBM writeback happens once,
    # after the last layer, because the out index_map is constant).
    @pl.when(pl.program_id(0) == 0)
    def _():
        o_ref[...] = x_ref[...]

    # Per-layer weights (DMA'd once per layer), hoisted out of the batch loop.
    ln1g, ln1b = ln1_g[...], ln1_b[...]
    wqkv, bqkv = w_qkv[...], b_qkv[...]
    w_o3 = w_out[...].reshape(HEADS, dh, W)                      # (H, dh, W) bf16
    bout = b_out[...]
    ln2g, ln2b = ln2_g[...], ln2_b[...]
    wfc, bfc = w_fc[...], b_fc[...]
    wproj, bproj = w_proj[...], b_proj[...]

    for b in range(B):                                           # static, B=2
        h = o_ref[b]                                             # (S, W) f32 carry

        # ---- multi-head self-attention sublayer (pre-LN) ----
        a = _ln(h, ln1g, ln1b)
        qkv = jnp.dot(a.astype(jnp.bfloat16), wqkv,
                      preferred_element_type=jnp.float32) + bqkv        # (S, 3W) f32
        qkv = qkv.astype(jnp.bfloat16)                           # cast once (v5e-friendly)
        q = jnp.stack([qkv[:, hd * dh:(hd + 1) * dh] for hd in range(HEADS)], axis=0)
        k = jnp.stack([qkv[:, W + hd * dh:W + (hd + 1) * dh] for hd in range(HEADS)], axis=0)
        v = jnp.stack([qkv[:, 2 * W + hd * dh:2 * W + (hd + 1) * dh] for hd in range(HEADS)], axis=0)

        # head-batched scores / softmax / context
        s = jax.lax.dot_general(q, k, (((2,), (2,)), ((0,), (0,))),
                                preferred_element_type=jnp.float32) * scale   # (H, S, S)
        s = s - jnp.max(s, axis=-1, keepdims=True)
        p = jnp.exp(s)
        p = p * pl.reciprocal(jnp.sum(p, axis=-1, keepdims=True), approx=True)  # EUP divide
        ctx = jax.lax.dot_general(p.astype(jnp.bfloat16), v,
                                  (((2,), (1,)), ((0,), (0,))),
                                  preferred_element_type=jnp.float32)          # (H, S, dh)
        # head-merge fused into the output projection: sum_h ctx_h @ W_out[h*dh:(h+1)*dh]
        oh = jax.lax.dot_general(ctx.astype(jnp.bfloat16), w_o3,
                                 (((2,), (1,)), ((0,), (0,))),
                                 preferred_element_type=jnp.float32)           # (H, S, W)
        h = h + jnp.sum(oh, axis=0) + bout                       # residual in-kernel

        # ---- MLP sublayer (pre-LN, GELU) ----
        m = _ln(h, ln2g, ln2b)
        h1 = jnp.dot(m.astype(jnp.bfloat16), wfc,
                     preferred_element_type=jnp.float32) + bfc
        # TODO(synk): PyTorch nn.GELU() is exact (erf); tanh-approximate GELU used for Mosaic portability.
        h1 = jax.nn.gelu(h1, approximate=True)
        h2 = jnp.dot(h1.astype(jnp.bfloat16), wproj,
                     preferred_element_type=jnp.float32) + bproj
        o_ref[b] = h + h2                                        # residual, carry in VMEM


def clip_encoder(h0, p):
    """h0: (B, S, W) f32.  Runs all transformer blocks in one pallas_call."""
    B = h0.shape[0]
    act_spec = pl.BlockSpec((B, SEQ, WIDTH), lambda l: (0, 0, 0))

    def wspec(shape):
        # one layer's weights per grid step (leading LAYERS axis squeezed)
        return pl.BlockSpec((None,) + shape, lambda l: (l,) + (0,) * len(shape))

    return pl.pallas_call(
        _encoder_kernel,
        grid=(LAYERS,),
        in_specs=[
            act_spec,                                            # stem activation (read once)
            wspec((1, WIDTH)), wspec((1, WIDTH)),                # ln1 gamma/beta
            wspec((WIDTH, 3 * WIDTH)), wspec((1, 3 * WIDTH)),    # qkv
            wspec((WIDTH, WIDTH)), wspec((1, WIDTH)),            # out proj
            wspec((1, WIDTH)), wspec((1, WIDTH)),                # ln2 gamma/beta
            wspec((WIDTH, MLP)), wspec((1, MLP)),                # mlp fc
            wspec((MLP, WIDTH)), wspec((1, WIDTH)),              # mlp proj
        ],
        out_specs=act_spec,
        out_shape=jax.ShapeDtypeStruct((B, SEQ, WIDTH), jnp.float32),
        compiler_params=pltpu.CompilerParams(
            # Layer axis carries the activation -> "arbitrary".
            # TODO(synk): on v7x, shard SEQ/B across the 2 TensorCores with
            # core_map + shared weight fetch (CMEM/VMEM_SHARED) so the weight
            # stream from HBM is not duplicated per core.
            dimension_semantics=("arbitrary",),
            # Safe on v5e/v6e (128 MiB physical) and v7x (64 MiB).  At real
            # CLIP-L sizes raise toward ~96 MiB on v5e/v6e; on v7x keep <=56 MiB
            # and use pl.Buffered(1) (or a K-tile grid axis) on the MLP weights.
            vmem_limit_bytes=48 * 1024 * 1024),
    )(h0, p["ln1_g"], p["ln1_b"], p["w_qkv"], p["b_qkv"], p["w_out"], p["b_out"],
      p["ln2_g"], p["ln2_b"], p["w_fc"], p["b_fc"], p["w_proj"], p["b_proj"])


# ----------------------------- head kernel ------------------------------------
def _head_kernel(cls_ref, lng_ref, lnb_ref, proj_ref, w1_ref, b1_ref,
                 bng_ref, bnb_ref, rm_ref, rv_ref, w2_ref, b2_ref, wn_ref, o_ref):
    pooled = _ln(cls_ref[...], lng_ref[...], lnb_ref[...])       # ln_post on CLS (B, W)
    feat = jnp.dot(pooled.astype(jnp.bfloat16), proj_ref[...],
                   preferred_element_type=jnp.float32)           # CLIP proj (B, 512)

    # intermediate: Linear -> ReLU -> BatchNorm1d(eval running stats) -> Linear
    z = jnp.dot(feat.astype(jnp.bfloat16), w1_ref[...],
                preferred_element_type=jnp.float32) + b1_ref[...]
    z = jnp.maximum(z, 0.0)
    z = (z - rm_ref[...]) * jax.lax.rsqrt(rv_ref[...] + 1e-5) * bng_ref[...] + bnb_ref[...]
    inter = jnp.dot(z.astype(jnp.bfloat16), w2_ref[...],
                    preferred_element_type=jnp.float32) + b2_ref[...]   # (B, 170)

    # thirds split (x[:, :c], x[:, c:2c], x[:, 2c:3c], c = 170//3 = 56, like the
    # module) stacked along batch, then ONE matmul against the pre-normalised,
    # lane-padded fc matrix -> unmasked (3B, NC_PAD) store.
    c = wn_ref.shape[1]                                          # 56
    stacked = jnp.concatenate(
        [inter[:, :c], inter[:, c:2 * c], inter[:, 2 * c:3 * c]], axis=0)    # (3B, 56)
    y = jax.lax.dot_general(stacked, wn_ref[...], (((1,), (1,)), ((), ())),
                            preferred_element_type=jnp.float32)  # (3B, NC_PAD)
    o_ref[...] = y.astype(o_ref.dtype)


# ----------------------------- model forward ---------------------------------
def clip_vit_large_forward(x, params):
    B, C, H, Wimg = x.shape
    gh, gw = H // PATCH, Wimg // PATCH
    # strided conv patch-embed as matmul: patch vector ordered (c, u, v) to match
    # Conv2d weight flattening (out, c, u, v); cast to bf16 in the wrapper so the
    # stem input DMA moves half the bytes.
    patches = x.reshape(B, C, gh, PATCH, gw, PATCH)
    patches = patches.transpose(0, 2, 4, 1, 3, 5).reshape(
        B * gh * gw, C * PATCH * PATCH).astype(jnp.bfloat16)

    cp = params["clip"]
    h0 = pl.pallas_call(
        _stem_kernel,
        out_shape=jax.ShapeDtypeStruct((B, SEQ, WIDTH), jnp.float32),
    )(patches, cp["conv1_w"], cp["class_embedding"], cp["positional_embedding"],
      cp["ln_pre_g"], cp["ln_pre_b"])

    h_enc = clip_encoder(h0, cp)                                 # (B, S, W)
    cls_tok = h_enc[:, 0, :]                                     # only the CLS row feeds the head

    hp = params["head"]
    # TODO(synk): training branch (plain fc with bias, dropout, BN batch stats) not
    # implemented; this reproduces the inference branch of _forward_impl.
    y = pl.pallas_call(
        _head_kernel,
        out_shape=jax.ShapeDtypeStruct((3 * B, NC_PAD), jnp.float32),
    )(cls_tok, cp["ln_post_g"], cp["ln_post_b"], cp["proj"],
      hp["w1"], hp["b1"], hp["bn_g"], hp["bn_b"], hp["bn_rm"], hp["bn_rv"],
      hp["w2"], hp["b2"], hp["fc_wn"])                           # (3B, NC_PAD)

    y = y[:, :NUM_CLASSES]
    return y[:B], y[B:2 * B], y[2 * B:3 * B]


# ----------------------------- deterministic init ----------------------------
def init_params(key, num_classes):
    keys = iter(jax.random.split(key, 64))

    def nrm(shape, scale=0.02, dtype=jnp.float32):
        return (scale * jax.random.normal(next(keys), shape, dtype=jnp.float32)).astype(dtype)

    bf16 = jnp.bfloat16
    clip = dict(
        conv1_w=nrm((3 * PATCH * PATCH, WIDTH), dtype=bf16),
        class_embedding=nrm((1, WIDTH)),
        positional_embedding=nrm((SEQ, WIDTH)),
        ln_pre_g=1.0 + nrm((1, WIDTH), 0.05), ln_pre_b=nrm((1, WIDTH)),
        ln_post_g=1.0 + nrm((1, WIDTH), 0.05), ln_post_b=nrm((1, WIDTH)),
        proj=nrm((WIDTH, EMBED), dtype=bf16),
        # per-layer weights stacked on a leading LAYERS axis (one layer DMA'd per grid step)
        ln1_g=1.0 + nrm((LAYERS, 1, WIDTH), 0.05), ln1_b=nrm((LAYERS, 1, WIDTH)),
        w_qkv=nrm((LAYERS, WIDTH, 3 * WIDTH), dtype=bf16), b_qkv=nrm((LAYERS, 1, 3 * WIDTH)),
        w_out=nrm((LAYERS, WIDTH, WIDTH), dtype=bf16), b_out=nrm((LAYERS, 1, WIDTH)),
        ln2_g=1.0 + nrm((LAYERS, 1, WIDTH), 0.05), ln2_b=nrm((LAYERS, 1, WIDTH)),
        w_fc=nrm((LAYERS, WIDTH, MLP), dtype=bf16), b_fc=nrm((LAYERS, 1, MLP)),
        w_proj=nrm((LAYERS, MLP, WIDTH), dtype=bf16), b_proj=nrm((LAYERS, 1, WIDTH)),
    )

    # Weight-normalised fc (eval branch): wn = W / ||W||_2^gamma.  Pure function
    # of fixed weights -> precomputed once at init; zero-padded to a lane-dense
    # (multiple-of-128) class dim so the head kernel store is unmasked.
    fc_w = nrm((num_classes, 170 // 3), 0.1)                     # (nc, 56)
    norm = jnp.sqrt(jnp.sum(fc_w * fc_w, axis=1, keepdims=True))
    fc_wn = fc_w * norm ** (-GAMMA)
    fc_wn = jnp.zeros((NC_PAD, 170 // 3), jnp.float32).at[:num_classes].set(fc_wn)

    head = dict(
        w1=nrm((EMBED, 1024), dtype=bf16), b1=nrm((1, 1024)),
        bn_g=1.0 + nrm((1, 1024), 0.05), bn_b=nrm((1, 1024)),
        bn_rm=nrm((1, 1024)),
        bn_rv=0.5 + jax.random.uniform(next(keys), (1, 1024), dtype=jnp.float32),
        w2=nrm((1024, 170), dtype=bf16), b2=nrm((1, 170)),
        fc_wn=fc_wn,
    )
    return dict(clip=clip, head=head)


# ----------------------------------- main -------------------------------------
if __name__ == "__main__":
    key = jax.random.PRNGKey(0)
    pkey, xkey = jax.random.split(key)
    params = init_params(pkey, NUM_CLASSES)
    x = jax.random.normal(xkey, (BATCH, 3, IMG, IMG), dtype=jnp.float32)  # NCHW like PyTorch

    fwd = jax.jit(lambda inp: clip_vit_large_forward(inp, params))
    y1, y2, y3 = fwd(x)
    jax.block_until_ready((y1, y2, y3))

    assert y1.shape == (BATCH, NUM_CLASSES)
    assert y2.shape == (BATCH, NUM_CLASSES)
    assert y3.shape == (BATCH, NUM_CLASSES)
    assert jnp.all(jnp.isfinite(y1)) and jnp.all(jnp.isfinite(y2)) and jnp.all(jnp.isfinite(y3))
    print("KERNEL_OK")
</pallas_src>

<mosaic_0001>
module attributes {stable_mosaic.version = 11 : i64} {
  func.func @_stem_kernel(%arg0: memref<8x768xbf16, #tpu.memory_space<vmem>>, %arg1: memref<768x128xbf16, #tpu.memory_space<vmem>>, %arg2: memref<1x128xf32, #tpu.memory_space<vmem>>, %arg3: memref<5x128xf32, #tpu.memory_space<vmem>>, %arg4: memref<1x128xf32, #tpu.memory_space<vmem>>, %arg5: memref<1x128xf32, #tpu.memory_space<vmem>>, %arg6: memref<2x5x128xf32, #tpu.memory_space<vmem>>) attributes {dimension_semantics = [], scalar_prefetch = 0 : i64, scratch_operands = 0 : i64, tpu.core_type = #tpu.core_type<tc>} {
    %c0 = arith.constant 0 : index
    %c0_0 = arith.constant 0 : index
    %0 = vector.load %arg0[%c0, %c0_0] : memref<8x768xbf16, #tpu.memory_space<vmem>>, vector<8x768xbf16>
    %c0_1 = arith.constant 0 : index
    %c0_2 = arith.constant 0 : index
    %1 = vector.load %arg1[%c0_1, %c0_2] : memref<768x128xbf16, #tpu.memory_space<vmem>>, vector<768x128xbf16>
    %cst = arith.constant dense<0.000000e+00> : vector<8x128xf32>
    %2 = tpu.matmul %0, %1, %cst {dimension_numbers = #tpu.dot_dimension_numbers<[1], [0], [0], [1], [0, 0, 1, 1], [], []>} : vector<8x768xbf16>, vector<768x128xbf16>, vector<8x128xf32> -> vector<8x128xf32>
    %c0_3 = arith.constant 0 : index
    %c0_4 = arith.constant 0 : index
    %3 = vector.load %arg4[%c0_3, %c0_4] : memref<1x128xf32, #tpu.memory_space<vmem>>, vector<1x128xf32>
    %c0_5 = arith.constant 0 : index
    %c0_6 = arith.constant 0 : index
    %4 = vector.load %arg5[%c0_5, %c0_6] : memref<1x128xf32, #tpu.memory_space<vmem>>, vector<1x128xf32>
    %c0_7 = arith.constant 0 : index
    %c0_8 = arith.constant 0 : index
    %5 = vector.load %arg3[%c0_7, %c0_8] : memref<5x128xf32, #tpu.memory_space<vmem>>, vector<5x128xf32>
    %c0_9 = arith.constant 0 : index
    %c0_10 = arith.constant 0 : index
    %6 = vector.load %arg2[%c0_9, %c0_10] : memref<1x128xf32, #tpu.memory_space<vmem>>, vector<1x128xf32>
    %7 = vector.extract_strided_slice %5 {offsets = [0, 0], sizes = [1, 128], strides = [1, 1]} : vector<5x128xf32> to vector<1x128xf32>
    %8 = arith.addf %6, %7 : vector<1x128xf32>
    %cst_11 = arith.constant dense<0.000000e+00> : vector<1xf32>
    %9 = vector.multi_reduction <add>, %8, %cst_11 [1] : vector<1x128xf32> to vector<1xf32>
    %10 = vector.shape_cast %9 : vector<1xf32> to vector<1x1xf32>
    %cst_12 = arith.constant 1.280000e+02 : f32
    %11 = vector.broadcast %cst_12 : f32 to vector<1x1xf32>
    %12 = arith.divf %10, %11 : vector<1x1xf32>
    %13 = vector.broadcast %12 : vector<1x1xf32> to vector<1x128xf32>
    %14 = arith.subf %8, %13 : vector<1x128xf32>
    %15 = arith.mulf %14, %14 : vector<1x128xf32>
    %cst_13 = arith.constant dense<0.000000e+00> : vector<1xf32>
    %16 = vector.multi_reduction <add>, %15, %cst_13 [1] : vector<1x128xf32> to vector<1xf32>
    %17 = vector.shape_cast %16 : vector<1xf32> to vector<1x1xf32>
    %cst_14 = arith.constant 1.280000e+02 : f32
    %18 = vector.broadcast %cst_14 : f32 to vector<1x1xf32>
    %19 = arith.divf %17, %18 : vector<1x1xf32>
    %cst_15 = arith.constant 9.99999974E-6 : f32
    %20 = vector.broadcast %cst_15 : f32 to vector<1x1xf32>
    %21 = arith.addf %19, %20 : vector<1x1xf32>
    %22 = math.rsqrt %21 : vector<1x1xf32>
    %23 = vector.broadcast %22 : vector<1x1xf32> to vector<1x128xf32>
    %24 = arith.mulf %14, %23 : vector<1x128xf32>
    %25 = arith.mulf %24, %3 : vector<1x128xf32>
    %26 = arith.addf %25, %4 : vector<1x128xf32>
    %c0_16 = arith.constant 0 : index
    %c0_17 = arith.constant 0 : index
    %c0_18 = arith.constant 0 : index
    %27 = vector.load %arg6[%c0_16, %c0_17, %c0_18] : memref<2x5x128xf32, #tpu.memory_space<vmem>>, vector<1x1x128xf32>
    %28 = vector.shape_cast %27 : vector<1x1x128xf32> to vector<1x128xf32>
    %29 = vector.shape_cast %26 : vector<1x128xf32> to vector<1x1x128xf32>
    tpu.vector_store %arg6[%c0_16, %c0_17, %c0_18], %29 {strides = array<i32>} : memref<2x5x128xf32, #tpu.memory_space<vmem>>, vector<1x1x128xf32>,
    %30 = vector.extract_strided_slice %2 {offsets = [0, 0], sizes = [4, 128], strides = [1, 1]} : vector<8x128xf32> to vector<4x128xf32>
    %31 = vector.extract_strided_slice %5 {offsets = [1, 0], sizes = [4, 128], strides = [1, 1]} : vector<5x128xf32> to vector<4x128xf32>
    %32 = arith.addf %30, %31 : vector<4x128xf32>
    %cst_19 = arith.constant dense<0.000000e+00> : vector<4xf32>
    %33 = vector.multi_reduction <add>, %32, %cst_19 [1] : vector<4x128xf32> to vector<4xf32>
    %34 = vector.shape_cast %33 : vector<4xf32> to vector<4x1xf32>
    %cst_20 = arith.constant 1.280000e+02 : f32
    %35 = vector.broadcast %cst_20 : f32 to vector<4x1xf32>
    %36 = arith.divf %34, %35 : vector<4x1xf32>
    %37 = vector.broadcast %36 : vector<4x1xf32> to vector<4x128xf32>
    %38 = arith.subf %32, %37 : vector<4x128xf32>
    %39 = arith.mulf %38, %38 : vector<4x128xf32>
    %cst_21 = arith.constant dense<0.000000e+00> : vector<4xf32>
    %40 = vector.multi_reduction <add>, %39, %cst_21 [1] : vector<4x128xf32> to vector<4xf32>
    %41 = vector.shape_cast %40 : vector<4xf32> to vector<4x1xf32>
    %cst_22 = arith.constant 1.280000e+02 : f32
    %42 = vector.broadcast %cst_22 : f32 to vector<4x1xf32>
    %43 = arith.divf %41, %42 : vector<4x1xf32>
    %cst_23 = arith.constant 9.99999974E-6 : f32
    %44 = vector.broadcast %cst_23 : f32 to vector<4x1xf32>
    %45 = arith.addf %43, %44 : vector<4x1xf32>
    %46 = math.rsqrt %45 : vector<4x1xf32>
    %47 = vector.broadcast %46 : vector<4x1xf32> to vector<4x128xf32>
    %48 = arith.mulf %38, %47 : vector<4x128xf32>
    %49 = vector.broadcast %3 : vector<1x128xf32> to vector<4x128xf32>
    %50 = arith.mulf %48, %49 : vector<4x128xf32>
    %51 = vector.broadcast %4 : vector<1x128xf32> to vector<4x128xf32>
    %52 = arith.addf %50, %51 : vector<4x128xf32>
    %c0_24 = arith.constant 0 : index
    %c1 = arith.constant 1 : index
    %c0_25 = arith.constant 0 : index
    %53 = vector.load %arg6[%c0_24, %c1, %c0_25] : memref<2x5x128xf32, #tpu.memory_space<vmem>>, vector<1x4x128xf32>
    %54 = vector.shape_cast %53 : vector<1x4x128xf32> to vector<4x128xf32>
    %55 = vector.shape_cast %52 : vector<4x128xf32> to vector<1x4x128xf32>
    tpu.vector_store %arg6[%c0_24, %c1, %c0_25], %55 {strides = array<i32>} : memref<2x5x128xf32, #tpu.memory_space<vmem>>, vector<1x4x128xf32>,
    %c1_26 = arith.constant 1 : index
    %c0_27 = arith.constant 0 : index
    %c0_28 = arith.constant 0 : index
    %56 = vector.load %arg6[%c1_26, %c0_27, %c0_28] : memref<2x5x128xf32, #tpu.memory_space<vmem>>, vector<1x1x128xf32>
    %57 = vector.shape_cast %56 : vector<1x1x128xf32> to vector<1x128xf32>
    %58 = vector.shape_cast %26 : vector<1x128xf32> to vector<1x1x128xf32>
    tpu.vector_store %arg6[%c1_26, %c0_27, %c0_28], %58 {strides = array<i32>} : memref<2x5x128xf32, #tpu.memory_space<vmem>>, vector<1x1x128xf32>,
    %59 = vector.extract_strided_slice %2 {offsets = [4, 0], sizes = [4, 128], strides = [1, 1]} : vector<8x128xf32> to vector<4x128xf32>
    %60 = vector.extract_strided_slice %5 {offsets = [1, 0], sizes = [4, 128], strides = [1, 1]} : vector<5x128xf32> to vector<4x128xf32>
    %61 = arith.addf %59, %60 : vector<4x128xf32>
    %cst_29 = arith.constant dense<0.000000e+00> : vector<4xf32>
    %62 = vector.multi_reduction <add>, %61, %cst_29 [1] : vector<4x128xf32> to vector<4xf32>
    %63 = vector.shape_cast %62 : vector<4xf32> to vector<4x1xf32>
    %cst_30 = arith.constant 1.280000e+02 : f32
    %64 = vector.broadcast %cst_30 : f32 to vector<4x1xf32>
    %65 = arith.divf %63, %64 : vector<4x1xf32>
    %66 = vector.broadcast %65 : vector<4x1xf32> to vector<4x128xf32>
    %67 = arith.subf %61, %66 : vector<4x128xf32>
    %68 = arith.mulf %67, %67 : vector<4x128xf32>
    %cst_31 = arith.constant dense<0.000000e+00> : vector<4xf32>
    %69 = vector.multi_reduction <add>, %68, %cst_31 [1] : vector<4x128xf32> to vector<4xf32>
    %70 = vector.shape_cast %69 : vector<4xf32> to vector<4x1xf32>
    %cst_32 = arith.constant 1.280000e+02 : f32
    %71 = vector.broadcast %cst_32 : f32 to vector<4x1xf32>
    %72 = arith.divf %70, %71 : vector<4x1xf32>
    %cst_33 = arith.constant 9.99999974E-6 : f32
    %73 = vector.broadcast %cst_33 : f32 to vector<4x1xf32>
    %74 = arith.addf %72, %73 : vector<4x1xf32>
    %75 = math.rsqrt %74 : vector<4x1xf32>
    %76 = vector.broadcast %75 : vector<4x1xf32> to vector<4x128xf32>
    %77 = arith.mulf %67, %76 : vector<4x128xf32>
    %78 = vector.broadcast %3 : vector<1x128xf32> to vector<4x128xf32>
    %79 = arith.mulf %77, %78 : vector<4x128xf32>
    %80 = vector.broadcast %4 : vector<1x128xf32> to vector<4x128xf32>
    %81 = arith.addf %79, %80 : vector<4x128xf32>
    %c1_34 = arith.constant 1 : index
    %c1_35 = arith.constant 1 : index
    %c0_36 = arith.constant 0 : index
    %82 = vector.load %arg6[%c1_34, %c1_35, %c0_36] : memref<2x5x128xf32, #tpu.memory_space<vmem>>, vector<1x4x128xf32>
    %83 = vector.shape_cast %82 : vector<1x4x128xf32> to vector<4x128xf32>
    %84 = vector.shape_cast %81 : vector<4x128xf32> to vector<1x4x128xf32>
    tpu.vector_store %arg6[%c1_34, %c1_35, %c0_36], %84 {strides = array<i32>} : memref<2x5x128xf32, #tpu.memory_space<vmem>>, vector<1x4x128xf32>,
    return
  }
}

module attributes {stable_mosaic.version = 11 : i64} {
  func.func @_encoder_kernel(%arg0: i32, %arg1: memref<2x5x128xf32, #tpu.memory_space<vmem>>, %arg2: memref<1x1x128xf32, #tpu.memory_space<vmem>>, %arg3: memref<1x1x128xf32, #tpu.memory_space<vmem>>, %arg4: memref<1x128x384xbf16, #tpu.memory_space<vmem>>, %arg5: memref<1x1x384xf32, #tpu.memory_space<vmem>>, %arg6: memref<1x128x128xbf16, #tpu.memory_space<vmem>>, %arg7: memref<1x1x128xf32, #tpu.memory_space<vmem>>, %arg8: memref<1x1x128xf32, #tpu.memory_space<vmem>>, %arg9: memref<1x1x128xf32, #tpu.memory_space<vmem>>, %arg10: memref<1x128x512xbf16, #tpu.memory_space<vmem>>, %arg11: memref<1x1x512xf32, #tpu.memory_space<vmem>>, %arg12: memref<1x512x128xbf16, #tpu.memory_space<vmem>>, %arg13: memref<1x1x128xf32, #tpu.memory_space<vmem>>, %arg14: memref<2x5x128xf32, #tpu.memory_space<vmem>>) attributes {dimension_semantics = [#tpu.dimension_semantics<arbitrary>], iteration_bounds = array<i64: 2>, scalar_prefetch = 0 : i64, scratch_operands = 0 : i64, tpu.core_type = #tpu.core_type<tc>, window_params = [{pipeline_mode = #tpu.pipeline_mode<synchronous>, transform_indices = @transform_0, window_bounds = array<i64: 2, 5, 128>}, {transform_indices = @transform_1, window_bounds = array<i64: 1, 1, 128>}, {transform_indices = @transform_2, window_bounds = array<i64: 1, 1, 128>}, {transform_indices = @transform_3, window_bounds = array<i64: 1, 128, 384>}, {transform_indices = @transform_4, window_bounds = array<i64: 1, 1, 384>}, {transform_indices = @transform_5, window_bounds = array<i64: 1, 128, 128>}, {transform_indices = @transform_6, window_bounds = array<i64: 1, 1, 128>}, {transform_indices = @transform_7, window_bounds = array<i64: 1, 1, 128>}, {transform_indices = @transform_8, window_bounds = array<i64: 1, 1, 128>}, {transform_indices = @transform_9, window_bounds = array<i64: 1, 128, 512>}, {transform_indices = @transform_10, window_bounds = array<i64: 1, 1, 512>}, {transform_indices = @transform_11, window_bounds = array<i64: 1, 512, 128>}, {transform_indices = @transform_12, window_bounds = array<i64: 1, 1, 128>}, {pipeline_mode = #tpu.pipeline_mode<synchronous>, transform_indices = @transform_13, window_bounds = array<i64: 2, 5, 128>}]} {
    %c0_i32 = arith.constant 0 : i32
    %0 = arith.cmpi eq, %arg0, %c0_i32 : i32
    %1 = arith.extui %0 : i1 to i32
    %c0_i32_0 = arith.constant 0 : i32
    %2 = arith.cmpi ne, %1, %c0_i32_0 : i32
    scf.if %2 {
      %c0_94 = arith.constant 0 : index
      %c0_95 = arith.constant 0 : index
      %c0_96 = arith.constant 0 : index
      %268 = vector.load %arg1[%c0_94, %c0_95, %c0_96] : memref<2x5x128xf32, #tpu.memory_space<vmem>>, vector<2x5x128xf32>
      %c0_97 = arith.constant 0 : index
      %c0_98 = arith.constant 0 : index
      %c0_99 = arith.constant 0 : index
      %269 = vector.load %arg14[%c0_97, %c0_98, %c0_99] : memref<2x5x128xf32, #tpu.memory_space<vmem>>, vector<2x5x128xf32>
      tpu.vector_store %arg14[%c0_97, %c0_98, %c0_99], %268 {strides = array<i32>} : memref<2x5x128xf32, #tpu.memory_space<vmem>>, vector<2x5x128xf32>,
    } else {
    }
    %c0 = arith.constant 0 : index
    %c0_1 = arith.constant 0 : index
    %c0_2 = arith.constant 0 : index
    %3 = vector.load %arg2[%c0, %c0_1, %c0_2] : memref<1x1x128xf32, #tpu.memory_space<vmem>>, vector<1x1x128xf32>
    %4 = vector.shape_cast %3 : vector<1x1x128xf32> to vector<1x128xf32>
    %c0_3 = arith.constant 0 : index
    %c0_4 = arith.constant 0 : index
    %c0_5 = arith.constant 0 : index
    %5 = vector.load %arg3[%c0_3, %c0_4, %c0_5] : memref<1x1x128xf32, #tpu.memory_space<vmem>>, vector<1x1x128xf32>
    %6 = vector.shape_cast %5 : vector<1x1x128xf32> to vector<1x128xf32>
    %c0_6 = arith.constant 0 : index
    %c0_7 = arith.constant 0 : index
    %c0_8 = arith.constant 0 : index
    %7 = vector.load %arg4[%c0_6, %c0_7, %c0_8] : memref<1x128x384xbf16, #tpu.memory_space<vmem>>, vector<1x128x384xbf16>
    %8 = vector.shape_cast %7 : vector<1x128x384xbf16> to vector<128x384xbf16>
    %c0_9 = arith.constant 0 : index
    %c0_10 = arith.constant 0 : index
    %c0_11 = arith.constant 0 : index
    %9 = vector.load %arg5[%c0_9, %c0_10, %c0_11] : memref<1x1x384xf32, #tpu.memory_space<vmem>>, vector<1x1x384xf32>
    %10 = vector.shape_cast %9 : vector<1x1x384xf32> to vector<1x384xf32>
    %c0_12 = arith.constant 0 : index
    %c0_13 = arith.constant 0 : index
    %c0_14 = arith.constant 0 : index
    %11 = vector.load %arg6[%c0_12, %c0_13, %c0_14] : memref<1x128x128xbf16, #tpu.memory_space<vmem>>, vector<1x128x128xbf16>
    %12 = vector.shape_cast %11 : vector<1x128x128xbf16> to vector<128x128xbf16>
    %13 = vector.shape_cast %12 : vector<128x128xbf16> to vector<4x32x128xbf16>
    %c0_15 = arith.constant 0 : index
    %c0_16 = arith.constant 0 : index
    %c0_17 = arith.constant 0 : index
    %14 = vector.load %arg7[%c0_15, %c0_16, %c0_17] : memref<1x1x128xf32, #tpu.memory_space<vmem>>, vector<1x1x128xf32>
    %15 = vector.shape_cast %14 : vector<1x1x128xf32> to vector<1x128xf32>
    %c0_18 = arith.constant 0 : index
    %c0_19 = arith.constant 0 : index
    %c0_20 = arith.constant 0 : index
    %16 = vector.load %arg8[%c0_18, %c0_19, %c0_20] : memref<1x1x128xf32, #tpu.memory_space<vmem>>, vector<1x1x128xf32>
    %17 = vector.shape_cast %16 : vector<1x1x128xf32> to vector<1x128xf32>
    %c0_21 = arith.constant 0 : index
    %c0_22 = arith.constant 0 : index
    %c0_23 = arith.constant 0 : index
    %18 = vector.load %arg9[%c0_21, %c0_22, %c0_23] : memref<1x1x128xf32, #tpu.memory_space<vmem>>, vector<1x1x128xf32>
    %19 = vector.shape_cast %18 : vector<1x1x128xf32> to vector<1x128xf32>
    %c0_24 = arith.constant 0 : index
    %c0_25 = arith.constant 0 : index
    %c0_26 = arith.constant 0 : index
    %20 = vector.load %arg10[%c0_24, %c0_25, %c0_26] : memref<1x128x512xbf16, #tpu.memory_space<vmem>>, vector<1x128x512xbf16>
    %21 = vector.shape_cast %20 : vector<1x128x512xbf16> to vector<128x512xbf16>
    %c0_27 = arith.constant 0 : index
    %c0_28 = arith.constant 0 : index
    %c0_29 = arith.constant 0 : index
    %22 = vector.load %arg11[%c0_27, %c0_28, %c0_29] : memref<1x1x512xf32, #tpu.memory_space<vmem>>, vector<1x1x512xf32>
    %23 = vector.shape_cast %22 : vector<1x1x512xf32> to vector<1x512xf32>
    %c0_30 = arith.constant 0 : index
    %c0_31 = arith.constant 0 : index
    %c0_32 = arith.constant 0 : index
    %24 = vector.load %arg12[%c0_30, %c0_31, %c0_32] : memref<1x512x128xbf16, #tpu.memory_space<vmem>>, vector<1x512x128xbf16>
    %25 = vector.shape_cast %24 : vector<1x512x128xbf16> to vector<512x128xbf16>
    %c0_33 = arith.constant 0 : index
    %c0_34 = arith.constant 0 : index
    %c0_35 = arith.constant 0 : index
    %26 = vector.load %arg13[%c0_33, %c0_34, %c0_35] : memref<1x1x128xf32, #tpu.memory_space<vmem>>, vector<1x1x128xf32>
    %27 = vector.shape_cast %26 : vector<1x1x128xf32> to vector<1x128xf32>
    %c0_36 = arith.constant 0 : index
    %c0_37 = arith.constant 0 : index
    %c0_38 = arith.constant 0 : index
    %28 = vector.load %arg14[%c0_36, %c0_37, %c0_38] : memref<2x5x128xf32, #tpu.memory_space<vmem>>, vector<1x5x128xf32>
    %29 = vector.shape_cast %28 : vector<1x5x128xf32> to vector<5x128xf32>
    %cst = arith.constant dense<0.000000e+00> : vector<5xf32>
    %30 = vector.multi_reduction <add>, %29, %cst [1] : vector<5x128xf32> to vector<5xf32>
    %31 = vector.shape_cast %30 : vector<5xf32> to vector<5x1xf32>
    %cst_39 = arith.constant 1.280000e+02 : f32
    %32 = vector.broadcast %cst_39 : f32 to vector<5x1xf32>
    %33 = arith.divf %31, %32 : vector<5x1xf32>
    %34 = vector.broadcast %33 : vector<5x1xf32> to vector<5x128xf32>
    %35 = arith.subf %29, %34 : vector<5x128xf32>
    %36 = arith.mulf %35, %35 : vector<5x128xf32>
    %cst_40 = arith.constant dense<0.000000e+00> : vector<5xf32>
    %37 = vector.multi_reduction <add>, %36, %cst_40 [1] : vector<5x128xf32> to vector<5xf32>
    %38 = vector.shape_cast %37 : vector<5xf32> to vector<5x1xf32>
    %cst_41 = arith.constant 1.280000e+02 : f32
    %39 = vector.broadcast %cst_41 : f32 to vector<5x1xf32>
    %40 = arith.divf %38, %39 : vector<5x1xf32>
    %cst_42 = arith.constant 9.99999974E-6 : f32
    %41 = vector.broadcast %cst_42 : f32 to vector<5x1xf32>
    %42 = arith.addf %40, %41 : vector<5x1xf32>
    %43 = math.rsqrt %42 : vector<5x1xf32>
    %44 = vector.broadcast %43 : vector<5x1xf32> to vector<5x128xf32>
    %45 = arith.mulf %35, %44 : vector<5x128xf32>
    %46 = vector.broadcast %4 : vector<1x128xf32> to vector<5x128xf32>
    %47 = arith.mulf %45, %46 : vector<5x128xf32>
    %48 = vector.broadcast %6 : vector<1x128xf32> to vector<5x128xf32>
    %49 = arith.addf %47, %48 : vector<5x128xf32>
    %50 = arith.truncf %49 : vector<5x128xf32> to vector<5x128xbf16>
    %cst_43 = arith.constant dense<0.000000e+00> : vector<5x384xf32>
    %51 = tpu.matmul %50, %8, %cst_43 {dimension_numbers = #tpu.dot_dimension_numbers<[1], [0], [0], [1], [0, 0, 1, 1], [], []>} : vector<5x128xbf16>, vector<128x384xbf16>, vector<5x384xf32> -> vector<5x384xf32>
    %52 = vector.broadcast %10 : vector<1x384xf32> to vector<5x384xf32>
    %53 = arith.addf %51, %52 : vector<5x384xf32>
    %54 = arith.truncf %53 : vector<5x384xf32> to vector<5x384xbf16>
    %55 = vector.extract_strided_slice %54 {offsets = [0, 0], sizes = [5, 32], strides = [1, 1]} : vector<5x384xbf16> to vector<5x32xbf16>
    %56 = vector.extract_strided_slice %54 {offsets = [0, 32], sizes = [5, 32], strides = [1, 1]} : vector<5x384xbf16> to vector<5x32xbf16>
    %57 = vector.extract_strided_slice %54 {offsets = [0, 64], sizes = [5, 32], strides = [1, 1]} : vector<5x384xbf16> to vector<5x32xbf16>
    %58 = vector.extract_strided_slice %54 {offsets = [0, 96], sizes = [5, 32], strides = [1, 1]} : vector<5x384xbf16> to vector<5x32xbf16>
    %59 = vector.shape_cast %55 : vector<5x32xbf16> to vector<1x5x32xbf16>
    %60 = vector.shape_cast %56 : vector<5x32xbf16> to vector<1x5x32xbf16>
    %61 = vector.shape_cast %57 : vector<5x32xbf16> to vector<1x5x32xbf16>
    %62 = vector.shape_cast %58 : vector<5x32xbf16> to vector<1x5x32xbf16>
    %63 = tpu.concatenate %59, %60, %61, %62 in 0 : vector<1x5x32xbf16>, vector<1x5x32xbf16>, vector<1x5x32xbf16>, vector<1x5x32xbf16> -> vector<4x5x32xbf16>
    %64 = vector.extract_strided_slice %54 {offsets = [0, 128], sizes = [5, 32], strides = [1, 1]} : vector<5x384xbf16> to vector<5x32xbf16>
    %65 = vector.extract_strided_slice %54 {offsets = [0, 160], sizes = [5, 32], strides = [1, 1]} : vector<5x384xbf16> to vector<5x32xbf16>
    %66 = vector.extract_strided_slice %54 {offsets = [0, 192], sizes = [5, 32], strides = [1, 1]} : vector<5x384xbf16> to vector<5x32xbf16>
    %67 = vector.extract_strided_slice %54 {offsets = [0, 224], sizes = [5, 32], strides = [1, 1]} : vector<5x384xbf16> to vector<5x32xbf16>
    %68 = vector.shape_cast %64 : vector<5x32xbf16> to vector<1x5x32xbf16>
    %69 = vector.shape_cast %65 : vector<5x32xbf16> to vector<1x5x32xbf16>
    %70 = vector.shape_cast %66 : vector<5x32xbf16> to vector<1x5x32xbf16>
    %71 = vector.shape_cast %67 : vector<5x32xbf16> to vector<1x5x32xbf16>
    %72 = tpu.concatenate %68, %69, %70, %71 in 0 : vector<1x5x32xbf16>, vector<1x5x32xbf16>, vector<1x5x32xbf16>, vector<1x5x32xbf16> -> vector<4x5x32xbf16>
    %73 = vector.extract_strided_slice %54 {offsets = [0, 256], sizes = [5, 32], strides = [1, 1]} : vector<5x384xbf16> to vector<5x32xbf16>
    %74 = vector.extract_strided_slice %54 {offsets = [0, 288], sizes = [5, 32], strides = [1, 1]} : vector<5x384xbf16> to vector<5x32xbf16>
    %75 = vector.extract_strided_slice %54 {offsets = [0, 320], sizes = [5, 32], strides = [1, 1]} : vector<5x384xbf16> to vector<5x32xbf16>
    %76 = vector.extract_strided_slice %54 {offsets = [0, 352], sizes = [5, 32], strides = [1, 1]} : vector<5x384xbf16> to vector<5x32xbf16>
    %77 = vector.shape_cast %73 : vector<5x32xbf16> to vector<1x5x32xbf16>
    %78 = vector.shape_cast %74 : vector<5x32xbf16> to vector<1x5x32xbf16>
    %79 = vector.shape_cast %75 : vector<5x32xbf16> to vector<1x5x32xbf16>
    %80 = vector.shape_cast %76 : vector<5x32xbf16> to vector<1x5x32xbf16>
    %81 = tpu.concatenate %77, %78, %79, %80 in 0 : vector<1x5x32xbf16>, vector<1x5x32xbf16>, vector<1x5x32xbf16>, vector<1x5x32xbf16> -> vector<4x5x32xbf16>
    %cst_44 = arith.constant dense<0.000000e+00> : vector<4x5x5xf32>
    %82 = tpu.matmul %63, %72, %cst_44 {dimension_numbers = #tpu.dot_dimension_numbers<[2], [2], [1], [1], [0, 0, 0, 1, 1, 1], [0], [0]>} : vector<4x5x32xbf16>, vector<4x5x32xbf16>, vector<4x5x5xf32> -> vector<4x5x5xf32>
    %cst_45 = arith.constant 0.176776692 : f32
    %83 = vector.broadcast %cst_45 : f32 to vector<4x5x5xf32>
    %84 = arith.mulf %82, %83 : vector<4x5x5xf32>
    %cst_46 = arith.constant dense<0xFF800000> : vector<4x5xf32>
    %85 = vector.multi_reduction <maximumf>, %84, %cst_46 [2] : vector<4x5x5xf32> to vector<4x5xf32>
    %86 = vector.shape_cast %85 : vector<4x5xf32> to vector<4x5x1xf32>
    %87 = vector.broadcast %86 : vector<4x5x1xf32> to vector<4x5x5xf32>
    %88 = arith.subf %84, %87 : vector<4x5x5xf32>
    %89 = math.exp %88 : vector<4x5x5xf32>
    %cst_47 = arith.constant dense<0.000000e+00> : vector<4x5xf32>
    %90 = vector.multi_reduction <add>, %89, %cst_47 [2] : vector<4x5x5xf32> to vector<4x5xf32>
    %91 = vector.shape_cast %90 : vector<4x5xf32> to vector<4x5x1xf32>
    %92 = tpu.reciprocal %91 {approx = true} : vector<4x5x1xf32> -> vector<4x5x1xf32>
    %93 = vector.broadcast %92 : vector<4x5x1xf32> to vector<4x5x5xf32>
    %94 = arith.mulf %89, %93 : vector<4x5x5xf32>
    %95 = arith.truncf %94 : vector<4x5x5xf32> to vector<4x5x5xbf16>
    %cst_48 = arith.constant dense<0.000000e+00> : vector<4x5x32xf32>
    %96 = tpu.matmul %95, %81, %cst_48 {dimension_numbers = #tpu.dot_dimension_numbers<[2], [1], [1], [2], [0, 0, 0, 1, 1, 2], [0], [0]>} : vector<4x5x5xbf16>, vector<4x5x32xbf16>, vector<4x5x32xf32> -> vector<4x5x32xf32>
    %97 = arith.truncf %96 : vector<4x5x32xf32> to vector<4x5x32xbf16>
    %cst_49 = arith.constant dense<0.000000e+00> : vector<4x5x128xf32>
    %98 = tpu.matmul %97, %13, %cst_49 {dimension_numbers = #tpu.dot_dimension_numbers<[2], [1], [1], [2], [0, 0, 0, 1, 1, 2], [0], [0]>} : vector<4x5x32xbf16>, vector<4x32x128xbf16>, vector<4x5x128xf32> -> vector<4x5x128xf32>
    %cst_50 = arith.constant dense<0.000000e+00> : vector<5x128xf32>
    %99 = vector.multi_reduction <add>, %98, %cst_50 [0] : vector<4x5x128xf32> to vector<5x128xf32>
    %100 = arith.addf %29, %99 : vector<5x128xf32>
    %101 = vector.broadcast %15 : vector<1x128xf32> to vector<5x128xf32>
    %102 = arith.addf %100, %101 : vector<5x128xf32>
    %cst_51 = arith.constant dense<0.000000e+00> : vector<5xf32>
    %103 = vector.multi_reduction <add>, %102, %cst_51 [1] : vector<5x128xf32> to vector<5xf32>
    %104 = vector.shape_cast %103 : vector<5xf32> to vector<5x1xf32>
    %cst_52 = arith.constant 1.280000e+02 : f32
    %105 = vector.broadcast %cst_52 : f32 to vector<5x1xf32>
    %106 = arith.divf %104, %105 : vector<5x1xf32>
    %107 = vector.broadcast %106 : vector<5x1xf32> to vector<5x128xf32>
    %108 = arith.subf %102, %107 : vector<5x128xf32>
    %109 = arith.mulf %108, %108 : vector<5x128xf32>
    %cst_53 = arith.constant dense<0.000000e+00> : vector<5xf32>
    %110 = vector.multi_reduction <add>, %109, %cst_53 [1] : vector<5x128xf32> to vector<5xf32>
    %111 = vector.shape_cast %110 : vector<5xf32> to vector<5x1xf32>
    %cst_54 = arith.constant 1.280000e+02 : f32
    %112 = vector.broadcast %cst_54 : f32 to vector<5x1xf32>
    %113 = arith.divf %111, %112 : vector<5x1xf32>
    %cst_55 = arith.constant 9.99999974E-6 : f32
    %114 = vector.broadcast %cst_55 : f32 to vector<5x1xf32>
    %115 = arith.addf %113, %114 : vector<5x1xf32>
    %116 = math.rsqrt %115 : vector<5x1xf32>
    %117 = vector.broadcast %116 : vector<5x1xf32> to vector<5x128xf32>
    %118 = arith.mulf %108, %117 : vector<5x128xf32>
    %119 = vector.broadcast %17 : vector<1x128xf32> to vector<5x128xf32>
    %120 = arith.mulf %118, %119 : vector<5x128xf32>
    %121 = vector.broadcast %19 : vector<1x128xf32> to vector<5x128xf32>
    %122 = arith.addf %120, %121 : vector<5x128xf32>
    %123 = arith.truncf %122 : vector<5x128xf32> to vector<5x128xbf16>
    %cst_56 = arith.constant dense<0.000000e+00> : vector<5x512xf32>
    %124 = tpu.matmul %123, %21, %cst_56 {dimension_numbers = #tpu.dot_dimension_numbers<[1], [0], [0], [1], [0, 0, 1, 1], [], []>} : vector<5x128xbf16>, vector<128x512xbf16>, vector<5x512xf32> -> vector<5x512xf32>
    %125 = vector.broadcast %23 : vector<1x512xf32> to vector<5x512xf32>
    %126 = arith.addf %124, %125 : vector<5x512xf32>
    %127 = arith.mulf %126, %126 : vector<5x512xf32>
    %128 = arith.mulf %126, %127 : vector<5x512xf32>
    %cst_57 = arith.constant 4.471500e-02 : f32
    %129 = vector.broadcast %cst_57 : f32 to vector<5x512xf32>
    %130 = arith.mulf %129, %128 : vector<5x512xf32>
    %131 = arith.addf %126, %130 : vector<5x512xf32>
    %cst_58 = arith.constant 0.797884583 : f32
    %132 = vector.broadcast %cst_58 : f32 to vector<5x512xf32>
    %133 = arith.mulf %132, %131 : vector<5x512xf32>
    %134 = math.tanh %133 : vector<5x512xf32>
    %cst_59 = arith.constant 1.000000e+00 : f32
    %135 = vector.broadcast %cst_59 : f32 to vector<5x512xf32>
    %136 = arith.addf %135, %134 : vector<5x512xf32>
    %cst_60 = arith.constant 5.000000e-01 : f32
    %137 = vector.broadcast %cst_60 : f32 to vector<5x512xf32>
    %138 = arith.mulf %137, %136 : vector<5x512xf32>
    %139 = arith.mulf %126, %138 : vector<5x512xf32>
    %140 = arith.truncf %139 : vector<5x512xf32> to vector<5x512xbf16>
    %cst_61 = arith.constant dense<0.000000e+00> : vector<5x128xf32>
    %141 = tpu.matmul %140, %25, %cst_61 {dimension_numbers = #tpu.dot_dimension_numbers<[1], [0], [0], [1], [0, 0, 1, 1], [], []>} : vector<5x512xbf16>, vector<512x128xbf16>, vector<5x128xf32> -> vector<5x128xf32>
    %142 = vector.broadcast %27 : vector<1x128xf32> to vector<5x128xf32>
    %143 = arith.addf %141, %142 : vector<5x128xf32>
    %144 = arith.addf %102, %143 : vector<5x128xf32>
    %c0_62 = arith.constant 0 : index
    %c0_63 = arith.constant 0 : index
    %c0_64 = arith.constant 0 : index
    %145 = vector.load %arg14[%c0_62, %c0_63, %c0_64] : memref<2x5x128xf32, #tpu.memory_space<vmem>>, vector<1x5x128xf32>
    %146 = vector.shape_cast %145 : vector<1x5x128xf32> to vector<5x128xf32>
    %147 = vector.shape_cast %144 : vector<5x128xf32> to vector<1x5x128xf32>
    tpu.vector_store %arg14[%c0_62, %c0_63, %c0_64], %147 {strides = array<i32>} : memref<2x5x128xf32, #tpu.memory_space<vmem>>, vector<1x5x128xf32>,
    %c1 = arith.constant 1 : index
    %c0_65 = arith.constant 0 : index
    %c0_66 = arith.constant 0 : index
    %148 = vector.load %arg14[%c1, %c0_65, %c0_66] : memref<2x5x128xf32, #tpu.memory_space<vmem>>, vector<1x5x128xf32>
    %149 = vector.shape_cast %148 : vector<1x5x128xf32> to vector<5x128xf32>
    %cst_67 = arith.constant dense<0.000000e+00> : vector<5xf32>
    %150 = vector.multi_reduction <add>, %149, %cst_67 [1] : vector<5x128xf32> to vector<5xf32>
    %151 = vector.shape_cast %150 : vector<5xf32> to vector<5x1xf32>
    %cst_68 = arith.constant 1.280000e+02 : f32
    %152 = vector.broadcast %cst_68 : f32 to vector<5x1xf32>
    %153 = arith.divf %151, %152 : vector<5x1xf32>
    %154 = vector.broadcast %153 : vector<5x1xf32> to vector<5x128xf32>
    %155 = arith.subf %149, %154 : vector<5x128xf32>
    %156 = arith.mulf %155, %155 : vector<5x128xf32>
    %cst_69 = arith.constant dense<0.000000e+00> : vector<5xf32>
    %157 = vector.multi_reduction <add>, %156, %cst_69 [1] : vector<5x128xf32> to vector<5xf32>
    %158 = vector.shape_cast %157 : vector<5xf32> to vector<5x1xf32>
    %cst_70 = arith.constant 1.280000e+02 : f32
    %159 = vector.broadcast %cst_70 : f32 to vector<5x1xf32>
    %160 = arith.divf %158, %159 : vector<5x1xf32>
    %cst_71 = arith.constant 9.99999974E-6 : f32
    %161 = vector.broadcast %cst_71 : f32 to vector<5x1xf32>
    %162 = arith.addf %160, %161 : vector<5x1xf32>
    %163 = math.rsqrt %162 : vector<5x1xf32>
    %164 = vector.broadcast %163 : vector<5x1xf32> to vector<5x128xf32>
    %165 = arith.mulf %155, %164 : vector<5x128xf32>
    %166 = vector.broadcast %4 : vector<1x128xf32> to vector<5x128xf32>
    %167 = arith.mulf %165, %166 : vector<5x128xf32>
    %168 = vector.broadcast %6 : vector<1x128xf32> to vector<5x128xf32>
    %169 = arith.addf %167, %168 : vector<5x128xf32>
    %170 = arith.truncf %169 : vector<5x128xf32> to vector<5x128xbf16>
    %cst_72 = arith.constant dense<0.000000e+00> : vector<5x384xf32>
    %171 = tpu.matmul %170, %8, %cst_72 {dimension_numbers = #tpu.dot_dimension_numbers<[1], [0], [0], [1], [0, 0, 1, 1], [], []>} : vector<5x128xbf16>, vector<128x384xbf16>, vector<5x384xf32> -> vector<5x384xf32>
    %172 = vector.broadcast %10 : vector<1x384xf32> to vector<5x384xf32>
    %173 = arith.addf %171, %172 : vector<5x384xf32>
    %174 = arith.truncf %173 : vector<5x384xf32> to vector<5x384xbf16>
    %175 = vector.extract_strided_slice %174 {offsets = [0, 0], sizes = [5, 32], strides = [1, 1]} : vector<5x384xbf16> to vector<5x32xbf16>
    %176 = vector.extract_strided_slice %174 {offsets = [0, 32], sizes = [5, 32], strides = [1, 1]} : vector<5x384xbf16> to vector<5x32xbf16>
    %177 = vector.extract_strided_slice %174 {offsets = [0, 64], sizes = [5, 32], strides = [1, 1]} : vector<5x384xbf16> to vector<5x32xbf16>
    %178 = vector.extract_strided_slice %174 {offsets = [0, 96], sizes = [5, 32], strides = [1, 1]} : vector<5x384xbf16> to vector<5x32xbf16>
    %179 = vector.shape_cast %175 : vector<5x32xbf16> to vector<1x5x32xbf16>
    %180 = vector.shape_cast %176 : vector<5x32xbf16> to vector<1x5x32xbf16>
    %181 = vector.shape_cast %177 : vector<5x32xbf16> to vector<1x5x32xbf16>
    %182 = vector.shape_cast %178 : vector<5x32xbf16> to vector<1x5x32xbf16>
    %183 = tpu.concatenate %179, %180, %181, %182 in 0 : vector<1x5x32xbf16>, vector<1x5x32xbf16>, vector<1x5x32xbf16>, vector<1x5x32xbf16> -> vector<4x5x32xbf16>
    %184 = vector.extract_strided_slice %174 {offsets = [0, 128], sizes = [5, 32], strides = [1, 1]} : vector<5x384xbf16> to vector<5x32xbf16>
    %185 = vector.extract_strided_slice %174 {offsets = [0, 160], sizes = [5, 32], strides = [1, 1]} : vector<5x384xbf16> to vector<5x32xbf16>
    %186 = vector.extract_strided_slice %174 {offsets = [0, 192], sizes = [5, 32], strides = [1, 1]} : vector<5x384xbf16> to vector<5x32xbf16>
    %187 = vector.extract_strided_slice %174 {offsets = [0, 224], sizes = [5, 32], strides = [1, 1]} : vector<5x384xbf16> to vector<5x32xbf16>
    %188 = vector.shape_cast %184 : vector<5x32xbf16> to vector<1x5x32xbf16>
    %189 = vector.shape_cast %185 : vector<5x32xbf16> to vector<1x5x32xbf16>
    %190 = vector.shape_cast %186 : vector<5x32xbf16> to vector<1x5x32xbf16>
    %191 = vector.shape_cast %187 : vector<5x32xbf16> to vector<1x5x32xbf16>
    %192 = tpu.concatenate %188, %189, %190, %191 in 0 : vector<1x5x32xbf16>, vector<1x5x32xbf16>, vector<1x5x32xbf16>, vector<1x5x32xbf16> -> vector<4x5x32xbf16>
    %193 = vector.extract_strided_slice %174 {offsets = [0, 256], sizes = [5, 32], strides = [1, 1]} : vector<5x384xbf16> to vector<5x32xbf16>
    %194 = vector.extract_strided_slice %174 {offsets = [0, 288], sizes = [5, 32], strides = [1, 1]} : vector<5x384xbf16> to vector<5x32xbf16>
    %195 = vector.extract_strided_slice %174 {offsets = [0, 320], sizes = [5, 32], strides = [1, 1]} : vector<5x384xbf16> to vector<5x32xbf16>
    %196 = vector.extract_strided_slice %174 {offsets = [0, 352], sizes = [5, 32], strides = [1, 1]} : vector<5x384xbf16> to vector<5x32xbf16>
    %197 = vector.shape_cast %193 : vector<5x32xbf16> to vector<1x5x32xbf16>
    %198 = vector.shape_cast %194 : vector<5x32xbf16> to vector<1x5x32xbf16>
    %199 = vector.shape_cast %195 : vector<5x32xbf16> to vector<1x5x32xbf16>
    %200 = vector.shape_cast %196 : vector<5x32xbf16> to vector<1x5x32xbf16>
    %201 = tpu.concatenate %197, %198, %199, %200 in 0 : vector<1x5x32xbf16>, vector<1x5x32xbf16>, vector<1x5x32xbf16>, vector<1x5x32xbf16> -> vector<4x5x32xbf16>
    %cst_73 = arith.constant dense<0.000000e+00> : vector<4x5x5xf32>
    %202 = tpu.matmul %183, %192, %cst_73 {dimension_numbers = #tpu.dot_dimension_numbers<[2], [2], [1], [1], [0, 0, 0, 1, 1, 1], [0], [0]>} : vector<4x5x32xbf16>, vector<4x5x32xbf16>, vector<4x5x5xf32> -> vector<4x5x5xf32>
    %cst_74 = arith.constant 0.176776692 : f32
    %203 = vector.broadcast %cst_74 : f32 to vector<4x5x5xf32>
    %204 = arith.mulf %202, %203 : vector<4x5x5xf32>
    %cst_75 = arith.constant dense<0xFF800000> : vector<4x5xf32>
    %205 = vector.multi_reduction <maximumf>, %204, %cst_75 [2] : vector<4x5x5xf32> to vector<4x5xf32>
    %206 = vector.shape_cast %205 : vector<4x5xf32> to vector<4x5x1xf32>
    %207 = vector.broadcast %206 : vector<4x5x1xf32> to vector<4x5x5xf32>
    %208 = arith.subf %204, %207 : vector<4x5x5xf32>
    %209 = math.exp %208 : vector<4x5x5xf32>
    %cst_76 = arith.constant dense<0.000000e+00> : vector<4x5xf32>
    %210 = vector.multi_reduction <add>, %209, %cst_76 [2] : vector<4x5x5xf32> to vector<4x5xf32>
    %211 = vector.shape_cast %210 : vector<4x5xf32> to vector<4x5x1xf32>
    %212 = tpu.reciprocal %211 {approx = true} : vector<4x5x1xf32> -> vector<4x5x1xf32>
    %213 = vector.broadcast %212 : vector<4x5x1xf32> to vector<4x5x5xf32>
    %214 = arith.mulf %209, %213 : vector<4x5x5xf32>
    %215 = arith.truncf %214 : vector<4x5x5xf32> to vector<4x5x5xbf16>
    %cst_77 = arith.constant dense<0.000000e+00> : vector<4x5x32xf32>
    %216 = tpu.matmul %215, %201, %cst_77 {dimension_numbers = #tpu.dot_dimension_numbers<[2], [1], [1], [2], [0, 0, 0, 1, 1, 2], [0], [0]>} : vector<4x5x5xbf16>, vector<4x5x32xbf16>, vector<4x5x32xf32> -> vector<4x5x32xf32>
    %217 = arith.truncf %216 : vector<4x5x32xf32> to vector<4x5x32xbf16>
    %cst_78 = arith.constant dense<0.000000e+00> : vector<4x5x128xf32>
    %218 = tpu.matmul %217, %13, %cst_78 {dimension_numbers = #tpu.dot_dimension_numbers<[2], [1], [1], [2], [0, 0, 0, 1, 1, 2], [0], [0]>} : vector<4x5x32xbf16>, vector<4x32x128xbf16>, vector<4x5x128xf32> -> vector<4x5x128xf32>
    %cst_79 = arith.constant dense<0.000000e+00> : vector<5x128xf32>
    %219 = vector.multi_reduction <add>, %218, %cst_79 [0] : vector<4x5x128xf32> to vector<5x128xf32>
    %220 = arith.addf %149, %219 : vector<5x128xf32>
    %221 = vector.broadcast %15 : vector<1x128xf32> to vector<5x128xf32>
    %222 = arith.addf %220, %221 : vector<5x128xf32>
    %cst_80 = arith.constant dense<0.000000e+00> : vector<5xf32>
    %223 = vector.multi_reduction <add>, %222, %cst_80 [1] : vector<5x128xf32> to vector<5xf32>
    %224 = vector.shape_cast %223 : vector<5xf32> to vector<5x1xf32>
    %cst_81 = arith.constant 1.280000e+02 : f32
    %225 = vector.broadcast %cst_81 : f32 to vector<5x1xf32>
    %226 = arith.divf %224, %225 : vector<5x1xf32>
    %227 = vector.broadcast %226 : vector<5x1xf32> to vector<5x128xf32>
    %228 = arith.subf %222, %227 : vector<5x128xf32>
    %229 = arith.mulf %228, %228 : vector<5x128xf32>
    %cst_82 = arith.constant dense<0.000000e+00> : vector<5xf32>
    %230 = vector.multi_reduction <add>, %229, %cst_82 [1] : vector<5x128xf32> to vector<5xf32>
    %231 = vector.shape_cast %230 : vector<5xf32> to vector<5x1xf32>
    %cst_83 = arith.constant 1.280000e+02 : f32
    %232 = vector.broadcast %cst_83 : f32 to vector<5x1xf32>
    %233 = arith.divf %231, %232 : vector<5x1xf32>
    %cst_84 = arith.constant 9.99999974E-6 : f32
    %234 = vector.broadcast %cst_84 : f32 to vector<5x1xf32>
    %235 = arith.addf %233, %234 : vector<5x1xf32>
    %236 = math.rsqrt %235 : vector<5x1xf32>
    %237 = vector.broadcast %236 : vector<5x1xf32> to vector<5x128xf32>
    %238 = arith.mulf %228, %237 : vector<5x128xf32>
    %239 = vector.broadcast %17 : vector<1x128xf32> to vector<5x128xf32>
    %240 = arith.mulf %238, %239 : vector<5x128xf32>
    %241 = vector.broadcast %19 : vector<1x128xf32> to vector<5x128xf32>
    %242 = arith.addf %240, %241 : vector<5x128xf32>
    %243 = arith.truncf %242 : vector<5x128xf32> to vector<5x128xbf16>
    %cst_85 = arith.constant dense<0.000000e+00> : vector<5x512xf32>
    %244 = tpu.matmul %243, %21, %cst_85 {dimension_numbers = #tpu.dot_dimension_numbers<[1], [0], [0], [1], [0, 0, 1, 1], [], []>} : vector<5x128xbf16>, vector<128x512xbf16>, vector<5x512xf32> -> vector<5x512xf32>
    %245 = vector.broadcast %23 : vector<1x512xf32> to vector<5x512xf32>
    %246 = arith.addf %244, %245 : vector<5x512xf32>
    %247 = arith.mulf %246, %246 : vector<5x512xf32>
    %248 = arith.mulf %246, %247 : vector<5x512xf32>
    %cst_86 = arith.constant 4.471500e-02 : f32
    %249 = vector.broadcast %cst_86 : f32 to vector<5x512xf32>
    %250 = arith.mulf %249, %248 : vector<5x512xf32>
    %251 = arith.addf %246, %250 : vector<5x512xf32>
    %cst_87 = arith.constant 0.797884583 : f32
    %252 = vector.broadcast %cst_87 : f32 to vector<5x512xf32>
    %253 = arith.mulf %252, %251 : vector<5x512xf32>
    %254 = math.tanh %253 : vector<5x512xf32>
    %cst_88 = arith.constant 1.000000e+00 : f32
    %255 = vector.broadcast %cst_88 : f32 to vector<5x512xf32>
    %256 = arith.addf %255, %254 : vector<5x512xf32>
    %cst_89 = arith.constant 5.000000e-01 : f32
    %257 = vector.broadcast %cst_89 : f32 to vector<5x512xf32>
    %258 = arith.mulf %257, %256 : vector<5x512xf32>
    %259 = arith.mulf %246, %258 : vector<5x512xf32>
    %260 = arith.truncf %259 : vector<5x512xf32> to vector<5x512xbf16>
    %cst_90 = arith.constant dense<0.000000e+00> : vector<5x128xf32>
    %261 = tpu.matmul %260, %25, %cst_90 {dimension_numbers = #tpu.dot_dimension_numbers<[1], [0], [0], [1], [0, 0, 1, 1], [], []>} : vector<5x512xbf16>, vector<512x128xbf16>, vector<5x128xf32> -> vector<5x128xf32>
    %262 = vector.broadcast %27 : vector<1x128xf32> to vector<5x128xf32>
    %263 = arith.addf %261, %262 : vector<5x128xf32>
    %264 = arith.addf %222, %263 : vector<5x128xf32>
    %c1_91 = arith.constant 1 : index
    %c0_92 = arith.constant 0 : index
    %c0_93 = arith.constant 0 : index
    %265 = vector.load %arg14[%c1_91, %c0_92, %c0_93] : memref<2x5x128xf32, #tpu.memory_space<vmem>>, vector<1x5x128xf32>
    %266 = vector.shape_cast %265 : vector<1x5x128xf32> to vector<5x128xf32>
    %267 = vector.shape_cast %264 : vector<5x128xf32> to vector<1x5x128xf32>
    tpu.vector_store %arg14[%c1_91, %c0_92, %c0_93], %267 {strides = array<i32>} : memref<2x5x128xf32, #tpu.memory_space<vmem>>, vector<1x5x128xf32>,
    return
  }
  func.func @transform_0(%arg0: i32) -> (i32, i32, i32) {
    %c0_i32 = arith.constant 0 : i32
    %c0_i32_0 = arith.constant 0 : i32
    %c0_i32_1 = arith.constant 0 : i32
    %c0_i32_2 = arith.constant 0 : i32
    return %c0_i32, %c0_i32_0, %c0_i32_1 : i32, i32, i32
  }
  func.func @transform_1(%arg0: i32) -> (i32, i32, i32) {
    %c0_i32 = arith.constant 0 : i32
    %c0_i32_0 = arith.constant 0 : i32
    %c0_i32_1 = arith.constant 0 : i32
    return %arg0, %c0_i32, %c0_i32_0 : i32, i32, i32
  }
  func.func @transform_2(%arg0: i32) -> (i32, i32, i32) {
    %c0_i32 = arith.constant 0 : i32
    %c0_i32_0 = arith.constant 0 : i32
    %c0_i32_1 = arith.constant 0 : i32
    return %arg0, %c0_i32, %c0_i32_0 : i32, i32, i32
  }
  func.func @transform_3(%arg0: i32) -> (i32, i32, i32) {
    %c0_i32 = arith.constant 0 : i32
    %c0_i32_0 = arith.constant 0 : i32
    %c0_i32_1 = arith.constant 0 : i32
    return %arg0, %c0_i32, %c0_i32_0 : i32, i32, i32
  }
  func.func @transform_4(%arg0: i32) -> (i32, i32, i32) {
    %c0_i32 = arith.constant 0 : i32
    %c0_i32_0 = arith.constant 0 : i32
    %c0_i32_1 = arith.constant 0 : i32
    return %arg0, %c0_i32, %c0_i32_0 : i32, i32, i32
  }
  func.func @transform_5(%arg0: i32) -> (i32, i32, i32) {
    %c0_i32 = arith.constant 0 : i32
    %c0_i32_0 = arith.constant 0 : i32
    %c0_i32_1 = arith.constant 0 : i32
    return %arg0, %c0_i32, %c0_i32_0 : i32, i32, i32
  }
  func.func @transform_6(%arg0: i32) -> (i32, i32, i32) {
    %c0_i32 = arith.constant 0 : i32
    %c0_i32_0 = arith.constant 0 : i32
    %c0_i32_1 = arith.constant 0 : i32
    return %arg0, %c0_i32, %c0_i32_0 : i32, i32, i32
  }
  func.func @transform_7(%arg0: i32) -> (i32, i32, i32) {
    %c0_i32 = arith.constant 0 : i32
    %c0_i32_0 = arith.constant 0 : i32
    %c0_i32_1 = arith.constant 0 : i32
    return %arg0, %c0_i32, %c0_i32_0 : i32, i32, i32
  }
  func.func @transform_8(%arg0: i32) -> (i32, i32, i32) {
    %c0_i32 = arith.constant 0 : i32
    %c0_i32_0 = arith.constant 0 : i32
    %c0_i32_1 = arith.constant 0 : i32
    return %arg0, %c0_i32, %c0_i32_0 : i32, i32, i32
  }
  func.func @transform_9(%arg0: i32) -> (i32, i32, i32) {
    %c0_i32 = arith.constant 0 : i32
    %c0_i32_0 = arith.constant 0 : i32
    %c0_i32_1 = arith.constant 0 : i32
    return %arg0, %c0_i32, %c0_i32_0 : i32, i32, i32
  }
  func.func @transform_10(%arg0: i32) -> (i32, i32, i32) {
    %c0_i32 = arith.constant 0 : i32
    %c0_i32_0 = arith.constant 0 : i32
    %c0_i32_1 = arith.constant 0 : i32
    return %arg0, %c0_i32, %c0_i32_0 : i32, i32, i32
  }
  func.func @transform_11(%arg0: i32) -> (i32, i32, i32) {
    %c0_i32 = arith.constant 0 : i32
    %c0_i32_0 = arith.constant 0 : i32
    %c0_i32_1 = arith.constant 0 : i32
    return %arg0, %c0_i32, %c0_i32_0 : i32, i32, i32
  }
  func.func @transform_12(%arg0: i32) -> (i32, i32, i32) {
    %c0_i32 = arith.constant 0 : i32
    %c0_i32_0 = arith.constant 0 : i32
    %c0_i32_1 = arith.constant 0 : i32
    return %arg0, %c0_i32, %c0_i32_0 : i32, i32, i32
  }
  func.func @transform_13(%arg0: i32) -> (i32, i32, i32) {
    %c0_i32 = arith.constant 0 : i32
    %c0_i32_0 = arith.constant 0 : i32
    %c0_i32_1 = arith.constant 0 : i32
    %c0_i32_2 = arith.constant 0 : i32
    return %c0_i32, %c0_i32_0, %c0_i32_1 : i32, i32, i32
  }
}

module attributes {stable_mosaic.version = 11 : i64} {
  func.func @_head_kernel(%arg0: memref<2x128xf32, #tpu.memory_space<vmem>>, %arg1: memref<1x128xf32, #tpu.memory_space<vmem>>, %arg2: memref<1x128xf32, #tpu.memory_space<vmem>>, %arg3: memref<128x512xbf16, #tpu.memory_space<vmem>>, %arg4: memref<512x1024xbf16, #tpu.memory_space<vmem>>, %arg5: memref<1x1024xf32, #tpu.memory_space<vmem>>, %arg6: memref<1x1024xf32, #tpu.memory_space<vmem>>, %arg7: memref<1x1024xf32, #tpu.memory_space<vmem>>, %arg8: memref<1x1024xf32, #tpu.memory_space<vmem>>, %arg9: memref<1x1024xf32, #tpu.memory_space<vmem>>, %arg10: memref<1024x170xbf16, #tpu.memory_space<vmem>>, %arg11: memref<1x170xf32, #tpu.memory_space<vmem>>, %arg12: memref<128x56xf32, #tpu.memory_space<vmem>>, %arg13: memref<6x128xf32, #tpu.memory_space<vmem>>) attributes {dimension_semantics = [], scalar_prefetch = 0 : i64, scratch_operands = 0 : i64, tpu.core_type = #tpu.core_type<tc>} {
    %c0 = arith.constant 0 : index
    %c0_0 = arith.constant 0 : index
    %0 = vector.load %arg0[%c0, %c0_0] : memref<2x128xf32, #tpu.memory_space<vmem>>, vector<2x128xf32>
    %c0_1 = arith.constant 0 : index
    %c0_2 = arith.constant 0 : index
    %1 = vector.load %arg1[%c0_1, %c0_2] : memref<1x128xf32, #tpu.memory_space<vmem>>, vector<1x128xf32>
    %c0_3 = arith.constant 0 : index
    %c0_4 = arith.constant 0 : index
    %2 = vector.load %arg2[%c0_3, %c0_4] : memref<1x128xf32, #tpu.memory_space<vmem>>, vector<1x128xf32>
    %cst = arith.constant dense<0.000000e+00> : vector<2xf32>
    %3 = vector.multi_reduction <add>, %0, %cst [1] : vector<2x128xf32> to vector<2xf32>
    %4 = vector.shape_cast %3 : vector<2xf32> to vector<2x1xf32>
    %cst_5 = arith.constant 1.280000e+02 : f32
    %5 = vector.broadcast %cst_5 : f32 to vector<2x1xf32>
    %6 = arith.divf %4, %5 : vector<2x1xf32>
    %7 = vector.broadcast %6 : vector<2x1xf32> to vector<2x128xf32>
    %8 = arith.subf %0, %7 : vector<2x128xf32>
    %9 = arith.mulf %8, %8 : vector<2x128xf32>
    %cst_6 = arith.constant dense<0.000000e+00> : vector<2xf32>
    %10 = vector.multi_reduction <add>, %9, %cst_6 [1] : vector<2x128xf32> to vector<2xf32>
    %11 = vector.shape_cast %10 : vector<2xf32> to vector<2x1xf32>
    %cst_7 = arith.constant 1.280000e+02 : f32
    %12 = vector.broadcast %cst_7 : f32 to vector<2x1xf32>
    %13 = arith.divf %11, %12 : vector<2x1xf32>
    %cst_8 = arith.constant 9.99999974E-6 : f32
    %14 = vector.broadcast %cst_8 : f32 to vector<2x1xf32>
    %15 = arith.addf %13, %14 : vector<2x1xf32>
    %16 = math.rsqrt %15 : vector<2x1xf32>
    %17 = vector.broadcast %16 : vector<2x1xf32> to vector<2x128xf32>
    %18 = arith.mulf %8, %17 : vector<2x128xf32>
    %19 = vector.broadcast %1 : vector<1x128xf32> to vector<2x128xf32>
    %20 = arith.mulf %18, %19 : vector<2x128xf32>
    %21 = vector.broadcast %2 : vector<1x128xf32> to vector<2x128xf32>
    %22 = arith.addf %20, %21 : vector<2x128xf32>
    %23 = arith.truncf %22 : vector<2x128xf32> to vector<2x128xbf16>
    %c0_9 = arith.constant 0 : index
    %c0_10 = arith.constant 0 : index
    %24 = vector.load %arg3[%c0_9, %c0_10] : memref<128x512xbf16, #tpu.memory_space<vmem>>, vector<128x512xbf16>
    %cst_11 = arith.constant dense<0.000000e+00> : vector<2x512xf32>
    %25 = tpu.matmul %23, %24, %cst_11 {dimension_numbers = #tpu.dot_dimension_numbers<[1], [0], [0], [1], [0, 0, 1, 1], [], []>} : vector<2x128xbf16>, vector<128x512xbf16>, vector<2x512xf32> -> vector<2x512xf32>
    %26 = arith.truncf %25 : vector<2x512xf32> to vector<2x512xbf16>
    %c0_12 = arith.constant 0 : index
    %c0_13 = arith.constant 0 : index
    %27 = vector.load %arg4[%c0_12, %c0_13] : memref<512x1024xbf16, #tpu.memory_space<vmem>>, vector<512x1024xbf16>
    %cst_14 = arith.constant dense<0.000000e+00> : vector<2x1024xf32>
    %28 = tpu.matmul %26, %27, %cst_14 {dimension_numbers = #tpu.dot_dimension_numbers<[1], [0], [0], [1], [0, 0, 1, 1], [], []>} : vector<2x512xbf16>, vector<512x1024xbf16>, vector<2x1024xf32> -> vector<2x1024xf32>
    %c0_15 = arith.constant 0 : index
    %c0_16 = arith.constant 0 : index
    %29 = vector.load %arg5[%c0_15, %c0_16] : memref<1x1024xf32, #tpu.memory_space<vmem>>, vector<1x1024xf32>
    %30 = vector.broadcast %29 : vector<1x1024xf32> to vector<2x1024xf32>
    %31 = arith.addf %28, %30 : vector<2x1024xf32>
    %cst_17 = arith.constant 0.000000e+00 : f32
    %32 = vector.broadcast %cst_17 : f32 to vector<2x1024xf32>
    %33 = arith.maximumf %31, %32 : vector<2x1024xf32>
    %c0_18 = arith.constant 0 : index
    %c0_19 = arith.constant 0 : index
    %34 = vector.load %arg8[%c0_18, %c0_19] : memref<1x1024xf32, #tpu.memory_space<vmem>>, vector<1x1024xf32>
    %35 = vector.broadcast %34 : vector<1x1024xf32> to vector<2x1024xf32>
    %36 = arith.subf %33, %35 : vector<2x1024xf32>
    %c0_20 = arith.constant 0 : index
    %c0_21 = arith.constant 0 : index
    %37 = vector.load %arg9[%c0_20, %c0_21] : memref<1x1024xf32, #tpu.memory_space<vmem>>, vector<1x1024xf32>
    %cst_22 = arith.constant 9.99999974E-6 : f32
    %38 = vector.broadcast %cst_22 : f32 to vector<1x1024xf32>
    %39 = arith.addf %37, %38 : vector<1x1024xf32>
    %40 = math.rsqrt %39 : vector<1x1024xf32>
    %41 = vector.broadcast %40 : vector<1x1024xf32> to vector<2x1024xf32>
    %42 = arith.mulf %36, %41 : vector<2x1024xf32>
    %c0_23 = arith.constant 0 : index
    %c0_24 = arith.constant 0 : index
    %43 = vector.load %arg6[%c0_23, %c0_24] : memref<1x1024xf32, #tpu.memory_space<vmem>>, vector<1x1024xf32>
    %44 = vector.broadcast %43 : vector<1x1024xf32> to vector<2x1024xf32>
    %45 = arith.mulf %42, %44 : vector<2x1024xf32>
    %c0_25 = arith.constant 0 : index
    %c0_26 = arith.constant 0 : index
    %46 = vector.load %arg7[%c0_25, %c0_26] : memref<1x1024xf32, #tpu.memory_space<vmem>>, vector<1x1024xf32>
    %47 = vector.broadcast %46 : vector<1x1024xf32> to vector<2x1024xf32>
    %48 = arith.addf %45, %47 : vector<2x1024xf32>
    %49 = arith.truncf %48 : vector<2x1024xf32> to vector<2x1024xbf16>
    %c0_27 = arith.constant 0 : index
    %c0_28 = arith.constant 0 : index
    %50 = vector.load %arg10[%c0_27, %c0_28] : memref<1024x170xbf16, #tpu.memory_space<vmem>>, vector<1024x170xbf16>
    %cst_29 = arith.constant dense<0.000000e+00> : vector<2x170xf32>
    %51 = tpu.matmul %49, %50, %cst_29 {dimension_numbers = #tpu.dot_dimension_numbers<[1], [0], [0], [1], [0, 0, 1, 1], [], []>} : vector<2x1024xbf16>, vector<1024x170xbf16>, vector<2x170xf32> -> vector<2x170xf32>
    %c0_30 = arith.constant 0 : index
    %c0_31 = arith.constant 0 : index
    %52 = vector.load %arg11[%c0_30, %c0_31] : memref<1x170xf32, #tpu.memory_space<vmem>>, vector<1x170xf32>
    %53 = vector.broadcast %52 : vector<1x170xf32> to vector<2x170xf32>
    %54 = arith.addf %51, %53 : vector<2x170xf32>
    %55 = vector.extract_strided_slice %54 {offsets = [0, 0], sizes = [2, 56], strides = [1, 1]} : vector<2x170xf32> to vector<2x56xf32>
    %56 = vector.extract_strided_slice %54 {offsets = [0, 56], sizes = [2, 56], strides = [1, 1]} : vector<2x170xf32> to vector<2x56xf32>
    %57 = vector.extract_strided_slice %54 {offsets = [0, 112], sizes = [2, 56], strides = [1, 1]} : vector<2x170xf32> to vector<2x56xf32>
    %58 = tpu.concatenate %55, %56, %57 in 0 : vector<2x56xf32>, vector<2x56xf32>, vector<2x56xf32> -> vector<6x56xf32>
    %c0_32 = arith.constant 0 : index
    %c0_33 = arith.constant 0 : index
    %59 = vector.load %arg12[%c0_32, %c0_33] : memref<128x56xf32, #tpu.memory_space<vmem>>, vector<128x56xf32>
    %cst_34 = arith.constant dense<0.000000e+00> : vector<6x128xf32>
    %60 = tpu.matmul %58, %59, %cst_34 {dimension_numbers = #tpu.dot_dimension_numbers<[1], [1], [0], [0], [0, 0, 1, 0], [], []>} : vector<6x56xf32>, vector<128x56xf32>, vector<6x128xf32> -> vector<6x128xf32>
    %c0_35 = arith.constant 0 : index
    %c0_36 = arith.constant 0 : index
    %61 = vector.load %arg13[%c0_35, %c0_36] : memref<6x128xf32, #tpu.memory_space<vmem>>, vector<6x128xf32>
    tpu.vector_store %arg13[%c0_35, %c0_36], %60 {strides = array<i32>} : memref<6x128xf32, #tpu.memory_space<vmem>>, vector<6x128xf32>,
    return
  }
}

</mosaic_0001>

<llo_original>
// kernel: _lambda_.3
$region0: #{_lambda_.3}
  #allocation0 [shape = 'u32[]', space=smem, size = 0x4, offset = 0x4, fixed_abs, tag = 'smem constant byte address 0x4 - core index']
  #allocation1 [shape = 'u32[144,128]{1,0:T(1,128)}', space=vmem, size = 0x12000, scoped, tag = 'internal scratch']
  %s0 = inlined_call_operand.vmem [shape: bf16[8,768], index: 0, kind: input, shape index: {}]
  %s1 = inlined_call_operand.vmem [shape: bf16[768,128], index: 1, kind: input, shape index: {}]
  %s2 = inlined_call_operand.vmem [shape: f32[1,128], index: 2, kind: input, shape index: {}]
  %s3 = inlined_call_operand.vmem [shape: f32[5,128], index: 3, kind: input, shape index: {}]
  %s4 = inlined_call_operand.vmem [shape: f32[1,128], index: 4, kind: input, shape index: {}]
  %s5 = inlined_call_operand.vmem [shape: f32[1,128], index: 5, kind: input, shape index: {}]
  %s6 = inlined_call_operand.vmem [shape: f32[2,5,128], index: 6, kind: output, shape index: {}]
  %s7 = sld [smem:[#allocation0]]
  $region34: #{_lambda_.3} parent=0
    _
  %s9 = ssub.s32 1, %s7
  %s10 = scalar_select 0, %s9, %s7
  // Predicated region
  $region2: #{_lambda_.3} parent=0 // pred_check
    _
  $region3: #{_lambda_.3} parent=0 // pred_check_branch
    %12 = sbr.rel (0) target = $region5
  $region4: #{_lambda_.3} parent=0 // pred_region
    _
  $region5: #{_lambda_.3} parent=0 // pred_fallthru
    _
  // Predicated region
  $region6: #{_lambda_.3} parent=0 // pred_check
    _
  $region7: #{_lambda_.3} parent=0 // pred_check_branch
    %14 = sbr.rel (0) target = $region9
  $region8: #{_lambda_.3} parent=0 // pred_region
    _
  $region9: #{_lambda_.3} parent=0 // pred_fallthru
    _
  // Predicated region
  $region10: #{_lambda_.3} parent=0 // pred_check
    _
  $region11: #{_lambda_.3} parent=0 // pred_check_branch
    %16 = sbr.rel (0) target = $region13
  $region12: #{_lambda_.3} parent=0 // pred_region
    _
  $region13: #{_lambda_.3} parent=0 // pred_fallthru
    _
  // Predicated region
  $region14: #{_lambda_.3} parent=0 // pred_check
    _
  $region15: #{_lambda_.3} parent=0 // pred_check_branch
    %18 = sbr.rel (0) target = $region17
  $region16: #{_lambda_.3} parent=0 // pred_region
    _
  $region17: #{_lambda_.3} parent=0 // pred_fallthru
    _
  // Predicated region
  $region18: #{_lambda_.3} parent=0 // pred_check
    _
  $region19: #{_lambda_.3} parent=0 // pred_check_branch
    %20 = sbr.rel (0) target = $region21
  $region20: #{_lambda_.3} parent=0 // pred_region
    _
  $region21: #{_lambda_.3} parent=0 // pred_fallthru
    _
  // Predicated region
  $region22: #{_lambda_.3} parent=0 // pred_check
    _
  $region23: #{_lambda_.3} parent=0 // pred_check_branch
    %22 = sbr.rel (0) target = $region25
  $region24: #{_lambda_.3} parent=0 // pred_region
    _
  $region25: #{_lambda_.3} parent=0 // pred_fallthru
    _
  %v24 = vld [vmem:[%s0] sm:$0xff]
  %v25 = vld [vmem:[%s0 + $0x8] sm:$0xff]
  %v26 = vld [vmem:[%s0 + $0x10] sm:$0xff]
  %v27 = vld [vmem:[%s1] sm:$0xf]
  %v28 = vld [vmem:[%s1 + $0x4] sm:$0xf]
  %v29 = vld [vmem:[%s1 + $0x8] sm:$0xf]
  %v30 = vld [vmem:[%s1 + $0xc] sm:$0xf]
  %v31 = vld [vmem:[%s1 + $0x10] sm:$0xf]
  %v32 = vld [vmem:[%s1 + $0x14] sm:$0xf]
  %v33 = vld [vmem:[%s1 + $0x18] sm:$0xf]
  %v34 = vld [vmem:[%s1 + $0x1c] sm:$0xf]
  %v35 = vld [vmem:[%s1 + $0x20] sm:$0xf]
  %v36 = vld [vmem:[%s1 + $0x24] sm:$0xf]
  %v37 = vld [vmem:[%s1 + $0x28] sm:$0xf]
  %v38 = vld [vmem:[%s1 + $0x2c] sm:$0xf]
  %v39 = vld [vmem:[%s1 + $0x30] sm:$0xf]
  %v40 = vld [vmem:[%s1 + $0x34] sm:$0xf]
  %v41 = vld [vmem:[%s1 + $0x38] sm:$0xf]
  %v42 = vld [vmem:[%s1 + $0x3c] sm:$0xf]
  %v43 = vld [vmem:[%s1 + $0x40] sm:$0xf]
  %v44 = vld [vmem:[%s1 + $0x44] sm:$0xf]
  %v45 = vld [vmem:[%s1 + $0x48] sm:$0xf]
  %v46 = vld [vmem:[%s1 + $0x4c] sm:$0xf]
  %v47 = vld [vmem:[%s1 + $0x50] sm:$0xf]
  %v48 = vld [vmem:[%s1 + $0x54] sm:$0xf]
  %v49 = vld [vmem:[%s1 + $0x58] sm:$0xf]
  %v50 = vld [vmem:[%s1 + $0x5c] sm:$0xf]
  %v51 = vld [vmem:[%s1 + $0x60] sm:$0xf]
  %v52 = vld [vmem:[%s1 + $0x64] sm:$0xf]
  %v53 = vld [vmem:[%s1 + $0x68] sm:$0xf]
  %v54 = vld [vmem:[%s1 + $0x6c] sm:$0xf]
  %v55 = vld [vmem:[%s1 + $0x70] sm:$0xf]
  %v56 = vld [vmem:[%s1 + $0x74] sm:$0xf]
  %v57 = vld [vmem:[%s1 + $0x78] sm:$0xf]
  %v58 = vld [vmem:[%s1 + $0x7c] sm:$0xf]
  %v59 = vld [vmem:[%s1 + $0x80] sm:$0xf]
  %v60 = vld [vmem:[%s1 + $0x84] sm:$0xf]
  %v61 = vld [vmem:[%s1 + $0x88] sm:$0xf]
  %v62 = vld [vmem:[%s1 + $0x8c] sm:$0xf]
  %v63 = vld [vmem:[%s1 + $0x90] sm:$0xf]
  %v64 = vld [vmem:[%s1 + $0x94] sm:$0xf]
  %v65 = vld [vmem:[%s1 + $0x98] sm:$0xf]
  %v66 = vld [vmem:[%s1 + $0x9c] sm:$0xf]
  %v67 = vld [vmem:[%s1 + $0xa0] sm:$0xf]
  %v68 = vld [vmem:[%s1 + $0xa4] sm:$0xf]
  %v69 = vld [vmem:[%s1 + $0xa8] sm:$0xf]
  %v70 = vld [vmem:[%s1 + $0xac] sm:$0xf]
  %v71 = vld [vmem:[%s1 + $0xb0] sm:$0xf]
  %v72 = vld [vmem:[%s1 + $0xb4] sm:$0xf]
  %v73 = vld [vmem:[%s1 + $0xb8] sm:$0xf]
  %v74 = vld [vmem:[%s1 + $0xbc] sm:$0xf]
  %v75 = vld [vmem:[%s1 + $0xc0] sm:$0xf]
  %v76 = vld [vmem:[%s1 + $0xc4] sm:$0xf]
  %v77 = vld [vmem:[%s1 + $0xc8] sm:$0xf]
  %v78 = vld [vmem:[%s1 + $0xcc] sm:$0xf]
  %v79 = vld [vmem:[%s1 + $0xd0] sm:$0xf]
  %v80 = vld [vmem:[%s1 + $0xd4] sm:$0xf]
  %v81 = vld [vmem:[%s1 + $0xd8] sm:$0xf]
  %v82 = vld [vmem:[%s1 + $0xdc] sm:$0xf]
  %v83 = vld [vmem:[%s1 + $0xe0] sm:$0xf]
  %v84 = vld [vmem:[%s1 + $0xe4] sm:$0xf]
  %v85 = vld [vmem:[%s1 + $0xe8] sm:$0xf]
  %v86 = vld [vmem:[%s1 + $0xec] sm:$0xf]
  %v87 = vld [vmem:[%s1 + $0xf0] sm:$0xf]
  %v88 = vld [vmem:[%s1 + $0xf4] sm:$0xf]
  %v89 = vld [vmem:[%s1 + $0xf8] sm:$0xf]
  %v90 = vld [vmem:[%s1 + $0xfc] sm:$0xf]
  %v91 = vld [vmem:[%s1 + $0x100] sm:$0xf]
  %v92 = vld [vmem:[%s1 + $0x104] sm:$0xf]
  %v93 = vld [vmem:[%s1 + $0x108] sm:$0xf]
  %v94 = vld [vmem:[%s1 + $0x10c] sm:$0xf]
  %v95 = vld [vmem:[%s1 + $0x110] sm:$0xf]
  %v96 = vld [vmem:[%s1 + $0x114] sm:$0xf]
  %v97 = vld [vmem:[%s1 + $0x118] sm:$0xf]
  %v98 = vld [vmem:[%s1 + $0x11c] sm:$0xf]
  %v99 = vld [vmem:[%s1 + $0x120] sm:$0xf]
  %v100 = vld [vmem:[%s1 + $0x124] sm:$0xf]
  %v101 = vld [vmem:[%s1 + $0x128] sm:$0xf]
  %v102 = vld [vmem:[%s1 + $0x12c] sm:$0xf]
  %v103 = vld [vmem:[%s1 + $0x130] sm:$0xf]
  %v104 = vld [vmem:[%s1 + $0x134] sm:$0xf]
  %v105 = vld [vmem:[%s1 + $0x138] sm:$0xf]
  %v106 = vld [vmem:[%s1 + $0x13c] sm:$0xf]
  %v107 = vld [vmem:[%s1 + $0x140] sm:$0xf]
  %v108 = vld [vmem:[%s1 + $0x144] sm:$0xf]
  %v109 = vld [vmem:[%s1 + $0x148] sm:$0xf]
  %v110 = vld [vmem:[%s1 + $0x14c] sm:$0xf]
  %v111 = vld [vmem:[%s1 + $0x150] sm:$0xf]
  %v112 = vld [vmem:[%s1 + $0x154] sm:$0xf]
  %v113 = vld [vmem:[%s1 + $0x158] sm:$0xf]
  %v114 = vld [vmem:[%s1 + $0x15c] sm:$0xf]
  %v115 = vld [vmem:[%s1 + $0x160] sm:$0xf]
  %v116 = vld [vmem:[%s1 + $0x164] sm:$0xf]
  %v117 = vld [vmem:[%s1 + $0x168] sm:$0xf]
  %v118 = vld [vmem:[%s1 + $0x16c] sm:$0xf]
  %v119 = vld [vmem:[%s1 + $0x170] sm:$0xf]
  %v120 = vld [vmem:[%s1 + $0x174] sm:$0xf]
  %v121 = vld [vmem:[%s1 + $0x178] sm:$0xf]
  %v122 = vld [vmem:[%s1 + $0x17c] sm:$0xf]
  %v126 = vunpack.c.l.b16 %v24
  %v127 = vunpack.c.h.b16 %v24
  %v128 = vunpack.c.l.b16 %v25
  %v129 = vunpack.c.h.b16 %v25
  %v130 = vunpack.c.l.b16 %v26
  %v131 = vunpack.c.h.b16 %v26
  %v132 = vpack.c.b16 %v126, %v126
  %v133 = vpack.c.b16 %v127, %v127
  %v134 = vpack.c.b16 %v128, %v128
  %v135 = vpack.c.b16 %v129, %v129
  %v136 = vpack.c.b16 %v130, %v130
  %v137 = vpack.c.b16 %v131, %v131
  %v240 = vunpack.c.l.b16 %v27
  %v241 = vunpack.c.l.b16 %v28
  %v242 = vunpack.c.l.b16 %v29
  %v243 = vunpack.c.l.b16 %v30
  %v244 = vunpack.c.l.b16 %v31
  %v245 = vunpack.c.l.b16 %v32
  %v246 = vunpack.c.l.b16 %v33
  %v247 = vunpack.c.l.b16 %v34
  %v248 = vunpack.c.l.b16 %v35
  %v249 = vunpack.c.l.b16 %v36
  %v250 = vunpack.c.l.b16 %v37
  %v251 = vunpack.c.l.b16 %v38
  %v252 = vunpack.c.l.b16 %v39
  %v253 = vunpack.c.l.b16 %v40
  %v254 = vunpack.c.l.b16 %v41
  %v255 = vunpack.c.l.b16 %v42
  %v256 = vunpack.c.l.b16 %v43
  %v257 = vunpack.c.l.b16 %v44
  %v258 = vunpack.c.l.b16 %v45
  %v259 = vunpack.c.l.b16 %v46
  %v260 = vunpack.c.l.b16 %v47
  %v261 = vunpack.c.l.b16 %v48
  %v262 = vunpack.c.l.b16 %v49
  %v263 = vunpack.c.l.b16 %v50
  %v264 = vunpack.c.l.b16 %v51
  %v265 = vunpack.c.l.b16 %v52
  %v266 = vunpack.c.l.b16 %v53
  %v267 = vunpack.c.l.b16 %v54
  %v268 = vunpack.c.l.b16 %v55
  %v269 = vunpack.c.l.b16 %v56
  %v270 = vunpack.c.l.b16 %v57
  %v271 = vunpack.c.l.b16 %v58
  %v272 = vunpack.c.l.b16 %v59
  %v273 = vunpack.c.l.b16 %v60
  %v274 = vunpack.c.l.b16 %v61
  %v275 = vunpack.c.l.b16 %v62
  %v276 = vunpack.c.l.b16 %v63
  %v277 = vunpack.c.l.b16 %v64
  %v278 = vunpack.c.l.b16 %v65
  %v279 = vunpack.c.l.b16 %v66
  %v280 = vunpack.c.l.b16 %v67
  %v281 = vunpack.c.l.b16 %v68
  %v282 = vunpack.c.l.b16 %v69
  %v283 = vunpack.c.l.b16 %v70
  %v284 = vunpack.c.l.b16 %v71
  %v285 = vunpack.c.l.b16 %v72
  %v286 = vunpack.c.l.b16 %v73
  %v287 = vunpack.c.l.b16 %v74
  %v288 = vunpack.c.l.b16 %v75
  %v289 = vunpack.c.l.b16 %v76
  %v290 = vunpack.c.l.b16 %v77
  %v291 = vunpack.c.l.b16 %v78
  %v292 = vunpack.c.l.b16 %v79
  %v293 = vunpack.c.l.b16 %v80
  %v294 = vunpack.c.l.b16 %v81
  %v295 = vunpack.c.l.b16 %v82
  %v296 = vunpack.c.l.b16 %v83
  %v297 = vunpack.c.l.b16 %v84
  %v298 = vunpack.c.l.b16 %v85
  %v299 = vunpack.c.l.b16 %v86
  %v300 = vunpack.c.l.b16 %v87
  %v301 = vunpack.c.l.b16 %v88
  %v302 = vunpack.c.l.b16 %v89
  %v303 = vunpack.c.l.b16 %v90
  %v304 = vunpack.c.l.b16 %v91
  %v305 = vunpack.c.l.b16 %v92
  %v306 = vunpack.c.l.b16 %v93
  %v307 = vunpack.c.l.b16 %v94
  %v308 = vunpack.c.l.b16 %v95
  %v309 = vunpack.c.l.b16 %v96
  %v310 = vunpack.c.l.b16 %v97
  %v311 = vunpack.c.l.b16 %v98
  %v312 = vunpack.c.l.b16 %v99
  %v313 = vunpack.c.l.b16 %v100
  %v314 = vunpack.c.l.b16 %v101
  %v315 = vunpack.c.l.b16 %v102
  %v316 = vunpack.c.l.b16 %v103
  %v317 = vunpack.c.l.b16 %v104
  %v318 = vunpack.c.l.b16 %v105
  %v319 = vunpack.c.l.b16 %v106
  %v320 = vunpack.c.l.b16 %v107
  %v321 = vunpack.c.l.b16 %v108
  %v322 = vunpack.c.l.b16 %v109
  %v323 = vunpack.c.l.b16 %v110
  %v324 = vunpack.c.l.b16 %v111
  %v325 = vunpack.c.l.b16 %v112
  %v326 = vunpack.c.l.b16 %v113
  %v327 = vunpack.c.l.b16 %v114
  %v328 = vunpack.c.l.b16 %v115
  %v329 = vunpack.c.l.b16 %v116
  %v330 = vunpack.c.l.b16 %v117
  %v331 = vunpack.c.l.b16 %v118
  %v332 = vunpack.c.l.b16 %v119
  %v333 = vunpack.c.l.b16 %v120
  %v334 = vunpack.c.l.b16 %v121
  %v335 = vunpack.c.l.b16 %v122
  %v336 = vpack.c.b16 %v241, %v240
  %v337 = vpack.c.b16 %v243, %v242
  %v338 = vpack.c.b16 %v245, %v244
  %v339 = vpack.c.b16 %v247, %v246
  %v340 = vpack.c.b16 %v249, %v248
  %v341 = vpack.c.b16 %v251, %v250
  %v342 = vpack.c.b16 %v253, %v252
  %v343 = vpack.c.b16 %v255, %v254
  %v344 = vpack.c.b16 %v257, %v256
  %v345 = vpack.c.b16 %v259, %v258
  %v346 = vpack.c.b16 %v261, %v260
  %v347 = vpack.c.b16 %v263, %v262
  %v348 = vpack.c.b16 %v265, %v264
  %v349 = vpack.c.b16 %v267, %v266
  %v350 = vpack.c.b16 %v269, %v268
  %v351 = vpack.c.b16 %v271, %v270
  %v352 = vpack.c.b16 %v273, %v272
  %v353 = vpack.c.b16 %v275, %v274
  %v354 = vpack.c.b16 %v277, %v276
  %v355 = vpack.c.b16 %v279, %v278
  %v356 = vpack.c.b16 %v281, %v280
  %v357 = vpack.c.b16 %v283, %v282
  %v358 = vpack.c.b16 %v285, %v284
  %v359 = vpack.c.b16 %v287, %v286
  %v360 = vpack.c.b16 %v289, %v288
  %v361 = vpack.c.b16 %v291, %v290
  %v362 = vpack.c.b16 %v293, %v292
  %v363 = vpack.c.b16 %v295, %v294
  %v364 = vpack.c.b16 %v297, %v296
  %v365 = vpack.c.b16 %v299, %v298
  %v366 = vpack.c.b16 %v301, %v300
  %v367 = vpack.c.b16 %v303, %v302
  %v368 = vpack.c.b16 %v305, %v304
  %v369 = vpack.c.b16 %v307, %v306
  %v370 = vpack.c.b16 %v309, %v308
  %v371 = vpack.c.b16 %v311, %v310
  %v372 = vpack.c.b16 %v313, %v312
  %v373 = vpack.c.b16 %v315, %v314
  %v374 = vpack.c.b16 %v317, %v316
  %v375 = vpack.c.b16 %v319, %v318
  %v376 = vpack.c.b16 %v321, %v320
  %v377 = vpack.c.b16 %v323, %v322
  %v378 = vpack.c.b16 %v325, %v324
  %v379 = vpack.c.b16 %v327, %v326
  %v380 = vpack.c.b16 %v329, %v328
  %v381 = vpack.c.b16 %v331, %v330
  %v382 = vpack.c.b16 %v333, %v332
  %v383 = vpack.c.b16 %v335, %v334
  %432 = vmatprep.subr.bf16.mxu0 0
  %433 = vmatpush1.bf16.msra.mxu0 %v336
  %434 = vmatprep.subr.bf16.mxu0 0
  %435 = vmatpush1.bf16.msra.mxu0 %v337
  %436 = vmatprep.subr.bf16.mxu0 0
  %437 = vmatpush1.bf16.msra.mxu0 %v338
  %438 = vmatprep.subr.bf16.mxu0 0
  %439 = vmatpush1.bf16.msra.mxu0 %v339
  %440 = vmatprep.subr.bf16.mxu0 0
  %441 = vmatpush1.bf16.msra.mxu0 %v340
  %442 = vmatprep.subr.bf16.mxu0 0
  %443 = vmatpush1.bf16.msra.mxu0 %v341
  %444 = vmatprep.subr.bf16.mxu0 0
  %445 = vmatpush1.bf16.msra.mxu0 %v342
  %446 = vmatprep.subr.bf16.mxu0 0
  %447 = vmatpush1.bf16.msra.mxu0 %v343
  %448 = vmatprep.subr.bf16.mxu0 0
  %449 = vmatpush1.bf16.msra.mxu0 %v344
  %450 = vmatprep.subr.bf16.mxu0 0
  %451 = vmatpush1.bf16.msra.mxu0 %v345
  %452 = vmatprep.subr.bf16.mxu0 0
  %453 = vmatpush1.bf16.msra.mxu0 %v346
  %454 = vmatprep.subr.bf16.mxu0 0
  %455 = vmatpush1.bf16.msra.mxu0 %v347
  %456 = vmatprep.subr.bf16.mxu0 0
  %457 = vmatpush1.bf16.msra.mxu0 %v348
  %458 = vmatprep.subr.bf16.mxu0 0
  %459 = vmatpush1.bf16.msra.mxu0 %v349
  %460 = vmatprep.subr.bf16.mxu0 0
  %461 = vmatpush1.bf16.msra.mxu0 %v350
  %462 = vmatprep.subr.bf16.mxu0 0
  %463 = vmatpush1.bf16.msra.mxu0 %v351
  %464 = vmatprep.mubr.bf16.mxu0 %v133
  %465 = vmatmul.mubr.bf16.gmra.mrb[0].mxu0 %v132
  %v466 = vpop.f32.mrb[0].mxu0
  %v467 = vadd.f32 0.0, %v466
  %v468 = vpop.f32.mrb[0].mxu0
  %v469 = vpop.f32.mrb[0].mxu0
  %v470 = vpop.f32.mrb[0].mxu0
  %471 = vdwg.mxu0
  %472 = vmatprep.subr.bf16.mxu0 0
  %473 = vmatpush1.bf16.msra.mxu0 %v352
  %474 = vmatprep.subr.bf16.mxu0 0
  %475 = vmatpush1.bf16.msra.mxu0 %v353
  %476 = vmatprep.subr.bf16.mxu0 0
  %477 = vmatpush1.bf16.msra.mxu0 %v354
  %478 = vmatprep.subr.bf16.mxu0 0
  %479 = vmatpush1.bf16.msra.mxu0 %v355
  %480 = vmatprep.subr.bf16.mxu0 0
  %481 = vmatpush1.bf16.msra.mxu0 %v356
  %482 = vmatprep.subr.bf16.mxu0 0
  %483 = vmatpush1.bf16.msra.mxu0 %v357
  %484 = vmatprep.subr.bf16.mxu0 0
  %485 = vmatpush1.bf16.msra.mxu0 %v358
  %486 = vmatprep.subr.bf16.mxu0 0
  %487 = vmatpush1.bf16.msra.mxu0 %v359
  %488 = vmatprep.subr.bf16.mxu0 0
  %489 = vmatpush1.bf16.msra.mxu0 %v360
  %490 = vmatprep.subr.bf16.mxu0 0
  %491 = vmatpush1.bf16.msra.mxu0 %v361
  %492 = vmatprep.subr.bf16.mxu0 0
  %493 = vmatpush1.bf16.msra.mxu0 %v362
  %494 = vmatprep.subr.bf16.mxu0 0
  %495 = vmatpush1.bf16.msra.mxu0 %v363
  %496 = vmatprep.subr.bf16.mxu0 0
  %497 = vmatpush1.bf16.msra.mxu0 %v364
  %498 = vmatprep.subr.bf16.mxu0 0
  %499 = vmatpush1.bf16.msra.mxu0 %v365
  %500 = vmatprep.subr.bf16.mxu0 0
  %501 = vmatpush1.bf16.msra.mxu0 %v366
  %502 = vmatprep.subr.bf16.mxu0 0
  %503 = vmatpush1.bf16.msra.mxu0 %v367
  %504 = vmatprep.mubr.bf16.mxu0 %v135
  %505 = vmatmul.mubr.bf16.gmra.mrb[0].mxu0 %v134
  %v506 = vpop.f32.mrb[0].mxu0
  %v507 = vadd.f32 %v467, %v506
  %v508 = vpop.f32.mrb[0].mxu0
  %v509 = vpop.f32.mrb[0].mxu0
  %v510 = vpop.f32.mrb[0].mxu0
  %511 = vdwg.mxu0
  %512 = vmatprep.subr.bf16.mxu0 0
  %513 = vmatpush1.bf16.msra.mxu0 %v368
  %514 = vmatprep.subr.bf16.mxu0 0
  %515 = vmatpush1.bf16.msra.mxu0 %v369
  %516 = vmatprep.subr.bf16.mxu0 0
  %517 = vmatpush1.bf16.msra.mxu0 %v370
  %518 = vmatprep.subr.bf16.mxu0 0
  %519 = vmatpush1.bf16.msra.mxu0 %v371
  %520 = vmatprep.subr.bf16.mxu0 0
  %521 = vmatpush1.bf16.msra.mxu0 %v372
  %522 = vmatprep.subr.bf16.mxu0 0
  %523 = vmatpush1.bf16.msra.mxu0 %v373
  %524 = vmatprep.subr.bf16.mxu0 0
  %525 = vmatpush1.bf16.msra.mxu0 %v374
  %526 = vmatprep.subr.bf16.mxu0 0
  %527 = vmatpush1.bf16.msra.mxu0 %v375
  %528 = vmatprep.subr.bf16.mxu0 0
  %529 = vmatpush1.bf16.msra.mxu0 %v376
  %530 = vmatprep.subr.bf16.mxu0 0
  %531 = vmatpush1.bf16.msra.mxu0 %v377
  %532 = vmatprep.subr.bf16.mxu0 0
  %533 = vmatpush1.bf16.msra.mxu0 %v378
  %534 = vmatprep.subr.bf16.mxu0 0
  %535 = vmatpush1.bf16.msra.mxu0 %v379
  %536 = vmatprep.subr.bf16.mxu0 0
  %537 = vmatpush1.bf16.msra.mxu0 %v380
  %538 = vmatprep.subr.bf16.mxu0 0
  %539 = vmatpush1.bf16.msra.mxu0 %v381
  %540 = vmatprep.subr.bf16.mxu0 0
  %541 = vmatpush1.bf16.msra.mxu0 %v382
  %542 = vmatprep.subr.bf16.mxu0 0
  %543 = vmatpush1.bf16.msra.mxu0 %v383
  %544 = vmatprep.mubr.bf16.mxu0 %v137
  %545 = vmatmul.mubr.bf16.gmra.mrb[0].mxu0 %v136
  %v546 = vpop.f32.mrb[0].mxu0
  %v547 = vadd.f32 %v507, %v546
  %v548 = vpop.f32.mrb[0].mxu0
  %v549 = vpop.f32.mrb[0].mxu0
  %v550 = vpop.f32.mrb[0].mxu0
  %551 = vdwg.mxu0
  %v552 = vld [vmem:[%s4] sm:$0x1]
  %v553 = vld [vmem:[%s5] sm:$0x1]
  %v554 = vld [vmem:[%s3] sm:$0x1f]
  %v555 = vld [vmem:[%s2] sm:$0x1]
  %v556 = vadd.f32 %v555, %v554
  %vm557 = vcmask 1040384
  %v558 = vsel %vm557, %v556, 0.0
  %559 = vadd.xlane.f32.xlu0 %v558
  %v560 = vpop.xlane.xlu0 %559
  %v561 = vrcp.pop 128.0
  %v562 = vmul.f32 %v560, %v561
  %v563 = vsub.f32 %v556, %v562
  %v564 = vmul.f32 %v563, %v563
  %v565 = vsel %vm557, %v564, 0.0
  %566 = vadd.xlane.f32.xlu0 %v565
  %v567 = vpop.xlane.xlu0 %566
  %v568 = vmul.f32 %v567, %v561
  %v569 = vadd.f32 %v568, 1e-05
  %v570 = vrsqrt.pop %v569
  %v571 = vmul.f32 %v563, %v570
  %v572 = vmul.f32 %v571, %v552
  %v573 = vadd.f32 %v572, %v553
  %574 = vst [vmem:[%s6] sm:$0x1] %v573
  %v576 = vrot.slane %v554, 1
  %v578 = vadd.f32 %v547, %v576
  %vm579 = vcmask 1043456
  %v580 = vsel %vm579, %v578, 0.0
  %581 = vadd.xlane.f32.xlu0 %v580
  %v582 = vpop.xlane.xlu0 %581
  %v583 = vmul.f32 %v582, %v561
  %v584 = vsub.f32 %v578, %v583
  %v585 = vmul.f32 %v584, %v584
  %v586 = vsel %vm579, %v585, 0.0
  %587 = vadd.xlane.f32.xlu0 %v586
  %v588 = vpop.xlane.xlu0 %587
  %v589 = vmul.f32 %v588, %v561
  %v590 = vadd.f32 %v589, 1e-05
  %v591 = vrsqrt.pop %v590
  %v592 = vmul.f32 %v584, %v591
  %v594 = vlaneseq
  %v595 = vshrl.u32 %v594, 7
  %v596 = vsub.s32 0, %v595
  %v597 = vrot.slane %v552, %v596
  %v599 = vmul.f32 %v592, %v597
  %v601 = vlaneseq
  %v602 = vshrl.u32 %v601, 7
  %v603 = vsub.s32 0, %v602
  %v604 = vrot.slane %v553, %v603
  %v606 = vadd.f32 %v599, %v604
  %607 = vst [vmem:[%s6 + $0x1] sm:$0xf] %v606
  %s608 = scalar_lea.vmem %s6, 8
  %609 = vst [vmem:[%s608] sm:$0x1] %v573
  %v610 = vrot.slane %v554, 5
  %v612 = vadd.f32 %v547, %v610
  %vm613 = vcmask 1047556
  %v614 = vsel %vm613, %v612, 0.0
  %615 = vadd.xlane.f32.xlu0 %v614
  %v616 = vpop.xlane.xlu0 %615
  %v617 = vmul.f32 %v616, %v561
  %v618 = vsub.f32 %v612, %v617
  %v619 = vmul.f32 %v618, %v618
  %v620 = vsel %vm613, %v619, 0.0
  %621 = vadd.xlane.f32.xlu0 %v620
  %v622 = vpop.xlane.xlu0 %621
  %v623 = vmul.f32 %v622, %v561
  %v624 = vadd.f32 %v623, 1e-05
  %v625 = vrsqrt.pop %v624
  %v626 = vmul.f32 %v618, %v625
  %v627 = vmul.f32 %v626, %v597
  %v628 = vadd.f32 %v627, %v604
  %629 = vst [vmem:[%s608 - $0x3] sm:$0xf0] %v628
  // Predicated region
  $region26: #{_lambda_.3} parent=0 // pred_check
    _
  $region27: #{_lambda_.3} parent=0 // pred_check_branch
    %631 = sbr.rel (0) target = $region29
  $region28: #{_lambda_.3} parent=0 // pred_region
    _
  $region29: #{_lambda_.3} parent=0 // pred_fallthru
    _
  // Predicated region
  $region30: #{_lambda_.3} parent=0 // pred_check
    _
  $region31: #{_lambda_.3} parent=0 // pred_check_branch
    %633 = sbr.rel (0) target = $region33
  $region32: #{_lambda_.3} parent=0 // pred_region
    _
  $region33: #{_lambda_.3} parent=0 // pred_fallthru
    _

// kernel: _lambda_.4
$region0: #{_lambda_.4}
  #allocation0 [shape = 'u32[]', space=smem, size = 0x4, offset = 0x4, fixed_abs, tag = 'smem constant byte address 0x4 - core index']
  #allocation1 [shape = 'u32[144,128]{1,0:T(1,128)}', space=vmem, size = 0x12000, scoped, tag = 'internal scratch']
  %s0 = inlined_call_operand.vmem [shape: f32[2,5,128], index: 0, kind: input, shape index: {}]
  %s1 = inlined_call_operand.vmem [shape: f32[2,1,128], index: 1, kind: input, shape index: {}]
  %s2 = inlined_call_operand.vmem [shape: f32[2,1,128], index: 2, kind: input, shape index: {}]
  %s3 = inlined_call_operand.vmem [shape: bf16[2,128,384], index: 3, kind: input, shape index: {}]
  %s4 = inlined_call_operand.vmem [shape: f32[2,1,384], index: 4, kind: input, shape index: {}]
  %s5 = inlined_call_operand.vmem [shape: bf16[2,128,128], index: 5, kind: input, shape index: {}]
  %s6 = inlined_call_operand.vmem [shape: f32[2,1,128], index: 6, kind: input, shape index: {}]
  %s7 = inlined_call_operand.vmem [shape: f32[2,1,128], index: 7, kind: input, shape index: {}]
  %s8 = inlined_call_operand.vmem [shape: f32[2,1,128], index: 8, kind: input, shape index: {}]
  %s9 = inlined_call_operand.vmem [shape: bf16[2,128,512], index: 9, kind: input, shape index: {}]
  %s10 = inlined_call_operand.vmem [shape: f32[2,1,512], index: 10, kind: input, shape index: {}]
  %s11 = inlined_call_operand.vmem [shape: bf16[2,512,128], index: 11, kind: input, shape index: {}]
  %s12 = inlined_call_operand.vmem [shape: f32[2,1,128], index: 12, kind: input, shape index: {}]
  %s13 = inlined_call_operand.vmem [shape: f32[2,5,128], index: 13, kind: output, shape index: {}]
  %s14 = sld [smem:[#allocation0]]
  $region89: #{_lambda_.4} parent=0
    _
  %s16 = ssub.s32 1, %s14
  %s17 = scalar_select 0, %s16, %s14
  loop: start=0, step=1, limit=4
  $region2: #{_lambda_.4} parent=0 // loop_pre_header
    _
  $region3: #{_lambda_.4} parent=0 // loop_header
    %s19 = sphi 0, %s23
    %p20 = scmp.ge.s32.totalorder %s19, 4
    %s27 = sphi 0, %s27
    %s29 = sphi 0, %s27
    %s30 = sphi 0, %s29
    %s44 = sphi 0, %s30
    %s50 = sphi 0, %s52
    %s53 = sphi 0, %s50
    %s54 = sphi 0, %s53
    %s70 = sphi 0, %s54
    %s76 = sphi 0, %s78
    %s79 = sphi 0, %s76
    %s80 = sphi 0, %s79
    %s96 = sphi 0, %s80
    %s102 = sphi 0, %s104
    %s105 = sphi 0, %s102
    %s106 = sphi 0, %s105
    %s122 = sphi 0, %s106
    %s128 = sphi 0, %s130
    %s131 = sphi 0, %s128
    %s132 = sphi 0, %s131
    %s148 = sphi 0, %s132
    %s154 = sphi 0, %s156
    %s157 = sphi 0, %s154
    %s158 = sphi 0, %s157
    %s174 = sphi 0, %s158
    %s180 = sphi 0, %s182
    %s183 = sphi 0, %s180
    %s184 = sphi 0, %s183
    %s200 = sphi 0, %s184
    %s206 = sphi 0, %s208
    %s209 = sphi 0, %s206
    %s210 = sphi 0, %s209
    %s226 = sphi 0, %s210
    %s232 = sphi 0, %s234
    %s235 = sphi 0, %s232
    %s236 = sphi 0, %s235
    %s252 = sphi 0, %s236
    %s258 = sphi 0, %s260
    %s261 = sphi 0, %s258
    %s262 = sphi 0, %s261
    %s278 = sphi 0, %s262
    %s284 = sphi 0, %s286
    %s287 = sphi 0, %s284
    %s288 = sphi 0, %s287
    %s304 = sphi 0, %s288
    %s310 = sphi 0, %s312
    %s313 = sphi 0, %s310
    %s314 = sphi 0, %s313
    %s330 = sphi 0, %s314
    %s336 = sphi 0, %s338
    %s339 = sphi 0, %s336
    %s340 = sphi 0, %s339
    %s356 = sphi 0, %s340
    %s360 = sphi 0, %s360
    %s362 = sphi 0, %s360
    %s363 = sphi 0, %s362
    %s377 = sphi 0, %s363
  $region4: #{_lambda_.4} parent=0 // loop_header_branch
    %22 = sbr.rel (%p20) target = $region8
  $region5: #{_lambda_.4} parent=0 // loop_body
    %s24 = ssub.s32 %s19, 1
    %s25 = ssub.s32 %s19, 2
    %s26 = sadd.s32 %s19, 1
    %s28 = sadd.s32 %s27, 1
    %p31 = scmp.eq.s32.totalorder %s19, 1
    %p32 = scmp.ne.s32.totalorder %s27, %s29
    %p33 = scmp.eq.s32.totalorder %s19, 0
    %p34 = por %p32, %p33
    %p35 = scmp.ne.s32.totalorder %s27, %s29
    %p36 = scmp.eq.s32.totalorder %s24, 1
    %p37 = por %p35, %p36
    %p38 = scmp.ne.s32.totalorder %s29, %s30
    %p39 = scmp.eq.s32.totalorder %s24, 0
    %p40 = por %p38, %p39
    %p41 = scmp.ne.s32.totalorder %s29, %s30
    %p42 = scmp.eq.s32.totalorder %s25, 1
    %p43 = por %p41, %p42
    %p45 = scmp.ne.s32.totalorder %s30, %s44
    %p46 = scmp.eq.s32.totalorder %s25, 0
    %p47 = por %p45, %p46
    %s48 = ssub.s32 %s19, %s26
    %p49 = scmp.eq.s32.totalorder %s48, 0
    %s51 = sadd.s32 %s50, 1
    %s52 = scalar_select %p49, %s50, %s51
    %p55 = pneg %p49
    %p56 = scmp.eq.s32.totalorder %s19, 1
    %p57 = por %p55, %p56
    %p58 = scmp.ne.s32.totalorder %s50, %s53
    %p59 = scmp.eq.s32.totalorder %s19, 0
    %p60 = por %p58, %p59
    %p61 = scmp.ne.s32.totalorder %s50, %s53
    %p62 = scmp.eq.s32.totalorder %s24, 1
    %p63 = por %p61, %p62
    %p64 = scmp.ne.s32.totalorder %s53, %s54
    %p65 = scmp.eq.s32.totalorder %s24, 0
    %p66 = por %p64, %p65
    %p67 = scmp.ne.s32.totalorder %s53, %s54
    %p68 = scmp.eq.s32.totalorder %s25, 1
    %p69 = por %p67, %p68
    %p71 = scmp.ne.s32.totalorder %s54, %s70
    %p72 = scmp.eq.s32.totalorder %s25, 0
    %p73 = por %p71, %p72
    %s74 = ssub.s32 %s19, %s26
    %p75 = scmp.eq.s32.totalorder %s74, 0
    %s77 = sadd.s32 %s76, 1
    %s78 = scalar_select %p75, %s76, %s77
    %p81 = pneg %p75
    %p82 = scmp.eq.s32.totalorder %s19, 1
    %p83 = por %p81, %p82
    %p84 = scmp.ne.s32.totalorder %s76, %s79
    %p85 = scmp.eq.s32.totalorder %s19, 0
    %p86 = por %p84, %p85
    %p87 = scmp.ne.s32.totalorder %s76, %s79
    %p88 = scmp.eq.s32.totalorder %s24, 1
    %p89 = por %p87, %p88
    %p90 = scmp.ne.s32.totalorder %s79, %s80
    %p91 = scmp.eq.s32.totalorder %s24, 0
    %p92 = por %p90, %p91
    %p93 = scmp.ne.s32.totalorder %s79, %s80
    %p94 = scmp.eq.s32.totalorder %s25, 1
    %p95 = por %p93, %p94
    %p97 = scmp.ne.s32.totalorder %s80, %s96
    %p98 = scmp.eq.s32.totalorder %s25, 0
    %p99 = por %p97, %p98
    %s100 = ssub.s32 %s19, %s26
    %p101 = scmp.eq.s32.totalorder %s100, 0
    %s103 = sadd.s32 %s102, 1
    %s104 = scalar_select %p101, %s102, %s103
    %p107 = pneg %p101
    %p108 = scmp.eq.s32.totalorder %s19, 1
    %p109 = por %p107, %p108
    %p110 = scmp.ne.s32.totalorder %s102, %s105
    %p111 = scmp.eq.s32.totalorder %s19, 0
    %p112 = por %p110, %p111
    %p113 = scmp.ne.s32.totalorder %s102, %s105
    %p114 = scmp.eq.s32.totalorder %s24, 1
    %p115 = por %p113, %p114
    %p116 = scmp.ne.s32.totalorder %s105, %s106
    %p117 = scmp.eq.s32.totalorder %s24, 0
    %p118 = por %p116, %p117
    %p119 = scmp.ne.s32.totalorder %s105, %s106
    %p120 = scmp.eq.s32.totalorder %s25, 1
    %p121 = por %p119, %p120
    %p123 = scmp.ne.s32.totalorder %s106, %s122
    %p124 = scmp.eq.s32.totalorder %s25, 0
    %p125 = por %p123, %p124
    %s126 = ssub.s32 %s19, %s26
    %p127 = scmp.eq.s32.totalorder %s126, 0
    %s129 = sadd.s32 %s128, 1
    %s130 = scalar_select %p127, %s128, %s129
    %p133 = pneg %p127
    %p134 = scmp.eq.s32.totalorder %s19, 1
    %p135 = por %p133, %p134
    %p136 = scmp.ne.s32.totalorder %s128, %s131
    %p137 = scmp.eq.s32.totalorder %s19, 0
    %p138 = por %p136, %p137
    %p139 = scmp.ne.s32.totalorder %s128, %s131
    %p140 = scmp.eq.s32.totalorder %s24, 1
    %p141 = por %p139, %p140
    %p142 = scmp.ne.s32.totalorder %s131, %s132
    %p143 = scmp.eq.s32.totalorder %s24, 0
    %p144 = por %p142, %p143
    %p145 = scmp.ne.s32.totalorder %s131, %s132
    %p146 = scmp.eq.s32.totalorder %s25, 1
    %p147 = por %p145, %p146
    %p149 = scmp.ne.s32.totalorder %s132, %s148
    %p150 = scmp.eq.s32.totalorder %s25, 0
    %p151 = por %p149, %p150
    %s152 = ssub.s32 %s19, %s26
    %p153 = scmp.eq.s32.totalorder %s152, 0
    %s155 = sadd.s32 %s154, 1
    %s156 = scalar_select %p153, %s154, %s155
    %p159 = pneg %p153
    %p160 = scmp.eq.s32.totalorder %s19, 1
    %p161 = por %p159, %p160
    %p162 = scmp.ne.s32.totalorder %s154, %s157
    %p163 = scmp.eq.s32.totalorder %s19, 0
    %p164 = por %p162, %p163
    %p165 = scmp.ne.s32.totalorder %s154, %s157
    %p166 = scmp.eq.s32.totalorder %s24, 1
    %p167 = por %p165, %p166
    %p168 = scmp.ne.s32.totalorder %s157, %s158
    %p169 = scmp.eq.s32.totalorder %s24, 0
    %p170 = por %p168, %p169
    %p171 = scmp.ne.s32.totalorder %s157, %s158
    %p172 = scmp.eq.s32.totalorder %s25, 1
    %p173 = por %p171, %p172
    %p175 = scmp.ne.s32.totalorder %s158, %s174
    %p176 = scmp.eq.s32.totalorder %s25, 0
    %p177 = por %p175, %p176
    %s178 = ssub.s32 %s19, %s26
    %p179 = scmp.eq.s32.totalorder %s178, 0
    %s181 = sadd.s32 %s180, 1
    %s182 = scalar_select %p179, %s180, %s181
    %p185 = pneg %p179
    %p186 = scmp.eq.s32.totalorder %s19, 1
    %p187 = por %p185, %p186
    %p188 = scmp.ne.s32.totalorder %s180, %s183
    %p189 = scmp.eq.s32.totalorder %s19, 0
    %p190 = por %p188, %p189
    %p191 = scmp.ne.s32.totalorder %s180, %s183
    %p192 = scmp.eq.s32.totalorder %s24, 1
    %p193 = por %p191, %p192
    %p194 = scmp.ne.s32.totalorder %s183, %s184
    %p195 = scmp.eq.s32.totalorder %s24, 0
    %p196 = por %p194, %p195
    %p197 = scmp.ne.s32.totalorder %s183, %s184
    %p198 = scmp.eq.s32.totalorder %s25, 1
    %p199 = por %p197, %p198
    %p201 = scmp.ne.s32.totalorder %s184, %s200
    %p202 = scmp.eq.s32.totalorder %s25, 0
    %p203 = por %p201, %p202
    %s204 = ssub.s32 %s19, %s26
    %p205 = scmp.eq.s32.totalorder %s204, 0
    %s207 = sadd.s32 %s206, 1
    %s208 = scalar_select %p205, %s206, %s207
    %p211 = pneg %p205
    %p212 = scmp.eq.s32.totalorder %s19, 1
    %p213 = por %p211, %p212
    %p214 = scmp.ne.s32.totalorder %s206, %s209
    %p215 = scmp.eq.s32.totalorder %s19, 0
    %p216 = por %p214, %p215
    %p217 = scmp.ne.s32.totalorder %s206, %s209
    %p218 = scmp.eq.s32.totalorder %s24, 1
    %p219 = por %p217, %p218
    %p220 = scmp.ne.s32.totalorder %s209, %s210
    %p221 = scmp.eq.s32.totalorder %s24, 0
    %p222 = por %p220, %p221
    %p223 = scmp.ne.s32.totalorder %s209, %s210
    %p224 = scmp.eq.s32.totalorder %s25, 1
    %p225 = por %p223, %p224
    %p227 = scmp.ne.s32.totalorder %s210, %s226
    %p228 = scmp.eq.s32.totalorder %s25, 0
    %p229 = por %p227, %p228
    %s230 = ssub.s32 %s19, %s26
    %p231 = scmp.eq.s32.totalorder %s230, 0
    %s233 = sadd.s32 %s232, 1
    %s234 = scalar_select %p231, %s232, %s233
    %p237 = pneg %p231
    %p238 = scmp.eq.s32.totalorder %s19, 1
    %p239 = por %p237, %p238
    %p240 = scmp.ne.s32.totalorder %s232, %s235
    %p241 = scmp.eq.s32.totalorder %s19, 0
    %p242 = por %p240, %p241
    %p243 = scmp.ne.s32.totalorder %s232, %s235
    %p244 = scmp.eq.s32.totalorder %s24, 1
    %p245 = por %p243, %p244
    %p246 = scmp.ne.s32.totalorder %s235, %s236
    %p247 = scmp.eq.s32.totalorder %s24, 0
    %p248 = por %p246, %p247
    %p249 = scmp.ne.s32.totalorder %s235, %s236
    %p250 = scmp.eq.s32.totalorder %s25, 1
    %p251 = por %p249, %p250
    %p253 = scmp.ne.s32.totalorder %s236, %s252
    %p254 = scmp.eq.s32.totalorder %s25, 0
    %p255 = por %p253, %p254
    %s256 = ssub.s32 %s19, %s26
    %p257 = scmp.eq.s32.totalorder %s256, 0
    %s259 = sadd.s32 %s258, 1
    %s260 = scalar_select %p257, %s258, %s259
    %p263 = pneg %p257
    %p264 = scmp.eq.s32.totalorder %s19, 1
    %p265 = por %p263, %p264
    %p266 = scmp.ne.s32.totalorder %s258, %s261
    %p267 = scmp.eq.s32.totalorder %s19, 0
    %p268 = por %p266, %p267
    %p269 = scmp.ne.s32.totalorder %s258, %s261
    %p270 = scmp.eq.s32.totalorder %s24, 1
    %p271 = por %p269, %p270
    %p272 = scmp.ne.s32.totalorder %s261, %s262
    %p273 = scmp.eq.s32.totalorder %s24, 0
    %p274 = por %p272, %p273
    %p275 = scmp.ne.s32.totalorder %s261, %s262
    %p276 = scmp.eq.s32.totalorder %s25, 1
    %p277 = por %p275, %p276
    %p279 = scmp.ne.s32.totalorder %s262, %s278
    %p280 = scmp.eq.s32.totalorder %s25, 0
    %p281 = por %p279, %p280
    %s282 = ssub.s32 %s19, %s26
    %p283 = scmp.eq.s32.totalorder %s282, 0
    %s285 = sadd.s32 %s284, 1
    %s286 = scalar_select %p283, %s284, %s285
    %p289 = pneg %p283
    %p290 = scmp.eq.s32.totalorder %s19, 1
    %p291 = por %p289, %p290
    %p292 = scmp.ne.s32.totalorder %s284, %s287
    %p293 = scmp.eq.s32.totalorder %s19, 0
    %p294 = por %p292, %p293
    %p295 = scmp.ne.s32.totalorder %s284, %s287
    %p296 = scmp.eq.s32.totalorder %s24, 1
    %p297 = por %p295, %p296
    %p298 = scmp.ne.s32.totalorder %s287, %s288
    %p299 = scmp.eq.s32.totalorder %s24, 0
    %p300 = por %p298, %p299
    %p301 = scmp.ne.s32.totalorder %s287, %s288
    %p302 = scmp.eq.s32.totalorder %s25, 1
    %p303 = por %p301, %p302
    %p305 = scmp.ne.s32.totalorder %s288, %s304
    %p306 = scmp.eq.s32.totalorder %s25, 0
    %p307 = por %p305, %p306
    %s308 = ssub.s32 %s19, %s26
    %p309 = scmp.eq.s32.totalorder %s308, 0
    %s311 = sadd.s32 %s310, 1
    %s312 = scalar_select %p309, %s310, %s311
    %p315 = pneg %p309
    %p316 = scmp.eq.s32.totalorder %s19, 1
    %p317 = por %p315, %p316
    %p318 = scmp.ne.s32.totalorder %s310, %s313
    %p319 = scmp.eq.s32.totalorder %s19, 0
    %p320 = por %p318, %p319
    %p321 = scmp.ne.s32.totalorder %s310, %s313
    %p322 = scmp.eq.s32.totalorder %s24, 1
    %p323 = por %p321, %p322
    %p324 = scmp.ne.s32.totalorder %s313, %s314
    %p325 = scmp.eq.s32.totalorder %s24, 0
    %p326 = por %p324, %p325
    %p327 = scmp.ne.s32.totalorder %s313, %s314
    %p328 = scmp.eq.s32.totalorder %s25, 1
    %p329 = por %p327, %p328
    %p331 = scmp.ne.s32.totalorder %s314, %s330
    %p332 = scmp.eq.s32.totalorder %s25, 0
    %p333 = por %p331, %p332
    %s334 = ssub.s32 %s19, %s26
    %p335 = scmp.eq.s32.totalorder %s334, 0
    %s337 = sadd.s32 %s336, 1
    %s338 = scalar_select %p335, %s336, %s337
    %p341 = pneg %p335
    %p342 = scmp.eq.s32.totalorder %s19, 1
    %p343 = por %p341, %p342
    %p344 = scmp.ne.s32.totalorder %s336, %s339
    %p345 = scmp.eq.s32.totalorder %s19, 0
    %p346 = por %p344, %p345
    %p347 = scmp.ne.s32.totalorder %s336, %s339
    %p348 = scmp.eq.s32.totalorder %s24, 1
    %p349 = por %p347, %p348
    %p350 = scmp.ne.s32.totalorder %s339, %s340
    %p351 = scmp.eq.s32.totalorder %s24, 0
    %p352 = por %p350, %p351
    %p353 = scmp.ne.s32.totalorder %s339, %s340
    %p354 = scmp.eq.s32.totalorder %s25, 1
    %p355 = por %p353, %p354
    %p357 = scmp.ne.s32.totalorder %s340, %s356
    %p358 = scmp.eq.s32.totalorder %s25, 0
    %p359 = por %p357, %p358
    %s361 = sadd.s32 %s360, 1
    %p364 = scmp.eq.s32.totalorder %s19, 1
    %p365 = scmp.ne.s32.totalorder %s360, %s362
    %p366 = scmp.eq.s32.totalorder %s19, 0
    %p367 = por %p365, %p366
    %p368 = scmp.ne.s32.totalorder %s360, %s362
    %p369 = scmp.eq.s32.totalorder %s24, 1
    %p370 = por %p368, %p369
    %p371 = scmp.ne.s32.totalorder %s362, %s363
    %p372 = scmp.eq.s32.totalorder %s24, 0
    %p373 = por %p371, %p372
    %p374 = scmp.ne.s32.totalorder %s362, %s363
    %p375 = scmp.eq.s32.totalorder %s25, 1
    %p376 = por %p374, %p375
    %p378 = scmp.ne.s32.totalorder %s363, %s377
    %p379 = scmp.eq.s32.totalorder %s25, 0
    %p380 = por %p378, %p379
    %p381 = scmp.le.s32.totalorder 1, %s19
    %p382 = scmp.lt.s32.totalorder %s19, 3
    %p383 = pnand %p381, %p382
    %p384 = pneg %p383
    // Predicated region
    $region9: #{_lambda_.4} parent=5 // pred_check
      _
    $region10: #{_lambda_.4} parent=5 // pred_check_branch
      %386 = sbr.rel (%p383) target = $region12
    $region11: #{_lambda_.4} parent=5 // pred_region
      %s387 = ssub.s32 %s19, 1
      // Predicated region
      $region13: #{_lambda_.4} parent=11 // pred_check
        %p388 = pneg %p40
      $region14: #{_lambda_.4} parent=11 // pred_check_branch
        %390 = sbr.rel (%p388) target = $region16
      $region15: #{_lambda_.4} parent=11 // pred_region
        _
      $region16: #{_lambda_.4} parent=11 // pred_fallthru
        _
    $region12: #{_lambda_.4} parent=5 // pred_fallthru
      _
    %p391 = scmp.lt.s32.totalorder %s19, 2
    // Predicated region
    $region17: #{_lambda_.4} parent=5 // pred_check
      %p392 = pneg %p391
    $region18: #{_lambda_.4} parent=5 // pred_check_branch
      %394 = sbr.rel (%p392) target = $region20
    $region19: #{_lambda_.4} parent=5 // pred_region
      // Predicated region
      $region21: #{_lambda_.4} parent=19 // pred_check
        %p395 = pneg %p60
      $region22: #{_lambda_.4} parent=19 // pred_check_branch
        %397 = sbr.rel (%p395) target = $region24
      $region23: #{_lambda_.4} parent=19 // pred_region
        %p398 = scmp.lt.s32.totalorder %s19, 1
        %s399 = scalar_select %p398, %s19, 1
        %s400 = scalar_lea.vmem %s1, %s399
      $region24: #{_lambda_.4} parent=19 // pred_fallthru
        _
      // Predicated region
      $region25: #{_lambda_.4} parent=19 // pred_check
        %p401 = pneg %p86
      $region26: #{_lambda_.4} parent=19 // pred_check_branch
        %403 = sbr.rel (%p401) target = $region28
      $region27: #{_lambda_.4} parent=19 // pred_region
        %p404 = scmp.lt.s32.totalorder %s19, 1
        %s405 = scalar_select %p404, %s19, 1
        %s406 = scalar_lea.vmem %s2, %s405
      $region28: #{_lambda_.4} parent=19 // pred_fallthru
        _
      // Predicated region
      $region29: #{_lambda_.4} parent=19 // pred_check
        %p407 = pneg %p112
      $region30: #{_lambda_.4} parent=19 // pred_check_branch
        %409 = sbr.rel (%p407) target = $region32
      $region31: #{_lambda_.4} parent=19 // pred_region
        %p410 = scmp.lt.s32.totalorder %s19, 1
        %s411 = scalar_select %p410, %s19, 1
        %s412 = smul.addr %s411, 48
        %s413 = smul.addr %s412, 4
        %s414 = scalar_lea.vmem %s3, %s413
      $region32: #{_lambda_.4} parent=19 // pred_fallthru
        _
      // Predicated region
      $region33: #{_lambda_.4} parent=19 // pred_check
        %p415 = pneg %p138
      $region34: #{_lambda_.4} parent=19 // pred_check_branch
        %417 = sbr.rel (%p415) target = $region36
      $region35: #{_lambda_.4} parent=19 // pred_region
        %p418 = scmp.lt.s32.totalorder %s19, 1
        %s419 = scalar_select %p418, %s19, 1
        %s420 = smul.addr %s419, 3
        %s421 = scalar_lea.vmem %s4, %s420
      $region36: #{_lambda_.4} parent=19 // pred_fallthru
        _
      // Predicated region
      $region37: #{_lambda_.4} parent=19 // pred_check
        %p422 = pneg %p164
      $region38: #{_lambda_.4} parent=19 // pred_check_branch
        %424 = sbr.rel (%p422) target = $region40
      $region39: #{_lambda_.4} parent=19 // pred_region
        %p425 = scmp.lt.s32.totalorder %s19, 1
        %s426 = scalar_select %p425, %s19, 1
        %s427 = smul.addr %s426, 16
        %s428 = smul.addr %s427, 4
        %s429 = scalar_lea.vmem %s5, %s428
      $region40: #{_lambda_.4} parent=19 // pred_fallthru
        _
      // Predicated region
      $region41: #{_lambda_.4} parent=19 // pred_check
        %p430 = pneg %p190
      $region42: #{_lambda_.4} parent=19 // pred_check_branch
        %432 = sbr.rel (%p430) target = $region44
      $region43: #{_lambda_.4} parent=19 // pred_region
        %p433 = scmp.lt.s32.totalorder %s19, 1
        %s434 = scalar_select %p433, %s19, 1
        %s435 = scalar_lea.vmem %s6, %s434
      $region44: #{_lambda_.4} parent=19 // pred_fallthru
        _
      // Predicated region
      $region45: #{_lambda_.4} parent=19 // pred_check
        %p436 = pneg %p216
      $region46: #{_lambda_.4} parent=19 // pred_check_branch
        %438 = sbr.rel (%p436) target = $region48
      $region47: #{_lambda_.4} parent=19 // pred_region
        %p439 = scmp.lt.s32.totalorder %s19, 1
        %s440 = scalar_select %p439, %s19, 1
        %s441 = scalar_lea.vmem %s7, %s440
      $region48: #{_lambda_.4} parent=19 // pred_fallthru
        _
      // Predicated region
      $region49: #{_lambda_.4} parent=19 // pred_check
        %p442 = pneg %p242
      $region50: #{_lambda_.4} parent=19 // pred_check_branch
        %444 = sbr.rel (%p442) target = $region52
      $region51: #{_lambda_.4} parent=19 // pred_region
        %p445 = scmp.lt.s32.totalorder %s19, 1
        %s446 = scalar_select %p445, %s19, 1
        %s447 = scalar_lea.vmem %s8, %s446
      $region52: #{_lambda_.4} parent=19 // pred_fallthru
        _
      // Predicated region
      $region53: #{_lambda_.4} parent=19 // pred_check
        %p448 = pneg %p268
      $region54: #{_lambda_.4} parent=19 // pred_check_branch
        %450 = sbr.rel (%p448) target = $region56
      $region55: #{_lambda_.4} parent=19 // pred_region
        %p451 = scmp.lt.s32.totalorder %s19, 1
        %s452 = scalar_select %p451, %s19, 1
        %s453 = smul.addr %s452, 64
        %s454 = smul.addr %s453, 4
        %s455 = scalar_lea.vmem %s9, %s454
      $region56: #{_lambda_.4} parent=19 // pred_fallthru
        _
      // Predicated region
      $region57: #{_lambda_.4} parent=19 // pred_check
        %p456 = pneg %p294
      $region58: #{_lambda_.4} parent=19 // pred_check_branch
        %458 = sbr.rel (%p456) target = $region60
      $region59: #{_lambda_.4} parent=19 // pred_region
        %p459 = scmp.lt.s32.totalorder %s19, 1
        %s460 = scalar_select %p459, %s19, 1
        %s461 = smul.addr %s460, 4
        %s462 = scalar_lea.vmem %s10, %s461
      $region60: #{_lambda_.4} parent=19 // pred_fallthru
        _
      // Predicated region
      $region61: #{_lambda_.4} parent=19 // pred_check
        %p463 = pneg %p320
      $region62: #{_lambda_.4} parent=19 // pred_check_branch
        %465 = sbr.rel (%p463) target = $region64
      $region63: #{_lambda_.4} parent=19 // pred_region
        %p466 = scmp.lt.s32.totalorder %s19, 1
        %s467 = scalar_select %p466, %s19, 1
        %s468 = smul.addr %s467, 64
        %s469 = smul.addr %s468, 4
        %s470 = scalar_lea.vmem %s11, %s469
      $region64: #{_lambda_.4} parent=19 // pred_fallthru
        _
      // Predicated region
      $region65: #{_lambda_.4} parent=19 // pred_check
        %p471 = pneg %p346
      $region66: #{_lambda_.4} parent=19 // pred_check_branch
        %473 = sbr.rel (%p471) target = $region68
      $region67: #{_lambda_.4} parent=19 // pred_region
        %p474 = scmp.lt.s32.totalorder %s19, 1
        %s475 = scalar_select %p474, %s19, 1
        %s476 = scalar_lea.vmem %s12, %s475
      $region68: #{_lambda_.4} parent=19 // pred_fallthru
        _
    $region20: #{_lambda_.4} parent=5 // pred_fallthru
      _
    %p477 = scmp.le.s32.totalorder 1, %s19
    %p478 = scmp.lt.s32.totalorder %s19, 3
    %p479 = pnand %p477, %p478
    %p480 = pneg %p479
    // Predicated region
    $region69: #{_lambda_.4} parent=5 // pred_check
      _
    $region70: #{_lambda_.4} parent=5 // pred_check_branch
      %482 = sbr.rel (%p479) target = $region72
    $region71: #{_lambda_.4} parent=5 // pred_region
      %s483 = ssub.s32 %s19, 1
      %p484 = pneg %p40
      %p485 = pneg %p37
      %p486 = scmp.lt.s32.totalorder %s24, 1
      %s487 = scalar_select %p486, %s24, 1
      %s488 = scalar_lea.vmem %s1, %s487
      %p489 = pneg %p66
      %p490 = pneg %p63
      %p491 = scmp.lt.s32.totalorder %s24, 1
      %s492 = scalar_select %p491, %s24, 1
      %s493 = scalar_lea.vmem %s2, %s492
      %p494 = pneg %p92
      %p495 = pneg %p89
      %p496 = scmp.lt.s32.totalorder %s24, 1
      %s497 = scalar_select %p496, %s24, 1
      %s498 = smul.addr %s497, 48
      %s499 = smul.addr %s498, 4
      %s500 = scalar_lea.vmem %s3, %s499
      %p501 = pneg %p118
      %p502 = pneg %p115
      %p503 = scmp.lt.s32.totalorder %s24, 1
      %s504 = scalar_select %p503, %s24, 1
      %s505 = smul.addr %s504, 3
      %s506 = scalar_lea.vmem %s4, %s505
      %p507 = pneg %p144
      %p508 = pneg %p141
      %p509 = scmp.lt.s32.totalorder %s24, 1
      %s510 = scalar_select %p509, %s24, 1
      %s511 = smul.addr %s510, 16
      %s512 = smul.addr %s511, 4
      %s513 = scalar_lea.vmem %s5, %s512
      %p514 = pneg %p170
      %p515 = pneg %p167
      %p516 = scmp.lt.s32.totalorder %s24, 1
      %s517 = scalar_select %p516, %s24, 1
      %s518 = scalar_lea.vmem %s6, %s517
      %p519 = pneg %p196
      %p520 = pneg %p193
      %p521 = scmp.lt.s32.totalorder %s24, 1
      %s522 = scalar_select %p521, %s24, 1
      %s523 = scalar_lea.vmem %s7, %s522
      %p524 = pneg %p222
      %p525 = pneg %p219
      %p526 = scmp.lt.s32.totalorder %s24, 1
      %s527 = scalar_select %p526, %s24, 1
      %s528 = scalar_lea.vmem %s8, %s527
      %p529 = pneg %p248
      %p530 = pneg %p245
      %p531 = scmp.lt.s32.totalorder %s24, 1
      %s532 = scalar_select %p531, %s24, 1
      %s533 = smul.addr %s532, 64
      %s534 = smul.addr %s533, 4
      %s535 = scalar_lea.vmem %s9, %s534
      %p536 = pneg %p274
      %p537 = pneg %p271
      %p538 = scmp.lt.s32.totalorder %s24, 1
      %s539 = scalar_select %p538, %s24, 1
      %s540 = smul.addr %s539, 4
      %s541 = scalar_lea.vmem %s10, %s540
      %p542 = pneg %p300
      %p543 = pneg %p297
      %p544 = scmp.lt.s32.totalorder %s24, 1
      %s545 = scalar_select %p544, %s24, 1
      %s546 = smul.addr %s545, 64
      %s547 = smul.addr %s546, 4
      %s548 = scalar_lea.vmem %s11, %s547
      %p549 = pneg %p326
      %p550 = pneg %p323
      %p551 = scmp.lt.s32.totalorder %s24, 1
      %s552 = scalar_select %p551, %s24, 1
      %s553 = scalar_lea.vmem %s12, %s552
      %p554 = pneg %p352
      %p555 = pneg %p349
      %p556 = pneg %p373
      %p557 = pneg %p370
      %p558 = scmp.lt.s32.totalorder %s24, 1
      %s559 = scalar_select %p558, %s24, 1
      %s560 = scalar_lea.vmem %s1, %s559
      %p561 = scmp.lt.s32.totalorder %s24, 1
      %s562 = scalar_select %p561, %s24, 1
      %s563 = scalar_lea.vmem %s2, %s562
      %p564 = scmp.lt.s32.totalorder %s24, 1
      %s565 = scalar_select %p564, %s24, 1
      %s566 = smul.addr %s565, 48
      %s567 = smul.addr %s566, 4
      %s568 = scalar_lea.vmem %s3, %s567
      %p569 = scmp.lt.s32.totalorder %s24, 1
      %s570 = scalar_select %p569, %s24, 1
      %s571 = smul.addr %s570, 3
      %s572 = scalar_lea.vmem %s4, %s571
      %p573 = scmp.lt.s32.totalorder %s24, 1
      %s574 = scalar_select %p573, %s24, 1
      %s575 = smul.addr %s574, 16
      %s576 = smul.addr %s575, 4
      %s577 = scalar_lea.vmem %s5, %s576
      %p578 = scmp.lt.s32.totalorder %s24, 1
      %s579 = scalar_select %p578, %s24, 1
      %s580 = scalar_lea.vmem %s6, %s579
      %p581 = scmp.lt.s32.totalorder %s24, 1
      %s582 = scalar_select %p581, %s24, 1
      %s583 = scalar_lea.vmem %s7, %s582
      %p584 = scmp.lt.s32.totalorder %s24, 1
      %s585 = scalar_select %p584, %s24, 1
      %s586 = scalar_lea.vmem %s8, %s585
      %p587 = scmp.lt.s32.totalorder %s24, 1
      %s588 = scalar_select %p587, %s24, 1
      %s589 = smul.addr %s588, 64
      %s590 = smul.addr %s589, 4
      %s591 = scalar_lea.vmem %s9, %s590
      %p592 = scmp.lt.s32.totalorder %s24, 1
      %s593 = scalar_select %p592, %s24, 1
      %s594 = smul.addr %s593, 4
      %s595 = scalar_lea.vmem %s10, %s594
      %p596 = scmp.lt.s32.totalorder %s24, 1
      %s597 = scalar_select %p596, %s24, 1
      %s598 = smul.addr %s597, 64
      %s599 = smul.addr %s598, 4
      %s600 = scalar_lea.vmem %s11, %s599
      %p601 = scmp.lt.s32.totalorder %s24, 1
      %s602 = scalar_select %p601, %s24, 1
      %s603 = scalar_lea.vmem %s12, %s602
      %p605 = scmp.eq.s32.totalorder %s24, 0
      // Predicated region
      $region73: #{_lambda_.4} parent=71 // pred_check
        %p606 = pneg %p605
      $region74: #{_lambda_.4} parent=71 // pred_check_branch
        %608 = sbr.rel (%p606) target = $region76
      $region75: #{_lambda_.4} parent=71 // pred_region
        %v609 = vld [vmem:[%s0] sm:$0x1f]
        %v610 = vld [vmem:[%s0 + $0x8] sm:$0x1f]
        %611 = vst [vmem:[%s13] sm:$0x1f] %v609
        %612 = vst [vmem:[%s13 + $0x8] sm:$0x1f] %v610
      $region76: #{_lambda_.4} parent=71 // pred_fallthru
        _
      %v613 = vld [vmem:[%s560] sm:$0x1]
      %v614 = vld [vmem:[%s563] sm:$0x1]
      %v615 = vld [vmem:[%s568] sm:$0xff]
      %v616 = vld [vmem:[%s568 + $0x8] sm:$0xf]
      %v617 = vld [vmem:[%s568 + $0xc] sm:$0xff]
      %v618 = vld [vmem:[%s568 + $0x14] sm:$0xf]
      %v619 = vld [vmem:[%s568 + $0x18] sm:$0xff]
      %v620 = vld [vmem:[%s568 + $0x20] sm:$0xf]
      %v621 = vld [vmem:[%s568 + $0x24] sm:$0xff]
      %v622 = vld [vmem:[%s568 + $0x2c] sm:$0xf]
      %v623 = vld [vmem:[%s568 + $0x30] sm:$0xff]
      %v624 = vld [vmem:[%s568 + $0x38] sm:$0xf]
      %v625 = vld [vmem:[%s568 + $0x3c] sm:$0xff]
      %v626 = vld [vmem:[%s568 + $0x44] sm:$0xf]
      %v627 = vld [vmem:[%s568 + $0x48] sm:$0xff]
      %v628 = vld [vmem:[%s568 + $0x50] sm:$0xf]
      %v629 = vld [vmem:[%s568 + $0x54] sm:$0xff]
      %v630 = vld [vmem:[%s568 + $0x5c] sm:$0xf]
      %v631 = vld [vmem:[%s568 + $0x60] sm:$0xff]
      %v632 = vld [vmem:[%s568 + $0x68] sm:$0xf]
      %v633 = vld [vmem:[%s568 + $0x6c] sm:$0xff]
      %v634 = vld [vmem:[%s568 + $0x74] sm:$0xf]
      %v635 = vld [vmem:[%s568 + $0x78] sm:$0xff]
      %v636 = vld [vmem:[%s568 + $0x80] sm:$0xf]
      %v637 = vld [vmem:[%s568 + $0x84] sm:$0xff]
      %v638 = vld [vmem:[%s568 + $0x8c] sm:$0xf]
      %v639 = vld [vmem:[%s568 + $0x90] sm:$0xff]
      %v640 = vld [vmem:[%s568 + $0x98] sm:$0xf]
      %v641 = vld [vmem:[%s568 + $0x9c] sm:$0xff]
      %v642 = vld [vmem:[%s568 + $0xa4] sm:$0xf]
      %v643 = vld [vmem:[%s568 + $0xa8] sm:$0xff]
      %v644 = vld [vmem:[%s568 + $0xb0] sm:$0xf]
      %v645 = vld [vmem:[%s568 + $0xb4] sm:$0xff]
      %v646 = vld [vmem:[%s568 + $0xbc] sm:$0xf]
      %v647 = vld [vmem:[%s572] sm:$0x7]
      %v648 = vld [vmem:[%s577] sm:$0xf]
      %v649 = vld [vmem:[%s577 + $0x4] sm:$0xf]
      %v650 = vld [vmem:[%s577 + $0x8] sm:$0xf]
      %v651 = vld [vmem:[%s577 + $0xc] sm:$0xf]
      %v652 = vld [vmem:[%s577 + $0x10] sm:$0xf]
      %v653 = vld [vmem:[%s577 + $0x14] sm:$0xf]
      %v654 = vld [vmem:[%s577 + $0x18] sm:$0xf]
      %v655 = vld [vmem:[%s577 + $0x1c] sm:$0xf]
      %v656 = vld [vmem:[%s577 + $0x20] sm:$0xf]
      %v657 = vld [vmem:[%s577 + $0x24] sm:$0xf]
      %v658 = vld [vmem:[%s577 + $0x28] sm:$0xf]
      %v659 = vld [vmem:[%s577 + $0x2c] sm:$0xf]
      %v660 = vld [vmem:[%s577 + $0x30] sm:$0xf]
      %v661 = vld [vmem:[%s577 + $0x34] sm:$0xf]
      %v662 = vld [vmem:[%s577 + $0x38] sm:$0xf]
      %v663 = vld [vmem:[%s577 + $0x3c] sm:$0xf]
      %v664 = vld [vmem:[%s580] sm:$0x1]
      %v665 = vld [vmem:[%s583] sm:$0x1]
      %v666 = vld [vmem:[%s586] sm:$0x1]
      %v667 = vld [vmem:[%s591] sm:$0xff]
      %v668 = vld [vmem:[%s591 + $0x8] sm:$0xff]
      %v669 = vld [vmem:[%s591 + $0x10] sm:$0xff]
      %v670 = vld [vmem:[%s591 + $0x18] sm:$0xff]
      %v671 = vld [vmem:[%s591 + $0x20] sm:$0xff]
      %v672 = vld [vmem:[%s591 + $0x28] sm:$0xff]
      %v673 = vld [vmem:[%s591 + $0x30] sm:$0xff]
      %v674 = vld [vmem:[%s591 + $0x38] sm:$0xff]
      %v675 = vld [vmem:[%s591 + $0x40] sm:$0xff]
      %v676 = vld [vmem:[%s591 + $0x48] sm:$0xff]
      %v677 = vld [vmem:[%s591 + $0x50] sm:$0xff]
      %v678 = vld [vmem:[%s591 + $0x58] sm:$0xff]
      %v679 = vld [vmem:[%s591 + $0x60] sm:$0xff]
      %v680 = vld [vmem:[%s591 + $0x68] sm:$0xff]
      %v681 = vld [vmem:[%s591 + $0x70] sm:$0xff]
      %v682 = vld [vmem:[%s591 + $0x78] sm:$0xff]
      %v683 = vld [vmem:[%s591 + $0x80] sm:$0xff]
      %v684 = vld [vmem:[%s591 + $0x88] sm:$0xff]
      %v685 = vld [vmem:[%s591 + $0x90] sm:$0xff]
      %v686 = vld [vmem:[%s591 + $0x98] sm:$0xff]
      %v687 = vld [vmem:[%s591 + $0xa0] sm:$0xff]
      %v688 = vld [vmem:[%s591 + $0xa8] sm:$0xff]
      %v689 = vld [vmem:[%s591 + $0xb0] sm:$0xff]
      %v690 = vld [vmem:[%s591 + $0xb8] sm:$0xff]
      %v691 = vld [vmem:[%s591 + $0xc0] sm:$0xff]
      %v692 = vld [vmem:[%s591 + $0xc8] sm:$0xff]
      %v693 = vld [vmem:[%s591 + $0xd0] sm:$0xff]
      %v694 = vld [vmem:[%s591 + $0xd8] sm:$0xff]
      %v695 = vld [vmem:[%s591 + $0xe0] sm:$0xff]
      %v696 = vld [vmem:[%s591 + $0xe8] sm:$0xff]
      %v697 = vld [vmem:[%s591 + $0xf0] sm:$0xff]
      %v698 = vld [vmem:[%s591 + $0xf8] sm:$0xff]
      %v699 = vld [vmem:[%s595] sm:$0xf]
      %v700 = vld [vmem:[%s600] sm:$0xf]
      %v701 = vld [vmem:[%s600 + $0x4] sm:$0xf]
      %v702 = vld [vmem:[%s600 + $0x8] sm:$0xf]
      %v703 = vld [vmem:[%s600 + $0xc] sm:$0xf]
      %v704 = vld [vmem:[%s600 + $0x10] sm:$0xf]
      %v705 = vld [vmem:[%s600 + $0x14] sm:$0xf]
      %v706 = vld [vmem:[%s600 + $0x18] sm:$0xf]
      %v707 = vld [vmem:[%s600 + $0x1c] sm:$0xf]
      %v708 = vld [vmem:[%s600 + $0x20] sm:$0xf]
      %v709 = vld [vmem:[%s600 + $0x24] sm:$0xf]
      %v710 = vld [vmem:[%s600 + $0x28] sm:$0xf]
      %v711 = vld [vmem:[%s600 + $0x2c] sm:$0xf]
      %v712 = vld [vmem:[%s600 + $0x30] sm:$0xf]
      %v713 = vld [vmem:[%s600 + $0x34] sm:$0xf]
      %v714 = vld [vmem:[%s600 + $0x38] sm:$0xf]
      %v715 = vld [vmem:[%s600 + $0x3c] sm:$0xf]
      %v716 = vld [vmem:[%s600 + $0x40] sm:$0xf]
      %v717 = vld [vmem:[%s600 + $0x44] sm:$0xf]
      %v718 = vld [vmem:[%s600 + $0x48] sm:$0xf]
      %v719 = vld [vmem:[%s600 + $0x4c] sm:$0xf]
      %v720 = vld [vmem:[%s600 + $0x50] sm:$0xf]
      %v721 = vld [vmem:[%s600 + $0x54] sm:$0xf]
      %v722 = vld [vmem:[%s600 + $0x58] sm:$0xf]
      %v723 = vld [vmem:[%s600 + $0x5c] sm:$0xf]
      %v724 = vld [vmem:[%s600 + $0x60] sm:$0xf]
      %v725 = vld [vmem:[%s600 + $0x64] sm:$0xf]
      %v726 = vld [vmem:[%s600 + $0x68] sm:$0xf]
      %v727 = vld [vmem:[%s600 + $0x6c] sm:$0xf]
      %v728 = vld [vmem:[%s600 + $0x70] sm:$0xf]
      %v729 = vld [vmem:[%s600 + $0x74] sm:$0xf]
      %v730 = vld [vmem:[%s600 + $0x78] sm:$0xf]
      %v731 = vld [vmem:[%s600 + $0x7c] sm:$0xf]
      %v732 = vld [vmem:[%s600 + $0x80] sm:$0xf]
      %v733 = vld [vmem:[%s600 + $0x84] sm:$0xf]
      %v734 = vld [vmem:[%s600 + $0x88] sm:$0xf]
      %v735 = vld [vmem:[%s600 + $0x8c] sm:$0xf]
      %v736 = vld [vmem:[%s600 + $0x90] sm:$0xf]
      %v737 = vld [vmem:[%s600 + $0x94] sm:$0xf]
      %v738 = vld [vmem:[%s600 + $0x98] sm:$0xf]
      %v739 = vld [vmem:[%s600 + $0x9c] sm:$0xf]
      %v740 = vld [vmem:[%s600 + $0xa0] sm:$0xf]
      %v741 = vld [vmem:[%s600 + $0xa4] sm:$0xf]
      %v742 = vld [vmem:[%s600 + $0xa8] sm:$0xf]
      %v743 = vld [vmem:[%s600 + $0xac] sm:$0xf]
      %v744 = vld [vmem:[%s600 + $0xb0] sm:$0xf]
      %v745 = vld [vmem:[%s600 + $0xb4] sm:$0xf]
      %v746 = vld [vmem:[%s600 + $0xb8] sm:$0xf]
      %v747 = vld [vmem:[%s600 + $0xbc] sm:$0xf]
      %v748 = vld [vmem:[%s600 + $0xc0] sm:$0xf]
      %v749 = vld [vmem:[%s600 + $0xc4] sm:$0xf]
      %v750 = vld [vmem:[%s600 + $0xc8] sm:$0xf]
      %v751 = vld [vmem:[%s600 + $0xcc] sm:$0xf]
      %v752 = vld [vmem:[%s600 + $0xd0] sm:$0xf]
      %v753 = vld [vmem:[%s600 + $0xd4] sm:$0xf]
      %v754 = vld [vmem:[%s600 + $0xd8] sm:$0xf]
      %v755 = vld [vmem:[%s600 + $0xdc] sm:$0xf]
      %v756 = vld [vmem:[%s600 + $0xe0] sm:$0xf]
      %v757 = vld [vmem:[%s600 + $0xe4] sm:$0xf]
      %v758 = vld [vmem:[%s600 + $0xe8] sm:$0xf]
      %v759 = vld [vmem:[%s600 + $0xec] sm:$0xf]
      %v760 = vld [vmem:[%s600 + $0xf0] sm:$0xf]
      %v761 = vld [vmem:[%s600 + $0xf4] sm:$0xf]
      %v762 = vld [vmem:[%s600 + $0xf8] sm:$0xf]
      %v763 = vld [vmem:[%s600 + $0xfc] sm:$0xf]
      %v764 = vld [vmem:[%s603] sm:$0x1]
      %v765 = vld [vmem:[%s13] sm:$0x1f]
      %vm766 = vcmask 1044480
      %v767 = vsel %vm766, %v765, 0.0
      %768 = vadd.xlane.f32.xlu0 %v767
      %v769 = vpop.xlane.xlu0 %768
      %v770 = vrcp.pop 128.0
      %v771 = vmul.f32 %v769, %v770
      %v772 = vsub.f32 %v765, %v771
      %v773 = vmul.f32 %v772, %v772
      %v774 = vsel %vm766, %v773, 0.0
      %775 = vadd.xlane.f32.xlu0 %v774
      %v776 = vpop.xlane.xlu0 %775
      %v777 = vmul.f32 %v776, %v770
      %v778 = vadd.f32 %v777, 1e-05
      %v779 = vrsqrt.pop %v778
      %v780 = vmul.f32 %v772, %v779
      %v782 = vlaneseq
      %v783 = vshrl.u32 %v782, 7
      %v784 = vsub.s32 0, %v783
      %v785 = vrot.slane %v613, %v784
      %v787 = vmul.f32 %v780, %v785
      %v789 = vlaneseq
      %v790 = vshrl.u32 %v789, 7
      %v791 = vsub.s32 0, %v790
      %v792 = vrot.slane %v614, %v791
      %v794 = vadd.f32 %v787, %v792
      %v795 = vpack.c.bf16 %v794, %v794
      %v797 = vlaneseq
      %v798 = vshrl.u32 %v797, 7
      %v799 = vsub.s32 0, %v798
      %v800 = vrot.slane %v647, %v799
      %v801 = vlaneseq
      %v802 = vshrl.u32 %v801, 7
      %v803 = vsub.s32 1, %v802
      %v804 = vrot.slane %v647, %v803
      %v805 = vlaneseq
      %v806 = vshrl.u32 %v805, 7
      %v807 = vsub.s32 2, %v806
      %v808 = vrot.slane %v647, %v807
      %v844 = vunpack.c.l.b16 %v615
      %v845 = vunpack.c.h.b16 %v615
      %v846 = vunpack.c.l.b16 %v616
      %v847 = vunpack.c.l.b16 %v617
      %v848 = vunpack.c.h.b16 %v617
      %v849 = vunpack.c.l.b16 %v618
      %v850 = vunpack.c.l.b16 %v619
      %v851 = vunpack.c.h.b16 %v619
      %v852 = vunpack.c.l.b16 %v620
      %v853 = vunpack.c.l.b16 %v621
      %v854 = vunpack.c.h.b16 %v621
      %v855 = vunpack.c.l.b16 %v622
      %v856 = vunpack.c.l.b16 %v623
      %v857 = vunpack.c.h.b16 %v623
      %v858 = vunpack.c.l.b16 %v624
      %v859 = vunpack.c.l.b16 %v625
      %v860 = vunpack.c.h.b16 %v625
      %v861 = vunpack.c.l.b16 %v626
      %v862 = vunpack.c.l.b16 %v627
      %v863 = vunpack.c.h.b16 %v627
      %v864 = vunpack.c.l.b16 %v628
      %v865 = vunpack.c.l.b16 %v629
      %v866 = vunpack.c.h.b16 %v629
      %v867 = vunpack.c.l.b16 %v630
      %v868 = vunpack.c.l.b16 %v631
      %v869 = vunpack.c.h.b16 %v631
      %v870 = vunpack.c.l.b16 %v632
      %v871 = vunpack.c.l.b16 %v633
      %v872 = vunpack.c.h.b16 %v633
      %v873 = vunpack.c.l.b16 %v634
      %v874 = vunpack.c.l.b16 %v635
      %v875 = vunpack.c.h.b16 %v635
      %v876 = vunpack.c.l.b16 %v636
      %v877 = vunpack.c.l.b16 %v637
      %v878 = vunpack.c.h.b16 %v637
      %v879 = vunpack.c.l.b16 %v638
      %v880 = vunpack.c.l.b16 %v639
      %v881 = vunpack.c.h.b16 %v639
      %v882 = vunpack.c.l.b16 %v640
      %v883 = vunpack.c.l.b16 %v641
      %v884 = vunpack.c.h.b16 %v641
      %v885 = vunpack.c.l.b16 %v642
      %v886 = vunpack.c.l.b16 %v643
      %v887 = vunpack.c.h.b16 %v643
      %v888 = vunpack.c.l.b16 %v644
      %v889 = vunpack.c.l.b16 %v645
      %v890 = vunpack.c.h.b16 %v645
      %v891 = vunpack.c.l.b16 %v646
      %v892 = vpack.c.b16 %v847, %v844
      %v893 = vpack.c.b16 %v848, %v845
      %v894 = vpack.c.b16 %v849, %v846
      %v895 = vpack.c.b16 %v853, %v850
      %v896 = vpack.c.b16 %v854, %v851
      %v897 = vpack.c.b16 %v855, %v852
      %v898 = vpack.c.b16 %v859, %v856
      %v899 = vpack.c.b16 %v860, %v857
      %v900 = vpack.c.b16 %v861, %v858
      %v901 = vpack.c.b16 %v865, %v862
      %v902 = vpack.c.b16 %v866, %v863
      %v903 = vpack.c.b16 %v867, %v864
      %v904 = vpack.c.b16 %v871, %v868
      %v905 = vpack.c.b16 %v872, %v869
      %v906 = vpack.c.b16 %v873, %v870
      %v907 = vpack.c.b16 %v877, %v874
      %v908 = vpack.c.b16 %v878, %v875
      %v909 = vpack.c.b16 %v879, %v876
      %v910 = vpack.c.b16 %v883, %v880
      %v911 = vpack.c.b16 %v884, %v881
      %v912 = vpack.c.b16 %v885, %v882
      %v913 = vpack.c.b16 %v889, %v886
      %v914 = vpack.c.b16 %v890, %v887
      %v915 = vpack.c.b16 %v891, %v888
      %940 = vmatprep.subr.bf16.mxu0 %v893
      %941 = vmatpush1.bf16.msra.mxu0 %v892
      %942 = vmatprep.subr.bf16.mxu0 %v896
      %943 = vmatpush1.bf16.msra.mxu0 %v895
      %944 = vmatprep.subr.bf16.mxu0 %v899
      %945 = vmatpush1.bf16.msra.mxu0 %v898
      %946 = vmatprep.subr.bf16.mxu0 %v902
      %947 = vmatpush1.bf16.msra.mxu0 %v901
      %948 = vmatprep.subr.bf16.mxu0 %v905
      %949 = vmatpush1.bf16.msra.mxu0 %v904
      %950 = vmatprep.subr.bf16.mxu0 %v908
      %951 = vmatpush1.bf16.msra.mxu0 %v907
      %952 = vmatprep.subr.bf16.mxu0 %v911
      %953 = vmatpush1.bf16.msra.mxu0 %v910
      %954 = vmatprep.subr.bf16.mxu0 %v914
      %955 = vmatpush1.bf16.msra.mxu0 %v913
      %956 = vmatprep.subr.bf16.mxu0 0
      %957 = vmatpush1.bf16.msra.mxu0 0
      %958 = vmatprep.subr.bf16.mxu0 0
      %959 = vmatpush1.bf16.msra.mxu0 0
      %960 = vmatprep.subr.bf16.mxu0 0
      %961 = vmatpush1.bf16.msra.mxu0 0
      %962 = vmatprep.subr.bf16.mxu0 0
      %963 = vmatpush1.bf16.msra.mxu0 0
      %964 = vmatprep.subr.bf16.mxu0 0
      %965 = vmatpush1.bf16.msra.mxu0 0
      %966 = vmatprep.subr.bf16.mxu0 0
      %967 = vmatpush1.bf16.msra.mxu0 0
      %968 = vmatprep.subr.bf16.mxu0 0
      %969 = vmatpush1.bf16.msra.mxu0 0
      %970 = vmatprep.subr.bf16.mxu0 0
      %971 = vmatpush1.bf16.msra.mxu0 0
      %972 = vmatprep.mubr.bf16.mxu0 0
      %973 = vmatmul.mubr.bf16.gmra.mrb[0].mxu0 %v795
      %v974 = vpop.f32.mrb[0].mxu0
      %v975 = vadd.f32 %v800, %v974
      %v976 = vpop.f32.mrb[0].mxu0
      %v977 = vadd.f32 %v804, %v976
      %v978 = vpop.f32.mrb[0].mxu0
      %v979 = vpop.f32.mrb[0].mxu0
      %980 = vdwg.mxu0
      %981 = vmatprep.subr.bf16.mxu0 0
      %982 = vmatpush1.bf16.msra.mxu0 %v894
      %983 = vmatprep.subr.bf16.mxu0 0
      %984 = vmatpush1.bf16.msra.mxu0 %v897
      %985 = vmatprep.subr.bf16.mxu0 0
      %986 = vmatpush1.bf16.msra.mxu0 %v900
      %987 = vmatprep.subr.bf16.mxu0 0
      %988 = vmatpush1.bf16.msra.mxu0 %v903
      %989 = vmatprep.subr.bf16.mxu0 0
      %990 = vmatpush1.bf16.msra.mxu0 %v906
      %991 = vmatprep.subr.bf16.mxu0 0
      %992 = vmatpush1.bf16.msra.mxu0 %v909
      %993 = vmatprep.subr.bf16.mxu0 0
      %994 = vmatpush1.bf16.msra.mxu0 %v912
      %995 = vmatprep.subr.bf16.mxu0 0
      %996 = vmatpush1.bf16.msra.mxu0 %v915
      %997 = vmatprep.subr.bf16.mxu0 0
      %998 = vmatpush1.bf16.msra.mxu0 0
      %999 = vmatprep.subr.bf16.mxu0 0
      %1000 = vmatpush1.bf16.msra.mxu0 0
      %1001 = vmatprep.subr.bf16.mxu0 0
      %1002 = vmatpush1.bf16.msra.mxu0 0
      %1003 = vmatprep.subr.bf16.mxu0 0
      %1004 = vmatpush1.bf16.msra.mxu0 0
      %1005 = vmatprep.subr.bf16.mxu0 0
      %1006 = vmatpush1.bf16.msra.mxu0 0
      %1007 = vmatprep.subr.bf16.mxu0 0
      %1008 = vmatpush1.bf16.msra.mxu0 0
      %1009 = vmatprep.subr.bf16.mxu0 0
      %1010 = vmatpush1.bf16.msra.mxu0 0
      %1011 = vmatprep.subr.bf16.mxu0 0
      %1012 = vmatpush1.bf16.msra.mxu0 0
      %1013 = vmatprep.mubr.bf16.mxu0 0
      %1014 = vmatmul.mubr.bf16.gmra.mrb[0].mxu0 %v795
      %v1015 = vpop.f32.mrb[0].mxu0
      %v1016 = vadd.f32 %v808, %v1015
      %v1017 = vpop.f32.mrb[0].mxu0
      %v1018 = vpop.f32.mrb[0].mxu0
      %v1019 = vpop.f32.mrb[0].mxu0
      %1020 = vdwg.mxu0
      %v1021 = vpack.c.bf16 %v975, %v975
      %v1022 = vpack.c.bf16 %v977, %v977
      %v1023 = vpack.c.bf16 %v1016, %v1016
      %1025 = vrot.lane.b32.xlu0 %v1021, 96
      %v1026 = vpop.permute.xlu0 %1025
      %1027 = vrot.lane.b32.xlu0 %v1021, 64
      %v1028 = vpop.permute.xlu0 %1027
      %1029 = vrot.lane.b32.xlu0 %v1021, 32
      %v1030 = vpop.permute.xlu0 %1029
      %1032 = vrot.lane.b32.xlu0 %v1022, 96
      %v1033 = vpop.permute.xlu0 %1032
      %1034 = vrot.lane.b32.xlu0 %v1022, 64
      %v1035 = vpop.permute.xlu0 %1034
      %1036 = vrot.lane.b32.xlu0 %v1022, 32
      %v1037 = vpop.permute.xlu0 %1036
      %1039 = vrot.lane.b32.xlu0 %v1023, 96
      %v1040 = vpop.permute.xlu0 %1039
      %1041 = vrot.lane.b32.xlu0 %v1023, 64
      %v1042 = vpop.permute.xlu0 %1041
      %1043 = vrot.lane.b32.xlu0 %v1023, 32
      %v1044 = vpop.permute.xlu0 %1043
      %vm1045 = vcmask 261120
      %v1047 = vsel %vm1045, %v1021, 0
      %v1050 = vsel %vm1045, %v1022, 0
      %1052 = vmatprep.subr.bf16.mxu0 0
      %1053 = vmatpush1.bf16.xpose.msra.mxu0 %v1050
      %1054 = vmatprep.subr.bf16.mxu0 0
      %1055 = vmatpush1.bf16.xpose.msra.mxu0 0
      %1056 = vmatprep.subr.bf16.mxu0 0
      %1057 = vmatpush1.bf16.xpose.msra.mxu0 0
      %1058 = vmatprep.subr.bf16.mxu0 0
      %1059 = vmatpush1.bf16.xpose.msra.mxu0 0
      %1060 = vmatprep.subr.bf16.mxu0 0
      %1061 = vmatpush1.bf16.xpose.msra.mxu0 0
      %1062 = vmatprep.subr.bf16.mxu0 0
      %1063 = vmatpush1.bf16.xpose.msra.mxu0 0
      %1064 = vmatprep.subr.bf16.mxu0 0
      %1065 = vmatpush1.bf16.xpose.msra.mxu0 0
      %1066 = vmatprep.subr.bf16.mxu0 0
      %1067 = vmatpush1.bf16.xpose.msra.mxu0 0
      %1068 = vmatprep.subr.bf16.mxu0 0
      %1069 = vmatpush1.bf16.xpose.msra.mxu0 0
      %1070 = vmatprep.subr.bf16.mxu0 0
      %1071 = vmatpush1.bf16.xpose.msra.mxu0 0
      %1072 = vmatprep.subr.bf16.mxu0 0
      %1073 = vmatpush1.bf16.xpose.msra.mxu0 0
      %1074 = vmatprep.subr.bf16.mxu0 0
      %1075 = vmatpush1.bf16.xpose.msra.mxu0 0
      %1076 = vmatprep.subr.bf16.mxu0 0
      %1077 = vmatpush1.bf16.xpose.msra.mxu0 0
      %1078 = vmatprep.subr.bf16.mxu0 0
      %1079 = vmatpush1.bf16.xpose.msra.mxu0 0
      %1080 = vmatprep.subr.bf16.mxu0 0
      %1081 = vmatpush1.bf16.xpose.msra.mxu0 0
      %1082 = vmatprep.subr.bf16.mxu0 0
      %1083 = vmatpush1.bf16.xpose.msra.mxu0 0
      %1084 = vmatprep.mubr.bf16.mxu0 0
      %1085 = vmatmul.mubr.bf16.gmra.mrb[0].mxu0 %v1047
      %v1086 = vpop.f32.mrb[0].mxu0
      %v1087 = vadd.f32 0.0, %v1086
      %v1088 = vpop.f32.mrb[0].mxu0
      %v1089 = vpop.f32.mrb[0].mxu0
      %v1090 = vpop.f32.mrb[0].mxu0
      %1091 = vdwg.mxu0
      %v1093 = vsel %vm1045, %v1026, 0
      %v1096 = vsel %vm1045, %v1033, 0
      %1098 = vmatprep.subr.bf16.mxu0 0
      %1099 = vmatpush1.bf16.xpose.msra.mxu0 %v1096
      %1100 = vmatprep.subr.bf16.mxu0 0
      %1101 = vmatpush1.bf16.xpose.msra.mxu0 0
      %1102 = vmatprep.subr.bf16.mxu0 0
      %1103 = vmatpush1.bf16.xpose.msra.mxu0 0
      %1104 = vmatprep.subr.bf16.mxu0 0
      %1105 = vmatpush1.bf16.xpose.msra.mxu0 0
      %1106 = vmatprep.subr.bf16.mxu0 0
      %1107 = vmatpush1.bf16.xpose.msra.mxu0 0
      %1108 = vmatprep.subr.bf16.mxu0 0
      %1109 = vmatpush1.bf16.xpose.msra.mxu0 0
      %1110 = vmatprep.subr.bf16.mxu0 0
      %1111 = vmatpush1.bf16.xpose.msra.mxu0 0
      %1112 = vmatprep.subr.bf16.mxu0 0
      %1113 = vmatpush1.bf16.xpose.msra.mxu0 0
      %1114 = vmatprep.subr.bf16.mxu0 0
      %1115 = vmatpush1.bf16.xpose.msra.mxu0 0
      %1116 = vmatprep.subr.bf16.mxu0 0
      %1117 = vmatpush1.bf16.xpose.msra.mxu0 0
      %1118 = vmatprep.subr.bf16.mxu0 0
      %1119 = vmatpush1.bf16.xpose.msra.mxu0 0
      %1120 = vmatprep.subr.bf16.mxu0 0
      %1121 = vmatpush1.bf16.xpose.msra.mxu0 0
      %1122 = vmatprep.subr.bf16.mxu0 0
      %1123 = vmatpush1.bf16.xpose.msra.mxu0 0
      %1124 = vmatprep.subr.bf16.mxu0 0
      %1125 = vmatpush1.bf16.xpose.msra.mxu0 0
      %1126 = vmatprep.subr.bf16.mxu0 0
      %1127 = vmatpush1.bf16.xpose.msra.mxu0 0
      %1128 = vmatprep.subr.bf16.mxu0 0
      %1129 = vmatpush1.bf16.xpose.msra.mxu0 0
      %1130 = vmatprep.mubr.bf16.mxu0 0
      %1131 = vmatmul.mubr.bf16.gmra.mrb[0].mxu0 %v1093
      %v1132 = vpop.f32.mrb[0].mxu0
      %v1133 = vadd.f32 0.0, %v1132
      %v1134 = vpop.f32.mrb[0].mxu0
      %v1135 = vpop.f32.mrb[0].mxu0
      %v1136 = vpop.f32.mrb[0].mxu0
      %1137 = vdwg.mxu0
      %v1139 = vsel %vm1045, %v1028, 0
      %v1142 = vsel %vm1045, %v1035, 0
      %1144 = vmatprep.subr.bf16.mxu0 0
      %1145 = vmatpush1.bf16.xpose.msra.mxu0 %v1142
      %1146 = vmatprep.subr.bf16.mxu0 0
      %1147 = vmatpush1.bf16.xpose.msra.mxu0 0
      %1148 = vmatprep.subr.bf16.mxu0 0
      %1149 = vmatpush1.bf16.xpose.msra.mxu0 0
      %1150 = vmatprep.subr.bf16.mxu0 0
      %1151 = vmatpush1.bf16.xpose.msra.mxu0 0
      %1152 = vmatprep.subr.bf16.mxu0 0
      %1153 = vmatpush1.bf16.xpose.msra.mxu0 0
      %1154 = vmatprep.subr.bf16.mxu0 0
      %1155 = vmatpush1.bf16.xpose.msra.mxu0 0
      %1156 = vmatprep.subr.bf16.mxu0 0
      %1157 = vmatpush1.bf16.xpose.msra.mxu0 0
      %1158 = vmatprep.subr.bf16.mxu0 0
      %1159 = vmatpush1.bf16.xpose.msra.mxu0 0
      %1160 = vmatprep.subr.bf16.mxu0 0
      %1161 = vmatpush1.bf16.xpose.msra.mxu0 0
      %1162 = vmatprep.subr.bf16.mxu0 0
      %1163 = vmatpush1.bf16.xpose.msra.mxu0 0
      %1164 = vmatprep.subr.bf16.mxu0 0
      %1165 = vmatpush1.bf16.xpose.msra.mxu0 0
      %1166 = vmatprep.subr.bf16.mxu0 0
      %1167 = vmatpush1.bf16.xpose.msra.mxu0 0
      %1168 = vmatprep.subr.bf16.mxu0 0
      %1169 = vmatpush1.bf16.xpose.msra.mxu0 0
      %1170 = vmatprep.subr.bf16.mxu0 0
      %1171 = vmatpush1.bf16.xpose.msra.mxu0 0
      %1172 = vmatprep.subr.bf16.mxu0 0
      %1173 = vmatpush1.bf16.xpose.msra.mxu0 0
      %1174 = vmatprep.subr.bf16.mxu0 0
      %1175 = vmatpush1.bf16.xpose.msra.mxu0 0
      %1176 = vmatprep.mubr.bf16.mxu0 0
      %1177 = vmatmul.mubr.bf16.gmra.mrb[0].mxu0 %v1139
      %v1178 = vpop.f32.mrb[0].mxu0
      %v1179 = vadd.f32 0.0, %v1178
      %v1180 = vpop.f32.mrb[0].mxu0
      %v1181 = vpop.f32.mrb[0].mxu0
      %v1182 = vpop.f32.mrb[0].mxu0
      %1183 = vdwg.mxu0
      %v1185 = vsel %vm1045, %v1030, 0
      %v1188 = vsel %vm1045, %v1037, 0
      %1190 = vmatprep.subr.bf16.mxu0 0
      %1191 = vmatpush1.bf16.xpose.msra.mxu0 %v1188
      %1192 = vmatprep.subr.bf16.mxu0 0
      %1193 = vmatpush1.bf16.xpose.msra.mxu0 0
      %1194 = vmatprep.subr.bf16.mxu0 0
      %1195 = vmatpush1.bf16.xpose.msra.mxu0 0
      %1196 = vmatprep.subr.bf16.mxu0 0
      %1197 = vmatpush1.bf16.xpose.msra.mxu0 0
      %1198 = vmatprep.subr.bf16.mxu0 0
      %1199 = vmatpush1.bf16.xpose.msra.mxu0 0
      %1200 = vmatprep.subr.bf16.mxu0 0
      %1201 = vmatpush1.bf16.xpose.msra.mxu0 0
      %1202 = vmatprep.subr.bf16.mxu0 0
      %1203 = vmatpush1.bf16.xpose.msra.mxu0 0
      %1204 = vmatprep.subr.bf16.mxu0 0
      %1205 = vmatpush1.bf16.xpose.msra.mxu0 0
      %1206 = vmatprep.subr.bf16.mxu0 0
      %1207 = vmatpush1.bf16.xpose.msra.mxu0 0
      %1208 = vmatprep.subr.bf16.mxu0 0
      %1209 = vmatpush1.bf16.xpose.msra.mxu0 0
      %1210 = vmatprep.subr.bf16.mxu0 0
      %1211 = vmatpush1.bf16.xpose.msra.mxu0 0
      %1212 = vmatprep.subr.bf16.mxu0 0
      %1213 = vmatpush1.bf16.xpose.msra.mxu0 0
      %1214 = vmatprep.subr.bf16.mxu0 0
      %1215 = vmatpush1.bf16.xpose.msra.mxu0 0
      %1216 = vmatprep.subr.bf16.mxu0 0
      %1217 = vmatpush1.bf16.xpose.msra.mxu0 0
      %1218 = vmatprep.subr.bf16.mxu0 0
      %1219 = vmatpush1.bf16.xpose.msra.mxu0 0
      %1220 = vmatprep.subr.bf16.mxu0 0
      %1221 = vmatpush1.bf16.xpose.msra.mxu0 0
      %1222 = vmatprep.mubr.bf16.mxu0 0
      %1223 = vmatmul.mubr.bf16.gmra.mrb[0].mxu0 %v1185
      %v1224 = vpop.f32.mrb[0].mxu0
      %v1225 = vadd.f32 0.0, %v1224
      %v1226 = vpop.f32.mrb[0].mxu0
      %v1227 = vpop.f32.mrb[0].mxu0
      %v1228 = vpop.f32.mrb[0].mxu0
      %1229 = vdwg.mxu0
      %v1230 = vmul.f32 %v1087, 0.17677669
      %v1231 = vmul.f32 %v1133, 0.17677669
      %v1232 = vmul.f32 %v1179, 0.17677669
      %v1233 = vmul.f32 %v1225, 0.17677669
      %vm1234 = vcmask 36864
      %v1235 = vsel %vm1234, %v1230, -inf
      %1236 = vmax.xlane.f32.xlu0 %v1235
      %v1237 = vpop.xlane.xlu0 %1236
      %v1238 = vsel %vm1234, %v1231, -inf
      %1239 = vmax.xlane.f32.xlu0 %v1238
      %v1240 = vpop.xlane.xlu0 %1239
      %v1241 = vsel %vm1234, %v1232, -inf
      %1242 = vmax.xlane.f32.xlu0 %v1241
      %v1243 = vpop.xlane.xlu0 %1242
      %v1244 = vsel %vm1234, %v1233, -inf
      %1245 = vmax.xlane.f32.xlu0 %v1244
      %v1246 = vpop.xlane.xlu0 %1245
      %v1247 = vsub.f32 %v1230, %v1237
      %v1248 = vsub.f32 %v1231, %v1240
      %v1249 = vsub.f32 %v1232, %v1243
      %v1250 = vsub.f32 %v1233, %v1246
      %v1251 = vmul.f32 %v1247, 1.442695
      %v1252 = vpow.pop %v1251
      %v1253 = vmul.f32 %v1248, 1.442695
      %v1254 = vpow.pop %v1253
      %v1255 = vmul.f32 %v1249, 1.442695
      %v1256 = vpow.pop %v1255
      %v1257 = vmul.f32 %v1250, 1.442695
      %v1258 = vpow.pop %v1257
      %v1259 = vsel %vm1234, %v1252, 0.0
      %1260 = vadd.xlane.f32.xlu0 %v1259
      %v1261 = vpop.xlane.xlu0 %1260
      %v1262 = vsel %vm1234, %v1254, 0.0
      %1263 = vadd.xlane.f32.xlu0 %v1262
      %v1264 = vpop.xlane.xlu0 %1263
      %v1265 = vsel %vm1234, %v1256, 0.0
      %1266 = vadd.xlane.f32.xlu0 %v1265
      %v1267 = vpop.xlane.xlu0 %1266
      %v1268 = vsel %vm1234, %v1258, 0.0
      %1269 = vadd.xlane.f32.xlu0 %v1268
      %v1270 = vpop.xlane.xlu0 %1269
      %v1271 = vrcp.pop %v1261
      %v1272 = vrcp.pop %v1264
      %v1273 = vrcp.pop %v1267
      %v1274 = vrcp.pop %v1270
      %v1275 = vmul.f32 %v1252, %v1271
      %v1276 = vmul.f32 %v1254, %v1272
      %v1277 = vmul.f32 %v1256, %v1273
      %v1278 = vmul.f32 %v1258, %v1274
      %v1279 = vpack.c.bf16 %v1275, %v1275
      %v1280 = vpack.c.bf16 %v1276, %v1276
      %v1281 = vpack.c.bf16 %v1277, %v1277
      %v1282 = vpack.c.bf16 %v1278, %v1278
      %vm1283 = vcmask 39936
      %v1285 = vsel %vm1283, %v1279, 0
      %vm1287 = vcmask 1041408
      %vm1288 = vcmask 1042432
      %v1289 = vsel %vm1287, 4294967295, 65535
      %v1290 = vsel %vm1288, %v1289, 0
      %v1292 = vand.u32 %v1023, %v1290
      %1294 = vmatprep.subr.bf16.mxu0 0
      %1295 = vmatpush1.bf16.msra.mxu0 %v1292
      %1296 = vmatprep.subr.bf16.mxu0 0
      %1297 = vmatpush1.bf16.msra.mxu0 0
      %1298 = vmatprep.subr.bf16.mxu0 0
      %1299 = vmatpush1.bf16.msra.mxu0 0
      %1300 = vmatprep.subr.bf16.mxu0 0
      %1301 = vmatpush1.bf16.msra.mxu0 0
      %1302 = vmatprep.subr.bf16.mxu0 0
      %1303 = vmatpush1.bf16.msra.mxu0 0
      %1304 = vmatprep.subr.bf16.mxu0 0
      %1305 = vmatpush1.bf16.msra.mxu0 0
      %1306 = vmatprep.subr.bf16.mxu0 0
      %1307 = vmatpush1.bf16.msra.mxu0 0
      %1308 = vmatprep.subr.bf16.mxu0 0
      %1309 = vmatpush1.bf16.msra.mxu0 0
      %1310 = vmatprep.subr.bf16.mxu0 0
      %1311 = vmatpush1.bf16.msra.mxu0 0
      %1312 = vmatprep.subr.bf16.mxu0 0
      %1313 = vmatpush1.bf16.msra.mxu0 0
      %1314 = vmatprep.subr.bf16.mxu0 0
      %1315 = vmatpush1.bf16.msra.mxu0 0
      %1316 = vmatprep.subr.bf16.mxu0 0
      %1317 = vmatpush1.bf16.msra.mxu0 0
      %1318 = vmatprep.subr.bf16.mxu0 0
      %1319 = vmatpush1.bf16.msra.mxu0 0
      %1320 = vmatprep.subr.bf16.mxu0 0
      %1321 = vmatpush1.bf16.msra.mxu0 0
      %1322 = vmatprep.subr.bf16.mxu0 0
      %1323 = vmatpush1.bf16.msra.mxu0 0
      %1324 = vmatprep.subr.bf16.mxu0 0
      %1325 = vmatpush1.bf16.msra.mxu0 0
      %1326 = vmatprep.mubr.bf16.mxu0 0
      %1327 = vmatmul.mubr.bf16.gmra.mrb[0].mxu0 %v1285
      %v1328 = vpop.f32.mrb[0].mxu0
      %v1329 = vadd.f32 0.0, %v1328
      %v1330 = vpop.f32.mrb[0].mxu0
      %v1331 = vpop.f32.mrb[0].mxu0
      %v1332 = vpop.f32.mrb[0].mxu0
      %1333 = vdwg.mxu0
      %v1335 = vsel %vm1283, %v1280, 0
      %v1338 = vand.u32 %v1040, %v1290
      %1340 = vmatprep.subr.bf16.mxu0 0
      %1341 = vmatpush1.bf16.msra.mxu0 %v1338
      %1342 = vmatprep.subr.bf16.mxu0 0
      %1343 = vmatpush1.bf16.msra.mxu0 0
      %1344 = vmatprep.subr.bf16.mxu0 0
      %1345 = vmatpush1.bf16.msra.mxu0 0
      %1346 = vmatprep.subr.bf16.mxu0 0
      %1347 = vmatpush1.bf16.msra.mxu0 0
      %1348 = vmatprep.subr.bf16.mxu0 0
      %1349 = vmatpush1.bf16.msra.mxu0 0
      %1350 = vmatprep.subr.bf16.mxu0 0
      %1351 = vmatpush1.bf16.msra.mxu0 0
      %1352 = vmatprep.subr.bf16.mxu0 0
      %1353 = vmatpush1.bf16.msra.mxu0 0
      %1354 = vmatprep.subr.bf16.mxu0 0
      %1355 = vmatpush1.bf16.msra.mxu0 0
      %1356 = vmatprep.subr.bf16.mxu0 0
      %1357 = vmatpush1.bf16.msra.mxu0 0
      %1358 = vmatprep.subr.bf16.mxu0 0
      %1359 = vmatpush1.bf16.msra.mxu0 0
      %1360 = vmatprep.subr.bf16.mxu0 0
      %1361 = vmatpush1.bf16.msra.mxu0 0
      %1362 = vmatprep.subr.bf16.mxu0 0
      %1363 = vmatpush1.bf16.msra.mxu0 0
      %1364 = vmatprep.subr.bf16.mxu0 0
      %1365 = vmatpush1.bf16.msra.mxu0 0
      %1366 = vmatprep.subr.bf16.mxu0 0
      %1367 = vmatpush1.bf16.msra.mxu0 0
      %1368 = vmatprep.subr.bf16.mxu0 0
      %1369 = vmatpush1.bf16.msra.mxu0 0
      %1370 = vmatprep.subr.bf16.mxu0 0
      %1371 = vmatpush1.bf16.msra.mxu0 0
      %1372 = vmatprep.mubr.bf16.mxu0 0
      %1373 = vmatmul.mubr.bf16.gmra.mrb[0].mxu0 %v1335
      %v1374 = vpop.f32.mrb[0].mxu0
      %v1375 = vadd.f32 0.0, %v1374
      %v1376 = vpop.f32.mrb[0].mxu0
      %v1377 = vpop.f32.mrb[0].mxu0
      %v1378 = vpop.f32.mrb[0].mxu0
      %1379 = vdwg.mxu0
      %v1381 = vsel %vm1283, %v1281, 0
      %v1384 = vand.u32 %v1042, %v1290
      %1386 = vmatprep.subr.bf16.mxu0 0
      %1387 = vmatpush1.bf16.msra.mxu0 %v1384
      %1388 = vmatprep.subr.bf16.mxu0 0
      %1389 = vmatpush1.bf16.msra.mxu0 0
      %1390 = vmatprep.subr.bf16.mxu0 0
      %1391 = vmatpush1.bf16.msra.mxu0 0
      %1392 = vmatprep.subr.bf16.mxu0 0
      %1393 = vmatpush1.bf16.msra.mxu0 0
      %1394 = vmatprep.subr.bf16.mxu0 0
      %1395 = vmatpush1.bf16.msra.mxu0 0
      %1396 = vmatprep.subr.bf16.mxu0 0
      %1397 = vmatpush1.bf16.msra.mxu0 0
      %1398 = vmatprep.subr.bf16.mxu0 0
      %1399 = vmatpush1.bf16.msra.mxu0 0
      %1400 = vmatprep.subr.bf16.mxu0 0
      %1401 = vmatpush1.bf16.msra.mxu0 0
      %1402 = vmatprep.subr.bf16.mxu0 0
      %1403 = vmatpush1.bf16.msra.mxu0 0
      %1404 = vmatprep.subr.bf16.mxu0 0
      %1405 = vmatpush1.bf16.msra.mxu0 0
      %1406 = vmatprep.subr.bf16.mxu0 0
      %1407 = vmatpush1.bf16.msra.mxu0 0
      %1408 = vmatprep.subr.bf16.mxu0 0
      %1409 = vmatpush1.bf16.msra.mxu0 0
      %1410 = vmatprep.subr.bf16.mxu0 0
      %1411 = vmatpush1.bf16.msra.mxu0 0
      %1412 = vmatprep.subr.bf16.mxu0 0
      %1413 = vmatpush1.bf16.msra.mxu0 0
      %1414 = vmatprep.subr.bf16.mxu0 0
      %1415 = vmatpush1.bf16.msra.mxu0 0
      %1416 = vmatprep.subr.bf16.mxu0 0
      %1417 = vmatpush1.bf16.msra.mxu0 0
      %1418 = vmatprep.mubr.bf16.mxu0 0
      %1419 = vmatmul.mubr.bf16.gmra.mrb[0].mxu0 %v1381
      %v1420 = vpop.f32.mrb[0].mxu0
      %v1421 = vadd.f32 0.0, %v1420
      %v1422 = vpop.f32.mrb[0].mxu0
      %v1423 = vpop.f32.mrb[0].mxu0
      %v1424 = vpop.f32.mrb[0].mxu0
      %1425 = vdwg.mxu0
      %v1427 = vsel %vm1283, %v1282, 0
      %v1430 = vand.u32 %v1044, %v1290
      %1432 = vmatprep.subr.bf16.mxu0 0
      %1433 = vmatpush1.bf16.msra.mxu0 %v1430
      %1434 = vmatprep.subr.bf16.mxu0 0
      %1435 = vmatpush1.bf16.msra.mxu0 0
      %1436 = vmatprep.subr.bf16.mxu0 0
      %1437 = vmatpush1.bf16.msra.mxu0 0
      %1438 = vmatprep.subr.bf16.mxu0 0
      %1439 = vmatpush1.bf16.msra.mxu0 0
      %1440 = vmatprep.subr.bf16.mxu0 0
      %1441 = vmatpush1.bf16.msra.mxu0 0
      %1442 = vmatprep.subr.bf16.mxu0 0
      %1443 = vmatpush1.bf16.msra.mxu0 0
      %1444 = vmatprep.subr.bf16.mxu0 0
      %1445 = vmatpush1.bf16.msra.mxu0 0
      %1446 = vmatprep.subr.bf16.mxu0 0
      %1447 = vmatpush1.bf16.msra.mxu0 0
      %1448 = vmatprep.subr.bf16.mxu0 0
      %1449 = vmatpush1.bf16.msra.mxu0 0
      %1450 = vmatprep.subr.bf16.mxu0 0
      %1451 = vmatpush1.bf16.msra.mxu0 0
      %1452 = vmatprep.subr.bf16.mxu0 0
      %1453 = vmatpush1.bf16.msra.mxu0 0
      %1454 = vmatprep.subr.bf16.mxu0 0
      %1455 = vmatpush1.bf16.msra.mxu0 0
      %1456 = vmatprep.subr.bf16.mxu0 0
      %1457 = vmatpush1.bf16.msra.mxu0 0
      %1458 = vmatprep.subr.bf16.mxu0 0
      %1459 = vmatpush1.bf16.msra.mxu0 0
      %1460 = vmatprep.subr.bf16.mxu0 0
      %1461 = vmatpush1.bf16.msra.mxu0 0
      %1462 = vmatprep.subr.bf16.mxu0 0
      %1463 = vmatpush1.bf16.msra.mxu0 0
      %1464 = vmatprep.mubr.bf16.mxu0 0
      %1465 = vmatmul.mubr.bf16.gmra.mrb[0].mxu0 %v1427
      %v1466 = vpop.f32.mrb[0].mxu0
      %v1467 = vadd.f32 0.0, %v1466
      %v1468 = vpop.f32.mrb[0].mxu0
      %v1469 = vpop.f32.mrb[0].mxu0
      %v1470 = vpop.f32.mrb[0].mxu0
      %1471 = vdwg.mxu0
      %v1472 = vpack.c.bf16 %v1329, %v1329
      %v1473 = vpack.c.bf16 %v1375, %v1375
      %v1474 = vpack.c.bf16 %v1421, %v1421
      %v1475 = vpack.c.bf16 %v1467, %v1467
      %v1480 = vunpack.c.l.b16 %v648
      %v1481 = vunpack.c.l.b16 %v649
      %v1482 = vunpack.c.l.b16 %v650
      %v1483 = vunpack.c.l.b16 %v651
      %v1484 = vpack.c.b16 %v1481, %v1480
      %v1485 = vpack.c.b16 %v1483, %v1482
      %v1489 = vsel %vm1045, %v1472, 0
      %1491 = vmatprep.subr.bf16.mxu0 0
      %1492 = vmatpush1.bf16.msra.mxu0 %v1484
      %1493 = vmatprep.subr.bf16.mxu0 0
      %1494 = vmatpush1.bf16.msra.mxu0 %v1485
      %1495 = vmatprep.subr.bf16.mxu0 0
      %1496 = vmatpush1.bf16.msra.mxu0 0
      %1497 = vmatprep.subr.bf16.mxu0 0
      %1498 = vmatpush1.bf16.msra.mxu0 0
      %1499 = vmatprep.subr.bf16.mxu0 0
      %1500 = vmatpush1.bf16.msra.mxu0 0
      %1501 = vmatprep.subr.bf16.mxu0 0
      %1502 = vmatpush1.bf16.msra.mxu0 0
      %1503 = vmatprep.subr.bf16.mxu0 0
      %1504 = vmatpush1.bf16.msra.mxu0 0
      %1505 = vmatprep.subr.bf16.mxu0 0
      %1506 = vmatpush1.bf16.msra.mxu0 0
      %1507 = vmatprep.subr.bf16.mxu0 0
      %1508 = vmatpush1.bf16.msra.mxu0 0
      %1509 = vmatprep.subr.bf16.mxu0 0
      %1510 = vmatpush1.bf16.msra.mxu0 0
      %1511 = vmatprep.subr.bf16.mxu0 0
      %1512 = vmatpush1.bf16.msra.mxu0 0
      %1513 = vmatprep.subr.bf16.mxu0 0
      %1514 = vmatpush1.bf16.msra.mxu0 0
      %1515 = vmatprep.subr.bf16.mxu0 0
      %1516 = vmatpush1.bf16.msra.mxu0 0
      %1517 = vmatprep.subr.bf16.mxu0 0
      %1518 = vmatpush1.bf16.msra.mxu0 0
      %1519 = vmatprep.subr.bf16.mxu0 0
      %1520 = vmatpush1.bf16.msra.mxu0 0
      %1521 = vmatprep.subr.bf16.mxu0 0
      %1522 = vmatpush1.bf16.msra.mxu0 0
      %1523 = vmatprep.mubr.bf16.mxu0 0
      %1524 = vmatmul.mubr.bf16.gmra.mrb[0].mxu0 %v1489
      %v1525 = vpop.f32.mrb[0].mxu0
      %v1526 = vadd.f32 0.0, %v1525
      %v1527 = vpop.f32.mrb[0].mxu0
      %v1528 = vpop.f32.mrb[0].mxu0
      %v1529 = vpop.f32.mrb[0].mxu0
      %1530 = vdwg.mxu0
      %v1535 = vunpack.c.l.b16 %v652
      %v1536 = vunpack.c.l.b16 %v653
      %v1537 = vunpack.c.l.b16 %v654
      %v1538 = vunpack.c.l.b16 %v655
      %v1539 = vpack.c.b16 %v1536, %v1535
      %v1540 = vpack.c.b16 %v1538, %v1537
      %v1544 = vsel %vm1045, %v1473, 0
      %1546 = vmatprep.subr.bf16.mxu0 0
      %1547 = vmatpush1.bf16.msra.mxu0 %v1539
      %1548 = vmatprep.subr.bf16.mxu0 0
      %1549 = vmatpush1.bf16.msra.mxu0 %v1540
      %1550 = vmatprep.subr.bf16.mxu0 0
      %1551 = vmatpush1.bf16.msra.mxu0 0
      %1552 = vmatprep.subr.bf16.mxu0 0
      %1553 = vmatpush1.bf16.msra.mxu0 0
      %1554 = vmatprep.subr.bf16.mxu0 0
      %1555 = vmatpush1.bf16.msra.mxu0 0
      %1556 = vmatprep.subr.bf16.mxu0 0
      %1557 = vmatpush1.bf16.msra.mxu0 0
      %1558 = vmatprep.subr.bf16.mxu0 0
      %1559 = vmatpush1.bf16.msra.mxu0 0
      %1560 = vmatprep.subr.bf16.mxu0 0
      %1561 = vmatpush1.bf16.msra.mxu0 0
      %1562 = vmatprep.subr.bf16.mxu0 0
      %1563 = vmatpush1.bf16.msra.mxu0 0
      %1564 = vmatprep.subr.bf16.mxu0 0
      %1565 = vmatpush1.bf16.msra.mxu0 0
      %1566 = vmatprep.subr.bf16.mxu0 0
      %1567 = vmatpush1.bf16.msra.mxu0 0
      %1568 = vmatprep.subr.bf16.mxu0 0
      %1569 = vmatpush1.bf16.msra.mxu0 0
      %1570 = vmatprep.subr.bf16.mxu0 0
      %1571 = vmatpush1.bf16.msra.mxu0 0
      %1572 = vmatprep.subr.bf16.mxu0 0
      %1573 = vmatpush1.bf16.msra.mxu0 0
      %1574 = vmatprep.subr.bf16.mxu0 0
      %1575 = vmatpush1.bf16.msra.mxu0 0
      %1576 = vmatprep.subr.bf16.mxu0 0
      %1577 = vmatpush1.bf16.msra.mxu0 0
      %1578 = vmatprep.mubr.bf16.mxu0 0
      %1579 = vmatmul.mubr.bf16.gmra.mrb[0].mxu0 %v1544
      %v1580 = vpop.f32.mrb[0].mxu0
      %v1581 = vadd.f32 0.0, %v1580
      %v1582 = vpop.f32.mrb[0].mxu0
      %v1583 = vpop.f32.mrb[0].mxu0
      %v1584 = vpop.f32.mrb[0].mxu0
      %1585 = vdwg.mxu0
      %v1590 = vunpack.c.l.b16 %v656
      %v1591 = vunpack.c.l.b16 %v657
      %v1592 = vunpack.c.l.b16 %v658
      %v1593 = vunpack.c.l.b16 %v659
      %v1594 = vpack.c.b16 %v1591, %v1590
      %v1595 = vpack.c.b16 %v1593, %v1592
      %v1599 = vsel %vm1045, %v1474, 0
      %1601 = vmatprep.subr.bf16.mxu0 0
      %1602 = vmatpush1.bf16.msra.mxu0 %v1594
      %1603 = vmatprep.subr.bf16.mxu0 0
      %1604 = vmatpush1.bf16.msra.mxu0 %v1595
      %1605 = vmatprep.subr.bf16.mxu0 0
      %1606 = vmatpush1.bf16.msra.mxu0 0
      %1607 = vmatprep.subr.bf16.mxu0 0
      %1608 = vmatpush1.bf16.msra.mxu0 0
      %1609 = vmatprep.subr.bf16.mxu0 0
      %1610 = vmatpush1.bf16.msra.mxu0 0
      %1611 = vmatprep.subr.bf16.mxu0 0
      %1612 = vmatpush1.bf16.msra.mxu0 0
      %1613 = vmatprep.subr.bf16.mxu0 0
      %1614 = vmatpush1.bf16.msra.mxu0 0
      %1615 = vmatprep.subr.bf16.mxu0 0
      %1616 = vmatpush1.bf16.msra.mxu0 0
      %1617 = vmatprep.subr.bf16.mxu0 0
      %1618 = vmatpush1.bf16.msra.mxu0 0
      %1619 = vmatprep.subr.bf16.mxu0 0
      %1620 = vmatpush1.bf16.msra.mxu0 0
      %1621 = vmatprep.subr.bf16.mxu0 0
      %1622 = vmatpush1.bf16.msra.mxu0 0
      %1623 = vmatprep.subr.bf16.mxu0 0
      %1624 = vmatpush1.bf16.msra.mxu0 0
      %1625 = vmatprep.subr.bf16.mxu0 0
      %1626 = vmatpush1.bf16.msra.mxu0 0
      %1627 = vmatprep.subr.bf16.mxu0 0
      %1628 = vmatpush1.bf16.msra.mxu0 0
      %1629 = vmatprep.subr.bf16.mxu0 0
      %1630 = vmatpush1.bf16.msra.mxu0 0
      %1631 = vmatprep.subr.bf16.mxu0 0
      %1632 = vmatpush1.bf16.msra.mxu0 0
      %1633 = vmatprep.mubr.bf16.mxu0 0
      %1634 = vmatmul.mubr.bf16.gmra.mrb[0].mxu0 %v1599
      %v1635 = vpop.f32.mrb[0].mxu0
      %v1636 = vadd.f32 0.0, %v1635
      %v1637 = vpop.f32.mrb[0].mxu0
      %v1638 = vpop.f32.mrb[0].mxu0
      %v1639 = vpop.f32.mrb[0].mxu0
      %1640 = vdwg.mxu0
      %v1645 = vunpack.c.l.b16 %v660
      %v1646 = vunpack.c.l.b16 %v661
      %v1647 = vunpack.c.l.b16 %v662
      %v1648 = vunpack.c.l.b16 %v663
      %v1649 = vpack.c.b16 %v1646, %v1645
      %v1650 = vpack.c.b16 %v1648, %v1647
      %v1654 = vsel %vm1045, %v1475, 0
      %1656 = vmatprep.subr.bf16.mxu0 0
      %1657 = vmatpush1.bf16.msra.mxu0 %v1649
      %1658 = vmatprep.subr.bf16.mxu0 0
      %1659 = vmatpush1.bf16.msra.mxu0 %v1650
      %1660 = vmatprep.subr.bf16.mxu0 0
      %1661 = vmatpush1.bf16.msra.mxu0 0
      %1662 = vmatprep.subr.bf16.mxu0 0
      %1663 = vmatpush1.bf16.msra.mxu0 0
      %1664 = vmatprep.subr.bf16.mxu0 0
      %1665 = vmatpush1.bf16.msra.mxu0 0
      %1666 = vmatprep.subr.bf16.mxu0 0
      %1667 = vmatpush1.bf16.msra.mxu0 0
      %1668 = vmatprep.subr.bf16.mxu0 0
      %1669 = vmatpush1.bf16.msra.mxu0 0
      %1670 = vmatprep.subr.bf16.mxu0 0
      %1671 = vmatpush1.bf16.msra.mxu0 0
      %1672 = vmatprep.subr.bf16.mxu0 0
      %1673 = vmatpush1.bf16.msra.mxu0 0
      %1674 = vmatprep.subr.bf16.mxu0 0
      %1675 = vmatpush1.bf16.msra.mxu0 0
      %1676 = vmatprep.subr.bf16.mxu0 0
      %1677 = vmatpush1.bf16.msra.mxu0 0
      %1678 = vmatprep.subr.bf16.mxu0 0
      %1679 = vmatpush1.bf16.msra.mxu0 0
      %1680 = vmatprep.subr.bf16.mxu0 0
      %1681 = vmatpush1.bf16.msra.mxu0 0
      %1682 = vmatprep.subr.bf16.mxu0 0
      %1683 = vmatpush1.bf16.msra.mxu0 0
      %1684 = vmatprep.subr.bf16.mxu0 0
      %1685 = vmatpush1.bf16.msra.mxu0 0
      %1686 = vmatprep.subr.bf16.mxu0 0
      %1687 = vmatpush1.bf16.msra.mxu0 0
      %1688 = vmatprep.mubr.bf16.mxu0 0
      %1689 = vmatmul.mubr.bf16.gmra.mrb[0].mxu0 %v1654
      %v1690 = vpop.f32.mrb[0].mxu0
      %v1691 = vadd.f32 0.0, %v1690
      %v1692 = vpop.f32.mrb[0].mxu0
      %v1693 = vpop.f32.mrb[0].mxu0
      %v1694 = vpop.f32.mrb[0].mxu0
      %1695 = vdwg.mxu0
      %v1696 = vsel %vm766, %v1526, 0.0
      %v1697 = vsel %vm766, %v1581, 0.0
      %v1698 = vadd.f32 %v1696, %v1697
      %v1699 = vsel %vm766, %v1636, 0.0
      %v1700 = vadd.f32 %v1698, %v1699
      %v1701 = vsel %vm766, %v1691, 0.0
      %v1702 = vadd.f32 %v1700, %v1701
      %v1703 = vadd.f32 %v765, %v1702
      %v1705 = vlaneseq
      %v1706 = vshrl.u32 %v1705, 7
      %v1707 = vsub.s32 0, %v1706
      %v1708 = vrot.slane %v664, %v1707
      %v1710 = vadd.f32 %v1703, %v1708
      %v1711 = vsel %vm766, %v1710, 0.0
      %1712 = vadd.xlane.f32.xlu0 %v1711
      %v1713 = vpop.xlane.xlu0 %1712
      %v1714 = vmul.f32 %v1713, %v770
      %v1715 = vsub.f32 %v1710, %v1714
      %v1716 = vmul.f32 %v1715, %v1715
      %v1717 = vsel %vm766, %v1716, 0.0
      %1718 = vadd.xlane.f32.xlu0 %v1717
      %v1719 = vpop.xlane.xlu0 %1718
      %v1720 = vmul.f32 %v1719, %v770
      %v1721 = vadd.f32 %v1720, 1e-05
      %v1722 = vrsqrt.pop %v1721
      %v1723 = vmul.f32 %v1715, %v1722
      %v1725 = vlaneseq
      %v1726 = vshrl.u32 %v1725, 7
      %v1727 = vsub.s32 0, %v1726
      %v1728 = vrot.slane %v665, %v1727
      %v1730 = vmul.f32 %v1723, %v1728
      %v1732 = vlaneseq
      %v1733 = vshrl.u32 %v1732, 7
      %v1734 = vsub.s32 0, %v1733
      %v1735 = vrot.slane %v666, %v1734
      %v1737 = vadd.f32 %v1730, %v1735
      %v1738 = vpack.c.bf16 %v1737, %v1737
      %v1740 = vlaneseq
      %v1741 = vshrl.u32 %v1740, 7
      %v1742 = vsub.s32 0, %v1741
      %v1743 = vrot.slane %v699, %v1742
      %v1744 = vlaneseq
      %v1745 = vshrl.u32 %v1744, 7
      %v1746 = vsub.s32 1, %v1745
      %v1747 = vrot.slane %v699, %v1746
      %v1748 = vlaneseq
      %v1749 = vshrl.u32 %v1748, 7
      %v1750 = vsub.s32 2, %v1749
      %v1751 = vrot.slane %v699, %v1750
      %v1752 = vlaneseq
      %v1753 = vshrl.u32 %v1752, 7
      %v1754 = vsub.s32 3, %v1753
      %v1755 = vrot.slane %v699, %v1754
      %v1792 = vunpack.c.l.b16 %v667
      %v1793 = vunpack.c.h.b16 %v667
      %v1794 = vunpack.c.l.b16 %v668
      %v1795 = vunpack.c.h.b16 %v668
      %v1796 = vunpack.c.l.b16 %v669
      %v1797 = vunpack.c.h.b16 %v669
      %v1798 = vunpack.c.l.b16 %v670
      %v1799 = vunpack.c.h.b16 %v670
      %v1800 = vunpack.c.l.b16 %v671
      %v1801 = vunpack.c.h.b16 %v671
      %v1802 = vunpack.c.l.b16 %v672
      %v1803 = vunpack.c.h.b16 %v672
      %v1804 = vunpack.c.l.b16 %v673
      %v1805 = vunpack.c.h.b16 %v673
      %v1806 = vunpack.c.l.b16 %v674
      %v1807 = vunpack.c.h.b16 %v674
      %v1808 = vunpack.c.l.b16 %v675
      %v1809 = vunpack.c.h.b16 %v675
      %v1810 = vunpack.c.l.b16 %v676
      %v1811 = vunpack.c.h.b16 %v676
      %v1812 = vunpack.c.l.b16 %v677
      %v1813 = vunpack.c.h.b16 %v677
      %v1814 = vunpack.c.l.b16 %v678
      %v1815 = vunpack.c.h.b16 %v678
      %v1816 = vunpack.c.l.b16 %v679
      %v1817 = vunpack.c.h.b16 %v679
      %v1818 = vunpack.c.l.b16 %v680
      %v1819 = vunpack.c.h.b16 %v680
      %v1820 = vunpack.c.l.b16 %v681
      %v1821 = vunpack.c.h.b16 %v681
      %v1822 = vunpack.c.l.b16 %v682
      %v1823 = vunpack.c.h.b16 %v682
      %v1824 = vunpack.c.l.b16 %v683
      %v1825 = vunpack.c.h.b16 %v683
      %v1826 = vunpack.c.l.b16 %v684
      %v1827 = vunpack.c.h.b16 %v684
      %v1828 = vunpack.c.l.b16 %v685
      %v1829 = vunpack.c.h.b16 %v685
      %v1830 = vunpack.c.l.b16 %v686
      %v1831 = vunpack.c.h.b16 %v686
      %v1832 = vunpack.c.l.b16 %v687
      %v1833 = vunpack.c.h.b16 %v687
      %v1834 = vunpack.c.l.b16 %v688
      %v1835 = vunpack.c.h.b16 %v688
      %v1836 = vunpack.c.l.b16 %v689
      %v1837 = vunpack.c.h.b16 %v689
      %v1838 = vunpack.c.l.b16 %v690
      %v1839 = vunpack.c.h.b16 %v690
      %v1840 = vunpack.c.l.b16 %v691
      %v1841 = vunpack.c.h.b16 %v691
      %v1842 = vunpack.c.l.b16 %v692
      %v1843 = vunpack.c.h.b16 %v692
      %v1844 = vunpack.c.l.b16 %v693
      %v1845 = vunpack.c.h.b16 %v693
      %v1846 = vunpack.c.l.b16 %v694
      %v1847 = vunpack.c.h.b16 %v694
      %v1848 = vunpack.c.l.b16 %v695
      %v1849 = vunpack.c.h.b16 %v695
      %v1850 = vunpack.c.l.b16 %v696
      %v1851 = vunpack.c.h.b16 %v696
      %v1852 = vunpack.c.l.b16 %v697
      %v1853 = vunpack.c.h.b16 %v697
      %v1854 = vunpack.c.l.b16 %v698
      %v1855 = vunpack.c.h.b16 %v698
      %v1856 = vpack.c.b16 %v1796, %v1792
      %v1857 = vpack.c.b16 %v1797, %v1793
      %v1858 = vpack.c.b16 %v1798, %v1794
      %v1859 = vpack.c.b16 %v1799, %v1795
      %v1860 = vpack.c.b16 %v1804, %v1800
      %v1861 = vpack.c.b16 %v1805, %v1801
      %v1862 = vpack.c.b16 %v1806, %v1802
      %v1863 = vpack.c.b16 %v1807, %v1803
      %v1864 = vpack.c.b16 %v1812, %v1808
      %v1865 = vpack.c.b16 %v1813, %v1809
      %v1866 = vpack.c.b16 %v1814, %v1810
      %v1867 = vpack.c.b16 %v1815, %v1811
      %v1868 = vpack.c.b16 %v1820, %v1816
      %v1869 = vpack.c.b16 %v1821, %v1817
      %v1870 = vpack.c.b16 %v1822, %v1818
      %v1871 = vpack.c.b16 %v1823, %v1819
      %v1872 = vpack.c.b16 %v1828, %v1824
      %v1873 = vpack.c.b16 %v1829, %v1825
      %v1874 = vpack.c.b16 %v1830, %v1826
      %v1875 = vpack.c.b16 %v1831, %v1827
      %v1876 = vpack.c.b16 %v1836, %v1832
      %v1877 = vpack.c.b16 %v1837, %v1833
      %v1878 = vpack.c.b16 %v1838, %v1834
      %v1879 = vpack.c.b16 %v1839, %v1835
      %v1880 = vpack.c.b16 %v1844, %v1840
      %v1881 = vpack.c.b16 %v1845, %v1841
      %v1882 = vpack.c.b16 %v1846, %v1842
      %v1883 = vpack.c.b16 %v1847, %v1843
      %v1884 = vpack.c.b16 %v1852, %v1848
      %v1885 = vpack.c.b16 %v1853, %v1849
      %v1886 = vpack.c.b16 %v1854, %v1850
      %v1887 = vpack.c.b16 %v1855, %v1851
      %1920 = vmatprep.subr.bf16.mxu0 %v1857
      %1921 = vmatpush1.bf16.msra.mxu0 %v1856
      %1922 = vmatprep.subr.bf16.mxu0 %v1861
      %1923 = vmatpush1.bf16.msra.mxu0 %v1860
      %1924 = vmatprep.subr.bf16.mxu0 %v1865
      %1925 = vmatpush1.bf16.msra.mxu0 %v1864
      %1926 = vmatprep.subr.bf16.mxu0 %v1869
      %1927 = vmatpush1.bf16.msra.mxu0 %v1868
      %1928 = vmatprep.subr.bf16.mxu0 %v1873
      %1929 = vmatpush1.bf16.msra.mxu0 %v1872
      %1930 = vmatprep.subr.bf16.mxu0 %v1877
      %1931 = vmatpush1.bf16.msra.mxu0 %v1876
      %1932 = vmatprep.subr.bf16.mxu0 %v1881
      %1933 = vmatpush1.bf16.msra.mxu0 %v1880
      %1934 = vmatprep.subr.bf16.mxu0 %v1885
      %1935 = vmatpush1.bf16.msra.mxu0 %v1884
      %1936 = vmatprep.subr.bf16.mxu0 0
      %1937 = vmatpush1.bf16.msra.mxu0 0
      %1938 = vmatprep.subr.bf16.mxu0 0
      %1939 = vmatpush1.bf16.msra.mxu0 0
      %1940 = vmatprep.subr.bf16.mxu0 0
      %1941 = vmatpush1.bf16.msra.mxu0 0
      %1942 = vmatprep.subr.bf16.mxu0 0
      %1943 = vmatpush1.bf16.msra.mxu0 0
      %1944 = vmatprep.subr.bf16.mxu0 0
      %1945 = vmatpush1.bf16.msra.mxu0 0
      %1946 = vmatprep.subr.bf16.mxu0 0
      %1947 = vmatpush1.bf16.msra.mxu0 0
      %1948 = vmatprep.subr.bf16.mxu0 0
      %1949 = vmatpush1.bf16.msra.mxu0 0
      %1950 = vmatprep.subr.bf16.mxu0 0
      %1951 = vmatpush1.bf16.msra.mxu0 0
      %1952 = vmatprep.mubr.bf16.mxu0 0
      %1953 = vmatmul.mubr.bf16.gmra.mrb[0].mxu0 %v1738
      %v1954 = vpop.f32.mrb[0].mxu0
      %v1955 = vadd.f32 %v1743, %v1954
      %v1956 = vpop.f32.mrb[0].mxu0
      %v1957 = vadd.f32 %v1747, %v1956
      %v1958 = vpop.f32.mrb[0].mxu0
      %v1959 = vpop.f32.mrb[0].mxu0
      %1960 = vdwg.mxu0
      %1961 = vmatprep.subr.bf16.mxu0 %v1859
      %1962 = vmatpush1.bf16.msra.mxu0 %v1858
      %1963 = vmatprep.subr.bf16.mxu0 %v1863
      %1964 = vmatpush1.bf16.msra.mxu0 %v1862
      %1965 = vmatprep.subr.bf16.mxu0 %v1867
      %1966 = vmatpush1.bf16.msra.mxu0 %v1866
      %1967 = vmatprep.subr.bf16.mxu0 %v1871
      %1968 = vmatpush1.bf16.msra.mxu0 %v1870
      %1969 = vmatprep.subr.bf16.mxu0 %v1875
      %1970 = vmatpush1.bf16.msra.mxu0 %v1874
      %1971 = vmatprep.subr.bf16.mxu0 %v1879
      %1972 = vmatpush1.bf16.msra.mxu0 %v1878
      %1973 = vmatprep.subr.bf16.mxu0 %v1883
      %1974 = vmatpush1.bf16.msra.mxu0 %v1882
      %1975 = vmatprep.subr.bf16.mxu0 %v1887
      %1976 = vmatpush1.bf16.msra.mxu0 %v1886
      %1977 = vmatprep.subr.bf16.mxu0 0
      %1978 = vmatpush1.bf16.msra.mxu0 0
      %1979 = vmatprep.subr.bf16.mxu0 0
      %1980 = vmatpush1.bf16.msra.mxu0 0
      %1981 = vmatprep.subr.bf16.mxu0 0
      %1982 = vmatpush1.bf16.msra.mxu0 0
      %1983 = vmatprep.subr.bf16.mxu0 0
      %1984 = vmatpush1.bf16.msra.mxu0 0
      %1985 = vmatprep.subr.bf16.mxu0 0
      %1986 = vmatpush1.bf16.msra.mxu0 0
      %1987 = vmatprep.subr.bf16.mxu0 0
      %1988 = vmatpush1.bf16.msra.mxu0 0
      %1989 = vmatprep.subr.bf16.mxu0 0
      %1990 = vmatpush1.bf16.msra.mxu0 0
      %1991 = vmatprep.subr.bf16.mxu0 0
      %1992 = vmatpush1.bf16.msra.mxu0 0
      %1993 = vmatprep.mubr.bf16.mxu0 0
      %1994 = vmatmul.mubr.bf16.gmra.mrb[0].mxu0 %v1738
      %v1995 = vpop.f32.mrb[0].mxu0
      %v1996 = vadd.f32 %v1751, %v1995
      %v1997 = vpop.f32.mrb[0].mxu0
      %v1998 = vadd.f32 %v1755, %v1997
      %v1999 = vpop.f32.mrb[0].mxu0
      %v2000 = vpop.f32.mrb[0].mxu0
      %2001 = vdwg.mxu0
      %v2002 = vmul.f32 %v1955, %v1955
      %v2003 = vmul.f32 %v1957, %v1957
      %v2004 = vmul.f32 %v1996, %v1996
      %v2005 = vmul.f32 %v1998, %v1998
      %v2006 = vmul.f32 %v1955, %v2002
      %v2007 = vmul.f32 %v1957, %v2003
      %v2008 = vmul.f32 %v1996, %v2004
      %v2009 = vmul.f32 %v1998, %v2005
      %v2010 = vmul.f32 %v2006, 0.044715
      %v2011 = vmul.f32 %v2007, 0.044715
      %v2012 = vmul.f32 %v2008, 0.044715
      %v2013 = vmul.f32 %v2009, 0.044715
      %v2014 = vadd.f32 %v1955, %v2010
      %v2015 = vadd.f32 %v1957, %v2011
      %v2016 = vadd.f32 %v1996, %v2012
      %v2017 = vadd.f32 %v1998, %v2013
      %v2018 = vmul.f32 %v2014, 0.7978846
      %v2019 = vmul.f32 %v2015, 0.7978846
      %v2020 = vmul.f32 %v2016, 0.7978846
      %v2021 = vmul.f32 %v2017, 0.7978846
      %v2022 = vtanh.pop %v2018
      %v2023 = vtanh.pop %v2019
      %v2024 = vtanh.pop %v2020
      %v2025 = vtanh.pop %v2021
      %v2026 = vadd.f32 %v2022, 1.0
      %v2027 = vadd.f32 %v2023, 1.0
      %v2028 = vadd.f32 %v2024, 1.0
      %v2029 = vadd.f32 %v2025, 1.0
      %v2030 = vmul.f32 %v2026, 0.5
      %v2031 = vmul.f32 %v2027, 0.5
      %v2032 = vmul.f32 %v2028, 0.5
      %v2033 = vmul.f32 %v2029, 0.5
      %v2034 = vmul.f32 %v1955, %v2030
      %v2035 = vmul.f32 %v1957, %v2031
      %v2036 = vmul.f32 %v1996, %v2032
      %v2037 = vmul.f32 %v1998, %v2033
      %v2038 = vpack.c.bf16 %v2034, %v2034
      %v2039 = vpack.c.bf16 %v2035, %v2035
      %v2040 = vpack.c.bf16 %v2036, %v2036
      %v2041 = vpack.c.bf16 %v2037, %v2037
      %v2043 = vlaneseq
      %v2044 = vshrl.u32 %v2043, 7
      %v2045 = vsub.s32 0, %v2044
      %v2046 = vrot.slane %v764, %v2045
      %v2112 = vunpack.c.l.b16 %v700
      %v2113 = vunpack.c.l.b16 %v701
      %v2114 = vunpack.c.l.b16 %v702
      %v2115 = vunpack.c.l.b16 %v703
      %v2116 = vunpack.c.l.b16 %v704
      %v2117 = vunpack.c.l.b16 %v705
      %v2118 = vunpack.c.l.b16 %v706
      %v2119 = vunpack.c.l.b16 %v707
      %v2120 = vunpack.c.l.b16 %v708
      %v2121 = vunpack.c.l.b16 %v709
      %v2122 = vunpack.c.l.b16 %v710
      %v2123 = vunpack.c.l.b16 %v711
      %v2124 = vunpack.c.l.b16 %v712
      %v2125 = vunpack.c.l.b16 %v713
      %v2126 = vunpack.c.l.b16 %v714
      %v2127 = vunpack.c.l.b16 %v715
      %v2128 = vunpack.c.l.b16 %v716
      %v2129 = vunpack.c.l.b16 %v717
      %v2130 = vunpack.c.l.b16 %v718
      %v2131 = vunpack.c.l.b16 %v719
      %v2132 = vunpack.c.l.b16 %v720
      %v2133 = vunpack.c.l.b16 %v721
      %v2134 = vunpack.c.l.b16 %v722
      %v2135 = vunpack.c.l.b16 %v723
      %v2136 = vunpack.c.l.b16 %v724
      %v2137 = vunpack.c.l.b16 %v725
      %v2138 = vunpack.c.l.b16 %v726
      %v2139 = vunpack.c.l.b16 %v727
      %v2140 = vunpack.c.l.b16 %v728
      %v2141 = vunpack.c.l.b16 %v729
      %v2142 = vunpack.c.l.b16 %v730
      %v2143 = vunpack.c.l.b16 %v731
      %v2144 = vunpack.c.l.b16 %v732
      %v2145 = vunpack.c.l.b16 %v733
      %v2146 = vunpack.c.l.b16 %v734
      %v2147 = vunpack.c.l.b16 %v735
      %v2148 = vunpack.c.l.b16 %v736
      %v2149 = vunpack.c.l.b16 %v737
      %v2150 = vunpack.c.l.b16 %v738
      %v2151 = vunpack.c.l.b16 %v739
      %v2152 = vunpack.c.l.b16 %v740
      %v2153 = vunpack.c.l.b16 %v741
      %v2154 = vunpack.c.l.b16 %v742
      %v2155 = vunpack.c.l.b16 %v743
      %v2156 = vunpack.c.l.b16 %v744
      %v2157 = vunpack.c.l.b16 %v745
      %v2158 = vunpack.c.l.b16 %v746
      %v2159 = vunpack.c.l.b16 %v747
      %v2160 = vunpack.c.l.b16 %v748
      %v2161 = vunpack.c.l.b16 %v749
      %v2162 = vunpack.c.l.b16 %v750
      %v2163 = vunpack.c.l.b16 %v751
      %v2164 = vunpack.c.l.b16 %v752
      %v2165 = vunpack.c.l.b16 %v753
      %v2166 = vunpack.c.l.b16 %v754
      %v2167 = vunpack.c.l.b16 %v755
      %v2168 = vunpack.c.l.b16 %v756
      %v2169 = vunpack.c.l.b16 %v757
      %v2170 = vunpack.c.l.b16 %v758
      %v2171 = vunpack.c.l.b16 %v759
      %v2172 = vunpack.c.l.b16 %v760
      %v2173 = vunpack.c.l.b16 %v761
      %v2174 = vunpack.c.l.b16 %v762
      %v2175 = vunpack.c.l.b16 %v763
      %v2176 = vpack.c.b16 %v2113, %v2112
      %v2177 = vpack.c.b16 %v2115, %v2114
      %v2178 = vpack.c.b16 %v2117, %v2116
      %v2179 = vpack.c.b16 %v2119, %v2118
      %v2180 = vpack.c.b16 %v2121, %v2120
      %v2181 = vpack.c.b16 %v2123, %v2122
      %v2182 = vpack.c.b16 %v2125, %v2124
      %v2183 = vpack.c.b16 %v2127, %v2126
      %v2184 = vpack.c.b16 %v2129, %v2128
      %v2185 = vpack.c.b16 %v2131, %v2130
      %v2186 = vpack.c.b16 %v2133, %v2132
      %v2187 = vpack.c.b16 %v2135, %v2134
      %v2188 = vpack.c.b16 %v2137, %v2136
      %v2189 = vpack.c.b16 %v2139, %v2138
      %v2190 = vpack.c.b16 %v2141, %v2140
      %v2191 = vpack.c.b16 %v2143, %v2142
      %v2192 = vpack.c.b16 %v2145, %v2144
      %v2193 = vpack.c.b16 %v2147, %v2146
      %v2194 = vpack.c.b16 %v2149, %v2148
      %v2195 = vpack.c.b16 %v2151, %v2150
      %v2196 = vpack.c.b16 %v2153, %v2152
      %v2197 = vpack.c.b16 %v2155, %v2154
      %v2198 = vpack.c.b16 %v2157, %v2156
      %v2199 = vpack.c.b16 %v2159, %v2158
      %v2200 = vpack.c.b16 %v2161, %v2160
      %v2201 = vpack.c.b16 %v2163, %v2162
      %v2202 = vpack.c.b16 %v2165, %v2164
      %v2203 = vpack.c.b16 %v2167, %v2166
      %v2204 = vpack.c.b16 %v2169, %v2168
      %v2205 = vpack.c.b16 %v2171, %v2170
      %v2206 = vpack.c.b16 %v2173, %v2172
      %v2207 = vpack.c.b16 %v2175, %v2174
      %2240 = vmatprep.subr.bf16.mxu0 0
      %2241 = vmatpush1.bf16.msra.mxu0 %v2176
      %2242 = vmatprep.subr.bf16.mxu0 0
      %2243 = vmatpush1.bf16.msra.mxu0 %v2177
      %2244 = vmatprep.subr.bf16.mxu0 0
      %2245 = vmatpush1.bf16.msra.mxu0 %v2178
      %2246 = vmatprep.subr.bf16.mxu0 0
      %2247 = vmatpush1.bf16.msra.mxu0 %v2179
      %2248 = vmatprep.subr.bf16.mxu0 0
      %2249 = vmatpush1.bf16.msra.mxu0 %v2180
      %2250 = vmatprep.subr.bf16.mxu0 0
      %2251 = vmatpush1.bf16.msra.mxu0 %v2181
      %2252 = vmatprep.subr.bf16.mxu0 0
      %2253 = vmatpush1.bf16.msra.mxu0 %v2182
      %2254 = vmatprep.subr.bf16.mxu0 0
      %2255 = vmatpush1.bf16.msra.mxu0 %v2183
      %2256 = vmatprep.subr.bf16.mxu0 0
      %2257 = vmatpush1.bf16.msra.mxu0 %v2184
      %2258 = vmatprep.subr.bf16.mxu0 0
      %2259 = vmatpush1.bf16.msra.mxu0 %v2185
      %2260 = vmatprep.subr.bf16.mxu0 0
      %2261 = vmatpush1.bf16.msra.mxu0 %v2186
      %2262 = vmatprep.subr.bf16.mxu0 0
      %2263 = vmatpush1.bf16.msra.mxu0 %v2187
      %2264 = vmatprep.subr.bf16.mxu0 0
      %2265 = vmatpush1.bf16.msra.mxu0 %v2188
      %2266 = vmatprep.subr.bf16.mxu0 0
      %2267 = vmatpush1.bf16.msra.mxu0 %v2189
      %2268 = vmatprep.subr.bf16.mxu0 0
      %2269 = vmatpush1.bf16.msra.mxu0 %v2190
      %2270 = vmatprep.subr.bf16.mxu0 0
      %2271 = vmatpush1.bf16.msra.mxu0 %v2191
      %2272 = vmatprep.mubr.bf16.mxu0 %v2039
      %2273 = vmatmul.mubr.bf16.gmra.mrb[0].mxu0 %v2038
      %v2274 = vpop.f32.mrb[0].mxu0
      %v2275 = vadd.f32 %v2046, %v2274
      %v2276 = vpop.f32.mrb[0].mxu0
      %v2277 = vpop.f32.mrb[0].mxu0
      %v2278 = vpop.f32.mrb[0].mxu0
      %2279 = vdwg.mxu0
      %2280 = vmatprep.subr.bf16.mxu0 0
      %2281 = vmatpush1.bf16.msra.mxu0 %v2192
      %2282 = vmatprep.subr.bf16.mxu0 0
      %2283 = vmatpush1.bf16.msra.mxu0 %v2193
      %2284 = vmatprep.subr.bf16.mxu0 0
      %2285 = vmatpush1.bf16.msra.mxu0 %v2194
      %2286 = vmatprep.subr.bf16.mxu0 0
      %2287 = vmatpush1.bf16.msra.mxu0 %v2195
      %2288 = vmatprep.subr.bf16.mxu0 0
      %2289 = vmatpush1.bf16.msra.mxu0 %v2196
      %2290 = vmatprep.subr.bf16.mxu0 0
      %2291 = vmatpush1.bf16.msra.mxu0 %v2197
      %2292 = vmatprep.subr.bf16.mxu0 0
      %2293 = vmatpush1.bf16.msra.mxu0 %v2198
      %2294 = vmatprep.subr.bf16.mxu0 0
      %2295 = vmatpush1.bf16.msra.mxu0 %v2199
      %2296 = vmatprep.subr.bf16.mxu0 0
      %2297 = vmatpush1.bf16.msra.mxu0 %v2200
      %2298 = vmatprep.subr.bf16.mxu0 0
      %2299 = vmatpush1.bf16.msra.mxu0 %v2201
      %2300 = vmatprep.subr.bf16.mxu0 0
      %2301 = vmatpush1.bf16.msra.mxu0 %v2202
      %2302 = vmatprep.subr.bf16.mxu0 0
      %2303 = vmatpush1.bf16.msra.mxu0 %v2203
      %2304 = vmatprep.subr.bf16.mxu0 0
      %2305 = vmatpush1.bf16.msra.mxu0 %v2204
      %2306 = vmatprep.subr.bf16.mxu0 0
      %2307 = vmatpush1.bf16.msra.mxu0 %v2205
      %2308 = vmatprep.subr.bf16.mxu0 0
      %2309 = vmatpush1.bf16.msra.mxu0 %v2206
      %2310 = vmatprep.subr.bf16.mxu0 0
      %2311 = vmatpush1.bf16.msra.mxu0 %v2207
      %2312 = vmatprep.mubr.bf16.mxu0 %v2041
      %2313 = vmatmul.mubr.bf16.gmra.mrb[0].mxu0 %v2040
      %v2314 = vpop.f32.mrb[0].mxu0
      %v2315 = vadd.f32 %v2275, %v2314
      %v2316 = vpop.f32.mrb[0].mxu0
      %v2317 = vpop.f32.mrb[0].mxu0
      %v2318 = vpop.f32.mrb[0].mxu0
      %2319 = vdwg.mxu0
      %v2320 = vadd.f32 %v1710, %v2315
      %2321 = vst [vmem:[%s13] sm:$0x1f] %v2320
      %s2322 = scalar_lea.vmem %s13, 8
      %v2323 = vld [vmem:[%s2322] sm:$0x1f]
      %v2324 = vsel %vm766, %v2323, 0.0
      %2325 = vadd.xlane.f32.xlu0 %v2324
      %v2326 = vpop.xlane.xlu0 %2325
      %v2327 = vmul.f32 %v2326, %v770
      %v2328 = vsub.f32 %v2323, %v2327
      %v2329 = vmul.f32 %v2328, %v2328
      %v2330 = vsel %vm766, %v2329, 0.0
      %2331 = vadd.xlane.f32.xlu0 %v2330
      %v2332 = vpop.xlane.xlu0 %2331
      %v2333 = vmul.f32 %v2332, %v770
      %v2334 = vadd.f32 %v2333, 1e-05
      %v2335 = vrsqrt.pop %v2334
      %v2336 = vmul.f32 %v2328, %v2335
      %v2337 = vmul.f32 %v2336, %v785
      %v2338 = vadd.f32 %v2337, %v792
      %v2339 = vpack.c.bf16 %v2338, %v2338
      %2340 = vmatprep.subr.bf16.mxu0 %v893
      %2341 = vmatpush1.bf16.msra.mxu0 %v892
      %2342 = vmatprep.subr.bf16.mxu0 %v896
      %2343 = vmatpush1.bf16.msra.mxu0 %v895
      %2344 = vmatprep.subr.bf16.mxu0 %v899
      %2345 = vmatpush1.bf16.msra.mxu0 %v898
      %2346 = vmatprep.subr.bf16.mxu0 %v902
      %2347 = vmatpush1.bf16.msra.mxu0 %v901
      %2348 = vmatprep.subr.bf16.mxu0 %v905
      %2349 = vmatpush1.bf16.msra.mxu0 %v904
      %2350 = vmatprep.subr.bf16.mxu0 %v908
      %2351 = vmatpush1.bf16.msra.mxu0 %v907
      %2352 = vmatprep.subr.bf16.mxu0 %v911
      %2353 = vmatpush1.bf16.msra.mxu0 %v910
      %2354 = vmatprep.subr.bf16.mxu0 %v914
      %2355 = vmatpush1.bf16.msra.mxu0 %v913
      %2356 = vmatprep.subr.bf16.mxu0 0
      %2357 = vmatpush1.bf16.msra.mxu0 0
      %2358 = vmatprep.subr.bf16.mxu0 0
      %2359 = vmatpush1.bf16.msra.mxu0 0
      %2360 = vmatprep.subr.bf16.mxu0 0
      %2361 = vmatpush1.bf16.msra.mxu0 0
      %2362 = vmatprep.subr.bf16.mxu0 0
      %2363 = vmatpush1.bf16.msra.mxu0 0
      %2364 = vmatprep.subr.bf16.mxu0 0
      %2365 = vmatpush1.bf16.msra.mxu0 0
      %2366 = vmatprep.subr.bf16.mxu0 0
      %2367 = vmatpush1.bf16.msra.mxu0 0
      %2368 = vmatprep.subr.bf16.mxu0 0
      %2369 = vmatpush1.bf16.msra.mxu0 0
      %2370 = vmatprep.subr.bf16.mxu0 0
      %2371 = vmatpush1.bf16.msra.mxu0 0
      %2372 = vmatprep.mubr.bf16.mxu0 0
      %2373 = vmatmul.mubr.bf16.gmra.mrb[0].mxu0 %v2339
      %v2374 = vpop.f32.mrb[0].mxu0
      %v2375 = vadd.f32 %v800, %v2374
      %v2376 = vpop.f32.mrb[0].mxu0
      %v2377 = vadd.f32 %v804, %v2376
      %v2378 = vpop.f32.mrb[0].mxu0
      %v2379 = vpop.f32.mrb[0].mxu0
      %2380 = vdwg.mxu0
      %2381 = vmatprep.subr.bf16.mxu0 0
      %2382 = vmatpush1.bf16.msra.mxu0 %v894
      %2383 = vmatprep.subr.bf16.mxu0 0
      %2384 = vmatpush1.bf16.msra.mxu0 %v897
      %2385 = vmatprep.subr.bf16.mxu0 0
      %2386 = vmatpush1.bf16.msra.mxu0 %v900
      %2387 = vmatprep.subr.bf16.mxu0 0
      %2388 = vmatpush1.bf16.msra.mxu0 %v903
      %2389 = vmatprep.subr.bf16.mxu0 0
      %2390 = vmatpush1.bf16.msra.mxu0 %v906
      %2391 = vmatprep.subr.bf16.mxu0 0
      %2392 = vmatpush1.bf16.msra.mxu0 %v909
      %2393 = vmatprep.subr.bf16.mxu0 0
      %2394 = vmatpush1.bf16.msra.mxu0 %v912
      %2395 = vmatprep.subr.bf16.mxu0 0
      %2396 = vmatpush1.bf16.msra.mxu0 %v915
      %2397 = vmatprep.subr.bf16.mxu0 0
      %2398 = vmatpush1.bf16.msra.mxu0 0
      %2399 = vmatprep.subr.bf16.mxu0 0
      %2400 = vmatpush1.bf16.msra.mxu0 0
      %2401 = vmatprep.subr.bf16.mxu0 0
      %2402 = vmatpush1.bf16.msra.mxu0 0
      %2403 = vmatprep.subr.bf16.mxu0 0
      %2404 = vmatpush1.bf16.msra.mxu0 0
      %2405 = vmatprep.subr.bf16.mxu0 0
      %2406 = vmatpush1.bf16.msra.mxu0 0
      %2407 = vmatprep.subr.bf16.mxu0 0
      %2408 = vmatpush1.bf16.msra.mxu0 0
      %2409 = vmatprep.subr.bf16.mxu0 0
      %2410 = vmatpush1.bf16.msra.mxu0 0
      %2411 = vmatprep.subr.bf16.mxu0 0
      %2412 = vmatpush1.bf16.msra.mxu0 0
      %2413 = vmatprep.mubr.bf16.mxu0 0
      %2414 = vmatmul.mubr.bf16.gmra.mrb[0].mxu0 %v2339
      %v2415 = vpop.f32.mrb[0].mxu0
      %v2416 = vadd.f32 %v808, %v2415
      %v2417 = vpop.f32.mrb[0].mxu0
      %v2418 = vpop.f32.mrb[0].mxu0
      %v2419 = vpop.f32.mrb[0].mxu0
      %2420 = vdwg.mxu0
      %v2421 = vpack.c.bf16 %v2375, %v2375
      %v2422 = vpack.c.bf16 %v2377, %v2377
      %v2423 = vpack.c.bf16 %v2416, %v2416
      %2425 = vrot.lane.b32.xlu0 %v2421, 96
      %v2426 = vpop.permute.xlu0 %2425
      %2427 = vrot.lane.b32.xlu0 %v2421, 64
      %v2428 = vpop.permute.xlu0 %2427
      %2429 = vrot.lane.b32.xlu0 %v2421, 32
      %v2430 = vpop.permute.xlu0 %2429
      %2432 = vrot.lane.b32.xlu0 %v2422, 96
      %v2433 = vpop.permute.xlu0 %2432
      %2434 = vrot.lane.b32.xlu0 %v2422, 64
      %v2435 = vpop.permute.xlu0 %2434
      %2436 = vrot.lane.b32.xlu0 %v2422, 32
      %v2437 = vpop.permute.xlu0 %2436
      %2439 = vrot.lane.b32.xlu0 %v2423, 96
      %v2440 = vpop.permute.xlu0 %2439
      %2441 = vrot.lane.b32.xlu0 %v2423, 64
      %v2442 = vpop.permute.xlu0 %2441
      %2443 = vrot.lane.b32.xlu0 %v2423, 32
      %v2444 = vpop.permute.xlu0 %2443
      %v2446 = vsel %vm1045, %v2421, 0
      %v2449 = vsel %vm1045, %v2422, 0
      %2451 = vmatprep.subr.bf16.mxu0 0
      %2452 = vmatpush1.bf16.xpose.msra.mxu0 %v2449
      %2453 = vmatprep.subr.bf16.mxu0 0
      %2454 = vmatpush1.bf16.xpose.msra.mxu0 0
      %2455 = vmatprep.subr.bf16.mxu0 0
      %2456 = vmatpush1.bf16.xpose.msra.mxu0 0
      %2457 = vmatprep.subr.bf16.mxu0 0
      %2458 = vmatpush1.bf16.xpose.msra.mxu0 0
      %2459 = vmatprep.subr.bf16.mxu0 0
      %2460 = vmatpush1.bf16.xpose.msra.mxu0 0
      %2461 = vmatprep.subr.bf16.mxu0 0
      %2462 = vmatpush1.bf16.xpose.msra.mxu0 0
      %2463 = vmatprep.subr.bf16.mxu0 0
      %2464 = vmatpush1.bf16.xpose.msra.mxu0 0
      %2465 = vmatprep.subr.bf16.mxu0 0
      %2466 = vmatpush1.bf16.xpose.msra.mxu0 0
      %2467 = vmatprep.subr.bf16.mxu0 0
      %2468 = vmatpush1.bf16.xpose.msra.mxu0 0
      %2469 = vmatprep.subr.bf16.mxu0 0
      %2470 = vmatpush1.bf16.xpose.msra.mxu0 0
      %2471 = vmatprep.subr.bf16.mxu0 0
      %2472 = vmatpush1.bf16.xpose.msra.mxu0 0
      %2473 = vmatprep.subr.bf16.mxu0 0
      %2474 = vmatpush1.bf16.xpose.msra.mxu0 0
      %2475 = vmatprep.subr.bf16.mxu0 0
      %2476 = vmatpush1.bf16.xpose.msra.mxu0 0
      %2477 = vmatprep.subr.bf16.mxu0 0
      %2478 = vmatpush1.bf16.xpose.msra.mxu0 0
      %2479 = vmatprep.subr.bf16.mxu0 0
      %2480 = vmatpush1.bf16.xpose.msra.mxu0 0
      %2481 = vmatprep.subr.bf16.mxu0 0
      %2482 = vmatpush1.bf16.xpose.msra.mxu0 0
      %2483 = vmatprep.mubr.bf16.mxu0 0
      %2484 = vmatmul.mubr.bf16.gmra.mrb[0].mxu0 %v2446
      %v2485 = vpop.f32.mrb[0].mxu0
      %v2486 = vadd.f32 0.0, %v2485
      %v2487 = vpop.f32.mrb[0].mxu0
      %v2488 = vpop.f32.mrb[0].mxu0
      %v2489 = vpop.f32.mrb[0].mxu0
      %2490 = vdwg.mxu0
      %v2492 = vsel %vm1045, %v2426, 0
      %v2495 = vsel %vm1045, %v2433, 0
      %2497 = vmatprep.subr.bf16.mxu0 0
      %2498 = vmatpush1.bf16.xpose.msra.mxu0 %v2495
      %2499 = vmatprep.subr.bf16.mxu0 0
      %2500 = vmatpush1.bf16.xpose.msra.mxu0 0
      %2501 = vmatprep.subr.bf16.mxu0 0
      %2502 = vmatpush1.bf16.xpose.msra.mxu0 0
      %2503 = vmatprep.subr.bf16.mxu0 0
      %2504 = vmatpush1.bf16.xpose.msra.mxu0 0
      %2505 = vmatprep.subr.bf16.mxu0 0
      %2506 = vmatpush1.bf16.xpose.msra.mxu0 0
      %2507 = vmatprep.subr.bf16.mxu0 0
      %2508 = vmatpush1.bf16.xpose.msra.mxu0 0
      %2509 = vmatprep.subr.bf16.mxu0 0
      %2510 = vmatpush1.bf16.xpose.msra.mxu0 0
      %2511 = vmatprep.subr.bf16.mxu0 0
      %2512 = vmatpush1.bf16.xpose.msra.mxu0 0
      %2513 = vmatprep.subr.bf16.mxu0 0
      %2514 = vmatpush1.bf16.xpose.msra.mxu0 0
      %2515 = vmatprep.subr.bf16.mxu0 0
      %2516 = vmatpush1.bf16.xpose.msra.mxu0 0
      %2517 = vmatprep.subr.bf16.mxu0 0
      %2518 = vmatpush1.bf16.xpose.msra.mxu0 0
      %2519 = vmatprep.subr.bf16.mxu0 0
      %2520 = vmatpush1.bf16.xpose.msra.mxu0 0
      %2521 = vmatprep.subr.bf16.mxu0 0
      %2522 = vmatpush1.bf16.xpose.msra.mxu0 0
      %2523 = vmatprep.subr.bf16.mxu0 0
      %2524 = vmatpush1.bf16.xpose.msra.mxu0 0
      %2525 = vmatprep.subr.bf16.mxu0 0
      %2526 = vmatpush1.bf16.xpose.msra.mxu0 0
      %2527 = vmatprep.subr.bf16.mxu0 0
      %2528 = vmatpush1.bf16.xpose.msra.mxu0 0
      %2529 = vmatprep.mubr.bf16.mxu0 0
      %2530 = vmatmul.mubr.bf16.gmra.mrb[0].mxu0 %v2492
      %v2531 = vpop.f32.mrb[0].mxu0
      %v2532 = vadd.f32 0.0, %v2531
      %v2533 = vpop.f32.mrb[0].mxu0
      %v2534 = vpop.f32.mrb[0].mxu0
      %v2535 = vpop.f32.mrb[0].mxu0
      %2536 = vdwg.mxu0
      %v2538 = vsel %vm1045, %v2428, 0
      %v2541 = vsel %vm1045, %v2435, 0
      %2543 = vmatprep.subr.bf16.mxu0 0
      %2544 = vmatpush1.bf16.xpose.msra.mxu0 %v2541
      %2545 = vmatprep.subr.bf16.mxu0 0
      %2546 = vmatpush1.bf16.xpose.msra.mxu0 0
      %2547 = vmatprep.subr.bf16.mxu0 0
      %2548 = vmatpush1.bf16.xpose.msra.mxu0 0
      %2549 = vmatprep.subr.bf16.mxu0 0
      %2550 = vmatpush1.bf16.xpose.msra.mxu0 0
      %2551 = vmatprep.subr.bf16.mxu0 0
      %2552 = vmatpush1.bf16.xpose.msra.mxu0 0
      %2553 = vmatprep.subr.bf16.mxu0 0
      %2554 = vmatpush1.bf16.xpose.msra.mxu0 0
      %2555 = vmatprep.subr.bf16.mxu0 0
      %2556 = vmatpush1.bf16.xpose.msra.mxu0 0
      %2557 = vmatprep.subr.bf16.mxu0 0
      %2558 = vmatpush1.bf16.xpose.msra.mxu0 0
      %2559 = vmatprep.subr.bf16.mxu0 0
      %2560 = vmatpush1.bf16.xpose.msra.mxu0 0
      %2561 = vmatprep.subr.bf16.mxu0 0
      %2562 = vmatpush1.bf16.xpose.msra.mxu0 0
      %2563 = vmatprep.subr.bf16.mxu0 0
      %2564 = vmatpush1.bf16.xpose.msra.mxu0 0
      %2565 = vmatprep.subr.bf16.mxu0 0
      %2566 = vmatpush1.bf16.xpose.msra.mxu0 0
      %2567 = vmatprep.subr.bf16.mxu0 0
      %2568 = vmatpush1.bf16.xpose.msra.mxu0 0
      %2569 = vmatprep.subr.bf16.mxu0 0
      %2570 = vmatpush1.bf16.xpose.msra.mxu0 0
      %2571 = vmatprep.subr.bf16.mxu0 0
      %2572 = vmatpush1.bf16.xpose.msra.mxu0 0
      %2573 = vmatprep.subr.bf16.mxu0 0
      %2574 = vmatpush1.bf16.xpose.msra.mxu0 0
      %2575 = vmatprep.mubr.bf16.mxu0 0
      %2576 = vmatmul.mubr.bf16.gmra.mrb[0].mxu0 %v2538
      %v2577 = vpop.f32.mrb[0].mxu0
      %v2578 = vadd.f32 0.0, %v2577
      %v2579 = vpop.f32.mrb[0].mxu0
      %v2580 = vpop.f32.mrb[0].mxu0
      %v2581 = vpop.f32.mrb[0].mxu0
      %2582 = vdwg.mxu0
      %v2584 = vsel %vm1045, %v2430, 0
      %v2587 = vsel %vm1045, %v2437, 0
      %2589 = vmatprep.subr.bf16.mxu0 0
      %2590 = vmatpush1.bf16.xpose.msra.mxu0 %v2587
      %2591 = vmatprep.subr.bf16.mxu0 0
      %2592 = vmatpush1.bf16.xpose.msra.mxu0 0
      %2593 = vmatprep.subr.bf16.mxu0 0
      %2594 = vmatpush1.bf16.xpose.msra.mxu0 0
      %2595 = vmatprep.subr.bf16.mxu0 0
      %2596 = vmatpush1.bf16.xpose.msra.mxu0 0
      %2597 = vmatprep.subr.bf16.mxu0 0
      %2598 = vmatpush1.bf16.xpose.msra.mxu0 0
      %2599 = vmatprep.subr.bf16.mxu0 0
      %2600 = vmatpush1.bf16.xpose.msra.mxu0 0
      %2601 = vmatprep.subr.bf16.mxu0 0
      %2602 = vmatpush1.bf16.xpose.msra.mxu0 0
      %2603 = vmatprep.subr.bf16.mxu0 0
      %2604 = vmatpush1.bf16.xpose.msra.mxu0 0
      %2605 = vmatprep.subr.bf16.mxu0 0
      %2606 = vmatpush1.bf16.xpose.msra.mxu0 0
      %2607 = vmatprep.subr.bf16.mxu0 0
      %2608 = vmatpush1.bf16.xpose.msra.mxu0 0
      %2609 = vmatprep.subr.bf16.mxu0 0
      %2610 = vmatpush1.bf16.xpose.msra.mxu0 0
      %2611 = vmatprep.subr.bf16.mxu0 0
      %2612 = vmatpush1.bf16.xpose.msra.mxu0 0
      %2613 = vmatprep.subr.bf16.mxu0 0
      %2614 = vmatpush1.bf16.xpose.msra.mxu0 0
      %2615 = vmatprep.subr.bf16.mxu0 0
      %2616 = vmatpush1.bf16.xpose.msra.mxu0 0
      %2617 = vmatprep.subr.bf16.mxu0 0
      %2618 = vmatpush1.bf16.xpose.msra.mxu0 0
      %2619 = vmatprep.subr.bf16.mxu0 0
      %2620 = vmatpush1.bf16.xpose.msra.mxu0 0
      %2621 = vmatprep.mubr.bf16.mxu0 0
      %2622 = vmatmul.mubr.bf16.gmra.mrb[0].mxu0 %v2584
      %v2623 = vpop.f32.mrb[0].mxu0
      %v2624 = vadd.f32 0.0, %v2623
      %v2625 = vpop.f32.mrb[0].mxu0
      %v2626 = vpop.f32.mrb[0].mxu0
      %v2627 = vpop.f32.mrb[0].mxu0
      %2628 = vdwg.mxu0
      %v2629 = vmul.f32 %v2486, 0.17677669
      %v2630 = vmul.f32 %v2532, 0.17677669
      %v2631 = vmul.f32 %v2578, 0.17677669
      %v2632 = vmul.f32 %v2624, 0.17677669
      %v2633 = vsel %vm1234, %v2629, -inf
      %2634 = vmax.xlane.f32.xlu0 %v2633
      %v2635 = vpop.xlane.xlu0 %2634
      %v2636 = vsel %vm1234, %v2630, -inf
      %2637 = vmax.xlane.f32.xlu0 %v2636
      %v2638 = vpop.xlane.xlu0 %2637
      %v2639 = vsel %vm1234, %v2631, -inf
      %2640 = vmax.xlane.f32.xlu0 %v2639
      %v2641 = vpop.xlane.xlu0 %2640
      %v2642 = vsel %vm1234, %v2632, -inf
      %2643 = vmax.xlane.f32.xlu0 %v2642
      %v2644 = vpop.xlane.xlu0 %2643
      %v2645 = vsub.f32 %v2629, %v2635
      %v2646 = vsub.f32 %v2630, %v2638
      %v2647 = vsub.f32 %v2631, %v2641
      %v2648 = vsub.f32 %v2632, %v2644
      %v2649 = vmul.f32 %v2645, 1.442695
      %v2650 = vpow.pop %v2649
      %v2651 = vmul.f32 %v2646, 1.442695
      %v2652 = vpow.pop %v2651
      %v2653 = vmul.f32 %v2647, 1.442695
      %v2654 = vpow.pop %v2653
      %v2655 = vmul.f32 %v2648, 1.442695
      %v2656 = vpow.pop %v2655
      %v2657 = vsel %vm1234, %v2650, 0.0
      %2658 = vadd.xlane.f32.xlu0 %v2657
      %v2659 = vpop.xlane.xlu0 %2658
      %v2660 = vsel %vm1234, %v2652, 0.0
      %2661 = vadd.xlane.f32.xlu0 %v2660
      %v2662 = vpop.xlane.xlu0 %2661
      %v2663 = vsel %vm1234, %v2654, 0.0
      %2664 = vadd.xlane.f32.xlu0 %v2663
      %v2665 = vpop.xlane.xlu0 %2664
      %v2666 = vsel %vm1234, %v2656, 0.0
      %2667 = vadd.xlane.f32.xlu0 %v2666
      %v2668 = vpop.xlane.xlu0 %2667
      %v2669 = vrcp.pop %v2659
      %v2670 = vrcp.pop %v2662
      %v2671 = vrcp.pop %v2665
      %v2672 = vrcp.pop %v2668
      %v2673 = vmul.f32 %v2650, %v2669
      %v2674 = vmul.f32 %v2652, %v2670
      %v2675 = vmul.f32 %v2654, %v2671
      %v2676 = vmul.f32 %v2656, %v2672
      %v2677 = vpack.c.bf16 %v2673, %v2673
      %v2678 = vpack.c.bf16 %v2674, %v2674
      %v2679 = vpack.c.bf16 %v2675, %v2675
      %v2680 = vpack.c.bf16 %v2676, %v2676
      %v2682 = vsel %vm1283, %v2677, 0
      %v2685 = vand.u32 %v2423, %v1290
      %2687 = vmatprep.subr.bf16.mxu0 0
      %2688 = vmatpush1.bf16.msra.mxu0 %v2685
      %2689 = vmatprep.subr.bf16.mxu0 0
      %2690 = vmatpush1.bf16.msra.mxu0 0
      %2691 = vmatprep.subr.bf16.mxu0 0
      %2692 = vmatpush1.bf16.msra.mxu0 0
      %2693 = vmatprep.subr.bf16.mxu0 0
      %2694 = vmatpush1.bf16.msra.mxu0 0
      %2695 = vmatprep.subr.bf16.mxu0 0
      %2696 = vmatpush1.bf16.msra.mxu0 0
      %2697 = vmatprep.subr.bf16.mxu0 0
      %2698 = vmatpush1.bf16.msra.mxu0 0
      %2699 = vmatprep.subr.bf16.mxu0 0
      %2700 = vmatpush1.bf16.msra.mxu0 0
      %2701 = vmatprep.subr.bf16.mxu0 0
      %2702 = vmatpush1.bf16.msra.mxu0 0
      %2703 = vmatprep.subr.bf16.mxu0 0
      %2704 = vmatpush1.bf16.msra.mxu0 0
      %2705 = vmatprep.subr.bf16.mxu0 0
      %2706 = vmatpush1.bf16.msra.mxu0 0
      %2707 = vmatprep.subr.bf16.mxu0 0
      %2708 = vmatpush1.bf16.msra.mxu0 0
      %2709 = vmatprep.subr.bf16.mxu0 0
      %2710 = vmatpush1.bf16.msra.mxu0 0
      %2711 = vmatprep.subr.bf16.mxu0 0
      %2712 = vmatpush1.bf16.msra.mxu0 0
      %2713 = vmatprep.subr.bf16.mxu0 0
      %2714 = vmatpush1.bf16.msra.mxu0 0
      %2715 = vmatprep.subr.bf16.mxu0 0
      %2716 = vmatpush1.bf16.msra.mxu0 0
      %2717 = vmatprep.subr.bf16.mxu0 0
      %2718 = vmatpush1.bf16.msra.mxu0 0
      %2719 = vmatprep.mubr.bf16.mxu0 0
      %2720 = vmatmul.mubr.bf16.gmra.mrb[0].mxu0 %v2682
      %v2721 = vpop.f32.mrb[0].mxu0
      %v2722 = vadd.f32 0.0, %v2721
      %v2723 = vpop.f32.mrb[0].mxu0
      %v2724 = vpop.f32.mrb[0].mxu0
      %v2725 = vpop.f32.mrb[0].mxu0
      %2726 = vdwg.mxu0
      %v2728 = vsel %vm1283, %v2678, 0
      %v2731 = vand.u32 %v2440, %v1290
      %2733 = vmatprep.subr.bf16.mxu0 0
      %2734 = vmatpush1.bf16.msra.mxu0 %v2731
      %2735 = vmatprep.subr.bf16.mxu0 0
      %2736 = vmatpush1.bf16.msra.mxu0 0
      %2737 = vmatprep.subr.bf16.mxu0 0
      %2738 = vmatpush1.bf16.msra.mxu0 0
      %2739 = vmatprep.subr.bf16.mxu0 0
      %2740 = vmatpush1.bf16.msra.mxu0 0
      %2741 = vmatprep.subr.bf16.mxu0 0
      %2742 = vmatpush1.bf16.msra.mxu0 0
      %2743 = vmatprep.subr.bf16.mxu0 0
      %2744 = vmatpush1.bf16.msra.mxu0 0
      %2745 = vmatprep.subr.bf16.mxu0 0
      %2746 = vmatpush1.bf16.msra.mxu0 0
      %2747 = vmatprep.subr.bf16.mxu0 0
      %2748 = vmatpush1.bf16.msra.mxu0 0
      %2749 = vmatprep.subr.bf16.mxu0 0
      %2750 = vmatpush1.bf16.msra.mxu0 0
      %2751 = vmatprep.subr.bf16.mxu0 0
      %2752 = vmatpush1.bf16.msra.mxu0 0
      %2753 = vmatprep.subr.bf16.mxu0 0
      %2754 = vmatpush1.bf16.msra.mxu0 0
      %2755 = vmatprep.subr.bf16.mxu0 0
      %2756 = vmatpush1.bf16.msra.mxu0 0
      %2757 = vmatprep.subr.bf16.mxu0 0
      %2758 = vmatpush1.bf16.msra.mxu0 0
      %2759 = vmatprep.subr.bf16.mxu0 0
      %2760 = vmatpush1.bf16.msra.mxu0 0
      %2761 = vmatprep.subr.bf16.mxu0 0
      %2762 = vmatpush1.bf16.msra.mxu0 0
      %2763 = vmatprep.subr.bf16.mxu0 0
      %2764 = vmatpush1.bf16.msra.mxu0 0
      %2765 = vmatprep.mubr.bf16.mxu0 0
      %2766 = vmatmul.mubr.bf16.gmra.mrb[0].mxu0 %v2728
      %v2767 = vpop.f32.mrb[0].mxu0
      %v2768 = vadd.f32 0.0, %v2767
      %v2769 = vpop.f32.mrb[0].mxu0
      %v2770 = vpop.f32.mrb[0].mxu0
      %v2771 = vpop.f32.mrb[0].mxu0
      %2772 = vdwg.mxu0
      %v2774 = vsel %vm1283, %v2679, 0
      %v2777 = vand.u32 %v2442, %v1290
      %2779 = vmatprep.subr.bf16.mxu0 0
      %2780 = vmatpush1.bf16.msra.mxu0 %v2777
      %2781 = vmatprep.subr.bf16.mxu0 0
      %2782 = vmatpush1.bf16.msra.mxu0 0
      %2783 = vmatprep.subr.bf16.mxu0 0
      %2784 = vmatpush1.bf16.msra.mxu0 0
      %2785 = vmatprep.subr.bf16.mxu0 0
      %2786 = vmatpush1.bf16.msra.mxu0 0
      %2787 = vmatprep.subr.bf16.mxu0 0
      %2788 = vmatpush1.bf16.msra.mxu0 0
      %2789 = vmatprep.subr.bf16.mxu0 0
      %2790 = vmatpush1.bf16.msra.mxu0 0
      %2791 = vmatprep.subr.bf16.mxu0 0
      %2792 = vmatpush1.bf16.msra.mxu0 0
      %2793 = vmatprep.subr.bf16.mxu0 0
      %2794 = vmatpush1.bf16.msra.mxu0 0
      %2795 = vmatprep.subr.bf16.mxu0 0
      %2796 = vmatpush1.bf16.msra.mxu0 0
      %2797 = vmatprep.subr.bf16.mxu0 0
      %2798 = vmatpush1.bf16.msra.mxu0 0
      %2799 = vmatprep.subr.bf16.mxu0 0
      %2800 = vmatpush1.bf16.msra.mxu0 0
      %2801 = vmatprep.subr.bf16.mxu0 0
      %2802 = vmatpush1.bf16.msra.mxu0 0
      %2803 = vmatprep.subr.bf16.mxu0 0
      %2804 = vmatpush1.bf16.msra.mxu0 0
      %2805 = vmatprep.subr.bf16.mxu0 0
      %2806 = vmatpush1.bf16.msra.mxu0 0
      %2807 = vmatprep.subr.bf16.mxu0 0
      %2808 = vmatpush1.bf16.msra.mxu0 0
      %2809 = vmatprep.subr.bf16.mxu0 0
      %2810 = vmatpush1.bf16.msra.mxu0 0
      %2811 = vmatprep.mubr.bf16.mxu0 0
      %2812 = vmatmul.mubr.bf16.gmra.mrb[0].mxu0 %v2774
      %v2813 = vpop.f32.mrb[0].mxu0
      %v2814 = vadd.f32 0.0, %v2813
      %v2815 = vpop.f32.mrb[0].mxu0
      %v2816 = vpop.f32.mrb[0].mxu0
      %v2817 = vpop.f32.mrb[0].mxu0
      %2818 = vdwg.mxu0
      %v2820 = vsel %vm1283, %v2680, 0
      %v2823 = vand.u32 %v2444, %v1290
      %2825 = vmatprep.subr.bf16.mxu0 0
      %2826 = vmatpush1.bf16.msra.mxu0 %v2823
      %2827 = vmatprep.subr.bf16.mxu0 0
      %2828 = vmatpush1.bf16.msra.mxu0 0
      %2829 = vmatprep.subr.bf16.mxu0 0
      %2830 = vmatpush1.bf16.msra.mxu0 0
      %2831 = vmatprep.subr.bf16.mxu0 0
      %2832 = vmatpush1.bf16.msra.mxu0 0
      %2833 = vmatprep.subr.bf16.mxu0 0
      %2834 = vmatpush1.bf16.msra.mxu0 0
      %2835 = vmatprep.subr.bf16.mxu0 0
      %2836 = vmatpush1.bf16.msra.mxu0 0
      %2837 = vmatprep.subr.bf16.mxu0 0
      %2838 = vmatpush1.bf16.msra.mxu0 0
      %2839 = vmatprep.subr.bf16.mxu0 0
      %2840 = vmatpush1.bf16.msra.mxu0 0
      %2841 = vmatprep.subr.bf16.mxu0 0
      %2842 = vmatpush1.bf16.msra.mxu0 0
      %2843 = vmatprep.subr.bf16.mxu0 0
      %2844 = vmatpush1.bf16.msra.mxu0 0
      %2845 = vmatprep.subr.bf16.mxu0 0
      %2846 = vmatpush1.bf16.msra.mxu0 0
      %2847 = vmatprep.subr.bf16.mxu0 0
      %2848 = vmatpush1.bf16.msra.mxu0 0
      %2849 = vmatprep.subr.bf16.mxu0 0
      %2850 = vmatpush1.bf16.msra.mxu0 0
      %2851 = vmatprep.subr.bf16.mxu0 0
      %2852 = vmatpush1.bf16.msra.mxu0 0
      %2853 = vmatprep.subr.bf16.mxu0 0
      %2854 = vmatpush1.bf16.msra.mxu0 0
      %2855 = vmatprep.subr.bf16.mxu0 0
      %2856 = vmatpush1.bf16.msra.mxu0 0
      %2857 = vmatprep.mubr.bf16.mxu0 0
      %2858 = vmatmul.mubr.bf16.gmra.mrb[0].mxu0 %v2820
      %v2859 = vpop.f32.mrb[0].mxu0
      %v2860 = vadd.f32 0.0, %v2859
      %v2861 = vpop.f32.mrb[0].mxu0
      %v2862 = vpop.f32.mrb[0].mxu0
      %v2863 = vpop.f32.mrb[0].mxu0
      %2864 = vdwg.mxu0
      %v2865 = vpack.c.bf16 %v2722, %v2722
      %v2866 = vpack.c.bf16 %v2768, %v2768
      %v2867 = vpack.c.bf16 %v2814, %v2814
      %v2868 = vpack.c.bf16 %v2860, %v2860
      %v2870 = vsel %vm1045, %v2865, 0
      %2872 = vmatprep.subr.bf16.mxu0 0
      %2873 = vmatpush1.bf16.msra.mxu0 %v1484
      %2874 = vmatprep.subr.bf16.mxu0 0
      %2875 = vmatpush1.bf16.msra.mxu0 %v1485
      %2876 = vmatprep.subr.bf16.mxu0 0
      %2877 = vmatpush1.bf16.msra.mxu0 0
      %2878 = vmatprep.subr.bf16.mxu0 0
      %2879 = vmatpush1.bf16.msra.mxu0 0
      %2880 = vmatprep.subr.bf16.mxu0 0
      %2881 = vmatpush1.bf16.msra.mxu0 0
      %2882 = vmatprep.subr.bf16.mxu0 0
      %2883 = vmatpush1.bf16.msra.mxu0 0
      %2884 = vmatprep.subr.bf16.mxu0 0
      %2885 = vmatpush1.bf16.msra.mxu0 0
      %2886 = vmatprep.subr.bf16.mxu0 0
      %2887 = vmatpush1.bf16.msra.mxu0 0
      %2888 = vmatprep.subr.bf16.mxu0 0
      %2889 = vmatpush1.bf16.msra.mxu0 0
      %2890 = vmatprep.subr.bf16.mxu0 0
      %2891 = vmatpush1.bf16.msra.mxu0 0
      %2892 = vmatprep.subr.bf16.mxu0 0
      %2893 = vmatpush1.bf16.msra.mxu0 0
      %2894 = vmatprep.subr.bf16.mxu0 0
      %2895 = vmatpush1.bf16.msra.mxu0 0
      %2896 = vmatprep.subr.bf16.mxu0 0
      %2897 = vmatpush1.bf16.msra.mxu0 0
      %2898 = vmatprep.subr.bf16.mxu0 0
      %2899 = vmatpush1.bf16.msra.mxu0 0
      %2900 = vmatprep.subr.bf16.mxu0 0
      %2901 = vmatpush1.bf16.msra.mxu0 0
      %2902 = vmatprep.subr.bf16.mxu0 0
      %2903 = vmatpush1.bf16.msra.mxu0 0
      %2904 = vmatprep.mubr.bf16.mxu0 0
      %2905 = vmatmul.mubr.bf16.gmra.mrb[0].mxu0 %v2870
      %v2906 = vpop.f32.mrb[0].mxu0
      %v2907 = vadd.f32 0.0, %v2906
      %v2908 = vpop.f32.mrb[0].mxu0
      %v2909 = vpop.f32.mrb[0].mxu0
      %v2910 = vpop.f32.mrb[0].mxu0
      %2911 = vdwg.mxu0
      %v2913 = vsel %vm1045, %v2866, 0
      %2915 = vmatprep.subr.bf16.mxu0 0
      %2916 = vmatpush1.bf16.msra.mxu0 %v1539
      %2917 = vmatprep.subr.bf16.mxu0 0
      %2918 = vmatpush1.bf16.msra.mxu0 %v1540
      %2919 = vmatprep.subr.bf16.mxu0 0
      %2920 = vmatpush1.bf16.msra.mxu0 0
      %2921 = vmatprep.subr.bf16.mxu0 0
      %2922 = vmatpush1.bf16.msra.mxu0 0
      %2923 = vmatprep.subr.bf16.mxu0 0
      %2924 = vmatpush1.bf16.msra.mxu0 0
      %2925 = vmatprep.subr.bf16.mxu0 0
      %2926 = vmatpush1.bf16.msra.mxu0 0
      %2927 = vmatprep.subr.bf16.mxu0 0
      %2928 = vmatpush1.bf16.msra.mxu0 0
      %2929 = vmatprep.subr.bf16.mxu0 0
      %2930 = vmatpush1.bf16.msra.mxu0 0
      %2931 = vmatprep.subr.bf16.mxu0 0
      %2932 = vmatpush1.bf16.msra.mxu0 0
      %2933 = vmatprep.subr.bf16.mxu0 0
      %2934 = vmatpush1.bf16.msra.mxu0 0
      %2935 = vmatprep.subr.bf16.mxu0 0
      %2936 = vmatpush1.bf16.msra.mxu0 0
      %2937 = vmatprep.subr.bf16.mxu0 0
      %2938 = vmatpush1.bf16.msra.mxu0 0
      %2939 = vmatprep.subr.bf16.mxu0 0
      %2940 = vmatpush1.bf16.msra.mxu0 0
      %2941 = vmatprep.subr.bf16.mxu0 0
      %2942 = vmatpush1.bf16.msra.mxu0 0
      %2943 = vmatprep.subr.bf16.mxu0 0
      %2944 = vmatpush1.bf16.msra.mxu0 0
      %2945 = vmatprep.subr.bf16.mxu0 0
      %2946 = vmatpush1.bf16.msra.mxu0 0
      %2947 = vmatprep.mubr.bf16.mxu0 0
      %2948 = vmatmul.mubr.bf16.gmra.mrb[0].mxu0 %v2913
      %v2949 = vpop.f32.mrb[0].mxu0
      %v2950 = vadd.f32 0.0, %v2949
      %v2951 = vpop.f32.mrb[0].mxu0
      %v2952 = vpop.f32.mrb[0].mxu0
      %v2953 = vpop.f32.mrb[0].mxu0
      %2954 = vdwg.mxu0
      %v2956 = vsel %vm1045, %v2867, 0
      %2958 = vmatprep.subr.bf16.mxu0 0
      %2959 = vmatpush1.bf16.msra.mxu0 %v1594
      %2960 = vmatprep.subr.bf16.mxu0 0
      %2961 = vmatpush1.bf16.msra.mxu0 %v1595
      %2962 = vmatprep.subr.bf16.mxu0 0
      %2963 = vmatpush1.bf16.msra.mxu0 0
      %2964 = vmatprep.subr.bf16.mxu0 0
      %2965 = vmatpush1.bf16.msra.mxu0 0
      %2966 = vmatprep.subr.bf16.mxu0 0
      %2967 = vmatpush1.bf16.msra.mxu0 0
      %2968 = vmatprep.subr.bf16.mxu0 0
      %2969 = vmatpush1.bf16.msra.mxu0 0
      %2970 = vmatprep.subr.bf16.mxu0 0
      %2971 = vmatpush1.bf16.msra.mxu0 0
      %2972 = vmatprep.subr.bf16.mxu0 0
      %2973 = vmatpush1.bf16.msra.mxu0 0
      %2974 = vmatprep.subr.bf16.mxu0 0
      %2975 = vmatpush1.bf16.msra.mxu0 0
      %2976 = vmatprep.subr.bf16.mxu0 0
      %2977 = vmatpush1.bf16.msra.mxu0 0
      %2978 = vmatprep.subr.bf16.mxu0 0
      %2979 = vmatpush1.bf16.msra.mxu0 0
      %2980 = vmatprep.subr.bf16.mxu0 0
      %2981 = vmatpush1.bf16.msra.mxu0 0
      %2982 = vmatprep.subr.bf16.mxu0 0
      %2983 = vmatpush1.bf16.msra.mxu0 0
      %2984 = vmatprep.subr.bf16.mxu0 0
      %2985 = vmatpush1.bf16.msra.mxu0 0
      %2986 = vmatprep.subr.bf16.mxu0 0
      %2987 = vmatpush1.bf16.msra.mxu0 0
      %2988 = vmatprep.subr.bf16.mxu0 0
      %2989 = vmatpush1.bf16.msra.mxu0 0
      %2990 = vmatprep.mubr.bf16.mxu0 0
      %2991 = vmatmul.mubr.bf16.gmra.mrb[0].mxu0 %v2956
      %v2992 = vpop.f32.mrb[0].mxu0
      %v2993 = vadd.f32 0.0, %v2992
      %v2994 = vpop.f32.mrb[0].mxu0
      %v2995 = vpop.f32.mrb[0].mxu0
      %v2996 = vpop.f32.mrb[0].mxu0
      %2997 = vdwg.mxu0
      %v2999 = vsel %vm1045, %v2868, 0
      %3001 = vmatprep.subr.bf16.mxu0 0
      %3002 = vmatpush1.bf16.msra.mxu0 %v1649
      %3003 = vmatprep.subr.bf16.mxu0 0
      %3004 = vmatpush1.bf16.msra.mxu0 %v1650
      %3005 = vmatprep.subr.bf16.mxu0 0
      %3006 = vmatpush1.bf16.msra.mxu0 0
      %3007 = vmatprep.subr.bf16.mxu0 0
      %3008 = vmatpush1.bf16.msra.mxu0 0
      %3009 = vmatprep.subr.bf16.mxu0 0
      %3010 = vmatpush1.bf16.msra.mxu0 0
      %3011 = vmatprep.subr.bf16.mxu0 0
      %3012 = vmatpush1.bf16.msra.mxu0 0
      %3013 = vmatprep.subr.bf16.mxu0 0
      %3014 = vmatpush1.bf16.msra.mxu0 0
      %3015 = vmatprep.subr.bf16.mxu0 0
      %3016 = vmatpush1.bf16.msra.mxu0 0
      %3017 = vmatprep.subr.bf16.mxu0 0
      %3018 = vmatpush1.bf16.msra.mxu0 0
      %3019 = vmatprep.subr.bf16.mxu0 0
      %3020 = vmatpush1.bf16.msra.mxu0 0
      %3021 = vmatprep.subr.bf16.mxu0 0
      %3022 = vmatpush1.bf16.msra.mxu0 0
      %3023 = vmatprep.subr.bf16.mxu0 0
      %3024 = vmatpush1.bf16.msra.mxu0 0
      %3025 = vmatprep.subr.bf16.mxu0 0
      %3026 = vmatpush1.bf16.msra.mxu0 0
      %3027 = vmatprep.subr.bf16.mxu0 0
      %3028 = vmatpush1.bf16.msra.mxu0 0
      %3029 = vmatprep.subr.bf16.mxu0 0
      %3030 = vmatpush1.bf16.msra.mxu0 0
      %3031 = vmatprep.subr.bf16.mxu0 0
      %3032 = vmatpush1.bf16.msra.mxu0 0
      %3033 = vmatprep.mubr.bf16.mxu0 0
      %3034 = vmatmul.mubr.bf16.gmra.mrb[0].mxu0 %v2999
      %v3035 = vpop.f32.mrb[0].mxu0
      %v3036 = vadd.f32 0.0, %v3035
      %v3037 = vpop.f32.mrb[0].mxu0
      %v3038 = vpop.f32.mrb[0].mxu0
      %v3039 = vpop.f32.mrb[0].mxu0
      %3040 = vdwg.mxu0
      %v3041 = vsel %vm766, %v2907, 0.0
      %v3042 = vsel %vm766, %v2950, 0.0
      %v3043 = vadd.f32 %v3041, %v3042
      %v3044 = vsel %vm766, %v2993, 0.0
      %v3045 = vadd.f32 %v3043, %v3044
      %v3046 = vsel %vm766, %v3036, 0.0
      %v3047 = vadd.f32 %v3045, %v3046
      %v3048 = vadd.f32 %v2323, %v3047
      %v3049 = vadd.f32 %v3048, %v1708
      %v3050 = vsel %vm766, %v3049, 0.0
      %3051 = vadd.xlane.f32.xlu0 %v3050
      %v3052 = vpop.xlane.xlu0 %3051
      %v3053 = vmul.f32 %v3052, %v770
      %v3054 = vsub.f32 %v3049, %v3053
      %v3055 = vmul.f32 %v3054, %v3054
      %v3056 = vsel %vm766, %v3055, 0.0
      %3057 = vadd.xlane.f32.xlu0 %v3056
      %v3058 = vpop.xlane.xlu0 %3057
      %v3059 = vmul.f32 %v3058, %v770
      %v3060 = vadd.f32 %v3059, 1e-05
      %v3061 = vrsqrt.pop %v3060
      %v3062 = vmul.f32 %v3054, %v3061
      %v3063 = vmul.f32 %v3062, %v1728
      %v3064 = vadd.f32 %v3063, %v1735
      %v3065 = vpack.c.bf16 %v3064, %v3064
      %3066 = vmatprep.subr.bf16.mxu0 %v1857
      %3067 = vmatpush1.bf16.msra.mxu0 %v1856
      %3068 = vmatprep.subr.bf16.mxu0 %v1861
      %3069 = vmatpush1.bf16.msra.mxu0 %v1860
      %3070 = vmatprep.subr.bf16.mxu0 %v1865
      %3071 = vmatpush1.bf16.msra.mxu0 %v1864
      %3072 = vmatprep.subr.bf16.mxu0 %v1869
      %3073 = vmatpush1.bf16.msra.mxu0 %v1868
      %3074 = vmatprep.subr.bf16.mxu0 %v1873
      %3075 = vmatpush1.bf16.msra.mxu0 %v1872
      %3076 = vmatprep.subr.bf16.mxu0 %v1877
      %3077 = vmatpush1.bf16.msra.mxu0 %v1876
      %3078 = vmatprep.subr.bf16.mxu0 %v1881
      %3079 = vmatpush1.bf16.msra.mxu0 %v1880
      %3080 = vmatprep.subr.bf16.mxu0 %v1885
      %3081 = vmatpush1.bf16.msra.mxu0 %v1884
      %3082 = vmatprep.subr.bf16.mxu0 0
      %3083 = vmatpush1.bf16.msra.mxu0 0
      %3084 = vmatprep.subr.bf16.mxu0 0
      %3085 = vmatpush1.bf16.msra.mxu0 0
      %3086 = vmatprep.subr.bf16.mxu0 0
      %3087 = vmatpush1.bf16.msra.mxu0 0
      %3088 = vmatprep.subr.bf16.mxu0 0
      %3089 = vmatpush1.bf16.msra.mxu0 0
      %3090 = vmatprep.subr.bf16.mxu0 0
      %3091 = vmatpush1.bf16.msra.mxu0 0
      %3092 = vmatprep.subr.bf16.mxu0 0
      %3093 = vmatpush1.bf16.msra.mxu0 0
      %3094 = vmatprep.subr.bf16.mxu0 0
      %3095 = vmatpush1.bf16.msra.mxu0 0
      %3096 = vmatprep.subr.bf16.mxu0 0
      %3097 = vmatpush1.bf16.msra.mxu0 0
      %3098 = vmatprep.mubr.bf16.mxu0 0
      %3099 = vmatmul.mubr.bf16.gmra.mrb[0].mxu0 %v3065
      %v3100 = vpop.f32.mrb[0].mxu0
      %v3101 = vadd.f32 %v1743, %v3100
      %v3102 = vpop.f32.mrb[0].mxu0
      %v3103 = vadd.f32 %v1747, %v3102
      %v3104 = vpop.f32.mrb[0].mxu0
      %v3105 = vpop.f32.mrb[0].mxu0
      %3106 = vdwg.mxu0
      %3107 = vmatprep.subr.bf16.mxu0 %v1859
      %3108 = vmatpush1.bf16.msra.mxu0 %v1858
      %3109 = vmatprep.subr.bf16.mxu0 %v1863
      %3110 = vmatpush1.bf16.msra.mxu0 %v1862
      %3111 = vmatprep.subr.bf16.mxu0 %v1867
      %3112 = vmatpush1.bf16.msra.mxu0 %v1866
      %3113 = vmatprep.subr.bf16.mxu0 %v1871
      %3114 = vmatpush1.bf16.msra.mxu0 %v1870
      %3115 = vmatprep.subr.bf16.mxu0 %v1875
      %3116 = vmatpush1.bf16.msra.mxu0 %v1874
      %3117 = vmatprep.subr.bf16.mxu0 %v1879
      %3118 = vmatpush1.bf16.msra.mxu0 %v1878
      %3119 = vmatprep.subr.bf16.mxu0 %v1883
      %3120 = vmatpush1.bf16.msra.mxu0 %v1882
      %3121 = vmatprep.subr.bf16.mxu0 %v1887
      %3122 = vmatpush1.bf16.msra.mxu0 %v1886
      %3123 = vmatprep.subr.bf16.mxu0 0
      %3124 = vmatpush1.bf16.msra.mxu0 0
      %3125 = vmatprep.subr.bf16.mxu0 0
      %3126 = vmatpush1.bf16.msra.mxu0 0
      %3127 = vmatprep.subr.bf16.mxu0 0
      %3128 = vmatpush1.bf16.msra.mxu0 0
      %3129 = vmatprep.subr.bf16.mxu0 0
      %3130 = vmatpush1.bf16.msra.mxu0 0
      %3131 = vmatprep.subr.bf16.mxu0 0
      %3132 = vmatpush1.bf16.msra.mxu0 0
      %3133 = vmatprep.subr.bf16.mxu0 0
      %3134 = vmatpush1.bf16.msra.mxu0 0
      %3135 = vmatprep.subr.bf16.mxu0 0
      %3136 = vmatpush1.bf16.msra.mxu0 0
      %3137 = vmatprep.subr.bf16.mxu0 0
      %3138 = vmatpush1.bf16.msra.mxu0 0
      %3139 = vmatprep.mubr.bf16.mxu0 0
      %3140 = vmatmul.mubr.bf16.gmra.mrb[0].mxu0 %v3065
      %v3141 = vpop.f32.mrb[0].mxu0
      %v3142 = vadd.f32 %v1751, %v3141
      %v3143 = vpop.f32.mrb[0].mxu0
      %v3144 = vadd.f32 %v1755, %v3143
      %v3145 = vpop.f32.mrb[0].mxu0
      %v3146 = vpop.f32.mrb[0].mxu0
      %3147 = vdwg.mxu0
      %v3148 = vmul.f32 %v3101, %v3101
      %v3149 = vmul.f32 %v3103, %v3103
      %v3150 = vmul.f32 %v3142, %v3142
      %v3151 = vmul.f32 %v3144, %v3144
      %v3152 = vmul.f32 %v3101, %v3148
      %v3153 = vmul.f32 %v3103, %v3149
      %v3154 = vmul.f32 %v3142, %v3150
      %v3155 = vmul.f32 %v3144, %v3151
      %v3156 = vmul.f32 %v3152, 0.044715
      %v3157 = vmul.f32 %v3153, 0.044715
      %v3158 = vmul.f32 %v3154, 0.044715
      %v3159 = vmul.f32 %v3155, 0.044715
      %v3160 = vadd.f32 %v3101, %v3156
      %v3161 = vadd.f32 %v3103, %v3157
      %v3162 = vadd.f32 %v3142, %v3158
      %v3163 = vadd.f32 %v3144, %v3159
      %v3164 = vmul.f32 %v3160, 0.7978846
      %v3165 = vmul.f32 %v3161, 0.7978846
      %v3166 = vmul.f32 %v3162, 0.7978846
      %v3167 = vmul.f32 %v3163, 0.7978846
      %v3168 = vtanh.pop %v3164
      %v3169 = vtanh.pop %v3165
      %v3170 = vtanh.pop %v3166
      %v3171 = vtanh.pop %v3167
      %v3172 = vadd.f32 %v3168, 1.0
      %v3173 = vadd.f32 %v3169, 1.0
      %v3174 = vadd.f32 %v3170, 1.0
      %v3175 = vadd.f32 %v3171, 1.0
      %v3176 = vmul.f32 %v3172, 0.5
      %v3177 = vmul.f32 %v3173, 0.5
      %v3178 = vmul.f32 %v3174, 0.5
      %v3179 = vmul.f32 %v3175, 0.5
      %v3180 = vmul.f32 %v3101, %v3176
      %v3181 = vmul.f32 %v3103, %v3177
      %v3182 = vmul.f32 %v3142, %v3178
      %v3183 = vmul.f32 %v3144, %v3179
      %v3184 = vpack.c.bf16 %v3180, %v3180
      %v3185 = vpack.c.bf16 %v3181, %v3181
      %v3186 = vpack.c.bf16 %v3182, %v3182
      %v3187 = vpack.c.bf16 %v3183, %v3183
      %3188 = vmatprep.subr.bf16.mxu0 0
      %3189 = vmatpush1.bf16.msra.mxu0 %v2176
      %3190 = vmatprep.subr.bf16.mxu0 0
      %3191 = vmatpush1.bf16.msra.mxu0 %v2177
      %3192 = vmatprep.subr.bf16.mxu0 0
      %3193 = vmatpush1.bf16.msra.mxu0 %v2178
      %3194 = vmatprep.subr.bf16.mxu0 0
      %3195 = vmatpush1.bf16.msra.mxu0 %v2179
      %3196 = vmatprep.subr.bf16.mxu0 0
      %3197 = vmatpush1.bf16.msra.mxu0 %v2180
      %3198 = vmatprep.subr.bf16.mxu0 0
      %3199 = vmatpush1.bf16.msra.mxu0 %v2181
      %3200 = vmatprep.subr.bf16.mxu0 0
      %3201 = vmatpush1.bf16.msra.mxu0 %v2182
      %3202 = vmatprep.subr.bf16.mxu0 0
      %3203 = vmatpush1.bf16.msra.mxu0 %v2183
      %3204 = vmatprep.subr.bf16.mxu0 0
      %3205 = vmatpush1.bf16.msra.mxu0 %v2184
      %3206 = vmatprep.subr.bf16.mxu0 0
      %3207 = vmatpush1.bf16.msra.mxu0 %v2185
      %3208 = vmatprep.subr.bf16.mxu0 0
      %3209 = vmatpush1.bf16.msra.mxu0 %v2186
      %3210 = vmatprep.subr.bf16.mxu0 0
      %3211 = vmatpush1.bf16.msra.mxu0 %v2187
      %3212 = vmatprep.subr.bf16.mxu0 0
      %3213 = vmatpush1.bf16.msra.mxu0 %v2188
      %3214 = vmatprep.subr.bf16.mxu0 0
      %3215 = vmatpush1.bf16.msra.mxu0 %v2189
      %3216 = vmatprep.subr.bf16.mxu0 0
      %3217 = vmatpush1.bf16.msra.mxu0 %v2190
      %3218 = vmatprep.subr.bf16.mxu0 0
      %3219 = vmatpush1.bf16.msra.mxu0 %v2191
      %3220 = vmatprep.mubr.bf16.mxu0 %v3185
      %3221 = vmatmul.mubr.bf16.gmra.mrb[0].mxu0 %v3184
      %v3222 = vpop.f32.mrb[0].mxu0
      %v3223 = vadd.f32 %v2046, %v3222
      %v3224 = vpop.f32.mrb[0].mxu0
      %v3225 = vpop.f32.mrb[0].mxu0
      %v3226 = vpop.f32.mrb[0].mxu0
      %3227 = vdwg.mxu0
      %3228 = vmatprep.subr.bf16.mxu0 0
      %3229 = vmatpush1.bf16.msra.mxu0 %v2192
      %3230 = vmatprep.subr.bf16.mxu0 0
      %3231 = vmatpush1.bf16.msra.mxu0 %v2193
      %3232 = vmatprep.subr.bf16.mxu0 0
      %3233 = vmatpush1.bf16.msra.mxu0 %v2194
      %3234 = vmatprep.subr.bf16.mxu0 0
      %3235 = vmatpush1.bf16.msra.mxu0 %v2195
      %3236 = vmatprep.subr.bf16.mxu0 0
      %3237 = vmatpush1.bf16.msra.mxu0 %v2196
      %3238 = vmatprep.subr.bf16.mxu0 0
      %3239 = vmatpush1.bf16.msra.mxu0 %v2197
      %3240 = vmatprep.subr.bf16.mxu0 0
      %3241 = vmatpush1.bf16.msra.mxu0 %v2198
      %3242 = vmatprep.subr.bf16.mxu0 0
      %3243 = vmatpush1.bf16.msra.mxu0 %v2199
      %3244 = vmatprep.subr.bf16.mxu0 0
      %3245 = vmatpush1.bf16.msra.mxu0 %v2200
      %3246 = vmatprep.subr.bf16.mxu0 0
      %3247 = vmatpush1.bf16.msra.mxu0 %v2201
      %3248 = vmatprep.subr.bf16.mxu0 0
      %3249 = vmatpush1.bf16.msra.mxu0 %v2202
      %3250 = vmatprep.subr.bf16.mxu0 0
      %3251 = vmatpush1.bf16.msra.mxu0 %v2203
      %3252 = vmatprep.subr.bf16.mxu0 0
      %3253 = vmatpush1.bf16.msra.mxu0 %v2204
      %3254 = vmatprep.subr.bf16.mxu0 0
      %3255 = vmatpush1.bf16.msra.mxu0 %v2205
      %3256 = vmatprep.subr.bf16.mxu0 0
      %3257 = vmatpush1.bf16.msra.mxu0 %v2206
      %3258 = vmatprep.subr.bf16.mxu0 0
      %3259 = vmatpush1.bf16.msra.mxu0 %v2207
      %3260 = vmatprep.mubr.bf16.mxu0 %v3187
      %3261 = vmatmul.mubr.bf16.gmra.mrb[0].mxu0 %v3186
      %v3262 = vpop.f32.mrb[0].mxu0
      %v3263 = vadd.f32 %v3223, %v3262
      %v3264 = vpop.f32.mrb[0].mxu0
      %v3265 = vpop.f32.mrb[0].mxu0
      %v3266 = vpop.f32.mrb[0].mxu0
      %3267 = vdwg.mxu0
      %v3268 = vadd.f32 %v3049, %v3263
      %3269 = vst [vmem:[%s2322] sm:$0x1f] %v3268
      // Predicated region
      $region77: #{_lambda_.4} parent=71 // pred_check
        %p3270 = pneg %p370
      $region78: #{_lambda_.4} parent=71 // pred_check_branch
        %3272 = sbr.rel (%p3270) target = $region80
      $region79: #{_lambda_.4} parent=71 // pred_region
        _
      $region80: #{_lambda_.4} parent=71 // pred_fallthru
        _
      // Predicated region
      $region81: #{_lambda_.4} parent=71 // pred_check
        %p3273 = pneg %p370
      $region82: #{_lambda_.4} parent=71 // pred_check_branch
        %3275 = sbr.rel (%p3273) target = $region84
      $region83: #{_lambda_.4} parent=71 // pred_region
        _
      $region84: #{_lambda_.4} parent=71 // pred_fallthru
        _
    $region72: #{_lambda_.4} parent=5 // pred_fallthru
      _
    %p3276 = scmp.le.s32.totalorder 2, %s19
    // Predicated region
    $region85: #{_lambda_.4} parent=5 // pred_check
      %p3277 = pneg %p3276
    $region86: #{_lambda_.4} parent=5 // pred_check_branch
      %3279 = sbr.rel (%p3277) target = $region88
    $region87: #{_lambda_.4} parent=5 // pred_region
      %s3280 = ssub.s32 %s19, 2
    $region88: #{_lambda_.4} parent=5 // pred_fallthru
      _
  $region6: #{_lambda_.4} parent=0 // loop_footer
    %s23 = sadd.s32 1, %s19
  $region7: #{_lambda_.4} parent=0 // loop_footer_branch
    %18 = sbr.rel target = $region3
  $region8: #{_lambda_.4} parent=0 // loop_exit
    _

// kernel: _lambda_.5
$region0: #{_lambda_.5}
  #allocation0 [shape = 'u32[]', space=smem, size = 0x4, offset = 0x4, fixed_abs, tag = 'smem constant byte address 0x4 - core index']
  #allocation1 [shape = 'u32[144,128]{1,0:T(1,128)}', space=vmem, size = 0x12000, scoped, tag = 'internal scratch']
  %s0 = inlined_call_operand.vmem [shape: f32[2,128], index: 0, kind: input, shape index: {}]
  %s1 = inlined_call_operand.vmem [shape: f32[1,128], index: 1, kind: input, shape index: {}]
  %s2 = inlined_call_operand.vmem [shape: f32[1,128], index: 2, kind: input, shape index: {}]
  %s3 = inlined_call_operand.vmem [shape: bf16[128,512], index: 3, kind: input, shape index: {}]
  %s4 = inlined_call_operand.vmem [shape: bf16[512,1024], index: 4, kind: input, shape index: {}]
  %s5 = inlined_call_operand.vmem [shape: f32[1,1024], index: 5, kind: input, shape index: {}]
  %s6 = inlined_call_operand.vmem [shape: f32[1,1024], index: 6, kind: input, shape index: {}]
  %s7 = inlined_call_operand.vmem [shape: f32[1,1024], index: 7, kind: input, shape index: {}]
  %s8 = inlined_call_operand.vmem [shape: f32[1,1024], index: 8, kind: input, shape index: {}]
  %s9 = inlined_call_operand.vmem [shape: f32[1,1024], index: 9, kind: input, shape index: {}]
  %s10 = inlined_call_operand.vmem [shape: bf16[1024,170], index: 10, kind: input, shape index: {}]
  %s11 = inlined_call_operand.vmem [shape: f32[1,170], index: 11, kind: input, shape index: {}]
  %s12 = inlined_call_operand.vmem [shape: f32[128,56], index: 12, kind: input, shape index: {}]
  %s13 = inlined_call_operand.vmem [shape: f32[6,128], index: 13, kind: output, shape index: {}]
  %s14 = sld [smem:[#allocation0]]
  $region62: #{_lambda_.5} parent=0
    _
  %s16 = ssub.s32 1, %s14
  %s17 = scalar_select 0, %s16, %s14
  // Predicated region
  $region2: #{_lambda_.5} parent=0 // pred_check
    _
  $region3: #{_lambda_.5} parent=0 // pred_check_branch
    %19 = sbr.rel (0) target = $region5
  $region4: #{_lambda_.5} parent=0 // pred_region
    _
  $region5: #{_lambda_.5} parent=0 // pred_fallthru
    _
  // Predicated region
  $region6: #{_lambda_.5} parent=0 // pred_check
    _
  $region7: #{_lambda_.5} parent=0 // pred_check_branch
    %21 = sbr.rel (0) target = $region9
  $region8: #{_lambda_.5} parent=0 // pred_region
    _
  $region9: #{_lambda_.5} parent=0 // pred_fallthru
    _
  // Predicated region
  $region10: #{_lambda_.5} parent=0 // pred_check
    _
  $region11: #{_lambda_.5} parent=0 // pred_check_branch
    %23 = sbr.rel (0) target = $region13
  $region12: #{_lambda_.5} parent=0 // pred_region
    _
  $region13: #{_lambda_.5} parent=0 // pred_fallthru
    _
  // Predicated region
  $region14: #{_lambda_.5} parent=0 // pred_check
    _
  $region15: #{_lambda_.5} parent=0 // pred_check_branch
    %25 = sbr.rel (0) target = $region17
  $region16: #{_lambda_.5} parent=0 // pred_region
    _
  $region17: #{_lambda_.5} parent=0 // pred_fallthru
    _
  // Predicated region
  $region18: #{_lambda_.5} parent=0 // pred_check
    _
  $region19: #{_lambda_.5} parent=0 // pred_check_branch
    %27 = sbr.rel (0) target = $region21
  $region20: #{_lambda_.5} parent=0 // pred_region
    _
  $region21: #{_lambda_.5} parent=0 // pred_fallthru
    _
  // Predicated region
  $region22: #{_lambda_.5} parent=0 // pred_check
    _
  $region23: #{_lambda_.5} parent=0 // pred_check_branch
    %29 = sbr.rel (0) target = $region25
  $region24: #{_lambda_.5} parent=0 // pred_region
    _
  $region25: #{_lambda_.5} parent=0 // pred_fallthru
    _
  // Predicated region
  $region26: #{_lambda_.5} parent=0 // pred_check
    _
  $region27: #{_lambda_.5} parent=0 // pred_check_branch
    %31 = sbr.rel (0) target = $region29
  $region28: #{_lambda_.5} parent=0 // pred_region
    _
  $region29: #{_lambda_.5} parent=0 // pred_fallthru
    _
  // Predicated region
  $region30: #{_lambda_.5} parent=0 // pred_check
    _
  $region31: #{_lambda_.5} parent=0 // pred_check_branch
    %33 = sbr.rel (0) target = $region33
  $region32: #{_lambda_.5} parent=0 // pred_region
    _
  $region33: #{_lambda_.5} parent=0 // pred_fallthru
    _
  // Predicated region
  $region34: #{_lambda_.5} parent=0 // pred_check
    _
  $region35: #{_lambda_.5} parent=0 // pred_check_branch
    %35 = sbr.rel (0) target = $region37
  $region36: #{_lambda_.5} parent=0 // pred_region
    _
  $region37: #{_lambda_.5} parent=0 // pred_fallthru
    _
  // Predicated region
  $region38: #{_lambda_.5} parent=0 // pred_check
    _
  $region39: #{_lambda_.5} parent=0 // pred_check_branch
    %37 = sbr.rel (0) target = $region41
  $region40: #{_lambda_.5} parent=0 // pred_region
    _
  $region41: #{_lambda_.5} parent=0 // pred_fallthru
    _
  // Predicated region
  $region42: #{_lambda_.5} parent=0 // pred_check
    _
  $region43: #{_lambda_.5} parent=0 // pred_check_branch
    %39 = sbr.rel (0) target = $region45
  $region44: #{_lambda_.5} parent=0 // pred_region
    _
  $region45: #{_lambda_.5} parent=0 // pred_fallthru
    _
  // Predicated region
  $region46: #{_lambda_.5} parent=0 // pred_check
    _
  $region47: #{_lambda_.5} parent=0 // pred_check_branch
    %41 = sbr.rel (0) target = $region49
  $region48: #{_lambda_.5} parent=0 // pred_region
    _
  $region49: #{_lambda_.5} parent=0 // pred_fallthru
    _
  // Predicated region
  $region50: #{_lambda_.5} parent=0 // pred_check
    _
  $region51: #{_lambda_.5} parent=0 // pred_check_branch
    %43 = sbr.rel (0) target = $region53
  $region52: #{_lambda_.5} parent=0 // pred_region
    _
  $region53: #{_lambda_.5} parent=0 // pred_fallthru
    _
  %v45 = vld [vmem:[%s0] sm:$0x3]
  %v46 = vld [vmem:[%s1] sm:$0x1]
  %v47 = vld [vmem:[%s2] sm:$0x1]
  %vm48 = vcmask 1041408
  %v49 = vsel %vm48, %v45, 0.0
  %50 = vadd.xlane.f32.xlu0 %v49
  %v51 = vpop.xlane.xlu0 %50
  %v52 = vrcp.pop 128.0
  %v53 = vmul.f32 %v51, %v52
  %v54 = vsub.f32 %v45, %v53
  %v55 = vmul.f32 %v54, %v54
  %v56 = vsel %vm48, %v55, 0.0
  %57 = vadd.xlane.f32.xlu0 %v56
  %v58 = vpop.xlane.xlu0 %57
  %v59 = vmul.f32 %v58, %v52
  %v60 = vadd.f32 %v59, 1e-05
  %v61 = vrsqrt.pop %v60
  %v62 = vmul.f32 %v54, %v61
  %v64 = vlaneseq
  %v65 = vshrl.u32 %v64, 7
  %v66 = vsub.s32 0, %v65
  %v67 = vrot.slane %v46, %v66
  %v69 = vmul.f32 %v62, %v67
  %v71 = vlaneseq
  %v72 = vshrl.u32 %v71, 7
  %v73 = vsub.s32 0, %v72
  %v74 = vrot.slane %v47, %v73
  %v76 = vadd.f32 %v69, %v74
  %v77 = vpack.c.bf16 %v76, %v76
  %v78 = vld [vmem:[%s3] sm:$0xff]
  %v79 = vld [vmem:[%s3 + $0x8] sm:$0xff]
  %v80 = vld [vmem:[%s3 + $0x10] sm:$0xff]
  %v81 = vld [vmem:[%s3 + $0x18] sm:$0xff]
  %v82 = vld [vmem:[%s3 + $0x20] sm:$0xff]
  %v83 = vld [vmem:[%s3 + $0x28] sm:$0xff]
  %v84 = vld [vmem:[%s3 + $0x30] sm:$0xff]
  %v85 = vld [vmem:[%s3 + $0x38] sm:$0xff]
  %v86 = vld [vmem:[%s3 + $0x40] sm:$0xff]
  %v87 = vld [vmem:[%s3 + $0x48] sm:$0xff]
  %v88 = vld [vmem:[%s3 + $0x50] sm:$0xff]
  %v89 = vld [vmem:[%s3 + $0x58] sm:$0xff]
  %v90 = vld [vmem:[%s3 + $0x60] sm:$0xff]
  %v91 = vld [vmem:[%s3 + $0x68] sm:$0xff]
  %v92 = vld [vmem:[%s3 + $0x70] sm:$0xff]
  %v93 = vld [vmem:[%s3 + $0x78] sm:$0xff]
  %v94 = vld [vmem:[%s3 + $0x80] sm:$0xff]
  %v95 = vld [vmem:[%s3 + $0x88] sm:$0xff]
  %v96 = vld [vmem:[%s3 + $0x90] sm:$0xff]
  %v97 = vld [vmem:[%s3 + $0x98] sm:$0xff]
  %v98 = vld [vmem:[%s3 + $0xa0] sm:$0xff]
  %v99 = vld [vmem:[%s3 + $0xa8] sm:$0xff]
  %v100 = vld [vmem:[%s3 + $0xb0] sm:$0xff]
  %v101 = vld [vmem:[%s3 + $0xb8] sm:$0xff]
  %v102 = vld [vmem:[%s3 + $0xc0] sm:$0xff]
  %v103 = vld [vmem:[%s3 + $0xc8] sm:$0xff]
  %v104 = vld [vmem:[%s3 + $0xd0] sm:$0xff]
  %v105 = vld [vmem:[%s3 + $0xd8] sm:$0xff]
  %v106 = vld [vmem:[%s3 + $0xe0] sm:$0xff]
  %v107 = vld [vmem:[%s3 + $0xe8] sm:$0xff]
  %v108 = vld [vmem:[%s3 + $0xf0] sm:$0xff]
  %v109 = vld [vmem:[%s3 + $0xf8] sm:$0xff]
  %v142 = vunpack.c.l.b16 %v78
  %v143 = vunpack.c.h.b16 %v78
  %v144 = vunpack.c.l.b16 %v79
  %v145 = vunpack.c.h.b16 %v79
  %v146 = vunpack.c.l.b16 %v80
  %v147 = vunpack.c.h.b16 %v80
  %v148 = vunpack.c.l.b16 %v81
  %v149 = vunpack.c.h.b16 %v81
  %v150 = vunpack.c.l.b16 %v82
  %v151 = vunpack.c.h.b16 %v82
  %v152 = vunpack.c.l.b16 %v83
  %v153 = vunpack.c.h.b16 %v83
  %v154 = vunpack.c.l.b16 %v84
  %v155 = vunpack.c.h.b16 %v84
  %v156 = vunpack.c.l.b16 %v85
  %v157 = vunpack.c.h.b16 %v85
  %v158 = vunpack.c.l.b16 %v86
  %v159 = vunpack.c.h.b16 %v86
  %v160 = vunpack.c.l.b16 %v87
  %v161 = vunpack.c.h.b16 %v87
  %v162 = vunpack.c.l.b16 %v88
  %v163 = vunpack.c.h.b16 %v88
  %v164 = vunpack.c.l.b16 %v89
  %v165 = vunpack.c.h.b16 %v89
  %v166 = vunpack.c.l.b16 %v90
  %v167 = vunpack.c.h.b16 %v90
  %v168 = vunpack.c.l.b16 %v91
  %v169 = vunpack.c.h.b16 %v91
  %v170 = vunpack.c.l.b16 %v92
  %v171 = vunpack.c.h.b16 %v92
  %v172 = vunpack.c.l.b16 %v93
  %v173 = vunpack.c.h.b16 %v93
  %v174 = vunpack.c.l.b16 %v94
  %v175 = vunpack.c.h.b16 %v94
  %v176 = vunpack.c.l.b16 %v95
  %v177 = vunpack.c.h.b16 %v95
  %v178 = vunpack.c.l.b16 %v96
  %v179 = vunpack.c.h.b16 %v96
  %v180 = vunpack.c.l.b16 %v97
  %v181 = vunpack.c.h.b16 %v97
  %v182 = vunpack.c.l.b16 %v98
  %v183 = vunpack.c.h.b16 %v98
  %v184 = vunpack.c.l.b16 %v99
  %v185 = vunpack.c.h.b16 %v99
  %v186 = vunpack.c.l.b16 %v100
  %v187 = vunpack.c.h.b16 %v100
  %v188 = vunpack.c.l.b16 %v101
  %v189 = vunpack.c.h.b16 %v101
  %v190 = vunpack.c.l.b16 %v102
  %v191 = vunpack.c.h.b16 %v102
  %v192 = vunpack.c.l.b16 %v103
  %v193 = vunpack.c.h.b16 %v103
  %v194 = vunpack.c.l.b16 %v104
  %v195 = vunpack.c.h.b16 %v104
  %v196 = vunpack.c.l.b16 %v105
  %v197 = vunpack.c.h.b16 %v105
  %v198 = vunpack.c.l.b16 %v106
  %v199 = vunpack.c.h.b16 %v106
  %v200 = vunpack.c.l.b16 %v107
  %v201 = vunpack.c.h.b16 %v107
  %v202 = vunpack.c.l.b16 %v108
  %v203 = vunpack.c.h.b16 %v108
  %v204 = vunpack.c.l.b16 %v109
  %v205 = vunpack.c.h.b16 %v109
  %v206 = vpack.c.b16 %v146, %v142
  %v207 = vpack.c.b16 %v147, %v143
  %v208 = vpack.c.b16 %v148, %v144
  %v209 = vpack.c.b16 %v149, %v145
  %v210 = vpack.c.b16 %v154, %v150
  %v211 = vpack.c.b16 %v155, %v151
  %v212 = vpack.c.b16 %v156, %v152
  %v213 = vpack.c.b16 %v157, %v153
  %v214 = vpack.c.b16 %v162, %v158
  %v215 = vpack.c.b16 %v163, %v159
  %v216 = vpack.c.b16 %v164, %v160
  %v217 = vpack.c.b16 %v165, %v161
  %v218 = vpack.c.b16 %v170, %v166
  %v219 = vpack.c.b16 %v171, %v167
  %v220 = vpack.c.b16 %v172, %v168
  %v221 = vpack.c.b16 %v173, %v169
  %v222 = vpack.c.b16 %v178, %v174
  %v223 = vpack.c.b16 %v179, %v175
  %v224 = vpack.c.b16 %v180, %v176
  %v225 = vpack.c.b16 %v181, %v177
  %v226 = vpack.c.b16 %v186, %v182
  %v227 = vpack.c.b16 %v187, %v183
  %v228 = vpack.c.b16 %v188, %v184
  %v229 = vpack.c.b16 %v189, %v185
  %v230 = vpack.c.b16 %v194, %v190
  %v231 = vpack.c.b16 %v195, %v191
  %v232 = vpack.c.b16 %v196, %v192
  %v233 = vpack.c.b16 %v197, %v193
  %v234 = vpack.c.b16 %v202, %v198
  %v235 = vpack.c.b16 %v203, %v199
  %v236 = vpack.c.b16 %v204, %v200
  %v237 = vpack.c.b16 %v205, %v201
  %270 = vmatprep.subr.bf16.mxu0 %v207
  %271 = vmatpush1.bf16.msra.mxu0 %v206
  %272 = vmatprep.subr.bf16.mxu0 %v211
  %273 = vmatpush1.bf16.msra.mxu0 %v210
  %274 = vmatprep.subr.bf16.mxu0 %v215
  %275 = vmatpush1.bf16.msra.mxu0 %v214
  %276 = vmatprep.subr.bf16.mxu0 %v219
  %277 = vmatpush1.bf16.msra.mxu0 %v218
  %278 = vmatprep.subr.bf16.mxu0 %v223
  %279 = vmatpush1.bf16.msra.mxu0 %v222
  %280 = vmatprep.subr.bf16.mxu0 %v227
  %281 = vmatpush1.bf16.msra.mxu0 %v226
  %282 = vmatprep.subr.bf16.mxu0 %v231
  %283 = vmatpush1.bf16.msra.mxu0 %v230
  %284 = vmatprep.subr.bf16.mxu0 %v235
  %285 = vmatpush1.bf16.msra.mxu0 %v234
  %286 = vmatprep.subr.bf16.mxu0 0
  %287 = vmatpush1.bf16.msra.mxu0 0
  %288 = vmatprep.subr.bf16.mxu0 0
  %289 = vmatpush1.bf16.msra.mxu0 0
  %290 = vmatprep.subr.bf16.mxu0 0
  %291 = vmatpush1.bf16.msra.mxu0 0
  %292 = vmatprep.subr.bf16.mxu0 0
  %293 = vmatpush1.bf16.msra.mxu0 0
  %294 = vmatprep.subr.bf16.mxu0 0
  %295 = vmatpush1.bf16.msra.mxu0 0
  %296 = vmatprep.subr.bf16.mxu0 0
  %297 = vmatpush1.bf16.msra.mxu0 0
  %298 = vmatprep.subr.bf16.mxu0 0
  %299 = vmatpush1.bf16.msra.mxu0 0
  %300 = vmatprep.subr.bf16.mxu0 0
  %301 = vmatpush1.bf16.msra.mxu0 0
  %302 = vmatprep.mubr.bf16.mxu0 0
  %303 = vmatmul.mubr.bf16.gmra.mrb[0].mxu0 %v77
  %v304 = vpop.f32.mrb[0].mxu0
  %v305 = vadd.f32 0.0, %v304
  %v306 = vpop.f32.mrb[0].mxu0
  %v307 = vadd.f32 0.0, %v306
  %v308 = vpop.f32.mrb[0].mxu0
  %v309 = vpop.f32.mrb[0].mxu0
  %310 = vdwg.mxu0
  %311 = vmatprep.subr.bf16.mxu0 %v209
  %312 = vmatpush1.bf16.msra.mxu0 %v208
  %313 = vmatprep.subr.bf16.mxu0 %v213
  %314 = vmatpush1.bf16.msra.mxu0 %v212
  %315 = vmatprep.subr.bf16.mxu0 %v217
  %316 = vmatpush1.bf16.msra.mxu0 %v216
  %317 = vmatprep.subr.bf16.mxu0 %v221
  %318 = vmatpush1.bf16.msra.mxu0 %v220
  %319 = vmatprep.subr.bf16.mxu0 %v225
  %320 = vmatpush1.bf16.msra.mxu0 %v224
  %321 = vmatprep.subr.bf16.mxu0 %v229
  %322 = vmatpush1.bf16.msra.mxu0 %v228
  %323 = vmatprep.subr.bf16.mxu0 %v233
  %324 = vmatpush1.bf16.msra.mxu0 %v232
  %325 = vmatprep.subr.bf16.mxu0 %v237
  %326 = vmatpush1.bf16.msra.mxu0 %v236
  %327 = vmatprep.subr.bf16.mxu0 0
  %328 = vmatpush1.bf16.msra.mxu0 0
  %329 = vmatprep.subr.bf16.mxu0 0
  %330 = vmatpush1.bf16.msra.mxu0 0
  %331 = vmatprep.subr.bf16.mxu0 0
  %332 = vmatpush1.bf16.msra.mxu0 0
  %333 = vmatprep.subr.bf16.mxu0 0
  %334 = vmatpush1.bf16.msra.mxu0 0
  %335 = vmatprep.subr.bf16.mxu0 0
  %336 = vmatpush1.bf16.msra.mxu0 0
  %337 = vmatprep.subr.bf16.mxu0 0
  %338 = vmatpush1.bf16.msra.mxu0 0
  %339 = vmatprep.subr.bf16.mxu0 0
  %340 = vmatpush1.bf16.msra.mxu0 0
  %341 = vmatprep.subr.bf16.mxu0 0
  %342 = vmatpush1.bf16.msra.mxu0 0
  %343 = vmatprep.mubr.bf16.mxu0 0
  %344 = vmatmul.mubr.bf16.gmra.mrb[0].mxu0 %v77
  %v345 = vpop.f32.mrb[0].mxu0
  %v346 = vadd.f32 0.0, %v345
  %v347 = vpop.f32.mrb[0].mxu0
  %v348 = vadd.f32 0.0, %v347
  %v349 = vpop.f32.mrb[0].mxu0
  %v350 = vpop.f32.mrb[0].mxu0
  %351 = vdwg.mxu0
  %v352 = vpack.c.bf16 %v305, %v305
  %v353 = vpack.c.bf16 %v307, %v307
  %v354 = vpack.c.bf16 %v346, %v346
  %v355 = vpack.c.bf16 %v348, %v348
  %v356 = vld [vmem:[%s4] sm:$0xff]
  %v357 = vld [vmem:[%s4 + $0x8] sm:$0xff]
  %v358 = vld [vmem:[%s4 + $0x10] sm:$0xff]
  %v359 = vld [vmem:[%s4 + $0x18] sm:$0xff]
  %v360 = vld [vmem:[%s4 + $0x20] sm:$0xff]
  %v361 = vld [vmem:[%s4 + $0x28] sm:$0xff]
  %v362 = vld [vmem:[%s4 + $0x30] sm:$0xff]
  %v363 = vld [vmem:[%s4 + $0x38] sm:$0xff]
  %v364 = vld [vmem:[%s4 + $0x40] sm:$0xff]
  %v365 = vld [vmem:[%s4 + $0x48] sm:$0xff]
  %v366 = vld [vmem:[%s4 + $0x50] sm:$0xff]
  %v367 = vld [vmem:[%s4 + $0x58] sm:$0xff]
  %v368 = vld [vmem:[%s4 + $0x60] sm:$0xff]
  %v369 = vld [vmem:[%s4 + $0x68] sm:$0xff]
  %v370 = vld [vmem:[%s4 + $0x70] sm:$0xff]
  %v371 = vld [vmem:[%s4 + $0x78] sm:$0xff]
  %v372 = vld [vmem:[%s4 + $0x80] sm:$0xff]
  %v373 = vld [vmem:[%s4 + $0x88] sm:$0xff]
  %v374 = vld [vmem:[%s4 + $0x90] sm:$0xff]
  %v375 = vld [vmem:[%s4 + $0x98] sm:$0xff]
  %v376 = vld [vmem:[%s4 + $0xa0] sm:$0xff]
  %v377 = vld [vmem:[%s4 + $0xa8] sm:$0xff]
  %v378 = vld [vmem:[%s4 + $0xb0] sm:$0xff]
  %v379 = vld [vmem:[%s4 + $0xb8] sm:$0xff]
  %v380 = vld [vmem:[%s4 + $0xc0] sm:$0xff]
  %v381 = vld [vmem:[%s4 + $0xc8] sm:$0xff]
  %v382 = vld [vmem:[%s4 + $0xd0] sm:$0xff]
  %v383 = vld [vmem:[%s4 + $0xd8] sm:$0xff]
  %v384 = vld [vmem:[%s4 + $0xe0] sm:$0xff]
  %v385 = vld [vmem:[%s4 + $0xe8] sm:$0xff]
  %v386 = vld [vmem:[%s4 + $0xf0] sm:$0xff]
  %v387 = vld [vmem:[%s4 + $0xf8] sm:$0xff]
  %v388 = vld [vmem:[%s4 + $0x100] sm:$0xff]
  %v389 = vld [vmem:[%s4 + $0x108] sm:$0xff]
  %v390 = vld [vmem:[%s4 + $0x110] sm:$0xff]
  %v391 = vld [vmem:[%s4 + $0x118] sm:$0xff]
  %v392 = vld [vmem:[%s4 + $0x120] sm:$0xff]
  %v393 = vld [vmem:[%s4 + $0x128] sm:$0xff]
  %v394 = vld [vmem:[%s4 + $0x130] sm:$0xff]
  %v395 = vld [vmem:[%s4 + $0x138] sm:$0xff]
  %v396 = vld [vmem:[%s4 + $0x140] sm:$0xff]
  %v397 = vld [vmem:[%s4 + $0x148] sm:$0xff]
  %v398 = vld [vmem:[%s4 + $0x150] sm:$0xff]
  %v399 = vld [vmem:[%s4 + $0x158] sm:$0xff]
  %v400 = vld [vmem:[%s4 + $0x160] sm:$0xff]
  %v401 = vld [vmem:[%s4 + $0x168] sm:$0xff]
  %v402 = vld [vmem:[%s4 + $0x170] sm:$0xff]
  %v403 = vld [vmem:[%s4 + $0x178] sm:$0xff]
  %v404 = vld [vmem:[%s4 + $0x180] sm:$0xff]
  %v405 = vld [vmem:[%s4 + $0x188] sm:$0xff]
  %v406 = vld [vmem:[%s4 + $0x190] sm:$0xff]
  %v407 = vld [vmem:[%s4 + $0x198] sm:$0xff]
  %v408 = vld [vmem:[%s4 + $0x1a0] sm:$0xff]
  %v409 = vld [vmem:[%s4 + $0x1a8] sm:$0xff]
  %v410 = vld [vmem:[%s4 + $0x1b0] sm:$0xff]
  %v411 = vld [vmem:[%s4 + $0x1b8] sm:$0xff]
  %v412 = vld [vmem:[%s4 + $0x1c0] sm:$0xff]
  %v413 = vld [vmem:[%s4 + $0x1c8] sm:$0xff]
  %v414 = vld [vmem:[%s4 + $0x1d0] sm:$0xff]
  %v415 = vld [vmem:[%s4 + $0x1d8] sm:$0xff]
  %v416 = vld [vmem:[%s4 + $0x1e0] sm:$0xff]
  %v417 = vld [vmem:[%s4 + $0x1e8] sm:$0xff]
  %v418 = vld [vmem:[%s4 + $0x1f0] sm:$0xff]
  %v419 = vld [vmem:[%s4 + $0x1f8] sm:$0xff]
  %v420 = vld [vmem:[%s4 + $0x200] sm:$0xff]
  %v421 = vld [vmem:[%s4 + $0x208] sm:$0xff]
  %v422 = vld [vmem:[%s4 + $0x210] sm:$0xff]
  %v423 = vld [vmem:[%s4 + $0x218] sm:$0xff]
  %v424 = vld [vmem:[%s4 + $0x220] sm:$0xff]
  %v425 = vld [vmem:[%s4 + $0x228] sm:$0xff]
  %v426 = vld [vmem:[%s4 + $0x230] sm:$0xff]
  %v427 = vld [vmem:[%s4 + $0x238] sm:$0xff]
  %v428 = vld [vmem:[%s4 + $0x240] sm:$0xff]
  %v429 = vld [vmem:[%s4 + $0x248] sm:$0xff]
  %v430 = vld [vmem:[%s4 + $0x250] sm:$0xff]
  %v431 = vld [vmem:[%s4 + $0x258] sm:$0xff]
  %v432 = vld [vmem:[%s4 + $0x260] sm:$0xff]
  %v433 = vld [vmem:[%s4 + $0x268] sm:$0xff]
  %v434 = vld [vmem:[%s4 + $0x270] sm:$0xff]
  %v435 = vld [vmem:[%s4 + $0x278] sm:$0xff]
  %v436 = vld [vmem:[%s4 + $0x280] sm:$0xff]
  %v437 = vld [vmem:[%s4 + $0x288] sm:$0xff]
  %v438 = vld [vmem:[%s4 + $0x290] sm:$0xff]
  %v439 = vld [vmem:[%s4 + $0x298] sm:$0xff]
  %v440 = vld [vmem:[%s4 + $0x2a0] sm:$0xff]
  %v441 = vld [vmem:[%s4 + $0x2a8] sm:$0xff]
  %v442 = vld [vmem:[%s4 + $0x2b0] sm:$0xff]
  %v443 = vld [vmem:[%s4 + $0x2b8] sm:$0xff]
  %v444 = vld [vmem:[%s4 + $0x2c0] sm:$0xff]
  %v445 = vld [vmem:[%s4 + $0x2c8] sm:$0xff]
  %v446 = vld [vmem:[%s4 + $0x2d0] sm:$0xff]
  %v447 = vld [vmem:[%s4 + $0x2d8] sm:$0xff]
  %v448 = vld [vmem:[%s4 + $0x2e0] sm:$0xff]
  %v449 = vld [vmem:[%s4 + $0x2e8] sm:$0xff]
  %v450 = vld [vmem:[%s4 + $0x2f0] sm:$0xff]
  %v451 = vld [vmem:[%s4 + $0x2f8] sm:$0xff]
  %v452 = vld [vmem:[%s4 + $0x300] sm:$0xff]
  %v453 = vld [vmem:[%s4 + $0x308] sm:$0xff]
  %v454 = vld [vmem:[%s4 + $0x310] sm:$0xff]
  %v455 = vld [vmem:[%s4 + $0x318] sm:$0xff]
  %v456 = vld [vmem:[%s4 + $0x320] sm:$0xff]
  %v457 = vld [vmem:[%s4 + $0x328] sm:$0xff]
  %v458 = vld [vmem:[%s4 + $0x330] sm:$0xff]
  %v459 = vld [vmem:[%s4 + $0x338] sm:$0xff]
  %v460 = vld [vmem:[%s4 + $0x340] sm:$0xff]
  %v461 = vld [vmem:[%s4 + $0x348] sm:$0xff]
  %v462 = vld [vmem:[%s4 + $0x350] sm:$0xff]
  %v463 = vld [vmem:[%s4 + $0x358] sm:$0xff]
  %v464 = vld [vmem:[%s4 + $0x360] sm:$0xff]
  %v465 = vld [vmem:[%s4 + $0x368] sm:$0xff]
  %v466 = vld [vmem:[%s4 + $0x370] sm:$0xff]
  %v467 = vld [vmem:[%s4 + $0x378] sm:$0xff]
  %v468 = vld [vmem:[%s4 + $0x380] sm:$0xff]
  %v469 = vld [vmem:[%s4 + $0x388] sm:$0xff]
  %v470 = vld [vmem:[%s4 + $0x390] sm:$0xff]
  %v471 = vld [vmem:[%s4 + $0x398] sm:$0xff]
  %v472 = vld [vmem:[%s4 + $0x3a0] sm:$0xff]
  %v473 = vld [vmem:[%s4 + $0x3a8] sm:$0xff]
  %v474 = vld [vmem:[%s4 + $0x3b0] sm:$0xff]
  %v475 = vld [vmem:[%s4 + $0x3b8] sm:$0xff]
  %v476 = vld [vmem:[%s4 + $0x3c0] sm:$0xff]
  %v477 = vld [vmem:[%s4 + $0x3c8] sm:$0xff]
  %v478 = vld [vmem:[%s4 + $0x3d0] sm:$0xff]
  %v479 = vld [vmem:[%s4 + $0x3d8] sm:$0xff]
  %v480 = vld [vmem:[%s4 + $0x3e0] sm:$0xff]
  %v481 = vld [vmem:[%s4 + $0x3e8] sm:$0xff]
  %v482 = vld [vmem:[%s4 + $0x3f0] sm:$0xff]
  %v483 = vld [vmem:[%s4 + $0x3f8] sm:$0xff]
  %v484 = vld [vmem:[%s4 + $0x400] sm:$0xff]
  %v485 = vld [vmem:[%s4 + $0x408] sm:$0xff]
  %v486 = vld [vmem:[%s4 + $0x410] sm:$0xff]
  %v487 = vld [vmem:[%s4 + $0x418] sm:$0xff]
  %v488 = vld [vmem:[%s4 + $0x420] sm:$0xff]
  %v489 = vld [vmem:[%s4 + $0x428] sm:$0xff]
  %v490 = vld [vmem:[%s4 + $0x430] sm:$0xff]
  %v491 = vld [vmem:[%s4 + $0x438] sm:$0xff]
  %v492 = vld [vmem:[%s4 + $0x440] sm:$0xff]
  %v493 = vld [vmem:[%s4 + $0x448] sm:$0xff]
  %v494 = vld [vmem:[%s4 + $0x450] sm:$0xff]
  %v495 = vld [vmem:[%s4 + $0x458] sm:$0xff]
  %v496 = vld [vmem:[%s4 + $0x460] sm:$0xff]
  %v497 = vld [vmem:[%s4 + $0x468] sm:$0xff]
  %v498 = vld [vmem:[%s4 + $0x470] sm:$0xff]
  %v499 = vld [vmem:[%s4 + $0x478] sm:$0xff]
  %v500 = vld [vmem:[%s4 + $0x480] sm:$0xff]
  %v501 = vld [vmem:[%s4 + $0x488] sm:$0xff]
  %v502 = vld [vmem:[%s4 + $0x490] sm:$0xff]
  %v503 = vld [vmem:[%s4 + $0x498] sm:$0xff]
  %v504 = vld [vmem:[%s4 + $0x4a0] sm:$0xff]
  %v505 = vld [vmem:[%s4 + $0x4a8] sm:$0xff]
  %v506 = vld [vmem:[%s4 + $0x4b0] sm:$0xff]
  %v507 = vld [vmem:[%s4 + $0x4b8] sm:$0xff]
  %v508 = vld [vmem:[%s4 + $0x4c0] sm:$0xff]
  %v509 = vld [vmem:[%s4 + $0x4c8] sm:$0xff]
  %v510 = vld [vmem:[%s4 + $0x4d0] sm:$0xff]
  %v511 = vld [vmem:[%s4 + $0x4d8] sm:$0xff]
  %v512 = vld [vmem:[%s4 + $0x4e0] sm:$0xff]
  %v513 = vld [vmem:[%s4 + $0x4e8] sm:$0xff]
  %v514 = vld [vmem:[%s4 + $0x4f0] sm:$0xff]
  %v515 = vld [vmem:[%s4 + $0x4f8] sm:$0xff]
  %v516 = vld [vmem:[%s4 + $0x500] sm:$0xff]
  %v517 = vld [vmem:[%s4 + $0x508] sm:$0xff]
  %v518 = vld [vmem:[%s4 + $0x510] sm:$0xff]
  %v519 = vld [vmem:[%s4 + $0x518] sm:$0xff]
  %v520 = vld [vmem:[%s4 + $0x520] sm:$0xff]
  %v521 = vld [vmem:[%s4 + $0x528] sm:$0xff]
  %v522 = vld [vmem:[%s4 + $0x530] sm:$0xff]
  %v523 = vld [vmem:[%s4 + $0x538] sm:$0xff]
  %v524 = vld [vmem:[%s4 + $0x540] sm:$0xff]
  %v525 = vld [vmem:[%s4 + $0x548] sm:$0xff]
  %v526 = vld [vmem:[%s4 + $0x550] sm:$0xff]
  %v527 = vld [vmem:[%s4 + $0x558] sm:$0xff]
  %v528 = vld [vmem:[%s4 + $0x560] sm:$0xff]
  %v529 = vld [vmem:[%s4 + $0x568] sm:$0xff]
  %v530 = vld [vmem:[%s4 + $0x570] sm:$0xff]
  %v531 = vld [vmem:[%s4 + $0x578] sm:$0xff]
  %v532 = vld [vmem:[%s4 + $0x580] sm:$0xff]
  %v533 = vld [vmem:[%s4 + $0x588] sm:$0xff]
  %v534 = vld [vmem:[%s4 + $0x590] sm:$0xff]
  %v535 = vld [vmem:[%s4 + $0x598] sm:$0xff]
  %v536 = vld [vmem:[%s4 + $0x5a0] sm:$0xff]
  %v537 = vld [vmem:[%s4 + $0x5a8] sm:$0xff]
  %v538 = vld [vmem:[%s4 + $0x5b0] sm:$0xff]
  %v539 = vld [vmem:[%s4 + $0x5b8] sm:$0xff]
  %v540 = vld [vmem:[%s4 + $0x5c0] sm:$0xff]
  %v541 = vld [vmem:[%s4 + $0x5c8] sm:$0xff]
  %v542 = vld [vmem:[%s4 + $0x5d0] sm:$0xff]
  %v543 = vld [vmem:[%s4 + $0x5d8] sm:$0xff]
  %v544 = vld [vmem:[%s4 + $0x5e0] sm:$0xff]
  %v545 = vld [vmem:[%s4 + $0x5e8] sm:$0xff]
  %v546 = vld [vmem:[%s4 + $0x5f0] sm:$0xff]
  %v547 = vld [vmem:[%s4 + $0x5f8] sm:$0xff]
  %v548 = vld [vmem:[%s4 + $0x600] sm:$0xff]
  %v549 = vld [vmem:[%s4 + $0x608] sm:$0xff]
  %v550 = vld [vmem:[%s4 + $0x610] sm:$0xff]
  %v551 = vld [vmem:[%s4 + $0x618] sm:$0xff]
  %v552 = vld [vmem:[%s4 + $0x620] sm:$0xff]
  %v553 = vld [vmem:[%s4 + $0x628] sm:$0xff]
  %v554 = vld [vmem:[%s4 + $0x630] sm:$0xff]
  %v555 = vld [vmem:[%s4 + $0x638] sm:$0xff]
  %v556 = vld [vmem:[%s4 + $0x640] sm:$0xff]
  %v557 = vld [vmem:[%s4 + $0x648] sm:$0xff]
  %v558 = vld [vmem:[%s4 + $0x650] sm:$0xff]
  %v559 = vld [vmem:[%s4 + $0x658] sm:$0xff]
  %v560 = vld [vmem:[%s4 + $0x660] sm:$0xff]
  %v561 = vld [vmem:[%s4 + $0x668] sm:$0xff]
  %v562 = vld [vmem:[%s4 + $0x670] sm:$0xff]
  %v563 = vld [vmem:[%s4 + $0x678] sm:$0xff]
  %v564 = vld [vmem:[%s4 + $0x680] sm:$0xff]
  %v565 = vld [vmem:[%s4 + $0x688] sm:$0xff]
  %v566 = vld [vmem:[%s4 + $0x690] sm:$0xff]
  %v567 = vld [vmem:[%s4 + $0x698] sm:$0xff]
  %v568 = vld [vmem:[%s4 + $0x6a0] sm:$0xff]
  %v569 = vld [vmem:[%s4 + $0x6a8] sm:$0xff]
  %v570 = vld [vmem:[%s4 + $0x6b0] sm:$0xff]
  %v571 = vld [vmem:[%s4 + $0x6b8] sm:$0xff]
  %v572 = vld [vmem:[%s4 + $0x6c0] sm:$0xff]
  %v573 = vld [vmem:[%s4 + $0x6c8] sm:$0xff]
  %v574 = vld [vmem:[%s4 + $0x6d0] sm:$0xff]
  %v575 = vld [vmem:[%s4 + $0x6d8] sm:$0xff]
  %v576 = vld [vmem:[%s4 + $0x6e0] sm:$0xff]
  %v577 = vld [vmem:[%s4 + $0x6e8] sm:$0xff]
  %v578 = vld [vmem:[%s4 + $0x6f0] sm:$0xff]
  %v579 = vld [vmem:[%s4 + $0x6f8] sm:$0xff]
  %v580 = vld [vmem:[%s4 + $0x700] sm:$0xff]
  %v581 = vld [vmem:[%s4 + $0x708] sm:$0xff]
  %v582 = vld [vmem:[%s4 + $0x710] sm:$0xff]
  %v583 = vld [vmem:[%s4 + $0x718] sm:$0xff]
  %v584 = vld [vmem:[%s4 + $0x720] sm:$0xff]
  %v585 = vld [vmem:[%s4 + $0x728] sm:$0xff]
  %v586 = vld [vmem:[%s4 + $0x730] sm:$0xff]
  %v587 = vld [vmem:[%s4 + $0x738] sm:$0xff]
  %v588 = vld [vmem:[%s4 + $0x740] sm:$0xff]
  %v589 = vld [vmem:[%s4 + $0x748] sm:$0xff]
  %v590 = vld [vmem:[%s4 + $0x750] sm:$0xff]
  %v591 = vld [vmem:[%s4 + $0x758] sm:$0xff]
  %v592 = vld [vmem:[%s4 + $0x760] sm:$0xff]
  %v593 = vld [vmem:[%s4 + $0x768] sm:$0xff]
  %v594 = vld [vmem:[%s4 + $0x770] sm:$0xff]
  %v595 = vld [vmem:[%s4 + $0x778] sm:$0xff]
  %v596 = vld [vmem:[%s4 + $0x780] sm:$0xff]
  %v597 = vld [vmem:[%s4 + $0x788] sm:$0xff]
  %v598 = vld [vmem:[%s4 + $0x790] sm:$0xff]
  %v599 = vld [vmem:[%s4 + $0x798] sm:$0xff]
  %v600 = vld [vmem:[%s4 + $0x7a0] sm:$0xff]
  %v601 = vld [vmem:[%s4 + $0x7a8] sm:$0xff]
  %v602 = vld [vmem:[%s4 + $0x7b0] sm:$0xff]
  %v603 = vld [vmem:[%s4 + $0x7b8] sm:$0xff]
  %v604 = vld [vmem:[%s4 + $0x7c0] sm:$0xff]
  %v605 = vld [vmem:[%s4 + $0x7c8] sm:$0xff]
  %v606 = vld [vmem:[%s4 + $0x7d0] sm:$0xff]
  %v607 = vld [vmem:[%s4 + $0x7d8] sm:$0xff]
  %v608 = vld [vmem:[%s4 + $0x7e0] sm:$0xff]
  %v609 = vld [vmem:[%s4 + $0x7e8] sm:$0xff]
  %v610 = vld [vmem:[%s4 + $0x7f0] sm:$0xff]
  %v611 = vld [vmem:[%s4 + $0x7f8] sm:$0xff]
  %v612 = vld [vmem:[%s5] sm:$0xff]
  %v614 = vlaneseq
  %v615 = vshrl.u32 %v614, 7
  %v616 = vsub.s32 0, %v615
  %v617 = vrot.slane %v612, %v616
  %v618 = vlaneseq
  %v619 = vshrl.u32 %v618, 7
  %v620 = vsub.s32 1, %v619
  %v621 = vrot.slane %v612, %v620
  %v622 = vlaneseq
  %v623 = vshrl.u32 %v622, 7
  %v624 = vsub.s32 2, %v623
  %v625 = vrot.slane %v612, %v624
  %v626 = vlaneseq
  %v627 = vshrl.u32 %v626, 7
  %v628 = vsub.s32 3, %v627
  %v629 = vrot.slane %v612, %v628
  %v630 = vlaneseq
  %v631 = vshrl.u32 %v630, 7
  %v632 = vsub.s32 4, %v631
  %v633 = vrot.slane %v612, %v632
  %v634 = vlaneseq
  %v635 = vshrl.u32 %v634, 7
  %v636 = vsub.s32 5, %v635
  %v637 = vrot.slane %v612, %v636
  %v638 = vlaneseq
  %v639 = vshrl.u32 %v638, 7
  %v640 = vsub.s32 6, %v639
  %v641 = vrot.slane %v612, %v640
  %v642 = vlaneseq
  %v643 = vshrl.u32 %v642, 7
  %v644 = vsub.s32 7, %v643
  %v645 = vrot.slane %v612, %v644
  %v910 = vunpack.c.l.b16 %v356
  %v911 = vunpack.c.h.b16 %v356
  %v912 = vunpack.c.l.b16 %v357
  %v913 = vunpack.c.h.b16 %v357
  %v914 = vunpack.c.l.b16 %v358
  %v915 = vunpack.c.h.b16 %v358
  %v916 = vunpack.c.l.b16 %v359
  %v917 = vunpack.c.h.b16 %v359
  %v918 = vunpack.c.l.b16 %v360
  %v919 = vunpack.c.h.b16 %v360
  %v920 = vunpack.c.l.b16 %v361
  %v921 = vunpack.c.h.b16 %v361
  %v922 = vunpack.c.l.b16 %v362
  %v923 = vunpack.c.h.b16 %v362
  %v924 = vunpack.c.l.b16 %v363
  %v925 = vunpack.c.h.b16 %v363
  %v926 = vunpack.c.l.b16 %v364
  %v927 = vunpack.c.h.b16 %v364
  %v928 = vunpack.c.l.b16 %v365
  %v929 = vunpack.c.h.b16 %v365
  %v930 = vunpack.c.l.b16 %v366
  %v931 = vunpack.c.h.b16 %v366
  %v932 = vunpack.c.l.b16 %v367
  %v933 = vunpack.c.h.b16 %v367
  %v934 = vunpack.c.l.b16 %v368
  %v935 = vunpack.c.h.b16 %v368
  %v936 = vunpack.c.l.b16 %v369
  %v937 = vunpack.c.h.b16 %v369
  %v938 = vunpack.c.l.b16 %v370
  %v939 = vunpack.c.h.b16 %v370
  %v940 = vunpack.c.l.b16 %v371
  %v941 = vunpack.c.h.b16 %v371
  %v942 = vunpack.c.l.b16 %v372
  %v943 = vunpack.c.h.b16 %v372
  %v944 = vunpack.c.l.b16 %v373
  %v945 = vunpack.c.h.b16 %v373
  %v946 = vunpack.c.l.b16 %v374
  %v947 = vunpack.c.h.b16 %v374
  %v948 = vunpack.c.l.b16 %v375
  %v949 = vunpack.c.h.b16 %v375
  %v950 = vunpack.c.l.b16 %v376
  %v951 = vunpack.c.h.b16 %v376
  %v952 = vunpack.c.l.b16 %v377
  %v953 = vunpack.c.h.b16 %v377
  %v954 = vunpack.c.l.b16 %v378
  %v955 = vunpack.c.h.b16 %v378
  %v956 = vunpack.c.l.b16 %v379
  %v957 = vunpack.c.h.b16 %v379
  %v958 = vunpack.c.l.b16 %v380
  %v959 = vunpack.c.h.b16 %v380
  %v960 = vunpack.c.l.b16 %v381
  %v961 = vunpack.c.h.b16 %v381
  %v962 = vunpack.c.l.b16 %v382
  %v963 = vunpack.c.h.b16 %v382
  %v964 = vunpack.c.l.b16 %v383
  %v965 = vunpack.c.h.b16 %v383
  %v966 = vunpack.c.l.b16 %v384
  %v967 = vunpack.c.h.b16 %v384
  %v968 = vunpack.c.l.b16 %v385
  %v969 = vunpack.c.h.b16 %v385
  %v970 = vunpack.c.l.b16 %v386
  %v971 = vunpack.c.h.b16 %v386
  %v972 = vunpack.c.l.b16 %v387
  %v973 = vunpack.c.h.b16 %v387
  %v974 = vunpack.c.l.b16 %v388
  %v975 = vunpack.c.h.b16 %v388
  %v976 = vunpack.c.l.b16 %v389
  %v977 = vunpack.c.h.b16 %v389
  %v978 = vunpack.c.l.b16 %v390
  %v979 = vunpack.c.h.b16 %v390
  %v980 = vunpack.c.l.b16 %v391
  %v981 = vunpack.c.h.b16 %v391
  %v982 = vunpack.c.l.b16 %v392
  %v983 = vunpack.c.h.b16 %v392
  %v984 = vunpack.c.l.b16 %v393
  %v985 = vunpack.c.h.b16 %v393
  %v986 = vunpack.c.l.b16 %v394
  %v987 = vunpack.c.h.b16 %v394
  %v988 = vunpack.c.l.b16 %v395
  %v989 = vunpack.c.h.b16 %v395
  %v990 = vunpack.c.l.b16 %v396
  %v991 = vunpack.c.h.b16 %v396
  %v992 = vunpack.c.l.b16 %v397
  %v993 = vunpack.c.h.b16 %v397
  %v994 = vunpack.c.l.b16 %v398
  %v995 = vunpack.c.h.b16 %v398
  %v996 = vunpack.c.l.b16 %v399
  %v997 = vunpack.c.h.b16 %v399
  %v998 = vunpack.c.l.b16 %v400
  %v999 = vunpack.c.h.b16 %v400
  %v1000 = vunpack.c.l.b16 %v401
  %v1001 = vunpack.c.h.b16 %v401
  %v1002 = vunpack.c.l.b16 %v402
  %v1003 = vunpack.c.h.b16 %v402
  %v1004 = vunpack.c.l.b16 %v403
  %v1005 = vunpack.c.h.b16 %v403
  %v1006 = vunpack.c.l.b16 %v404
  %v1007 = vunpack.c.h.b16 %v404
  %v1008 = vunpack.c.l.b16 %v405
  %v1009 = vunpack.c.h.b16 %v405
  %v1010 = vunpack.c.l.b16 %v406
  %v1011 = vunpack.c.h.b16 %v406
  %v1012 = vunpack.c.l.b16 %v407
  %v1013 = vunpack.c.h.b16 %v407
  %v1014 = vunpack.c.l.b16 %v408
  %v1015 = vunpack.c.h.b16 %v408
  %v1016 = vunpack.c.l.b16 %v409
  %v1017 = vunpack.c.h.b16 %v409
  %v1018 = vunpack.c.l.b16 %v410
  %v1019 = vunpack.c.h.b16 %v410
  %v1020 = vunpack.c.l.b16 %v411
  %v1021 = vunpack.c.h.b16 %v411
  %v1022 = vunpack.c.l.b16 %v412
  %v1023 = vunpack.c.h.b16 %v412
  %v1024 = vunpack.c.l.b16 %v413
  %v1025 = vunpack.c.h.b16 %v413
  %v1026 = vunpack.c.l.b16 %v414
  %v1027 = vunpack.c.h.b16 %v414
  %v1028 = vunpack.c.l.b16 %v415
  %v1029 = vunpack.c.h.b16 %v415
  %v1030 = vunpack.c.l.b16 %v416
  %v1031 = vunpack.c.h.b16 %v416
  %v1032 = vunpack.c.l.b16 %v417
  %v1033 = vunpack.c.h.b16 %v417
  %v1034 = vunpack.c.l.b16 %v418
  %v1035 = vunpack.c.h.b16 %v418
  %v1036 = vunpack.c.l.b16 %v419
  %v1037 = vunpack.c.h.b16 %v419
  %v1038 = vunpack.c.l.b16 %v420
  %v1039 = vunpack.c.h.b16 %v420
  %v1040 = vunpack.c.l.b16 %v421
  %v1041 = vunpack.c.h.b16 %v421
  %v1042 = vunpack.c.l.b16 %v422
  %v1043 = vunpack.c.h.b16 %v422
  %v1044 = vunpack.c.l.b16 %v423
  %v1045 = vunpack.c.h.b16 %v423
  %v1046 = vunpack.c.l.b16 %v424
  %v1047 = vunpack.c.h.b16 %v424
  %v1048 = vunpack.c.l.b16 %v425
  %v1049 = vunpack.c.h.b16 %v425
  %v1050 = vunpack.c.l.b16 %v426
  %v1051 = vunpack.c.h.b16 %v426
  %v1052 = vunpack.c.l.b16 %v427
  %v1053 = vunpack.c.h.b16 %v427
  %v1054 = vunpack.c.l.b16 %v428
  %v1055 = vunpack.c.h.b16 %v428
  %v1056 = vunpack.c.l.b16 %v429
  %v1057 = vunpack.c.h.b16 %v429
  %v1058 = vunpack.c.l.b16 %v430
  %v1059 = vunpack.c.h.b16 %v430
  %v1060 = vunpack.c.l.b16 %v431
  %v1061 = vunpack.c.h.b16 %v431
  %v1062 = vunpack.c.l.b16 %v432
  %v1063 = vunpack.c.h.b16 %v432
  %v1064 = vunpack.c.l.b16 %v433
  %v1065 = vunpack.c.h.b16 %v433
  %v1066 = vunpack.c.l.b16 %v434
  %v1067 = vunpack.c.h.b16 %v434
  %v1068 = vunpack.c.l.b16 %v435
  %v1069 = vunpack.c.h.b16 %v435
  %v1070 = vunpack.c.l.b16 %v436
  %v1071 = vunpack.c.h.b16 %v436
  %v1072 = vunpack.c.l.b16 %v437
  %v1073 = vunpack.c.h.b16 %v437
  %v1074 = vunpack.c.l.b16 %v438
  %v1075 = vunpack.c.h.b16 %v438
  %v1076 = vunpack.c.l.b16 %v439
  %v1077 = vunpack.c.h.b16 %v439
  %v1078 = vunpack.c.l.b16 %v440
  %v1079 = vunpack.c.h.b16 %v440
  %v1080 = vunpack.c.l.b16 %v441
  %v1081 = vunpack.c.h.b16 %v441
  %v1082 = vunpack.c.l.b16 %v442
  %v1083 = vunpack.c.h.b16 %v442
  %v1084 = vunpack.c.l.b16 %v443
  %v1085 = vunpack.c.h.b16 %v443
  %v1086 = vunpack.c.l.b16 %v444
  %v1087 = vunpack.c.h.b16 %v444
  %v1088 = vunpack.c.l.b16 %v445
  %v1089 = vunpack.c.h.b16 %v445
  %v1090 = vunpack.c.l.b16 %v446
  %v1091 = vunpack.c.h.b16 %v446
  %v1092 = vunpack.c.l.b16 %v447
  %v1093 = vunpack.c.h.b16 %v447
  %v1094 = vunpack.c.l.b16 %v448
  %v1095 = vunpack.c.h.b16 %v448
  %v1096 = vunpack.c.l.b16 %v449
  %v1097 = vunpack.c.h.b16 %v449
  %v1098 = vunpack.c.l.b16 %v450
  %v1099 = vunpack.c.h.b16 %v450
  %v1100 = vunpack.c.l.b16 %v451
  %v1101 = vunpack.c.h.b16 %v451
  %v1102 = vunpack.c.l.b16 %v452
  %v1103 = vunpack.c.h.b16 %v452
  %v1104 = vunpack.c.l.b16 %v453
  %v1105 = vunpack.c.h.b16 %v453
  %v1106 = vunpack.c.l.b16 %v454
  %v1107 = vunpack.c.h.b16 %v454
  %v1108 = vunpack.c.l.b16 %v455
  %v1109 = vunpack.c.h.b16 %v455
  %v1110 = vunpack.c.l.b16 %v456
  %v1111 = vunpack.c.h.b16 %v456
  %v1112 = vunpack.c.l.b16 %v457
  %v1113 = vunpack.c.h.b16 %v457
  %v1114 = vunpack.c.l.b16 %v458
  %v1115 = vunpack.c.h.b16 %v458
  %v1116 = vunpack.c.l.b16 %v459
  %v1117 = vunpack.c.h.b16 %v459
  %v1118 = vunpack.c.l.b16 %v460
  %v1119 = vunpack.c.h.b16 %v460
  %v1120 = vunpack.c.l.b16 %v461
  %v1121 = vunpack.c.h.b16 %v461
  %v1122 = vunpack.c.l.b16 %v462
  %v1123 = vunpack.c.h.b16 %v462
  %v1124 = vunpack.c.l.b16 %v463
  %v1125 = vunpack.c.h.b16 %v463
  %v1126 = vunpack.c.l.b16 %v464
  %v1127 = vunpack.c.h.b16 %v464
  %v1128 = vunpack.c.l.b16 %v465
  %v1129 = vunpack.c.h.b16 %v465
  %v1130 = vunpack.c.l.b16 %v466
  %v1131 = vunpack.c.h.b16 %v466
  %v1132 = vunpack.c.l.b16 %v467
  %v1133 = vunpack.c.h.b16 %v467
  %v1134 = vunpack.c.l.b16 %v468
  %v1135 = vunpack.c.h.b16 %v468
  %v1136 = vunpack.c.l.b16 %v469
  %v1137 = vunpack.c.h.b16 %v469
  %v1138 = vunpack.c.l.b16 %v470
  %v1139 = vunpack.c.h.b16 %v470
  %v1140 = vunpack.c.l.b16 %v471
  %v1141 = vunpack.c.h.b16 %v471
  %v1142 = vunpack.c.l.b16 %v472
  %v1143 = vunpack.c.h.b16 %v472
  %v1144 = vunpack.c.l.b16 %v473
  %v1145 = vunpack.c.h.b16 %v473
  %v1146 = vunpack.c.l.b16 %v474
  %v1147 = vunpack.c.h.b16 %v474
  %v1148 = vunpack.c.l.b16 %v475
  %v1149 = vunpack.c.h.b16 %v475
  %v1150 = vunpack.c.l.b16 %v476
  %v1151 = vunpack.c.h.b16 %v476
  %v1152 = vunpack.c.l.b16 %v477
  %v1153 = vunpack.c.h.b16 %v477
  %v1154 = vunpack.c.l.b16 %v478
  %v1155 = vunpack.c.h.b16 %v478
  %v1156 = vunpack.c.l.b16 %v479
  %v1157 = vunpack.c.h.b16 %v479
  %v1158 = vunpack.c.l.b16 %v480
  %v1159 = vunpack.c.h.b16 %v480
  %v1160 = vunpack.c.l.b16 %v481
  %v1161 = vunpack.c.h.b16 %v481
  %v1162 = vunpack.c.l.b16 %v482
  %v1163 = vunpack.c.h.b16 %v482
  %v1164 = vunpack.c.l.b16 %v483
  %v1165 = vunpack.c.h.b16 %v483
  %v1166 = vunpack.c.l.b16 %v484
  %v1167 = vunpack.c.h.b16 %v484
  %v1168 = vunpack.c.l.b16 %v485
  %v1169 = vunpack.c.h.b16 %v485
  %v1170 = vunpack.c.l.b16 %v486
  %v1171 = vunpack.c.h.b16 %v486
  %v1172 = vunpack.c.l.b16 %v487
  %v1173 = vunpack.c.h.b16 %v487
  %v1174 = vunpack.c.l.b16 %v488
  %v1175 = vunpack.c.h.b16 %v488
  %v1176 = vunpack.c.l.b16 %v489
  %v1177 = vunpack.c.h.b16 %v489
  %v1178 = vunpack.c.l.b16 %v490
  %v1179 = vunpack.c.h.b16 %v490
  %v1180 = vunpack.c.l.b16 %v491
  %v1181 = vunpack.c.h.b16 %v491
  %v1182 = vunpack.c.l.b16 %v492
  %v1183 = vunpack.c.h.b16 %v492
  %v1184 = vunpack.c.l.b16 %v493
  %v1185 = vunpack.c.h.b16 %v493
  %v1186 = vunpack.c.l.b16 %v494
  %v1187 = vunpack.c.h.b16 %v494
  %v1188 = vunpack.c.l.b16 %v495
  %v1189 = vunpack.c.h.b16 %v495
  %v1190 = vunpack.c.l.b16 %v496
  %v1191 = vunpack.c.h.b16 %v496
  %v1192 = vunpack.c.l.b16 %v497
  %v1193 = vunpack.c.h.b16 %v497
  %v1194 = vunpack.c.l.b16 %v498
  %v1195 = vunpack.c.h.b16 %v498
  %v1196 = vunpack.c.l.b16 %v499
  %v1197 = vunpack.c.h.b16 %v499
  %v1198 = vunpack.c.l.b16 %v500
  %v1199 = vunpack.c.h.b16 %v500
  %v1200 = vunpack.c.l.b16 %v501
  %v1201 = vunpack.c.h.b16 %v501
  %v1202 = vunpack.c.l.b16 %v502
  %v1203 = vunpack.c.h.b16 %v502
  %v1204 = vunpack.c.l.b16 %v503
  %v1205 = vunpack.c.h.b16 %v503
  %v1206 = vunpack.c.l.b16 %v504
  %v1207 = vunpack.c.h.b16 %v504
  %v1208 = vunpack.c.l.b16 %v505
  %v1209 = vunpack.c.h.b16 %v505
  %v1210 = vunpack.c.l.b16 %v506
  %v1211 = vunpack.c.h.b16 %v506
  %v1212 = vunpack.c.l.b16 %v507
  %v1213 = vunpack.c.h.b16 %v507
  %v1214 = vunpack.c.l.b16 %v508
  %v1215 = vunpack.c.h.b16 %v508
  %v1216 = vunpack.c.l.b16 %v509
  %v1217 = vunpack.c.h.b16 %v509
  %v1218 = vunpack.c.l.b16 %v510
  %v1219 = vunpack.c.h.b16 %v510
  %v1220 = vunpack.c.l.b16 %v511
  %v1221 = vunpack.c.h.b16 %v511
  %v1222 = vunpack.c.l.b16 %v512
  %v1223 = vunpack.c.h.b16 %v512
  %v1224 = vunpack.c.l.b16 %v513
  %v1225 = vunpack.c.h.b16 %v513
  %v1226 = vunpack.c.l.b16 %v514
  %v1227 = vunpack.c.h.b16 %v514
  %v1228 = vunpack.c.l.b16 %v515
  %v1229 = vunpack.c.h.b16 %v515
  %v1230 = vunpack.c.l.b16 %v516
  %v1231 = vunpack.c.h.b16 %v516
  %v1232 = vunpack.c.l.b16 %v517
  %v1233 = vunpack.c.h.b16 %v517
  %v1234 = vunpack.c.l.b16 %v518
  %v1235 = vunpack.c.h.b16 %v518
  %v1236 = vunpack.c.l.b16 %v519
  %v1237 = vunpack.c.h.b16 %v519
  %v1238 = vunpack.c.l.b16 %v520
  %v1239 = vunpack.c.h.b16 %v520
  %v1240 = vunpack.c.l.b16 %v521
  %v1241 = vunpack.c.h.b16 %v521
  %v1242 = vunpack.c.l.b16 %v522
  %v1243 = vunpack.c.h.b16 %v522
  %v1244 = vunpack.c.l.b16 %v523
  %v1245 = vunpack.c.h.b16 %v523
  %v1246 = vunpack.c.l.b16 %v524
  %v1247 = vunpack.c.h.b16 %v524
  %v1248 = vunpack.c.l.b16 %v525
  %v1249 = vunpack.c.h.b16 %v525
  %v1250 = vunpack.c.l.b16 %v526
  %v1251 = vunpack.c.h.b16 %v526
  %v1252 = vunpack.c.l.b16 %v527
  %v1253 = vunpack.c.h.b16 %v527
  %v1254 = vunpack.c.l.b16 %v528
  %v1255 = vunpack.c.h.b16 %v528
  %v1256 = vunpack.c.l.b16 %v529
  %v1257 = vunpack.c.h.b16 %v529
  %v1258 = vunpack.c.l.b16 %v530
  %v1259 = vunpack.c.h.b16 %v530
  %v1260 = vunpack.c.l.b16 %v531
  %v1261 = vunpack.c.h.b16 %v531
  %v1262 = vunpack.c.l.b16 %v532
  %v1263 = vunpack.c.h.b16 %v532
  %v1264 = vunpack.c.l.b16 %v533
  %v1265 = vunpack.c.h.b16 %v533
  %v1266 = vunpack.c.l.b16 %v534
  %v1267 = vunpack.c.h.b16 %v534
  %v1268 = vunpack.c.l.b16 %v535
  %v1269 = vunpack.c.h.b16 %v535
  %v1270 = vunpack.c.l.b16 %v536
  %v1271 = vunpack.c.h.b16 %v536
  %v1272 = vunpack.c.l.b16 %v537
  %v1273 = vunpack.c.h.b16 %v537
  %v1274 = vunpack.c.l.b16 %v538
  %v1275 = vunpack.c.h.b16 %v538
  %v1276 = vunpack.c.l.b16 %v539
  %v1277 = vunpack.c.h.b16 %v539
  %v1278 = vunpack.c.l.b16 %v540
  %v1279 = vunpack.c.h.b16 %v540
  %v1280 = vunpack.c.l.b16 %v541
  %v1281 = vunpack.c.h.b16 %v541
  %v1282 = vunpack.c.l.b16 %v542
  %v1283 = vunpack.c.h.b16 %v542
  %v1284 = vunpack.c.l.b16 %v543
  %v1285 = vunpack.c.h.b16 %v543
  %v1286 = vunpack.c.l.b16 %v544
  %v1287 = vunpack.c.h.b16 %v544
  %v1288 = vunpack.c.l.b16 %v545
  %v1289 = vunpack.c.h.b16 %v545
  %v1290 = vunpack.c.l.b16 %v546
  %v1291 = vunpack.c.h.b16 %v546
  %v1292 = vunpack.c.l.b16 %v547
  %v1293 = vunpack.c.h.b16 %v547
  %v1294 = vunpack.c.l.b16 %v548
  %v1295 = vunpack.c.h.b16 %v548
  %v1296 = vunpack.c.l.b16 %v549
  %v1297 = vunpack.c.h.b16 %v549
  %v1298 = vunpack.c.l.b16 %v550
  %v1299 = vunpack.c.h.b16 %v550
  %v1300 = vunpack.c.l.b16 %v551
  %v1301 = vunpack.c.h.b16 %v551
  %v1302 = vunpack.c.l.b16 %v552
  %v1303 = vunpack.c.h.b16 %v552
  %v1304 = vunpack.c.l.b16 %v553
  %v1305 = vunpack.c.h.b16 %v553
  %v1306 = vunpack.c.l.b16 %v554
  %v1307 = vunpack.c.h.b16 %v554
  %v1308 = vunpack.c.l.b16 %v555
  %v1309 = vunpack.c.h.b16 %v555
  %v1310 = vunpack.c.l.b16 %v556
  %v1311 = vunpack.c.h.b16 %v556
  %v1312 = vunpack.c.l.b16 %v557
  %v1313 = vunpack.c.h.b16 %v557
  %v1314 = vunpack.c.l.b16 %v558
  %v1315 = vunpack.c.h.b16 %v558
  %v1316 = vunpack.c.l.b16 %v559
  %v1317 = vunpack.c.h.b16 %v559
  %v1318 = vunpack.c.l.b16 %v560
  %v1319 = vunpack.c.h.b16 %v560
  %v1320 = vunpack.c.l.b16 %v561
  %v1321 = vunpack.c.h.b16 %v561
  %v1322 = vunpack.c.l.b16 %v562
  %v1323 = vunpack.c.h.b16 %v562
  %v1324 = vunpack.c.l.b16 %v563
  %v1325 = vunpack.c.h.b16 %v563
  %v1326 = vunpack.c.l.b16 %v564
  %v1327 = vunpack.c.h.b16 %v564
  %v1328 = vunpack.c.l.b16 %v565
  %v1329 = vunpack.c.h.b16 %v565
  %v1330 = vunpack.c.l.b16 %v566
  %v1331 = vunpack.c.h.b16 %v566
  %v1332 = vunpack.c.l.b16 %v567
  %v1333 = vunpack.c.h.b16 %v567
  %v1334 = vunpack.c.l.b16 %v568
  %v1335 = vunpack.c.h.b16 %v568
  %v1336 = vunpack.c.l.b16 %v569
  %v1337 = vunpack.c.h.b16 %v569
  %v1338 = vunpack.c.l.b16 %v570
  %v1339 = vunpack.c.h.b16 %v570
  %v1340 = vunpack.c.l.b16 %v571
  %v1341 = vunpack.c.h.b16 %v571
  %v1342 = vunpack.c.l.b16 %v572
  %v1343 = vunpack.c.h.b16 %v572
  %v1344 = vunpack.c.l.b16 %v573
  %v1345 = vunpack.c.h.b16 %v573
  %v1346 = vunpack.c.l.b16 %v574
  %v1347 = vunpack.c.h.b16 %v574
  %v1348 = vunpack.c.l.b16 %v575
  %v1349 = vunpack.c.h.b16 %v575
  %v1350 = vunpack.c.l.b16 %v576
  %v1351 = vunpack.c.h.b16 %v576
  %v1352 = vunpack.c.l.b16 %v577
  %v1353 = vunpack.c.h.b16 %v577
  %v1354 = vunpack.c.l.b16 %v578
  %v1355 = vunpack.c.h.b16 %v578
  %v1356 = vunpack.c.l.b16 %v579
  %v1357 = vunpack.c.h.b16 %v579
  %v1358 = vunpack.c.l.b16 %v580
  %v1359 = vunpack.c.h.b16 %v580
  %v1360 = vunpack.c.l.b16 %v581
  %v1361 = vunpack.c.h.b16 %v581
  %v1362 = vunpack.c.l.b16 %v582
  %v1363 = vunpack.c.h.b16 %v582
  %v1364 = vunpack.c.l.b16 %v583
  %v1365 = vunpack.c.h.b16 %v583
  %v1366 = vunpack.c.l.b16 %v584
  %v1367 = vunpack.c.h.b16 %v584
  %v1368 = vunpack.c.l.b16 %v585
  %v1369 = vunpack.c.h.b16 %v585
  %v1370 = vunpack.c.l.b16 %v586
  %v1371 = vunpack.c.h.b16 %v586
  %v1372 = vunpack.c.l.b16 %v587
  %v1373 = vunpack.c.h.b16 %v587
  %v1374 = vunpack.c.l.b16 %v588
  %v1375 = vunpack.c.h.b16 %v588
  %v1376 = vunpack.c.l.b16 %v589
  %v1377 = vunpack.c.h.b16 %v589
  %v1378 = vunpack.c.l.b16 %v590
  %v1379 = vunpack.c.h.b16 %v590
  %v1380 = vunpack.c.l.b16 %v591
  %v1381 = vunpack.c.h.b16 %v591
  %v1382 = vunpack.c.l.b16 %v592
  %v1383 = vunpack.c.h.b16 %v592
  %v1384 = vunpack.c.l.b16 %v593
  %v1385 = vunpack.c.h.b16 %v593
  %v1386 = vunpack.c.l.b16 %v594
  %v1387 = vunpack.c.h.b16 %v594
  %v1388 = vunpack.c.l.b16 %v595
  %v1389 = vunpack.c.h.b16 %v595
  %v1390 = vunpack.c.l.b16 %v596
  %v1391 = vunpack.c.h.b16 %v596
  %v1392 = vunpack.c.l.b16 %v597
  %v1393 = vunpack.c.h.b16 %v597
  %v1394 = vunpack.c.l.b16 %v598
  %v1395 = vunpack.c.h.b16 %v598
  %v1396 = vunpack.c.l.b16 %v599
  %v1397 = vunpack.c.h.b16 %v599
  %v1398 = vunpack.c.l.b16 %v600
  %v1399 = vunpack.c.h.b16 %v600
  %v1400 = vunpack.c.l.b16 %v601
  %v1401 = vunpack.c.h.b16 %v601
  %v1402 = vunpack.c.l.b16 %v602
  %v1403 = vunpack.c.h.b16 %v602
  %v1404 = vunpack.c.l.b16 %v603
  %v1405 = vunpack.c.h.b16 %v603
  %v1406 = vunpack.c.l.b16 %v604
  %v1407 = vunpack.c.h.b16 %v604
  %v1408 = vunpack.c.l.b16 %v605
  %v1409 = vunpack.c.h.b16 %v605
  %v1410 = vunpack.c.l.b16 %v606
  %v1411 = vunpack.c.h.b16 %v606
  %v1412 = vunpack.c.l.b16 %v607
  %v1413 = vunpack.c.h.b16 %v607
  %v1414 = vunpack.c.l.b16 %v608
  %v1415 = vunpack.c.h.b16 %v608
  %v1416 = vunpack.c.l.b16 %v609
  %v1417 = vunpack.c.h.b16 %v609
  %v1418 = vunpack.c.l.b16 %v610
  %v1419 = vunpack.c.h.b16 %v610
  %v1420 = vunpack.c.l.b16 %v611
  %v1421 = vunpack.c.h.b16 %v611
  %v1422 = vpack.c.b16 %v918, %v910
  %v1423 = vpack.c.b16 %v919, %v911
  %v1424 = vpack.c.b16 %v920, %v912
  %v1425 = vpack.c.b16 %v921, %v913
  %v1426 = vpack.c.b16 %v922, %v914
  %v1427 = vpack.c.b16 %v923, %v915
  %v1428 = vpack.c.b16 %v924, %v916
  %v1429 = vpack.c.b16 %v925, %v917
  %v1430 = vpack.c.b16 %v934, %v926
  %v1431 = vpack.c.b16 %v935, %v927
  %v1432 = vpack.c.b16 %v936, %v928
  %v1433 = vpack.c.b16 %v937, %v929
  %v1434 = vpack.c.b16 %v938, %v930
  %v1435 = vpack.c.b16 %v939, %v931
  %v1436 = vpack.c.b16 %v940, %v932
  %v1437 = vpack.c.b16 %v941, %v933
  %v1438 = vpack.c.b16 %v950, %v942
  %v1439 = vpack.c.b16 %v951, %v943
  %v1440 = vpack.c.b16 %v952, %v944
  %v1441 = vpack.c.b16 %v953, %v945
  %v1442 = vpack.c.b16 %v954, %v946
  %v1443 = vpack.c.b16 %v955, %v947
  %v1444 = vpack.c.b16 %v956, %v948
  %v1445 = vpack.c.b16 %v957, %v949
  %v1446 = vpack.c.b16 %v966, %v958
  %v1447 = vpack.c.b16 %v967, %v959
  %v1448 = vpack.c.b16 %v968, %v960
  %v1449 = vpack.c.b16 %v969, %v961
  %v1450 = vpack.c.b16 %v970, %v962
  %v1451 = vpack.c.b16 %v971, %v963
  %v1452 = vpack.c.b16 %v972, %v964
  %v1453 = vpack.c.b16 %v973, %v965
  %v1454 = vpack.c.b16 %v982, %v974
  %v1455 = vpack.c.b16 %v983, %v975
  %v1456 = vpack.c.b16 %v984, %v976
  %v1457 = vpack.c.b16 %v985, %v977
  %v1458 = vpack.c.b16 %v986, %v978
  %v1459 = vpack.c.b16 %v987, %v979
  %v1460 = vpack.c.b16 %v988, %v980
  %v1461 = vpack.c.b16 %v989, %v981
  %v1462 = vpack.c.b16 %v998, %v990
  %v1463 = vpack.c.b16 %v999, %v991
  %v1464 = vpack.c.b16 %v1000, %v992
  %v1465 = vpack.c.b16 %v1001, %v993
  %v1466 = vpack.c.b16 %v1002, %v994
  %v1467 = vpack.c.b16 %v1003, %v995
  %v1468 = vpack.c.b16 %v1004, %v996
  %v1469 = vpack.c.b16 %v1005, %v997
  %v1470 = vpack.c.b16 %v1014, %v1006
  %v1471 = vpack.c.b16 %v1015, %v1007
  %v1472 = vpack.c.b16 %v1016, %v1008
  %v1473 = vpack.c.b16 %v1017, %v1009
  %v1474 = vpack.c.b16 %v1018, %v1010
  %v1475 = vpack.c.b16 %v1019, %v1011
  %v1476 = vpack.c.b16 %v1020, %v1012
  %v1477 = vpack.c.b16 %v1021, %v1013
  %v1478 = vpack.c.b16 %v1030, %v1022
  %v1479 = vpack.c.b16 %v1031, %v1023
  %v1480 = vpack.c.b16 %v1032, %v1024
  %v1481 = vpack.c.b16 %v1033, %v1025
  %v1482 = vpack.c.b16 %v1034, %v1026
  %v1483 = vpack.c.b16 %v1035, %v1027
  %v1484 = vpack.c.b16 %v1036, %v1028
  %v1485 = vpack.c.b16 %v1037, %v1029
  %v1486 = vpack.c.b16 %v1046, %v1038
  %v1487 = vpack.c.b16 %v1047, %v1039
  %v1488 = vpack.c.b16 %v1048, %v1040
  %v1489 = vpack.c.b16 %v1049, %v1041
  %v1490 = vpack.c.b16 %v1050, %v1042
  %v1491 = vpack.c.b16 %v1051, %v1043
  %v1492 = vpack.c.b16 %v1052, %v1044
  %v1493 = vpack.c.b16 %v1053, %v1045
  %v1494 = vpack.c.b16 %v1062, %v1054
  %v1495 = vpack.c.b16 %v1063, %v1055
  %v1496 = vpack.c.b16 %v1064, %v1056
  %v1497 = vpack.c.b16 %v1065, %v1057
  %v1498 = vpack.c.b16 %v1066, %v1058
  %v1499 = vpack.c.b16 %v1067, %v1059
  %v1500 = vpack.c.b16 %v1068, %v1060
  %v1501 = vpack.c.b16 %v1069, %v1061
  %v1502 = vpack.c.b16 %v1078, %v1070
  %v1503 = vpack.c.b16 %v1079, %v1071
  %v1504 = vpack.c.b16 %v1080, %v1072
  %v1505 = vpack.c.b16 %v1081, %v1073
  %v1506 = vpack.c.b16 %v1082, %v1074
  %v1507 = vpack.c.b16 %v1083, %v1075
  %v1508 = vpack.c.b16 %v1084, %v1076
  %v1509 = vpack.c.b16 %v1085, %v1077
  %v1510 = vpack.c.b16 %v1094, %v1086
  %v1511 = vpack.c.b16 %v1095, %v1087
  %v1512 = vpack.c.b16 %v1096, %v1088
  %v1513 = vpack.c.b16 %v1097, %v1089
  %v1514 = vpack.c.b16 %v1098, %v1090
  %v1515 = vpack.c.b16 %v1099, %v1091
  %v1516 = vpack.c.b16 %v1100, %v1092
  %v1517 = vpack.c.b16 %v1101, %v1093
  %v1518 = vpack.c.b16 %v1110, %v1102
  %v1519 = vpack.c.b16 %v1111, %v1103
  %v1520 = vpack.c.b16 %v1112, %v1104
  %v1521 = vpack.c.b16 %v1113, %v1105
  %v1522 = vpack.c.b16 %v1114, %v1106
  %v1523 = vpack.c.b16 %v1115, %v1107
  %v1524 = vpack.c.b16 %v1116, %v1108
  %v1525 = vpack.c.b16 %v1117, %v1109
  %v1526 = vpack.c.b16 %v1126, %v1118
  %v1527 = vpack.c.b16 %v1127, %v1119
  %v1528 = vpack.c.b16 %v1128, %v1120
  %v1529 = vpack.c.b16 %v1129, %v1121
  %v1530 = vpack.c.b16 %v1130, %v1122
  %v1531 = vpack.c.b16 %v1131, %v1123
  %v1532 = vpack.c.b16 %v1132, %v1124
  %v1533 = vpack.c.b16 %v1133, %v1125
  %v1534 = vpack.c.b16 %v1142, %v1134
  %v1535 = vpack.c.b16 %v1143, %v1135
  %v1536 = vpack.c.b16 %v1144, %v1136
  %v1537 = vpack.c.b16 %v1145, %v1137
  %v1538 = vpack.c.b16 %v1146, %v1138
  %v1539 = vpack.c.b16 %v1147, %v1139
  %v1540 = vpack.c.b16 %v1148, %v1140
  %v1541 = vpack.c.b16 %v1149, %v1141
  %v1542 = vpack.c.b16 %v1158, %v1150
  %v1543 = vpack.c.b16 %v1159, %v1151
  %v1544 = vpack.c.b16 %v1160, %v1152
  %v1545 = vpack.c.b16 %v1161, %v1153
  %v1546 = vpack.c.b16 %v1162, %v1154
  %v1547 = vpack.c.b16 %v1163, %v1155
  %v1548 = vpack.c.b16 %v1164, %v1156
  %v1549 = vpack.c.b16 %v1165, %v1157
  %v1550 = vpack.c.b16 %v1174, %v1166
  %v1551 = vpack.c.b16 %v1175, %v1167
  %v1552 = vpack.c.b16 %v1176, %v1168
  %v1553 = vpack.c.b16 %v1177, %v1169
  %v1554 = vpack.c.b16 %v1178, %v1170
  %v1555 = vpack.c.b16 %v1179, %v1171
  %v1556 = vpack.c.b16 %v1180, %v1172
  %v1557 = vpack.c.b16 %v1181, %v1173
  %v1558 = vpack.c.b16 %v1190, %v1182
  %v1559 = vpack.c.b16 %v1191, %v1183
  %v1560 = vpack.c.b16 %v1192, %v1184
  %v1561 = vpack.c.b16 %v1193, %v1185
  %v1562 = vpack.c.b16 %v1194, %v1186
  %v1563 = vpack.c.b16 %v1195, %v1187
  %v1564 = vpack.c.b16 %v1196, %v1188
  %v1565 = vpack.c.b16 %v1197, %v1189
  %v1566 = vpack.c.b16 %v1206, %v1198
  %v1567 = vpack.c.b16 %v1207, %v1199
  %v1568 = vpack.c.b16 %v1208, %v1200
  %v1569 = vpack.c.b16 %v1209, %v1201
  %v1570 = vpack.c.b16 %v1210, %v1202
  %v1571 = vpack.c.b16 %v1211, %v1203
  %v1572 = vpack.c.b16 %v1212, %v1204
  %v1573 = vpack.c.b16 %v1213, %v1205
  %v1574 = vpack.c.b16 %v1222, %v1214
  %v1575 = vpack.c.b16 %v1223, %v1215
  %v1576 = vpack.c.b16 %v1224, %v1216
  %v1577 = vpack.c.b16 %v1225, %v1217
  %v1578 = vpack.c.b16 %v1226, %v1218
  %v1579 = vpack.c.b16 %v1227, %v1219
  %v1580 = vpack.c.b16 %v1228, %v1220
  %v1581 = vpack.c.b16 %v1229, %v1221
  %v1582 = vpack.c.b16 %v1238, %v1230
  %v1583 = vpack.c.b16 %v1239, %v1231
  %v1584 = vpack.c.b16 %v1240, %v1232
  %v1585 = vpack.c.b16 %v1241, %v1233
  %v1586 = vpack.c.b16 %v1242, %v1234
  %v1587 = vpack.c.b16 %v1243, %v1235
  %v1588 = vpack.c.b16 %v1244, %v1236
  %v1589 = vpack.c.b16 %v1245, %v1237
  %v1590 = vpack.c.b16 %v1254, %v1246
  %v1591 = vpack.c.b16 %v1255, %v1247
  %v1592 = vpack.c.b16 %v1256, %v1248
  %v1593 = vpack.c.b16 %v1257, %v1249
  %v1594 = vpack.c.b16 %v1258, %v1250
  %v1595 = vpack.c.b16 %v1259, %v1251
  %v1596 = vpack.c.b16 %v1260, %v1252
  %v1597 = vpack.c.b16 %v1261, %v1253
  %v1598 = vpack.c.b16 %v1270, %v1262
  %v1599 = vpack.c.b16 %v1271, %v1263
  %v1600 = vpack.c.b16 %v1272, %v1264
  %v1601 = vpack.c.b16 %v1273, %v1265
  %v1602 = vpack.c.b16 %v1274, %v1266
  %v1603 = vpack.c.b16 %v1275, %v1267
  %v1604 = vpack.c.b16 %v1276, %v1268
  %v1605 = vpack.c.b16 %v1277, %v1269
  %v1606 = vpack.c.b16 %v1286, %v1278
  %v1607 = vpack.c.b16 %v1287, %v1279
  %v1608 = vpack.c.b16 %v1288, %v1280
  %v1609 = vpack.c.b16 %v1289, %v1281
  %v1610 = vpack.c.b16 %v1290, %v1282
  %v1611 = vpack.c.b16 %v1291, %v1283
  %v1612 = vpack.c.b16 %v1292, %v1284
  %v1613 = vpack.c.b16 %v1293, %v1285
  %v1614 = vpack.c.b16 %v1302, %v1294
  %v1615 = vpack.c.b16 %v1303, %v1295
  %v1616 = vpack.c.b16 %v1304, %v1296
  %v1617 = vpack.c.b16 %v1305, %v1297
  %v1618 = vpack.c.b16 %v1306, %v1298
  %v1619 = vpack.c.b16 %v1307, %v1299
  %v1620 = vpack.c.b16 %v1308, %v1300
  %v1621 = vpack.c.b16 %v1309, %v1301
  %v1622 = vpack.c.b16 %v1318, %v1310
  %v1623 = vpack.c.b16 %v1319, %v1311
  %v1624 = vpack.c.b16 %v1320, %v1312
  %v1625 = vpack.c.b16 %v1321, %v1313
  %v1626 = vpack.c.b16 %v1322, %v1314
  %v1627 = vpack.c.b16 %v1323, %v1315
  %v1628 = vpack.c.b16 %v1324, %v1316
  %v1629 = vpack.c.b16 %v1325, %v1317
  %v1630 = vpack.c.b16 %v1334, %v1326
  %v1631 = vpack.c.b16 %v1335, %v1327
  %v1632 = vpack.c.b16 %v1336, %v1328
  %v1633 = vpack.c.b16 %v1337, %v1329
  %v1634 = vpack.c.b16 %v1338, %v1330
  %v1635 = vpack.c.b16 %v1339, %v1331
  %v1636 = vpack.c.b16 %v1340, %v1332
  %v1637 = vpack.c.b16 %v1341, %v1333
  %v1638 = vpack.c.b16 %v1350, %v1342
  %v1639 = vpack.c.b16 %v1351, %v1343
  %v1640 = vpack.c.b16 %v1352, %v1344
  %v1641 = vpack.c.b16 %v1353, %v1345
  %v1642 = vpack.c.b16 %v1354, %v1346
  %v1643 = vpack.c.b16 %v1355, %v1347
  %v1644 = vpack.c.b16 %v1356, %v1348
  %v1645 = vpack.c.b16 %v1357, %v1349
  %v1646 = vpack.c.b16 %v1366, %v1358
  %v1647 = vpack.c.b16 %v1367, %v1359
  %v1648 = vpack.c.b16 %v1368, %v1360
  %v1649 = vpack.c.b16 %v1369, %v1361
  %v1650 = vpack.c.b16 %v1370, %v1362
  %v1651 = vpack.c.b16 %v1371, %v1363
  %v1652 = vpack.c.b16 %v1372, %v1364
  %v1653 = vpack.c.b16 %v1373, %v1365
  %v1654 = vpack.c.b16 %v1382, %v1374
  %v1655 = vpack.c.b16 %v1383, %v1375
  %v1656 = vpack.c.b16 %v1384, %v1376
  %v1657 = vpack.c.b16 %v1385, %v1377
  %v1658 = vpack.c.b16 %v1386, %v1378
  %v1659 = vpack.c.b16 %v1387, %v1379
  %v1660 = vpack.c.b16 %v1388, %v1380
  %v1661 = vpack.c.b16 %v1389, %v1381
  %v1662 = vpack.c.b16 %v1398, %v1390
  %v1663 = vpack.c.b16 %v1399, %v1391
  %v1664 = vpack.c.b16 %v1400, %v1392
  %v1665 = vpack.c.b16 %v1401, %v1393
  %v1666 = vpack.c.b16 %v1402, %v1394
  %v1667 = vpack.c.b16 %v1403, %v1395
  %v1668 = vpack.c.b16 %v1404, %v1396
  %v1669 = vpack.c.b16 %v1405, %v1397
  %v1670 = vpack.c.b16 %v1414, %v1406
  %v1671 = vpack.c.b16 %v1415, %v1407
  %v1672 = vpack.c.b16 %v1416, %v1408
  %v1673 = vpack.c.b16 %v1417, %v1409
  %v1674 = vpack.c.b16 %v1418, %v1410
  %v1675 = vpack.c.b16 %v1419, %v1411
  %v1676 = vpack.c.b16 %v1420, %v1412
  %v1677 = vpack.c.b16 %v1421, %v1413
  %1934 = vmatprep.subr.bf16.mxu0 %v1423
  %1935 = vmatpush1.bf16.msra.mxu0 %v1422
  %1936 = vmatprep.subr.bf16.mxu0 %v1431
  %1937 = vmatpush1.bf16.msra.mxu0 %v1430
  %1938 = vmatprep.subr.bf16.mxu0 %v1439
  %1939 = vmatpush1.bf16.msra.mxu0 %v1438
  %1940 = vmatprep.subr.bf16.mxu0 %v1447
  %1941 = vmatpush1.bf16.msra.mxu0 %v1446
  %1942 = vmatprep.subr.bf16.mxu0 %v1455
  %1943 = vmatpush1.bf16.msra.mxu0 %v1454
  %1944 = vmatprep.subr.bf16.mxu0 %v1463
  %1945 = vmatpush1.bf16.msra.mxu0 %v1462
  %1946 = vmatprep.subr.bf16.mxu0 %v1471
  %1947 = vmatpush1.bf16.msra.mxu0 %v1470
  %1948 = vmatprep.subr.bf16.mxu0 %v1479
  %1949 = vmatpush1.bf16.msra.mxu0 %v1478
  %1950 = vmatprep.subr.bf16.mxu0 %v1487
  %1951 = vmatpush1.bf16.msra.mxu0 %v1486
  %1952 = vmatprep.subr.bf16.mxu0 %v1495
  %1953 = vmatpush1.bf16.msra.mxu0 %v1494
  %1954 = vmatprep.subr.bf16.mxu0 %v1503
  %1955 = vmatpush1.bf16.msra.mxu0 %v1502
  %1956 = vmatprep.subr.bf16.mxu0 %v1511
  %1957 = vmatpush1.bf16.msra.mxu0 %v1510
  %1958 = vmatprep.subr.bf16.mxu0 %v1519
  %1959 = vmatpush1.bf16.msra.mxu0 %v1518
  %1960 = vmatprep.subr.bf16.mxu0 %v1527
  %1961 = vmatpush1.bf16.msra.mxu0 %v1526
  %1962 = vmatprep.subr.bf16.mxu0 %v1535
  %1963 = vmatpush1.bf16.msra.mxu0 %v1534
  %1964 = vmatprep.subr.bf16.mxu0 %v1543
  %1965 = vmatpush1.bf16.msra.mxu0 %v1542
  %1966 = vmatprep.mubr.bf16.mxu0 %v353
  %1967 = vmatmul.mubr.bf16.gmra.mrb[0].mxu0 %v352
  %v1968 = vpop.f32.mrb[0].mxu0
  %v1969 = vadd.f32 %v617, %v1968
  %v1970 = vpop.f32.mrb[0].mxu0
  %v1971 = vadd.f32 %v621, %v1970
  %v1972 = vpop.f32.mrb[0].mxu0
  %v1973 = vpop.f32.mrb[0].mxu0
  %1974 = vdwg.mxu0
  %1975 = vmatprep.subr.bf16.mxu0 %v1551
  %1976 = vmatpush1.bf16.msra.mxu0 %v1550
  %1977 = vmatprep.subr.bf16.mxu0 %v1559
  %1978 = vmatpush1.bf16.msra.mxu0 %v1558
  %1979 = vmatprep.subr.bf16.mxu0 %v1567
  %1980 = vmatpush1.bf16.msra.mxu0 %v1566
  %1981 = vmatprep.subr.bf16.mxu0 %v1575
  %1982 = vmatpush1.bf16.msra.mxu0 %v1574
  %1983 = vmatprep.subr.bf16.mxu0 %v1583
  %1984 = vmatpush1.bf16.msra.mxu0 %v1582
  %1985 = vmatprep.subr.bf16.mxu0 %v1591
  %1986 = vmatpush1.bf16.msra.mxu0 %v1590
  %1987 = vmatprep.subr.bf16.mxu0 %v1599
  %1988 = vmatpush1.bf16.msra.mxu0 %v1598
  %1989 = vmatprep.subr.bf16.mxu0 %v1607
  %1990 = vmatpush1.bf16.msra.mxu0 %v1606
  %1991 = vmatprep.subr.bf16.mxu0 %v1615
  %1992 = vmatpush1.bf16.msra.mxu0 %v1614
  %1993 = vmatprep.subr.bf16.mxu0 %v1623
  %1994 = vmatpush1.bf16.msra.mxu0 %v1622
  %1995 = vmatprep.subr.bf16.mxu0 %v1631
  %1996 = vmatpush1.bf16.msra.mxu0 %v1630
  %1997 = vmatprep.subr.bf16.mxu0 %v1639
  %1998 = vmatpush1.bf16.msra.mxu0 %v1638
  %1999 = vmatprep.subr.bf16.mxu0 %v1647
  %2000 = vmatpush1.bf16.msra.mxu0 %v1646
  %2001 = vmatprep.subr.bf16.mxu0 %v1655
  %2002 = vmatpush1.bf16.msra.mxu0 %v1654
  %2003 = vmatprep.subr.bf16.mxu0 %v1663
  %2004 = vmatpush1.bf16.msra.mxu0 %v1662
  %2005 = vmatprep.subr.bf16.mxu0 %v1671
  %2006 = vmatpush1.bf16.msra.mxu0 %v1670
  %2007 = vmatprep.mubr.bf16.mxu0 %v355
  %2008 = vmatmul.mubr.bf16.gmra.mrb[0].mxu0 %v354
  %v2009 = vpop.f32.mrb[0].mxu0
  %v2010 = vadd.f32 %v1969, %v2009
  %v2011 = vpop.f32.mrb[0].mxu0
  %v2012 = vadd.f32 %v1971, %v2011
  %v2013 = vpop.f32.mrb[0].mxu0
  %v2014 = vpop.f32.mrb[0].mxu0
  %2015 = vdwg.mxu0
  %2016 = vmatprep.subr.bf16.mxu0 %v1425
  %2017 = vmatpush1.bf16.msra.mxu0 %v1424
  %2018 = vmatprep.subr.bf16.mxu0 %v1433
  %2019 = vmatpush1.bf16.msra.mxu0 %v1432
  %2020 = vmatprep.subr.bf16.mxu0 %v1441
  %2021 = vmatpush1.bf16.msra.mxu0 %v1440
  %2022 = vmatprep.subr.bf16.mxu0 %v1449
  %2023 = vmatpush1.bf16.msra.mxu0 %v1448
  %2024 = vmatprep.subr.bf16.mxu0 %v1457
  %2025 = vmatpush1.bf16.msra.mxu0 %v1456
  %2026 = vmatprep.subr.bf16.mxu0 %v1465
  %2027 = vmatpush1.bf16.msra.mxu0 %v1464
  %2028 = vmatprep.subr.bf16.mxu0 %v1473
  %2029 = vmatpush1.bf16.msra.mxu0 %v1472
  %2030 = vmatprep.subr.bf16.mxu0 %v1481
  %2031 = vmatpush1.bf16.msra.mxu0 %v1480
  %2032 = vmatprep.subr.bf16.mxu0 %v1489
  %2033 = vmatpush1.bf16.msra.mxu0 %v1488
  %2034 = vmatprep.subr.bf16.mxu0 %v1497
  %2035 = vmatpush1.bf16.msra.mxu0 %v1496
  %2036 = vmatprep.subr.bf16.mxu0 %v1505
  %2037 = vmatpush1.bf16.msra.mxu0 %v1504
  %2038 = vmatprep.subr.bf16.mxu0 %v1513
  %2039 = vmatpush1.bf16.msra.mxu0 %v1512
  %2040 = vmatprep.subr.bf16.mxu0 %v1521
  %2041 = vmatpush1.bf16.msra.mxu0 %v1520
  %2042 = vmatprep.subr.bf16.mxu0 %v1529
  %2043 = vmatpush1.bf16.msra.mxu0 %v1528
  %2044 = vmatprep.subr.bf16.mxu0 %v1537
  %2045 = vmatpush1.bf16.msra.mxu0 %v1536
  %2046 = vmatprep.subr.bf16.mxu0 %v1545
  %2047 = vmatpush1.bf16.msra.mxu0 %v1544
  %2048 = vmatprep.mubr.bf16.mxu0 %v353
  %2049 = vmatmul.mubr.bf16.gmra.mrb[0].mxu0 %v352
  %v2050 = vpop.f32.mrb[0].mxu0
  %v2051 = vadd.f32 %v625, %v2050
  %v2052 = vpop.f32.mrb[0].mxu0
  %v2053 = vadd.f32 %v629, %v2052
  %v2054 = vpop.f32.mrb[0].mxu0
  %v2055 = vpop.f32.mrb[0].mxu0
  %2056 = vdwg.mxu0
  %2057 = vmatprep.subr.bf16.mxu0 %v1553
  %2058 = vmatpush1.bf16.msra.mxu0 %v1552
  %2059 = vmatprep.subr.bf16.mxu0 %v1561
  %2060 = vmatpush1.bf16.msra.mxu0 %v1560
  %2061 = vmatprep.subr.bf16.mxu0 %v1569
  %2062 = vmatpush1.bf16.msra.mxu0 %v1568
  %2063 = vmatprep.subr.bf16.mxu0 %v1577
  %2064 = vmatpush1.bf16.msra.mxu0 %v1576
  %2065 = vmatprep.subr.bf16.mxu0 %v1585
  %2066 = vmatpush1.bf16.msra.mxu0 %v1584
  %2067 = vmatprep.subr.bf16.mxu0 %v1593
  %2068 = vmatpush1.bf16.msra.mxu0 %v1592
  %2069 = vmatprep.subr.bf16.mxu0 %v1601
  %2070 = vmatpush1.bf16.msra.mxu0 %v1600
  %2071 = vmatprep.subr.bf16.mxu0 %v1609
  %2072 = vmatpush1.bf16.msra.mxu0 %v1608
  %2073 = vmatprep.subr.bf16.mxu0 %v1617
  %2074 = vmatpush1.bf16.msra.mxu0 %v1616
  %2075 = vmatprep.subr.bf16.mxu0 %v1625
  %2076 = vmatpush1.bf16.msra.mxu0 %v1624
  %2077 = vmatprep.subr.bf16.mxu0 %v1633
  %2078 = vmatpush1.bf16.msra.mxu0 %v1632
  %2079 = vmatprep.subr.bf16.mxu0 %v1641
  %2080 = vmatpush1.bf16.msra.mxu0 %v1640
  %2081 = vmatprep.subr.bf16.mxu0 %v1649
  %2082 = vmatpush1.bf16.msra.mxu0 %v1648
  %2083 = vmatprep.subr.bf16.mxu0 %v1657
  %2084 = vmatpush1.bf16.msra.mxu0 %v1656
  %2085 = vmatprep.subr.bf16.mxu0 %v1665
  %2086 = vmatpush1.bf16.msra.mxu0 %v1664
  %2087 = vmatprep.subr.bf16.mxu0 %v1673
  %2088 = vmatpush1.bf16.msra.mxu0 %v1672
  %2089 = vmatprep.mubr.bf16.mxu0 %v355
  %2090 = vmatmul.mubr.bf16.gmra.mrb[0].mxu0 %v354
  %v2091 = vpop.f32.mrb[0].mxu0
  %v2092 = vadd.f32 %v2051, %v2091
  %v2093 = vpop.f32.mrb[0].mxu0
  %v2094 = vadd.f32 %v2053, %v2093
  %v2095 = vpop.f32.mrb[0].mxu0
  %v2096 = vpop.f32.mrb[0].mxu0
  %2097 = vdwg.mxu0
  %2098 = vmatprep.subr.bf16.mxu0 %v1427
  %2099 = vmatpush1.bf16.msra.mxu0 %v1426
  %2100 = vmatprep.subr.bf16.mxu0 %v1435
  %2101 = vmatpush1.bf16.msra.mxu0 %v1434
  %2102 = vmatprep.subr.bf16.mxu0 %v1443
  %2103 = vmatpush1.bf16.msra.mxu0 %v1442
  %2104 = vmatprep.subr.bf16.mxu0 %v1451
  %2105 = vmatpush1.bf16.msra.mxu0 %v1450
  %2106 = vmatprep.subr.bf16.mxu0 %v1459
  %2107 = vmatpush1.bf16.msra.mxu0 %v1458
  %2108 = vmatprep.subr.bf16.mxu0 %v1467
  %2109 = vmatpush1.bf16.msra.mxu0 %v1466
  %2110 = vmatprep.subr.bf16.mxu0 %v1475
  %2111 = vmatpush1.bf16.msra.mxu0 %v1474
  %2112 = vmatprep.subr.bf16.mxu0 %v1483
  %2113 = vmatpush1.bf16.msra.mxu0 %v1482
  %2114 = vmatprep.subr.bf16.mxu0 %v1491
  %2115 = vmatpush1.bf16.msra.mxu0 %v1490
  %2116 = vmatprep.subr.bf16.mxu0 %v1499
  %2117 = vmatpush1.bf16.msra.mxu0 %v1498
  %2118 = vmatprep.subr.bf16.mxu0 %v1507
  %2119 = vmatpush1.bf16.msra.mxu0 %v1506
  %2120 = vmatprep.subr.bf16.mxu0 %v1515
  %2121 = vmatpush1.bf16.msra.mxu0 %v1514
  %2122 = vmatprep.subr.bf16.mxu0 %v1523
  %2123 = vmatpush1.bf16.msra.mxu0 %v1522
  %2124 = vmatprep.subr.bf16.mxu0 %v1531
  %2125 = vmatpush1.bf16.msra.mxu0 %v1530
  %2126 = vmatprep.subr.bf16.mxu0 %v1539
  %2127 = vmatpush1.bf16.msra.mxu0 %v1538
  %2128 = vmatprep.subr.bf16.mxu0 %v1547
  %2129 = vmatpush1.bf16.msra.mxu0 %v1546
  %2130 = vmatprep.mubr.bf16.mxu0 %v353
  %2131 = vmatmul.mubr.bf16.gmra.mrb[0].mxu0 %v352
  %v2132 = vpop.f32.mrb[0].mxu0
  %v2133 = vadd.f32 %v633, %v2132
  %v2134 = vpop.f32.mrb[0].mxu0
  %v2135 = vadd.f32 %v637, %v2134
  %v2136 = vpop.f32.mrb[0].mxu0
  %v2137 = vpop.f32.mrb[0].mxu0
  %2138 = vdwg.mxu0
  %2139 = vmatprep.subr.bf16.mxu0 %v1555
  %2140 = vmatpush1.bf16.msra.mxu0 %v1554
  %2141 = vmatprep.subr.bf16.mxu0 %v1563
  %2142 = vmatpush1.bf16.msra.mxu0 %v1562
  %2143 = vmatprep.subr.bf16.mxu0 %v1571
  %2144 = vmatpush1.bf16.msra.mxu0 %v1570
  %2145 = vmatprep.subr.bf16.mxu0 %v1579
  %2146 = vmatpush1.bf16.msra.mxu0 %v1578
  %2147 = vmatprep.subr.bf16.mxu0 %v1587
  %2148 = vmatpush1.bf16.msra.mxu0 %v1586
  %2149 = vmatprep.subr.bf16.mxu0 %v1595
  %2150 = vmatpush1.bf16.msra.mxu0 %v1594
  %2151 = vmatprep.subr.bf16.mxu0 %v1603
  %2152 = vmatpush1.bf16.msra.mxu0 %v1602
  %2153 = vmatprep.subr.bf16.mxu0 %v1611
  %2154 = vmatpush1.bf16.msra.mxu0 %v1610
  %2155 = vmatprep.subr.bf16.mxu0 %v1619
  %2156 = vmatpush1.bf16.msra.mxu0 %v1618
  %2157 = vmatprep.subr.bf16.mxu0 %v1627
  %2158 = vmatpush1.bf16.msra.mxu0 %v1626
  %2159 = vmatprep.subr.bf16.mxu0 %v1635
  %2160 = vmatpush1.bf16.msra.mxu0 %v1634
  %2161 = vmatprep.subr.bf16.mxu0 %v1643
  %2162 = vmatpush1.bf16.msra.mxu0 %v1642
  %2163 = vmatprep.subr.bf16.mxu0 %v1651
  %2164 = vmatpush1.bf16.msra.mxu0 %v1650
  %2165 = vmatprep.subr.bf16.mxu0 %v1659
  %2166 = vmatpush1.bf16.msra.mxu0 %v1658
  %2167 = vmatprep.subr.bf16.mxu0 %v1667
  %2168 = vmatpush1.bf16.msra.mxu0 %v1666
  %2169 = vmatprep.subr.bf16.mxu0 %v1675
  %2170 = vmatpush1.bf16.msra.mxu0 %v1674
  %2171 = vmatprep.mubr.bf16.mxu0 %v355
  %2172 = vmatmul.mubr.bf16.gmra.mrb[0].mxu0 %v354
  %v2173 = vpop.f32.mrb[0].mxu0
  %v2174 = vadd.f32 %v2133, %v2173
  %v2175 = vpop.f32.mrb[0].mxu0
  %v2176 = vadd.f32 %v2135, %v2175
  %v2177 = vpop.f32.mrb[0].mxu0
  %v2178 = vpop.f32.mrb[0].mxu0
  %2179 = vdwg.mxu0
  %2180 = vmatprep.subr.bf16.mxu0 %v1429
  %2181 = vmatpush1.bf16.msra.mxu0 %v1428
  %2182 = vmatprep.subr.bf16.mxu0 %v1437
  %2183 = vmatpush1.bf16.msra.mxu0 %v1436
  %2184 = vmatprep.subr.bf16.mxu0 %v1445
  %2185 = vmatpush1.bf16.msra.mxu0 %v1444
  %2186 = vmatprep.subr.bf16.mxu0 %v1453
  %2187 = vmatpush1.bf16.msra.mxu0 %v1452
  %2188 = vmatprep.subr.bf16.mxu0 %v1461
  %2189 = vmatpush1.bf16.msra.mxu0 %v1460
  %2190 = vmatprep.subr.bf16.mxu0 %v1469
  %2191 = vmatpush1.bf16.msra.mxu0 %v1468
  %2192 = vmatprep.subr.bf16.mxu0 %v1477
  %2193 = vmatpush1.bf16.msra.mxu0 %v1476
  %2194 = vmatprep.subr.bf16.mxu0 %v1485
  %2195 = vmatpush1.bf16.msra.mxu0 %v1484
  %2196 = vmatprep.subr.bf16.mxu0 %v1493
  %2197 = vmatpush1.bf16.msra.mxu0 %v1492
  %2198 = vmatprep.subr.bf16.mxu0 %v1501
  %2199 = vmatpush1.bf16.msra.mxu0 %v1500
  %2200 = vmatprep.subr.bf16.mxu0 %v1509
  %2201 = vmatpush1.bf16.msra.mxu0 %v1508
  %2202 = vmatprep.subr.bf16.mxu0 %v1517
  %2203 = vmatpush1.bf16.msra.mxu0 %v1516
  %2204 = vmatprep.subr.bf16.mxu0 %v1525
  %2205 = vmatpush1.bf16.msra.mxu0 %v1524
  %2206 = vmatprep.subr.bf16.mxu0 %v1533
  %2207 = vmatpush1.bf16.msra.mxu0 %v1532
  %2208 = vmatprep.subr.bf16.mxu0 %v1541
  %2209 = vmatpush1.bf16.msra.mxu0 %v1540
  %2210 = vmatprep.subr.bf16.mxu0 %v1549
  %2211 = vmatpush1.bf16.msra.mxu0 %v1548
  %2212 = vmatprep.mubr.bf16.mxu0 %v353
  %2213 = vmatmul.mubr.bf16.gmra.mrb[0].mxu0 %v352
  %v2214 = vpop.f32.mrb[0].mxu0
  %v2215 = vadd.f32 %v641, %v2214
  %v2216 = vpop.f32.mrb[0].mxu0
  %v2217 = vadd.f32 %v645, %v2216
  %v2218 = vpop.f32.mrb[0].mxu0
  %v2219 = vpop.f32.mrb[0].mxu0
  %2220 = vdwg.mxu0
  %2221 = vmatprep.subr.bf16.mxu0 %v1557
  %2222 = vmatpush1.bf16.msra.mxu0 %v1556
  %2223 = vmatprep.subr.bf16.mxu0 %v1565
  %2224 = vmatpush1.bf16.msra.mxu0 %v1564
  %2225 = vmatprep.subr.bf16.mxu0 %v1573
  %2226 = vmatpush1.bf16.msra.mxu0 %v1572
  %2227 = vmatprep.subr.bf16.mxu0 %v1581
  %2228 = vmatpush1.bf16.msra.mxu0 %v1580
  %2229 = vmatprep.subr.bf16.mxu0 %v1589
  %2230 = vmatpush1.bf16.msra.mxu0 %v1588
  %2231 = vmatprep.subr.bf16.mxu0 %v1597
  %2232 = vmatpush1.bf16.msra.mxu0 %v1596
  %2233 = vmatprep.subr.bf16.mxu0 %v1605
  %2234 = vmatpush1.bf16.msra.mxu0 %v1604
  %2235 = vmatprep.subr.bf16.mxu0 %v1613
  %2236 = vmatpush1.bf16.msra.mxu0 %v1612
  %2237 = vmatprep.subr.bf16.mxu0 %v1621
  %2238 = vmatpush1.bf16.msra.mxu0 %v1620
  %2239 = vmatprep.subr.bf16.mxu0 %v1629
  %2240 = vmatpush1.bf16.msra.mxu0 %v1628
  %2241 = vmatprep.subr.bf16.mxu0 %v1637
  %2242 = vmatpush1.bf16.msra.mxu0 %v1636
  %2243 = vmatprep.subr.bf16.mxu0 %v1645
  %2244 = vmatpush1.bf16.msra.mxu0 %v1644
  %2245 = vmatprep.subr.bf16.mxu0 %v1653
  %2246 = vmatpush1.bf16.msra.mxu0 %v1652
  %2247 = vmatprep.subr.bf16.mxu0 %v1661
  %2248 = vmatpush1.bf16.msra.mxu0 %v1660
  %2249 = vmatprep.subr.bf16.mxu0 %v1669
  %2250 = vmatpush1.bf16.msra.mxu0 %v1668
  %2251 = vmatprep.subr.bf16.mxu0 %v1677
  %2252 = vmatpush1.bf16.msra.mxu0 %v1676
  %2253 = vmatprep.mubr.bf16.mxu0 %v355
  %2254 = vmatmul.mubr.bf16.gmra.mrb[0].mxu0 %v354
  %v2255 = vpop.f32.mrb[0].mxu0
  %v2256 = vadd.f32 %v2215, %v2255
  %v2257 = vpop.f32.mrb[0].mxu0
  %v2258 = vadd.f32 %v2217, %v2257
  %v2259 = vpop.f32.mrb[0].mxu0
  %v2260 = vpop.f32.mrb[0].mxu0
  %2261 = vdwg.mxu0
  %v2262 = vmax.f32 %v2010, 0.0
  %v2263 = vmax.f32 %v2012, 0.0
  %v2264 = vmax.f32 %v2092, 0.0
  %v2265 = vmax.f32 %v2094, 0.0
  %v2266 = vmax.f32 %v2174, 0.0
  %v2267 = vmax.f32 %v2176, 0.0
  %v2268 = vmax.f32 %v2256, 0.0
  %v2269 = vmax.f32 %v2258, 0.0
  %v2270 = vld [vmem:[%s8] sm:$0xff]
  %v2272 = vlaneseq
  %v2273 = vshrl.u32 %v2272, 7
  %v2274 = vsub.s32 0, %v2273
  %v2275 = vrot.slane %v2270, %v2274
  %v2276 = vlaneseq
  %v2277 = vshrl.u32 %v2276, 7
  %v2278 = vsub.s32 1, %v2277
  %v2279 = vrot.slane %v2270, %v2278
  %v2280 = vlaneseq
  %v2281 = vshrl.u32 %v2280, 7
  %v2282 = vsub.s32 2, %v2281
  %v2283 = vrot.slane %v2270, %v2282
  %v2284 = vlaneseq
  %v2285 = vshrl.u32 %v2284, 7
  %v2286 = vsub.s32 3, %v2285
  %v2287 = vrot.slane %v2270, %v2286
  %v2288 = vlaneseq
  %v2289 = vshrl.u32 %v2288, 7
  %v2290 = vsub.s32 4, %v2289
  %v2291 = vrot.slane %v2270, %v2290
  %v2292 = vlaneseq
  %v2293 = vshrl.u32 %v2292, 7
  %v2294 = vsub.s32 5, %v2293
  %v2295 = vrot.slane %v2270, %v2294
  %v2296 = vlaneseq
  %v2297 = vshrl.u32 %v2296, 7
  %v2298 = vsub.s32 6, %v2297
  %v2299 = vrot.slane %v2270, %v2298
  %v2300 = vlaneseq
  %v2301 = vshrl.u32 %v2300, 7
  %v2302 = vsub.s32 7, %v2301
  %v2303 = vrot.slane %v2270, %v2302
  %v2312 = vsub.f32 %v2262, %v2275
  %v2313 = vsub.f32 %v2263, %v2279
  %v2314 = vsub.f32 %v2264, %v2283
  %v2315 = vsub.f32 %v2265, %v2287
  %v2316 = vsub.f32 %v2266, %v2291
  %v2317 = vsub.f32 %v2267, %v2295
  %v2318 = vsub.f32 %v2268, %v2299
  %v2319 = vsub.f32 %v2269, %v2303
  %v2320 = vld [vmem:[%s9] sm:$0xff]
  %v2321 = vadd.f32 %v2320, 1e-05
  %v2322 = vrsqrt.pop %v2321
  %v2324 = vlaneseq
  %v2325 = vshrl.u32 %v2324, 7
  %v2326 = vsub.s32 0, %v2325
  %v2327 = vrot.slane %v2322, %v2326
  %v2328 = vlaneseq
  %v2329 = vshrl.u32 %v2328, 7
  %v2330 = vsub.s32 1, %v2329
  %v2331 = vrot.slane %v2322, %v2330
  %v2332 = vlaneseq
  %v2333 = vshrl.u32 %v2332, 7
  %v2334 = vsub.s32 2, %v2333
  %v2335 = vrot.slane %v2322, %v2334
  %v2336 = vlaneseq
  %v2337 = vshrl.u32 %v2336, 7
  %v2338 = vsub.s32 3, %v2337
  %v2339 = vrot.slane %v2322, %v2338
  %v2340 = vlaneseq
  %v2341 = vshrl.u32 %v2340, 7
  %v2342 = vsub.s32 4, %v2341
  %v2343 = vrot.slane %v2322, %v2342
  %v2344 = vlaneseq
  %v2345 = vshrl.u32 %v2344, 7
  %v2346 = vsub.s32 5, %v2345
  %v2347 = vrot.slane %v2322, %v2346
  %v2348 = vlaneseq
  %v2349 = vshrl.u32 %v2348, 7
  %v2350 = vsub.s32 6, %v2349
  %v2351 = vrot.slane %v2322, %v2350
  %v2352 = vlaneseq
  %v2353 = vshrl.u32 %v2352, 7
  %v2354 = vsub.s32 7, %v2353
  %v2355 = vrot.slane %v2322, %v2354
  %v2364 = vmul.f32 %v2312, %v2327
  %v2365 = vmul.f32 %v2313, %v2331
  %v2366 = vmul.f32 %v2314, %v2335
  %v2367 = vmul.f32 %v2315, %v2339
  %v2368 = vmul.f32 %v2316, %v2343
  %v2369 = vmul.f32 %v2317, %v2347
  %v2370 = vmul.f32 %v2318, %v2351
  %v2371 = vmul.f32 %v2319, %v2355
  %v2372 = vld [vmem:[%s6] sm:$0xff]
  %v2374 = vlaneseq
  %v2375 = vshrl.u32 %v2374, 7
  %v2376 = vsub.s32 0, %v2375
  %v2377 = vrot.slane %v2372, %v2376
  %v2378 = vlaneseq
  %v2379 = vshrl.u32 %v2378, 7
  %v2380 = vsub.s32 1, %v2379
  %v2381 = vrot.slane %v2372, %v2380
  %v2382 = vlaneseq
  %v2383 = vshrl.u32 %v2382, 7
  %v2384 = vsub.s32 2, %v2383
  %v2385 = vrot.slane %v2372, %v2384
  %v2386 = vlaneseq
  %v2387 = vshrl.u32 %v2386, 7
  %v2388 = vsub.s32 3, %v2387
  %v2389 = vrot.slane %v2372, %v2388
  %v2390 = vlaneseq
  %v2391 = vshrl.u32 %v2390, 7
  %v2392 = vsub.s32 4, %v2391
  %v2393 = vrot.slane %v2372, %v2392
  %v2394 = vlaneseq
  %v2395 = vshrl.u32 %v2394, 7
  %v2396 = vsub.s32 5, %v2395
  %v2397 = vrot.slane %v2372, %v2396
  %v2398 = vlaneseq
  %v2399 = vshrl.u32 %v2398, 7
  %v2400 = vsub.s32 6, %v2399
  %v2401 = vrot.slane %v2372, %v2400
  %v2402 = vlaneseq
  %v2403 = vshrl.u32 %v2402, 7
  %v2404 = vsub.s32 7, %v2403
  %v2405 = vrot.slane %v2372, %v2404
  %v2414 = vmul.f32 %v2364, %v2377
  %v2415 = vmul.f32 %v2365, %v2381
  %v2416 = vmul.f32 %v2366, %v2385
  %v2417 = vmul.f32 %v2367, %v2389
  %v2418 = vmul.f32 %v2368, %v2393
  %v2419 = vmul.f32 %v2369, %v2397
  %v2420 = vmul.f32 %v2370, %v2401
  %v2421 = vmul.f32 %v2371, %v2405
  %v2422 = vld [vmem:[%s7] sm:$0xff]
  %v2424 = vlaneseq
  %v2425 = vshrl.u32 %v2424, 7
  %v2426 = vsub.s32 0, %v2425
  %v2427 = vrot.slane %v2422, %v2426
  %v2428 = vlaneseq
  %v2429 = vshrl.u32 %v2428, 7
  %v2430 = vsub.s32 1, %v2429
  %v2431 = vrot.slane %v2422, %v2430
  %v2432 = vlaneseq
  %v2433 = vshrl.u32 %v2432, 7
  %v2434 = vsub.s32 2, %v2433
  %v2435 = vrot.slane %v2422, %v2434
  %v2436 = vlaneseq
  %v2437 = vshrl.u32 %v2436, 7
  %v2438 = vsub.s32 3, %v2437
  %v2439 = vrot.slane %v2422, %v2438
  %v2440 = vlaneseq
  %v2441 = vshrl.u32 %v2440, 7
  %v2442 = vsub.s32 4, %v2441
  %v2443 = vrot.slane %v2422, %v2442
  %v2444 = vlaneseq
  %v2445 = vshrl.u32 %v2444, 7
  %v2446 = vsub.s32 5, %v2445
  %v2447 = vrot.slane %v2422, %v2446
  %v2448 = vlaneseq
  %v2449 = vshrl.u32 %v2448, 7
  %v2450 = vsub.s32 6, %v2449
  %v2451 = vrot.slane %v2422, %v2450
  %v2452 = vlaneseq
  %v2453 = vshrl.u32 %v2452, 7
  %v2454 = vsub.s32 7, %v2453
  %v2455 = vrot.slane %v2422, %v2454
  %v2464 = vadd.f32 %v2414, %v2427
  %v2465 = vadd.f32 %v2415, %v2431
  %v2466 = vadd.f32 %v2416, %v2435
  %v2467 = vadd.f32 %v2417, %v2439
  %v2468 = vadd.f32 %v2418, %v2443
  %v2469 = vadd.f32 %v2419, %v2447
  %v2470 = vadd.f32 %v2420, %v2451
  %v2471 = vadd.f32 %v2421, %v2455
  %v2472 = vpack.c.bf16 %v2464, %v2464
  %v2473 = vpack.c.bf16 %v2465, %v2465
  %v2474 = vpack.c.bf16 %v2466, %v2466
  %v2475 = vpack.c.bf16 %v2467, %v2467
  %v2476 = vpack.c.bf16 %v2468, %v2468
  %v2477 = vpack.c.bf16 %v2469, %v2469
  %v2478 = vpack.c.bf16 %v2470, %v2470
  %v2479 = vpack.c.bf16 %v2471, %v2471
  %v2480 = vld [vmem:[%s10] sm:$0xff]
  %v2481 = vld [vmem:[%s10 + $0x8] sm:$0xff]
  %v2482 = vld [vmem:[%s10 + $0x10] sm:$0xff]
  %v2483 = vld [vmem:[%s10 + $0x18] sm:$0xff]
  %v2484 = vld [vmem:[%s10 + $0x20] sm:$0xff]
  %v2485 = vld [vmem:[%s10 + $0x28] sm:$0xff]
  %v2486 = vld [vmem:[%s10 + $0x30] sm:$0xff]
  %v2487 = vld [vmem:[%s10 + $0x38] sm:$0xff]
  %v2488 = vld [vmem:[%s10 + $0x40] sm:$0xff]
  %v2489 = vld [vmem:[%s10 + $0x48] sm:$0xff]
  %v2490 = vld [vmem:[%s10 + $0x50] sm:$0xff]
  %v2491 = vld [vmem:[%s10 + $0x58] sm:$0xff]
  %v2492 = vld [vmem:[%s10 + $0x60] sm:$0xff]
  %v2493 = vld [vmem:[%s10 + $0x68] sm:$0xff]
  %v2494 = vld [vmem:[%s10 + $0x70] sm:$0xff]
  %v2495 = vld [vmem:[%s10 + $0x78] sm:$0xff]
  %v2496 = vld [vmem:[%s10 + $0x80] sm:$0xff]
  %v2497 = vld [vmem:[%s10 + $0x88] sm:$0xff]
  %v2498 = vld [vmem:[%s10 + $0x90] sm:$0xff]
  %v2499 = vld [vmem:[%s10 + $0x98] sm:$0xff]
  %v2500 = vld [vmem:[%s10 + $0xa0] sm:$0xff]
  %v2501 = vld [vmem:[%s10 + $0xa8] sm:$0xff]
  %v2502 = vld [vmem:[%s10 + $0xb0] sm:$0xff]
  %v2503 = vld [vmem:[%s10 + $0xb8] sm:$0xff]
  %v2504 = vld [vmem:[%s10 + $0xc0] sm:$0xff]
  %v2505 = vld [vmem:[%s10 + $0xc8] sm:$0xff]
  %v2506 = vld [vmem:[%s10 + $0xd0] sm:$0xff]
  %v2507 = vld [vmem:[%s10 + $0xd8] sm:$0xff]
  %v2508 = vld [vmem:[%s10 + $0xe0] sm:$0xff]
  %v2509 = vld [vmem:[%s10 + $0xe8] sm:$0xff]
  %v2510 = vld [vmem:[%s10 + $0xf0] sm:$0xff]
  %v2511 = vld [vmem:[%s10 + $0xf8] sm:$0xff]
  %v2512 = vld [vmem:[%s10 + $0x100] sm:$0xff]
  %v2513 = vld [vmem:[%s10 + $0x108] sm:$0xff]
  %v2514 = vld [vmem:[%s10 + $0x110] sm:$0xff]
  %v2515 = vld [vmem:[%s10 + $0x118] sm:$0xff]
  %v2516 = vld [vmem:[%s10 + $0x120] sm:$0xff]
  %v2517 = vld [vmem:[%s10 + $0x128] sm:$0xff]
  %v2518 = vld [vmem:[%s10 + $0x130] sm:$0xff]
  %v2519 = vld [vmem:[%s10 + $0x138] sm:$0xff]
  %v2520 = vld [vmem:[%s10 + $0x140] sm:$0xff]
  %v2521 = vld [vmem:[%s10 + $0x148] sm:$0xff]
  %v2522 = vld [vmem:[%s10 + $0x150] sm:$0xff]
  %v2523 = vld [vmem:[%s10 + $0x158] sm:$0xff]
  %v2524 = vld [vmem:[%s10 + $0x160] sm:$0xff]
  %v2525 = vld [vmem:[%s10 + $0x168] sm:$0xff]
  %v2526 = vld [vmem:[%s10 + $0x170] sm:$0xff]
  %v2527 = vld [vmem:[%s10 + $0x178] sm:$0xff]
  %v2528 = vld [vmem:[%s10 + $0x180] sm:$0xff]
  %v2529 = vld [vmem:[%s10 + $0x188] sm:$0xff]
  %v2530 = vld [vmem:[%s10 + $0x190] sm:$0xff]
  %v2531 = vld [vmem:[%s10 + $0x198] sm:$0xff]
  %v2532 = vld [vmem:[%s10 + $0x1a0] sm:$0xff]
  %v2533 = vld [vmem:[%s10 + $0x1a8] sm:$0xff]
  %v2534 = vld [vmem:[%s10 + $0x1b0] sm:$0xff]
  %v2535 = vld [vmem:[%s10 + $0x1b8] sm:$0xff]
  %v2536 = vld [vmem:[%s10 + $0x1c0] sm:$0xff]
  %v2537 = vld [vmem:[%s10 + $0x1c8] sm:$0xff]
  %v2538 = vld [vmem:[%s10 + $0x1d0] sm:$0xff]
  %v2539 = vld [vmem:[%s10 + $0x1d8] sm:$0xff]
  %v2540 = vld [vmem:[%s10 + $0x1e0] sm:$0xff]
  %v2541 = vld [vmem:[%s10 + $0x1e8] sm:$0xff]
  %v2542 = vld [vmem:[%s10 + $0x1f0] sm:$0xff]
  %v2543 = vld [vmem:[%s10 + $0x1f8] sm:$0xff]
  %v2544 = vld [vmem:[%s10 + $0x200] sm:$0xff]
  %v2545 = vld [vmem:[%s10 + $0x208] sm:$0xff]
  %v2546 = vld [vmem:[%s10 + $0x210] sm:$0xff]
  %v2547 = vld [vmem:[%s10 + $0x218] sm:$0xff]
  %v2548 = vld [vmem:[%s10 + $0x220] sm:$0xff]
  %v2549 = vld [vmem:[%s10 + $0x228] sm:$0xff]
  %v2550 = vld [vmem:[%s10 + $0x230] sm:$0xff]
  %v2551 = vld [vmem:[%s10 + $0x238] sm:$0xff]
  %v2552 = vld [vmem:[%s10 + $0x240] sm:$0xff]
  %v2553 = vld [vmem:[%s10 + $0x248] sm:$0xff]
  %v2554 = vld [vmem:[%s10 + $0x250] sm:$0xff]
  %v2555 = vld [vmem:[%s10 + $0x258] sm:$0xff]
  %v2556 = vld [vmem:[%s10 + $0x260] sm:$0xff]
  %v2557 = vld [vmem:[%s10 + $0x268] sm:$0xff]
  %v2558 = vld [vmem:[%s10 + $0x270] sm:$0xff]
  %v2559 = vld [vmem:[%s10 + $0x278] sm:$0xff]
  %v2560 = vld [vmem:[%s10 + $0x280] sm:$0xff]
  %v2561 = vld [vmem:[%s10 + $0x288] sm:$0xff]
  %v2562 = vld [vmem:[%s10 + $0x290] sm:$0xff]
  %v2563 = vld [vmem:[%s10 + $0x298] sm:$0xff]
  %v2564 = vld [vmem:[%s10 + $0x2a0] sm:$0xff]
  %v2565 = vld [vmem:[%s10 + $0x2a8] sm:$0xff]
  %v2566 = vld [vmem:[%s10 + $0x2b0] sm:$0xff]
  %v2567 = vld [vmem:[%s10 + $0x2b8] sm:$0xff]
  %v2568 = vld [vmem:[%s10 + $0x2c0] sm:$0xff]
  %v2569 = vld [vmem:[%s10 + $0x2c8] sm:$0xff]
  %v2570 = vld [vmem:[%s10 + $0x2d0] sm:$0xff]
  %v2571 = vld [vmem:[%s10 + $0x2d8] sm:$0xff]
  %v2572 = vld [vmem:[%s10 + $0x2e0] sm:$0xff]
  %v2573 = vld [vmem:[%s10 + $0x2e8] sm:$0xff]
  %v2574 = vld [vmem:[%s10 + $0x2f0] sm:$0xff]
  %v2575 = vld [vmem:[%s10 + $0x2f8] sm:$0xff]
  %v2576 = vld [vmem:[%s10 + $0x300] sm:$0xff]
  %v2577 = vld [vmem:[%s10 + $0x308] sm:$0xff]
  %v2578 = vld [vmem:[%s10 + $0x310] sm:$0xff]
  %v2579 = vld [vmem:[%s10 + $0x318] sm:$0xff]
  %v2580 = vld [vmem:[%s10 + $0x320] sm:$0xff]
  %v2581 = vld [vmem:[%s10 + $0x328] sm:$0xff]
  %v2582 = vld [vmem:[%s10 + $0x330] sm:$0xff]
  %v2583 = vld [vmem:[%s10 + $0x338] sm:$0xff]
  %v2584 = vld [vmem:[%s10 + $0x340] sm:$0xff]
  %v2585 = vld [vmem:[%s10 + $0x348] sm:$0xff]
  %v2586 = vld [vmem:[%s10 + $0x350] sm:$0xff]
  %v2587 = vld [vmem:[%s10 + $0x358] sm:$0xff]
  %v2588 = vld [vmem:[%s10 + $0x360] sm:$0xff]
  %v2589 = vld [vmem:[%s10 + $0x368] sm:$0xff]
  %v2590 = vld [vmem:[%s10 + $0x370] sm:$0xff]
  %v2591 = vld [vmem:[%s10 + $0x378] sm:$0xff]
  %v2592 = vld [vmem:[%s10 + $0x380] sm:$0xff]
  %v2593 = vld [vmem:[%s10 + $0x388] sm:$0xff]
  %v2594 = vld [vmem:[%s10 + $0x390] sm:$0xff]
  %v2595 = vld [vmem:[%s10 + $0x398] sm:$0xff]
  %v2596 = vld [vmem:[%s10 + $0x3a0] sm:$0xff]
  %v2597 = vld [vmem:[%s10 + $0x3a8] sm:$0xff]
  %v2598 = vld [vmem:[%s10 + $0x3b0] sm:$0xff]
  %v2599 = vld [vmem:[%s10 + $0x3b8] sm:$0xff]
  %v2600 = vld [vmem:[%s10 + $0x3c0] sm:$0xff]
  %v2601 = vld [vmem:[%s10 + $0x3c8] sm:$0xff]
  %v2602 = vld [vmem:[%s10 + $0x3d0] sm:$0xff]
  %v2603 = vld [vmem:[%s10 + $0x3d8] sm:$0xff]
  %v2604 = vld [vmem:[%s10 + $0x3e0] sm:$0xff]
  %v2605 = vld [vmem:[%s10 + $0x3e8] sm:$0xff]
  %v2606 = vld [vmem:[%s10 + $0x3f0] sm:$0xff]
  %v2607 = vld [vmem:[%s10 + $0x3f8] sm:$0xff]
  %v2608 = vld [vmem:[%s11] sm:$0x3]
  %v2610 = vlaneseq
  %v2611 = vshrl.u32 %v2610, 7
  %v2612 = vsub.s32 0, %v2611
  %v2613 = vrot.slane %v2608, %v2612
  %v2614 = vlaneseq
  %v2615 = vshrl.u32 %v2614, 7
  %v2616 = vsub.s32 1, %v2615
  %v2617 = vrot.slane %v2608, %v2616
  %v2748 = vunpack.c.l.b16 %v2480
  %v2749 = vunpack.c.h.b16 %v2480
  %v2750 = vunpack.c.l.b16 %v2481
  %v2751 = vunpack.c.h.b16 %v2481
  %v2752 = vunpack.c.l.b16 %v2482
  %v2753 = vunpack.c.h.b16 %v2482
  %v2754 = vunpack.c.l.b16 %v2483
  %v2755 = vunpack.c.h.b16 %v2483
  %v2756 = vunpack.c.l.b16 %v2484
  %v2757 = vunpack.c.h.b16 %v2484
  %v2758 = vunpack.c.l.b16 %v2485
  %v2759 = vunpack.c.h.b16 %v2485
  %v2760 = vunpack.c.l.b16 %v2486
  %v2761 = vunpack.c.h.b16 %v2486
  %v2762 = vunpack.c.l.b16 %v2487
  %v2763 = vunpack.c.h.b16 %v2487
  %v2764 = vunpack.c.l.b16 %v2488
  %v2765 = vunpack.c.h.b16 %v2488
  %v2766 = vunpack.c.l.b16 %v2489
  %v2767 = vunpack.c.h.b16 %v2489
  %v2768 = vunpack.c.l.b16 %v2490
  %v2769 = vunpack.c.h.b16 %v2490
  %v2770 = vunpack.c.l.b16 %v2491
  %v2771 = vunpack.c.h.b16 %v2491
  %v2772 = vunpack.c.l.b16 %v2492
  %v2773 = vunpack.c.h.b16 %v2492
  %v2774 = vunpack.c.l.b16 %v2493
  %v2775 = vunpack.c.h.b16 %v2493
  %v2776 = vunpack.c.l.b16 %v2494
  %v2777 = vunpack.c.h.b16 %v2494
  %v2778 = vunpack.c.l.b16 %v2495
  %v2779 = vunpack.c.h.b16 %v2495
  %v2780 = vunpack.c.l.b16 %v2496
  %v2781 = vunpack.c.h.b16 %v2496
  %v2782 = vunpack.c.l.b16 %v2497
  %v2783 = vunpack.c.h.b16 %v2497
  %v2784 = vunpack.c.l.b16 %v2498
  %v2785 = vunpack.c.h.b16 %v2498
  %v2786 = vunpack.c.l.b16 %v2499
  %v2787 = vunpack.c.h.b16 %v2499
  %v2788 = vunpack.c.l.b16 %v2500
  %v2789 = vunpack.c.h.b16 %v2500
  %v2790 = vunpack.c.l.b16 %v2501
  %v2791 = vunpack.c.h.b16 %v2501
  %v2792 = vunpack.c.l.b16 %v2502
  %v2793 = vunpack.c.h.b16 %v2502
  %v2794 = vunpack.c.l.b16 %v2503
  %v2795 = vunpack.c.h.b16 %v2503
  %v2796 = vunpack.c.l.b16 %v2504
  %v2797 = vunpack.c.h.b16 %v2504
  %v2798 = vunpack.c.l.b16 %v2505
  %v2799 = vunpack.c.h.b16 %v2505
  %v2800 = vunpack.c.l.b16 %v2506
  %v2801 = vunpack.c.h.b16 %v2506
  %v2802 = vunpack.c.l.b16 %v2507
  %v2803 = vunpack.c.h.b16 %v2507
  %v2804 = vunpack.c.l.b16 %v2508
  %v2805 = vunpack.c.h.b16 %v2508
  %v2806 = vunpack.c.l.b16 %v2509
  %v2807 = vunpack.c.h.b16 %v2509
  %v2808 = vunpack.c.l.b16 %v2510
  %v2809 = vunpack.c.h.b16 %v2510
  %v2810 = vunpack.c.l.b16 %v2511
  %v2811 = vunpack.c.h.b16 %v2511
  %v2812 = vunpack.c.l.b16 %v2512
  %v2813 = vunpack.c.h.b16 %v2512
  %v2814 = vunpack.c.l.b16 %v2513
  %v2815 = vunpack.c.h.b16 %v2513
  %v2816 = vunpack.c.l.b16 %v2514
  %v2817 = vunpack.c.h.b16 %v2514
  %v2818 = vunpack.c.l.b16 %v2515
  %v2819 = vunpack.c.h.b16 %v2515
  %v2820 = vunpack.c.l.b16 %v2516
  %v2821 = vunpack.c.h.b16 %v2516
  %v2822 = vunpack.c.l.b16 %v2517
  %v2823 = vunpack.c.h.b16 %v2517
  %v2824 = vunpack.c.l.b16 %v2518
  %v2825 = vunpack.c.h.b16 %v2518
  %v2826 = vunpack.c.l.b16 %v2519
  %v2827 = vunpack.c.h.b16 %v2519
  %v2828 = vunpack.c.l.b16 %v2520
  %v2829 = vunpack.c.h.b16 %v2520
  %v2830 = vunpack.c.l.b16 %v2521
  %v2831 = vunpack.c.h.b16 %v2521
  %v2832 = vunpack.c.l.b16 %v2522
  %v2833 = vunpack.c.h.b16 %v2522
  %v2834 = vunpack.c.l.b16 %v2523
  %v2835 = vunpack.c.h.b16 %v2523
  %v2836 = vunpack.c.l.b16 %v2524
  %v2837 = vunpack.c.h.b16 %v2524
  %v2838 = vunpack.c.l.b16 %v2525
  %v2839 = vunpack.c.h.b16 %v2525
  %v2840 = vunpack.c.l.b16 %v2526
  %v2841 = vunpack.c.h.b16 %v2526
  %v2842 = vunpack.c.l.b16 %v2527
  %v2843 = vunpack.c.h.b16 %v2527
  %v2844 = vunpack.c.l.b16 %v2528
  %v2845 = vunpack.c.h.b16 %v2528
  %v2846 = vunpack.c.l.b16 %v2529
  %v2847 = vunpack.c.h.b16 %v2529
  %v2848 = vunpack.c.l.b16 %v2530
  %v2849 = vunpack.c.h.b16 %v2530
  %v2850 = vunpack.c.l.b16 %v2531
  %v2851 = vunpack.c.h.b16 %v2531
  %v2852 = vunpack.c.l.b16 %v2532
  %v2853 = vunpack.c.h.b16 %v2532
  %v2854 = vunpack.c.l.b16 %v2533
  %v2855 = vunpack.c.h.b16 %v2533
  %v2856 = vunpack.c.l.b16 %v2534
  %v2857 = vunpack.c.h.b16 %v2534
  %v2858 = vunpack.c.l.b16 %v2535
  %v2859 = vunpack.c.h.b16 %v2535
  %v2860 = vunpack.c.l.b16 %v2536
  %v2861 = vunpack.c.h.b16 %v2536
  %v2862 = vunpack.c.l.b16 %v2537
  %v2863 = vunpack.c.h.b16 %v2537
  %v2864 = vunpack.c.l.b16 %v2538
  %v2865 = vunpack.c.h.b16 %v2538
  %v2866 = vunpack.c.l.b16 %v2539
  %v2867 = vunpack.c.h.b16 %v2539
  %v2868 = vunpack.c.l.b16 %v2540
  %v2869 = vunpack.c.h.b16 %v2540
  %v2870 = vunpack.c.l.b16 %v2541
  %v2871 = vunpack.c.h.b16 %v2541
  %v2872 = vunpack.c.l.b16 %v2542
  %v2873 = vunpack.c.h.b16 %v2542
  %v2874 = vunpack.c.l.b16 %v2543
  %v2875 = vunpack.c.h.b16 %v2543
  %v2876 = vunpack.c.l.b16 %v2544
  %v2877 = vunpack.c.h.b16 %v2544
  %v2878 = vunpack.c.l.b16 %v2545
  %v2879 = vunpack.c.h.b16 %v2545
  %v2880 = vunpack.c.l.b16 %v2546
  %v2881 = vunpack.c.h.b16 %v2546
  %v2882 = vunpack.c.l.b16 %v2547
  %v2883 = vunpack.c.h.b16 %v2547
  %v2884 = vunpack.c.l.b16 %v2548
  %v2885 = vunpack.c.h.b16 %v2548
  %v2886 = vunpack.c.l.b16 %v2549
  %v2887 = vunpack.c.h.b16 %v2549
  %v2888 = vunpack.c.l.b16 %v2550
  %v2889 = vunpack.c.h.b16 %v2550
  %v2890 = vunpack.c.l.b16 %v2551
  %v2891 = vunpack.c.h.b16 %v2551
  %v2892 = vunpack.c.l.b16 %v2552
  %v2893 = vunpack.c.h.b16 %v2552
  %v2894 = vunpack.c.l.b16 %v2553
  %v2895 = vunpack.c.h.b16 %v2553
  %v2896 = vunpack.c.l.b16 %v2554
  %v2897 = vunpack.c.h.b16 %v2554
  %v2898 = vunpack.c.l.b16 %v2555
  %v2899 = vunpack.c.h.b16 %v2555
  %v2900 = vunpack.c.l.b16 %v2556
  %v2901 = vunpack.c.h.b16 %v2556
  %v2902 = vunpack.c.l.b16 %v2557
  %v2903 = vunpack.c.h.b16 %v2557
  %v2904 = vunpack.c.l.b16 %v2558
  %v2905 = vunpack.c.h.b16 %v2558
  %v2906 = vunpack.c.l.b16 %v2559
  %v2907 = vunpack.c.h.b16 %v2559
  %v2908 = vunpack.c.l.b16 %v2560
  %v2909 = vunpack.c.h.b16 %v2560
  %v2910 = vunpack.c.l.b16 %v2561
  %v2911 = vunpack.c.h.b16 %v2561
  %v2912 = vunpack.c.l.b16 %v2562
  %v2913 = vunpack.c.h.b16 %v2562
  %v2914 = vunpack.c.l.b16 %v2563
  %v2915 = vunpack.c.h.b16 %v2563
  %v2916 = vunpack.c.l.b16 %v2564
  %v2917 = vunpack.c.h.b16 %v2564
  %v2918 = vunpack.c.l.b16 %v2565
  %v2919 = vunpack.c.h.b16 %v2565
  %v2920 = vunpack.c.l.b16 %v2566
  %v2921 = vunpack.c.h.b16 %v2566
  %v2922 = vunpack.c.l.b16 %v2567
  %v2923 = vunpack.c.h.b16 %v2567
  %v2924 = vunpack.c.l.b16 %v2568
  %v2925 = vunpack.c.h.b16 %v2568
  %v2926 = vunpack.c.l.b16 %v2569
  %v2927 = vunpack.c.h.b16 %v2569
  %v2928 = vunpack.c.l.b16 %v2570
  %v2929 = vunpack.c.h.b16 %v2570
  %v2930 = vunpack.c.l.b16 %v2571
  %v2931 = vunpack.c.h.b16 %v2571
  %v2932 = vunpack.c.l.b16 %v2572
  %v2933 = vunpack.c.h.b16 %v2572
  %v2934 = vunpack.c.l.b16 %v2573
  %v2935 = vunpack.c.h.b16 %v2573
  %v2936 = vunpack.c.l.b16 %v2574
  %v2937 = vunpack.c.h.b16 %v2574
  %v2938 = vunpack.c.l.b16 %v2575
  %v2939 = vunpack.c.h.b16 %v2575
  %v2940 = vunpack.c.l.b16 %v2576
  %v2941 = vunpack.c.h.b16 %v2576
  %v2942 = vunpack.c.l.b16 %v2577
  %v2943 = vunpack.c.h.b16 %v2577
  %v2944 = vunpack.c.l.b16 %v2578
  %v2945 = vunpack.c.h.b16 %v2578
  %v2946 = vunpack.c.l.b16 %v2579
  %v2947 = vunpack.c.h.b16 %v2579
  %v2948 = vunpack.c.l.b16 %v2580
  %v2949 = vunpack.c.h.b16 %v2580
  %v2950 = vunpack.c.l.b16 %v2581
  %v2951 = vunpack.c.h.b16 %v2581
  %v2952 = vunpack.c.l.b16 %v2582
  %v2953 = vunpack.c.h.b16 %v2582
  %v2954 = vunpack.c.l.b16 %v2583
  %v2955 = vunpack.c.h.b16 %v2583
  %v2956 = vunpack.c.l.b16 %v2584
  %v2957 = vunpack.c.h.b16 %v2584
  %v2958 = vunpack.c.l.b16 %v2585
  %v2959 = vunpack.c.h.b16 %v2585
  %v2960 = vunpack.c.l.b16 %v2586
  %v2961 = vunpack.c.h.b16 %v2586
  %v2962 = vunpack.c.l.b16 %v2587
  %v2963 = vunpack.c.h.b16 %v2587
  %v2964 = vunpack.c.l.b16 %v2588
  %v2965 = vunpack.c.h.b16 %v2588
  %v2966 = vunpack.c.l.b16 %v2589
  %v2967 = vunpack.c.h.b16 %v2589
  %v2968 = vunpack.c.l.b16 %v2590
  %v2969 = vunpack.c.h.b16 %v2590
  %v2970 = vunpack.c.l.b16 %v2591
  %v2971 = vunpack.c.h.b16 %v2591
  %v2972 = vunpack.c.l.b16 %v2592
  %v2973 = vunpack.c.h.b16 %v2592
  %v2974 = vunpack.c.l.b16 %v2593
  %v2975 = vunpack.c.h.b16 %v2593
  %v2976 = vunpack.c.l.b16 %v2594
  %v2977 = vunpack.c.h.b16 %v2594
  %v2978 = vunpack.c.l.b16 %v2595
  %v2979 = vunpack.c.h.b16 %v2595
  %v2980 = vunpack.c.l.b16 %v2596
  %v2981 = vunpack.c.h.b16 %v2596
  %v2982 = vunpack.c.l.b16 %v2597
  %v2983 = vunpack.c.h.b16 %v2597
  %v2984 = vunpack.c.l.b16 %v2598
  %v2985 = vunpack.c.h.b16 %v2598
  %v2986 = vunpack.c.l.b16 %v2599
  %v2987 = vunpack.c.h.b16 %v2599
  %v2988 = vunpack.c.l.b16 %v2600
  %v2989 = vunpack.c.h.b16 %v2600
  %v2990 = vunpack.c.l.b16 %v2601
  %v2991 = vunpack.c.h.b16 %v2601
  %v2992 = vunpack.c.l.b16 %v2602
  %v2993 = vunpack.c.h.b16 %v2602
  %v2994 = vunpack.c.l.b16 %v2603
  %v2995 = vunpack.c.h.b16 %v2603
  %v2996 = vunpack.c.l.b16 %v2604
  %v2997 = vunpack.c.h.b16 %v2604
  %v2998 = vunpack.c.l.b16 %v2605
  %v2999 = vunpack.c.h.b16 %v2605
  %v3000 = vunpack.c.l.b16 %v2606
  %v3001 = vunpack.c.h.b16 %v2606
  %v3002 = vunpack.c.l.b16 %v2607
  %v3003 = vunpack.c.h.b16 %v2607
  %v3004 = vpack.c.b16 %v2750, %v2748
  %v3005 = vpack.c.b16 %v2751, %v2749
  %v3006 = vpack.c.b16 %v2754, %v2752
  %v3007 = vpack.c.b16 %v2755, %v2753
  %v3008 = vpack.c.b16 %v2758, %v2756
  %v3009 = vpack.c.b16 %v2759, %v2757
  %v3010 = vpack.c.b16 %v2762, %v2760
  %v3011 = vpack.c.b16 %v2763, %v2761
  %v3012 = vpack.c.b16 %v2766, %v2764
  %v3013 = vpack.c.b16 %v2767, %v2765
  %v3014 = vpack.c.b16 %v2770, %v2768
  %v3015 = vpack.c.b16 %v2771, %v2769
  %v3016 = vpack.c.b16 %v2774, %v2772
  %v3017 = vpack.c.b16 %v2775, %v2773
  %v3018 = vpack.c.b16 %v2778, %v2776
  %v3019 = vpack.c.b16 %v2779, %v2777
  %v3020 = vpack.c.b16 %v2782, %v2780
  %v3021 = vpack.c.b16 %v2783, %v2781
  %v3022 = vpack.c.b16 %v2786, %v2784
  %v3023 = vpack.c.b16 %v2787, %v2785
  %v3024 = vpack.c.b16 %v2790, %v2788
  %v3025 = vpack.c.b16 %v2791, %v2789
  %v3026 = vpack.c.b16 %v2794, %v2792
  %v3027 = vpack.c.b16 %v2795, %v2793
  %v3028 = vpack.c.b16 %v2798, %v2796
  %v3029 = vpack.c.b16 %v2799, %v2797
  %v3030 = vpack.c.b16 %v2802, %v2800
  %v3031 = vpack.c.b16 %v2803, %v2801
  %v3032 = vpack.c.b16 %v2806, %v2804
  %v3033 = vpack.c.b16 %v2807, %v2805
  %v3034 = vpack.c.b16 %v2810, %v2808
  %v3035 = vpack.c.b16 %v2811, %v2809
  %v3036 = vpack.c.b16 %v2814, %v2812
  %v3037 = vpack.c.b16 %v2815, %v2813
  %v3038 = vpack.c.b16 %v2818, %v2816
  %v3039 = vpack.c.b16 %v2819, %v2817
  %v3040 = vpack.c.b16 %v2822, %v2820
  %v3041 = vpack.c.b16 %v2823, %v2821
  %v3042 = vpack.c.b16 %v2826, %v2824
  %v3043 = vpack.c.b16 %v2827, %v2825
  %v3044 = vpack.c.b16 %v2830, %v2828
  %v3045 = vpack.c.b16 %v2831, %v2829
  %v3046 = vpack.c.b16 %v2834, %v2832
  %v3047 = vpack.c.b16 %v2835, %v2833
  %v3048 = vpack.c.b16 %v2838, %v2836
  %v3049 = vpack.c.b16 %v2839, %v2837
  %v3050 = vpack.c.b16 %v2842, %v2840
  %v3051 = vpack.c.b16 %v2843, %v2841
  %v3052 = vpack.c.b16 %v2846, %v2844
  %v3053 = vpack.c.b16 %v2847, %v2845
  %v3054 = vpack.c.b16 %v2850, %v2848
  %v3055 = vpack.c.b16 %v2851, %v2849
  %v3056 = vpack.c.b16 %v2854, %v2852
  %v3057 = vpack.c.b16 %v2855, %v2853
  %v3058 = vpack.c.b16 %v2858, %v2856
  %v3059 = vpack.c.b16 %v2859, %v2857
  %v3060 = vpack.c.b16 %v2862, %v2860
  %v3061 = vpack.c.b16 %v2863, %v2861
  %v3062 = vpack.c.b16 %v2866, %v2864
  %v3063 = vpack.c.b16 %v2867, %v2865
  %v3064 = vpack.c.b16 %v2870, %v2868
  %v3065 = vpack.c.b16 %v2871, %v2869
  %v3066 = vpack.c.b16 %v2874, %v2872
  %v3067 = vpack.c.b16 %v2875, %v2873
  %v3068 = vpack.c.b16 %v2878, %v2876
  %v3069 = vpack.c.b16 %v2879, %v2877
  %v3070 = vpack.c.b16 %v2882, %v2880
  %v3071 = vpack.c.b16 %v2883, %v2881
  %v3072 = vpack.c.b16 %v2886, %v2884
  %v3073 = vpack.c.b16 %v2887, %v2885
  %v3074 = vpack.c.b16 %v2890, %v2888
  %v3075 = vpack.c.b16 %v2891, %v2889
  %v3076 = vpack.c.b16 %v2894, %v2892
  %v3077 = vpack.c.b16 %v2895, %v2893
  %v3078 = vpack.c.b16 %v2898, %v2896
  %v3079 = vpack.c.b16 %v2899, %v2897
  %v3080 = vpack.c.b16 %v2902, %v2900
  %v3081 = vpack.c.b16 %v2903, %v2901
  %v3082 = vpack.c.b16 %v2906, %v2904
  %v3083 = vpack.c.b16 %v2907, %v2905
  %v3084 = vpack.c.b16 %v2910, %v2908
  %v3085 = vpack.c.b16 %v2911, %v2909
  %v3086 = vpack.c.b16 %v2914, %v2912
  %v3087 = vpack.c.b16 %v2915, %v2913
  %v3088 = vpack.c.b16 %v2918, %v2916
  %v3089 = vpack.c.b16 %v2919, %v2917
  %v3090 = vpack.c.b16 %v2922, %v2920
  %v3091 = vpack.c.b16 %v2923, %v2921
  %v3092 = vpack.c.b16 %v2926, %v2924
  %v3093 = vpack.c.b16 %v2927, %v2925
  %v3094 = vpack.c.b16 %v2930, %v2928
  %v3095 = vpack.c.b16 %v2931, %v2929
  %v3096 = vpack.c.b16 %v2934, %v2932
  %v3097 = vpack.c.b16 %v2935, %v2933
  %v3098 = vpack.c.b16 %v2938, %v2936
  %v3099 = vpack.c.b16 %v2939, %v2937
  %v3100 = vpack.c.b16 %v2942, %v2940
  %v3101 = vpack.c.b16 %v2943, %v2941
  %v3102 = vpack.c.b16 %v2946, %v2944
  %v3103 = vpack.c.b16 %v2947, %v2945
  %v3104 = vpack.c.b16 %v2950, %v2948
  %v3105 = vpack.c.b16 %v2951, %v2949
  %v3106 = vpack.c.b16 %v2954, %v2952
  %v3107 = vpack.c.b16 %v2955, %v2953
  %v3108 = vpack.c.b16 %v2958, %v2956
  %v3109 = vpack.c.b16 %v2959, %v2957
  %v3110 = vpack.c.b16 %v2962, %v2960
  %v3111 = vpack.c.b16 %v2963, %v2961
  %v3112 = vpack.c.b16 %v2966, %v2964
  %v3113 = vpack.c.b16 %v2967, %v2965
  %v3114 = vpack.c.b16 %v2970, %v2968
  %v3115 = vpack.c.b16 %v2971, %v2969
  %v3116 = vpack.c.b16 %v2974, %v2972
  %v3117 = vpack.c.b16 %v2975, %v2973
  %v3118 = vpack.c.b16 %v2978, %v2976
  %v3119 = vpack.c.b16 %v2979, %v2977
  %v3120 = vpack.c.b16 %v2982, %v2980
  %v3121 = vpack.c.b16 %v2983, %v2981
  %v3122 = vpack.c.b16 %v2986, %v2984
  %v3123 = vpack.c.b16 %v2987, %v2985
  %v3124 = vpack.c.b16 %v2990, %v2988
  %v3125 = vpack.c.b16 %v2991, %v2989
  %v3126 = vpack.c.b16 %v2994, %v2992
  %v3127 = vpack.c.b16 %v2995, %v2993
  %v3128 = vpack.c.b16 %v2998, %v2996
  %v3129 = vpack.c.b16 %v2999, %v2997
  %v3130 = vpack.c.b16 %v3002, %v3000
  %v3131 = vpack.c.b16 %v3003, %v3001
  %3260 = vmatprep.subr.bf16.mxu0 %v3005
  %3261 = vmatpush1.bf16.msra.mxu0 %v3004
  %3262 = vmatprep.subr.bf16.mxu0 %v3007
  %3263 = vmatpush1.bf16.msra.mxu0 %v3006
  %3264 = vmatprep.subr.bf16.mxu0 %v3009
  %3265 = vmatpush1.bf16.msra.mxu0 %v3008
  %3266 = vmatprep.subr.bf16.mxu0 %v3011
  %3267 = vmatpush1.bf16.msra.mxu0 %v3010
  %3268 = vmatprep.subr.bf16.mxu0 %v3013
  %3269 = vmatpush1.bf16.msra.mxu0 %v3012
  %3270 = vmatprep.subr.bf16.mxu0 %v3015
  %3271 = vmatpush1.bf16.msra.mxu0 %v3014
  %3272 = vmatprep.subr.bf16.mxu0 %v3017
  %3273 = vmatpush1.bf16.msra.mxu0 %v3016
  %3274 = vmatprep.subr.bf16.mxu0 %v3019
  %3275 = vmatpush1.bf16.msra.mxu0 %v3018
  %3276 = vmatprep.subr.bf16.mxu0 %v3021
  %3277 = vmatpush1.bf16.msra.mxu0 %v3020
  %3278 = vmatprep.subr.bf16.mxu0 %v3023
  %3279 = vmatpush1.bf16.msra.mxu0 %v3022
  %3280 = vmatprep.subr.bf16.mxu0 %v3025
  %3281 = vmatpush1.bf16.msra.mxu0 %v3024
  %3282 = vmatprep.subr.bf16.mxu0 %v3027
  %3283 = vmatpush1.bf16.msra.mxu0 %v3026
  %3284 = vmatprep.subr.bf16.mxu0 %v3029
  %3285 = vmatpush1.bf16.msra.mxu0 %v3028
  %3286 = vmatprep.subr.bf16.mxu0 %v3031
  %3287 = vmatpush1.bf16.msra.mxu0 %v3030
  %3288 = vmatprep.subr.bf16.mxu0 %v3033
  %3289 = vmatpush1.bf16.msra.mxu0 %v3032
  %3290 = vmatprep.subr.bf16.mxu0 %v3035
  %3291 = vmatpush1.bf16.msra.mxu0 %v3034
  %3292 = vmatprep.mubr.bf16.mxu0 %v2473
  %3293 = vmatmul.mubr.bf16.gmra.mrb[0].mxu0 %v2472
  %v3294 = vpop.f32.mrb[0].mxu0
  %v3295 = vadd.f32 %v2613, %v3294
  %v3296 = vpop.f32.mrb[0].mxu0
  %v3297 = vadd.f32 %v2617, %v3296
  %v3298 = vpop.f32.mrb[0].mxu0
  %v3299 = vpop.f32.mrb[0].mxu0
  %3300 = vdwg.mxu0
  %3301 = vmatprep.subr.bf16.mxu0 %v3037
  %3302 = vmatpush1.bf16.msra.mxu0 %v3036
  %3303 = vmatprep.subr.bf16.mxu0 %v3039
  %3304 = vmatpush1.bf16.msra.mxu0 %v3038
  %3305 = vmatprep.subr.bf16.mxu0 %v3041
  %3306 = vmatpush1.bf16.msra.mxu0 %v3040
  %3307 = vmatprep.subr.bf16.mxu0 %v3043
  %3308 = vmatpush1.bf16.msra.mxu0 %v3042
  %3309 = vmatprep.subr.bf16.mxu0 %v3045
  %3310 = vmatpush1.bf16.msra.mxu0 %v3044
  %3311 = vmatprep.subr.bf16.mxu0 %v3047
  %3312 = vmatpush1.bf16.msra.mxu0 %v3046
  %3313 = vmatprep.subr.bf16.mxu0 %v3049
  %3314 = vmatpush1.bf16.msra.mxu0 %v3048
  %3315 = vmatprep.subr.bf16.mxu0 %v3051
  %3316 = vmatpush1.bf16.msra.mxu0 %v3050
  %3317 = vmatprep.subr.bf16.mxu0 %v3053
  %3318 = vmatpush1.bf16.msra.mxu0 %v3052
  %3319 = vmatprep.subr.bf16.mxu0 %v3055
  %3320 = vmatpush1.bf16.msra.mxu0 %v3054
  %3321 = vmatprep.subr.bf16.mxu0 %v3057
  %3322 = vmatpush1.bf16.msra.mxu0 %v3056
  %3323 = vmatprep.subr.bf16.mxu0 %v3059
  %3324 = vmatpush1.bf16.msra.mxu0 %v3058
  %3325 = vmatprep.subr.bf16.mxu0 %v3061
  %3326 = vmatpush1.bf16.msra.mxu0 %v3060
  %3327 = vmatprep.subr.bf16.mxu0 %v3063
  %3328 = vmatpush1.bf16.msra.mxu0 %v3062
  %3329 = vmatprep.subr.bf16.mxu0 %v3065
  %3330 = vmatpush1.bf16.msra.mxu0 %v3064
  %3331 = vmatprep.subr.bf16.mxu0 %v3067
  %3332 = vmatpush1.bf16.msra.mxu0 %v3066
  %3333 = vmatprep.mubr.bf16.mxu0 %v2475
  %3334 = vmatmul.mubr.bf16.gmra.mrb[0].mxu0 %v2474
  %v3335 = vpop.f32.mrb[0].mxu0
  %v3336 = vadd.f32 %v3295, %v3335
  %v3337 = vpop.f32.mrb[0].mxu0
  %v3338 = vadd.f32 %v3297, %v3337
  %v3339 = vpop.f32.mrb[0].mxu0
  %v3340 = vpop.f32.mrb[0].mxu0
  %3341 = vdwg.mxu0
  %3342 = vmatprep.subr.bf16.mxu0 %v3069
  %3343 = vmatpush1.bf16.msra.mxu0 %v3068
  %3344 = vmatprep.subr.bf16.mxu0 %v3071
  %3345 = vmatpush1.bf16.msra.mxu0 %v3070
  %3346 = vmatprep.subr.bf16.mxu0 %v3073
  %3347 = vmatpush1.bf16.msra.mxu0 %v3072
  %3348 = vmatprep.subr.bf16.mxu0 %v3075
  %3349 = vmatpush1.bf16.msra.mxu0 %v3074
  %3350 = vmatprep.subr.bf16.mxu0 %v3077
  %3351 = vmatpush1.bf16.msra.mxu0 %v3076
  %3352 = vmatprep.subr.bf16.mxu0 %v3079
  %3353 = vmatpush1.bf16.msra.mxu0 %v3078
  %3354 = vmatprep.subr.bf16.mxu0 %v3081
  %3355 = vmatpush1.bf16.msra.mxu0 %v3080
  %3356 = vmatprep.subr.bf16.mxu0 %v3083
  %3357 = vmatpush1.bf16.msra.mxu0 %v3082
  %3358 = vmatprep.subr.bf16.mxu0 %v3085
  %3359 = vmatpush1.bf16.msra.mxu0 %v3084
  %3360 = vmatprep.subr.bf16.mxu0 %v3087
  %3361 = vmatpush1.bf16.msra.mxu0 %v3086
  %3362 = vmatprep.subr.bf16.mxu0 %v3089
  %3363 = vmatpush1.bf16.msra.mxu0 %v3088
  %3364 = vmatprep.subr.bf16.mxu0 %v3091
  %3365 = vmatpush1.bf16.msra.mxu0 %v3090
  %3366 = vmatprep.subr.bf16.mxu0 %v3093
  %3367 = vmatpush1.bf16.msra.mxu0 %v3092
  %3368 = vmatprep.subr.bf16.mxu0 %v3095
  %3369 = vmatpush1.bf16.msra.mxu0 %v3094
  %3370 = vmatprep.subr.bf16.mxu0 %v3097
  %3371 = vmatpush1.bf16.msra.mxu0 %v3096
  %3372 = vmatprep.subr.bf16.mxu0 %v3099
  %3373 = vmatpush1.bf16.msra.mxu0 %v3098
  %3374 = vmatprep.mubr.bf16.mxu0 %v2477
  %3375 = vmatmul.mubr.bf16.gmra.mrb[0].mxu0 %v2476
  %v3376 = vpop.f32.mrb[0].mxu0
  %v3377 = vadd.f32 %v3336, %v3376
  %v3378 = vpop.f32.mrb[0].mxu0
  %v3379 = vadd.f32 %v3338, %v3378
  %v3380 = vpop.f32.mrb[0].mxu0
  %v3381 = vpop.f32.mrb[0].mxu0
  %3382 = vdwg.mxu0
  %3383 = vmatprep.subr.bf16.mxu0 %v3101
  %3384 = vmatpush1.bf16.msra.mxu0 %v3100
  %3385 = vmatprep.subr.bf16.mxu0 %v3103
  %3386 = vmatpush1.bf16.msra.mxu0 %v3102
  %3387 = vmatprep.subr.bf16.mxu0 %v3105
  %3388 = vmatpush1.bf16.msra.mxu0 %v3104
  %3389 = vmatprep.subr.bf16.mxu0 %v3107
  %3390 = vmatpush1.bf16.msra.mxu0 %v3106
  %3391 = vmatprep.subr.bf16.mxu0 %v3109
  %3392 = vmatpush1.bf16.msra.mxu0 %v3108
  %3393 = vmatprep.subr.bf16.mxu0 %v3111
  %3394 = vmatpush1.bf16.msra.mxu0 %v3110
  %3395 = vmatprep.subr.bf16.mxu0 %v3113
  %3396 = vmatpush1.bf16.msra.mxu0 %v3112
  %3397 = vmatprep.subr.bf16.mxu0 %v3115
  %3398 = vmatpush1.bf16.msra.mxu0 %v3114
  %3399 = vmatprep.subr.bf16.mxu0 %v3117
  %3400 = vmatpush1.bf16.msra.mxu0 %v3116
  %3401 = vmatprep.subr.bf16.mxu0 %v3119
  %3402 = vmatpush1.bf16.msra.mxu0 %v3118
  %3403 = vmatprep.subr.bf16.mxu0 %v3121
  %3404 = vmatpush1.bf16.msra.mxu0 %v3120
  %3405 = vmatprep.subr.bf16.mxu0 %v3123
  %3406 = vmatpush1.bf16.msra.mxu0 %v3122
  %3407 = vmatprep.subr.bf16.mxu0 %v3125
  %3408 = vmatpush1.bf16.msra.mxu0 %v3124
  %3409 = vmatprep.subr.bf16.mxu0 %v3127
  %3410 = vmatpush1.bf16.msra.mxu0 %v3126
  %3411 = vmatprep.subr.bf16.mxu0 %v3129
  %3412 = vmatpush1.bf16.msra.mxu0 %v3128
  %3413 = vmatprep.subr.bf16.mxu0 %v3131
  %3414 = vmatpush1.bf16.msra.mxu0 %v3130
  %3415 = vmatprep.mubr.bf16.mxu0 %v2479
  %3416 = vmatmul.mubr.bf16.gmra.mrb[0].mxu0 %v2478
  %v3417 = vpop.f32.mrb[0].mxu0
  %v3418 = vadd.f32 %v3377, %v3417
  %v3419 = vpop.f32.mrb[0].mxu0
  %v3420 = vadd.f32 %v3379, %v3419
  %v3421 = vpop.f32.mrb[0].mxu0
  %v3422 = vpop.f32.mrb[0].mxu0
  %3423 = vdwg.mxu0
  %v3425 = vrot.slane %v3418, 6
  %3426 = vrot.lane.b32.xlu0 %v3425, 72
  %v3427 = vpop.permute.xlu0 %3426
  %v3430 = vrot.slane %v3418, 4
  %v3431 = vrot.slane %v3420, 4
  %3432 = vrot.lane.b32.xlu0 %v3430, 16
  %v3433 = vpop.permute.xlu0 %3432
  %3434 = vrot.lane.b32.xlu0 %v3431, 16
  %v3435 = vpop.permute.xlu0 %3434
  %vm3436 = vcmask 130048
  %v3437 = vsel %vm3436, %v3433, %v3435
  %v3439 = vsel %vm48, %v3418, %v3427
  %vm3440 = vcmask 1043456
  %v3441 = vsel %vm3440, %v3439, %v3437
  %v3442 = vld [vmem:[%s12] sm:$0xff]
  %v3443 = vld [vmem:[%s12 + $0x8] sm:$0xff]
  %v3444 = vld [vmem:[%s12 + $0x10] sm:$0xff]
  %v3445 = vld [vmem:[%s12 + $0x18] sm:$0xff]
  %v3446 = vld [vmem:[%s12 + $0x20] sm:$0xff]
  %v3447 = vld [vmem:[%s12 + $0x28] sm:$0xff]
  %v3448 = vld [vmem:[%s12 + $0x30] sm:$0xff]
  %v3449 = vld [vmem:[%s12 + $0x38] sm:$0xff]
  %v3450 = vld [vmem:[%s12 + $0x40] sm:$0xff]
  %v3451 = vld [vmem:[%s12 + $0x48] sm:$0xff]
  %v3452 = vld [vmem:[%s12 + $0x50] sm:$0xff]
  %v3453 = vld [vmem:[%s12 + $0x58] sm:$0xff]
  %v3454 = vld [vmem:[%s12 + $0x60] sm:$0xff]
  %v3455 = vld [vmem:[%s12 + $0x68] sm:$0xff]
  %v3456 = vld [vmem:[%s12 + $0x70] sm:$0xff]
  %v3457 = vld [vmem:[%s12 + $0x78] sm:$0xff]
  %vm3458 = vcmask 457728
  %v3460 = vsel %vm3458, %v3441, 0
  %v3463 = vsel %vm3458, %v3442, 0
  %v3466 = vsel %vm3458, %v3443, 0
  %v3469 = vsel %vm3458, %v3444, 0
  %v3472 = vsel %vm3458, %v3445, 0
  %v3475 = vsel %vm3458, %v3446, 0
  %v3478 = vsel %vm3458, %v3447, 0
  %v3481 = vsel %vm3458, %v3448, 0
  %v3484 = vsel %vm3458, %v3449, 0
  %v3487 = vsel %vm3458, %v3450, 0
  %v3490 = vsel %vm3458, %v3451, 0
  %v3493 = vsel %vm3458, %v3452, 0
  %v3496 = vsel %vm3458, %v3453, 0
  %v3499 = vsel %vm3458, %v3454, 0
  %v3502 = vsel %vm3458, %v3455, 0
  %v3505 = vsel %vm3458, %v3456, 0
  %v3508 = vsel %vm3458, %v3457, 0
  %3510 = vmatprep.subr.mxu0 0.0
  %3511 = vmatpush1.xpose.msra.mxu0 %v3463
  %3512 = vmatprep.subr.mxu0 0.0
  %3513 = vmatpush1.xpose.msra.mxu0 %v3466
  %3514 = vmatprep.subr.mxu0 0.0
  %3515 = vmatpush1.xpose.msra.mxu0 %v3469
  %3516 = vmatprep.subr.mxu0 0.0
  %3517 = vmatpush1.xpose.msra.mxu0 %v3472
  %3518 = vmatprep.subr.mxu0 0.0
  %3519 = vmatpush1.xpose.msra.mxu0 %v3475
  %3520 = vmatprep.subr.mxu0 0.0
  %3521 = vmatpush1.xpose.msra.mxu0 %v3478
  %3522 = vmatprep.subr.mxu0 0.0
  %3523 = vmatpush1.xpose.msra.mxu0 %v3481
  %3524 = vmatprep.subr.mxu0 0.0
  %3525 = vmatpush1.xpose.msra.mxu0 %v3484
  %3526 = vmatprep.subr.mxu0 0.0
  %3527 = vmatpush1.xpose.msra.mxu0 %v3487
  %3528 = vmatprep.subr.mxu0 0.0
  %3529 = vmatpush1.xpose.msra.mxu0 %v3490
  %3530 = vmatprep.subr.mxu0 0.0
  %3531 = vmatpush1.xpose.msra.mxu0 %v3493
  %3532 = vmatprep.subr.mxu0 0.0
  %3533 = vmatpush1.xpose.msra.mxu0 %v3496
  %3534 = vmatprep.subr.mxu0 0.0
  %3535 = vmatpush1.xpose.msra.mxu0 %v3499
  %3536 = vmatprep.subr.mxu0 0.0
  %3537 = vmatpush1.xpose.msra.mxu0 %v3502
  %3538 = vmatprep.subr.mxu0 0.0
  %3539 = vmatpush1.xpose.msra.mxu0 %v3505
  %3540 = vmatprep.subr.mxu0 0.0
  %3541 = vmatpush1.xpose.msra.mxu0 %v3508
  %3542 = vmatprep.subr.mxu0 0.0
  %3543 = vmatpush1.xpose.msra.mxu0 0.0
  %3544 = vmatprep.subr.mxu0 0.0
  %3545 = vmatpush1.xpose.msra.mxu0 0.0
  %3546 = vmatprep.subr.mxu0 0.0
  %3547 = vmatpush1.xpose.msra.mxu0 0.0
  %3548 = vmatprep.subr.mxu0 0.0
  %3549 = vmatpush1.xpose.msra.mxu0 0.0
  %3550 = vmatprep.subr.mxu0 0.0
  %3551 = vmatpush1.xpose.msra.mxu0 0.0
  %3552 = vmatprep.subr.mxu0 0.0
  %3553 = vmatpush1.xpose.msra.mxu0 0.0
  %3554 = vmatprep.subr.mxu0 0.0
  %3555 = vmatpush1.xpose.msra.mxu0 0.0
  %3556 = vmatprep.subr.mxu0 0.0
  %3557 = vmatpush1.xpose.msra.mxu0 0.0
  %3558 = vmatprep.subr.mxu0 0.0
  %3559 = vmatpush1.xpose.msra.mxu0 0.0
  %3560 = vmatprep.subr.mxu0 0.0
  %3561 = vmatpush1.xpose.msra.mxu0 0.0
  %3562 = vmatprep.subr.mxu0 0.0
  %3563 = vmatpush1.xpose.msra.mxu0 0.0
  %3564 = vmatprep.subr.mxu0 0.0
  %3565 = vmatpush1.xpose.msra.mxu0 0.0
  %3566 = vmatprep.subr.mxu0 0.0
  %3567 = vmatpush1.xpose.msra.mxu0 0.0
  %3568 = vmatprep.subr.mxu0 0.0
  %3569 = vmatpush1.xpose.msra.mxu0 0.0
  %3570 = vmatprep.subr.mxu0 0.0
  %3571 = vmatpush1.xpose.msra.mxu0 0.0
  %3572 = vmatprep.subr.mxu0 0.0
  %3573 = vmatpush1.xpose.msra.mxu0 0.0
  %3574 = vmatprep.mubr.f32.mxu0 0.0
  %3575 = vmatmul.mubr.f32.gmra.mrb[0].mxu0 %v3460
  %v3576 = vpop.f32.mrb[0].mxu0
  %v3577 = vadd.f32 0.0, %v3576
  %v3578 = vpop.f32.mrb[0].mxu0
  %3579 = vdwg.mxu0
  %3580 = vst [vmem:[%s13] sm:$0x3f] %v3577
  // Predicated region
  $region54: #{_lambda_.5} parent=0 // pred_check
    _
  $region55: #{_lambda_.5} parent=0 // pred_check_branch
    %3582 = sbr.rel (0) target = $region57
  $region56: #{_lambda_.5} parent=0 // pred_region
    _
  $region57: #{_lambda_.5} parent=0 // pred_fallthru
    _
  // Predicated region
  $region58: #{_lambda_.5} parent=0 // pred_check
    _
  $region59: #{_lambda_.5} parent=0 // pred_check_branch
    %3584 = sbr.rel (0) target = $region61
  $region60: #{_lambda_.5} parent=0 // pred_region
    _
  $region61: #{_lambda_.5} parent=0 // pred_fallthru
    _

</llo_original>
